<compile_context>
chip_gen: v7x
topology: tpu7x:2x2x1
jax: 0.10.0
libtpu: 0.0.40
codegen_flags: <defaults>
</compile_context>

<pallas_src>
import functools

import jax
import jax.numpy as jnp
from jax import lax
from jax.experimental import pallas as pl
from jax.experimental.pallas import tpu as pltpu


def _choose_q_tile(N):
    """Largest nice query tile (multiple of 128/256) that divides N."""
    for tq in (256, 128):
        if N > tq and N % tq == 0:
            return tq
    return N


def _retention_kernel(xq_ref, xkv_ref, wq_ref, wk_ref, wv_ref,
                      bq_ref, bk_ref, bv_ref, wo_ref, bo_ref, lg_ref,
                      o_ref, attn_ref, *, num_heads):
    TQ, C = xq_ref.shape
    N = xkv_ref.shape[0]
    H = num_heads
    hd = C // H

    q_start = pl.program_id(1) * TQ

    # ---- dense projections: bf16 operands, f32 accumulation on the MXU ----
    xq = xq_ref[...].astype(jnp.bfloat16)                    # (TQ, C)
    xkv = xkv_ref[...].astype(jnp.bfloat16)                  # (N,  C)

    q2d = (jnp.dot(xq, wq_ref[...], preferred_element_type=jnp.float32)
           + bq_ref[...]).astype(jnp.bfloat16)               # (TQ, C) scale pre-folded
    k2d = (jnp.dot(xkv, wk_ref[...], preferred_element_type=jnp.float32)
           + bk_ref[...]).astype(jnp.bfloat16)               # (N, C)
    v2d = (jnp.dot(xkv, wv_ref[...], preferred_element_type=jnp.float32)
           + bv_ref[...]).astype(jnp.bfloat16)               # (N, C)

    # ---- retention decay mask pieces, rebuilt in-kernel (no HBM mask) ----
    row = lax.broadcasted_iota(jnp.int32, (TQ, N), 0) + q_start
    col = lax.broadcasted_iota(jnp.int32, (TQ, N), 1)
    diff = row - col
    valid = diff >= 0
    diff_f = jnp.where(valid, diff.astype(jnp.float32), 0.0)  # (TQ, N)

    log_g = lg_ref[...]                                       # (H, 1) f32

    # ---- per-head retention (hd < 128 bounds MXU shape regardless; the loop
    #      keeps everything 2-D and avoids relayout transposes) ----
    for h in range(H):
        sl = pl.ds(h * hd, hd)
        qh = q2d[:, h * hd:(h + 1) * hd]                      # (TQ, hd) bf16
        kh = k2d[:, h * hd:(h + 1) * hd]                      # (N,  hd) bf16
        vh = v2d[:, h * hd:(h + 1) * hd]                      # (N,  hd) bf16

        # scores = q_h @ k_h^T  (contraction over hd), f32 accumulate
        s = lax.dot_general(qh, kh, (((1,), (1,)), ((), ())),
                            preferred_element_type=jnp.float32)   # (TQ, N)

        # decay mask: gamma^(i-j) for i>=j else 0 (zero-mask before softmax,
        # exactly like the reference/torch semantics).
        decay = jnp.exp(diff_f * log_g[h:h + 1, :])           # (1,1) broadcast
        s = s * jnp.where(valid, decay, 0.0)

        # numerically-stable softmax in f32; divide moved to the EUP slot.
        s = s - jnp.max(s, axis=-1, keepdims=True)
        e = jnp.exp(s)
        p = e * pl.reciprocal(jnp.sum(e, axis=-1, keepdims=True), approx=True)

        # p @ v_h  (contraction over N), written straight into the head slab.
        attn_ref[:, sl] = jnp.dot(p.astype(jnp.bfloat16), vh,
                                  preferred_element_type=jnp.float32)

    # ---- single dense output projection (folds the head "concat") ----
    out = jnp.dot(attn_ref[...].astype(jnp.bfloat16), wo_ref[...],
                  preferred_element_type=jnp.float32) + bo_ref[...]
    o_ref[...] = out.astype(o_ref.dtype)


def retention_parallel(x, w_qkv, b_qkv, w_out, b_out, gammas, *, num_heads):
    """Retention.parallel: weights are (in_features, out_features) so y = x @ W + b."""
    B, N, C = x.shape
    H = num_heads
    assert C % H == 0
    hd = C // H
    scale = float(hd) ** -0.5

    TQ = _choose_q_tile(N)
    nq = N // TQ

    # Split the fused QKV projection (torch column order [q | k | v], head-major
    # inside each slab) and fold the 1/sqrt(hd) scale into the Q projection.
    w_q = (w_qkv[:, 0 * C:1 * C] * scale).astype(jnp.bfloat16)
    w_k = w_qkv[:, 1 * C:2 * C].astype(jnp.bfloat16)
    w_v = w_qkv[:, 2 * C:3 * C].astype(jnp.bfloat16)
    b_q = (b_qkv[0 * C:1 * C] * scale).reshape(1, C).astype(jnp.float32)
    b_k = b_qkv[1 * C:2 * C].reshape(1, C).astype(jnp.float32)
    b_v = b_qkv[2 * C:3 * C].reshape(1, C).astype(jnp.float32)
    w_o = w_out.astype(jnp.bfloat16)
    b_o = b_out.reshape(1, C).astype(jnp.float32)
    log_g = jnp.log(gammas.astype(jnp.float32)).reshape(H, 1)

    kernel = functools.partial(_retention_kernel, num_heads=H)
    return pl.pallas_call(
        kernel,
        out_shape=jax.ShapeDtypeStruct((B, N, C), x.dtype),
        grid_spec=pltpu.PrefetchScalarGridSpec(
            num_scalar_prefetch=0,
            grid=(B, nq),
            in_specs=[
                pl.BlockSpec((None, TQ, C), lambda b, qi: (b, qi, 0)),  # x (query rows)
                pl.BlockSpec((None, N, C), lambda b, qi: (b, 0, 0)),    # x (full seq for K/V)
                pl.BlockSpec((C, C), lambda b, qi: (0, 0)),             # w_q (scaled, bf16)
                pl.BlockSpec((C, C), lambda b, qi: (0, 0)),             # w_k
                pl.BlockSpec((C, C), lambda b, qi: (0, 0)),             # w_v
                pl.BlockSpec((1, C), lambda b, qi: (0, 0)),             # b_q (scaled)
                pl.BlockSpec((1, C), lambda b, qi: (0, 0)),             # b_k
                pl.BlockSpec((1, C), lambda b, qi: (0, 0)),             # b_v
                pl.BlockSpec((C, C), lambda b, qi: (0, 0)),             # w_out (bf16)
                pl.BlockSpec((1, C), lambda b, qi: (0, 0)),             # b_out
                pl.BlockSpec((H, 1), lambda b, qi: (0, 0)),             # log(gamma) per head
            ],
            out_specs=pl.BlockSpec((None, TQ, C), lambda b, qi: (b, qi, 0)),
            scratch_shapes=[pltpu.VMEM((TQ, C), jnp.float32)],          # head-assembly slab
        ),
        compiler_params=pltpu.CompilerParams(
            dimension_semantics=("parallel", "parallel"),
            vmem_limit_bytes=48 * 1024 * 1024,
        ),
    )(x, x, w_q, w_k, w_v, b_q, b_k, b_v, w_o, b_o, log_g)


def retention_reference(x, w_qkv, b_qkv, w_out, b_out, mask, *, num_heads):
    """Plain-JAX mirror of Retention.parallel (torch semantics), full f32."""
    B, N, C = x.shape
    H = num_heads
    hd = C // H
    scale = hd ** -0.5
    qkv = x @ w_qkv + b_qkv                                   # (B, N, 3C)
    qkv = qkv.reshape(B, N, 3, H, hd).transpose(2, 0, 3, 1, 4)
    q, k, v = qkv[0], qkv[1], qkv[2]                          # (B, H, N, hd)
    q = q * scale
    ret = jnp.einsum('bhnd,bhmd->bhnm', q, k)
    ret = ret * mask[None]
    ret = jax.nn.softmax(ret, axis=-1)
    ret = jnp.einsum('bhnm,bhmd->bhnd', ret, v)
    ret = ret.transpose(0, 2, 1, 3).reshape(B, N, C)
    return ret @ w_out + b_out


if __name__ == "__main__":
    B, N, C, H = 2, 256, 128, 8       # hd = 16, TQ = 128 -> grid (2, 2)
    hd = C // H

    key = jax.random.PRNGKey(0)
    kx, kw1, kb1, kw2, kb2 = jax.random.split(key, 5)

    x = jax.random.normal(kx, (B, N, C), dtype=jnp.float32)
    w_qkv = jax.random.normal(kw1, (C, 3 * C), dtype=jnp.float32) * 0.05
    b_qkv = jax.random.normal(kb1, (3 * C,), dtype=jnp.float32) * 0.05
    w_out = jax.random.normal(kw2, (C, C), dtype=jnp.float32) * 0.05
    b_out = jax.random.normal(kb2, (C,), dtype=jnp.float32) * 0.05

    # Retention decay coefficients (one gamma per head).
    gammas = 1.0 - 2.0 ** (-5.0 - jnp.arange(H, dtype=jnp.float32))

    out = retention_parallel(x, w_qkv, b_qkv, w_out, b_out, gammas, num_heads=H)
    out = jax.block_until_ready(out)

    # Full (H, N, N) decay mask only for the pure-JAX reference.
    n_idx = jnp.arange(N, dtype=jnp.float32)
    diff = n_idx[:, None] - n_idx[None, :]
    mask = jnp.where(diff >= 0,
                     gammas[:, None, None] ** diff[None],
                     0.0).astype(jnp.float32)

    ref = retention_reference(x, w_qkv, b_qkv, w_out, b_out, mask, num_heads=H)
    assert out.shape == (B, N, C)
    max_err = float(jnp.max(jnp.abs(out - ref)))
    assert jnp.allclose(out, ref, atol=2e-2, rtol=2e-2), f"mismatch vs reference: {max_err}"

    print("KERNEL_OK")
</pallas_src>

<mosaic_0001>
module attributes {stable_mosaic.version = 11 : i64} {
  func.func @_retention_kernel(%arg0: i32, %arg1: i32, %arg2: memref<1x128x128xf32, #tpu.memory_space<vmem>>, %arg3: memref<1x256x128xf32, #tpu.memory_space<vmem>>, %arg4: memref<128x128xbf16, #tpu.memory_space<vmem>>, %arg5: memref<128x128xbf16, #tpu.memory_space<vmem>>, %arg6: memref<128x128xbf16, #tpu.memory_space<vmem>>, %arg7: memref<1x128xf32, #tpu.memory_space<vmem>>, %arg8: memref<1x128xf32, #tpu.memory_space<vmem>>, %arg9: memref<1x128xf32, #tpu.memory_space<vmem>>, %arg10: memref<128x128xbf16, #tpu.memory_space<vmem>>, %arg11: memref<1x128xf32, #tpu.memory_space<vmem>>, %arg12: memref<8x1xf32, #tpu.memory_space<vmem>>, %arg13: memref<1x128x128xf32, #tpu.memory_space<vmem>>, %arg14: memref<128x128xf32, #tpu.memory_space<vmem>>) attributes {dimension_semantics = [#tpu.dimension_semantics<parallel>, #tpu.dimension_semantics<parallel>], iteration_bounds = array<i64: 2, 2>, scalar_prefetch = 0 : i64, scratch_operands = 1 : i64, tpu.core_type = #tpu.core_type<tc>, window_params = [{transform_indices = @transform_0, window_bounds = array<i64: 1, 128, 128>}, {transform_indices = @transform_1, window_bounds = array<i64: 1, 256, 128>}, {pipeline_mode = #tpu.pipeline_mode<synchronous>, transform_indices = @transform_2, window_bounds = array<i64: 128, 128>}, {pipeline_mode = #tpu.pipeline_mode<synchronous>, transform_indices = @transform_3, window_bounds = array<i64: 128, 128>}, {pipeline_mode = #tpu.pipeline_mode<synchronous>, transform_indices = @transform_4, window_bounds = array<i64: 128, 128>}, {pipeline_mode = #tpu.pipeline_mode<synchronous>, transform_indices = @transform_5, window_bounds = array<i64: 1, 128>}, {pipeline_mode = #tpu.pipeline_mode<synchronous>, transform_indices = @transform_6, window_bounds = array<i64: 1, 128>}, {pipeline_mode = #tpu.pipeline_mode<synchronous>, transform_indices = @transform_7, window_bounds = array<i64: 1, 128>}, {pipeline_mode = #tpu.pipeline_mode<synchronous>, transform_indices = @transform_8, window_bounds = array<i64: 128, 128>}, {pipeline_mode = #tpu.pipeline_mode<synchronous>, transform_indices = @transform_9, window_bounds = array<i64: 1, 128>}, {pipeline_mode = #tpu.pipeline_mode<synchronous>, transform_indices = @transform_10, window_bounds = array<i64: 8, 1>}, {transform_indices = @transform_11, window_bounds = array<i64: 1, 128, 128>}]} {
    %c128_i32 = arith.constant 128 : i32
    %0 = arith.muli %arg1, %c128_i32 : i32
    %c0 = arith.constant 0 : index
    %c0_0 = arith.constant 0 : index
    %c0_1 = arith.constant 0 : index
    %1 = vector.load %arg2[%c0, %c0_0, %c0_1] : memref<1x128x128xf32, #tpu.memory_space<vmem>>, vector<1x128x128xf32>
    %2 = vector.shape_cast %1 : vector<1x128x128xf32> to vector<128x128xf32>
    %3 = arith.truncf %2 : vector<128x128xf32> to vector<128x128xbf16>
    %c0_2 = arith.constant 0 : index
    %c0_3 = arith.constant 0 : index
    %c0_4 = arith.constant 0 : index
    %4 = vector.load %arg3[%c0_2, %c0_3, %c0_4] : memref<1x256x128xf32, #tpu.memory_space<vmem>>, vector<1x256x128xf32>
    %5 = vector.shape_cast %4 : vector<1x256x128xf32> to vector<256x128xf32>
    %6 = arith.truncf %5 : vector<256x128xf32> to vector<256x128xbf16>
    %c0_5 = arith.constant 0 : index
    %c0_6 = arith.constant 0 : index
    %7 = vector.load %arg4[%c0_5, %c0_6] : memref<128x128xbf16, #tpu.memory_space<vmem>>, vector<128x128xbf16>
    %cst = arith.constant dense<0.000000e+00> : vector<128x128xf32>
    %8 = tpu.matmul %3, %7, %cst {dimension_numbers = #tpu.dot_dimension_numbers<[1], [0], [0], [1], [0, 0, 1, 1], [], []>} : vector<128x128xbf16>, vector<128x128xbf16>, vector<128x128xf32> -> vector<128x128xf32>
    %c0_7 = arith.constant 0 : index
    %c0_8 = arith.constant 0 : index
    %9 = vector.load %arg7[%c0_7, %c0_8] : memref<1x128xf32, #tpu.memory_space<vmem>>, vector<1x128xf32>
    %10 = vector.broadcast %9 : vector<1x128xf32> to vector<128x128xf32>
    %11 = arith.addf %8, %10 : vector<128x128xf32>
    %12 = arith.truncf %11 : vector<128x128xf32> to vector<128x128xbf16>
    %c0_9 = arith.constant 0 : index
    %c0_10 = arith.constant 0 : index
    %13 = vector.load %arg5[%c0_9, %c0_10] : memref<128x128xbf16, #tpu.memory_space<vmem>>, vector<128x128xbf16>
    %cst_11 = arith.constant dense<0.000000e+00> : vector<256x128xf32>
    %14 = tpu.matmul %6, %13, %cst_11 {dimension_numbers = #tpu.dot_dimension_numbers<[1], [0], [0], [1], [0, 0, 1, 1], [], []>} : vector<256x128xbf16>, vector<128x128xbf16>, vector<256x128xf32> -> vector<256x128xf32>
    %c0_12 = arith.constant 0 : index
    %c0_13 = arith.constant 0 : index
    %15 = vector.load %arg8[%c0_12, %c0_13] : memref<1x128xf32, #tpu.memory_space<vmem>>, vector<1x128xf32>
    %16 = vector.broadcast %15 : vector<1x128xf32> to vector<256x128xf32>
    %17 = arith.addf %14, %16 : vector<256x128xf32>
    %18 = arith.truncf %17 : vector<256x128xf32> to vector<256x128xbf16>
    %c0_14 = arith.constant 0 : index
    %c0_15 = arith.constant 0 : index
    %19 = vector.load %arg6[%c0_14, %c0_15] : memref<128x128xbf16, #tpu.memory_space<vmem>>, vector<128x128xbf16>
    %cst_16 = arith.constant dense<0.000000e+00> : vector<256x128xf32>
    %20 = tpu.matmul %6, %19, %cst_16 {dimension_numbers = #tpu.dot_dimension_numbers<[1], [0], [0], [1], [0, 0, 1, 1], [], []>} : vector<256x128xbf16>, vector<128x128xbf16>, vector<256x128xf32> -> vector<256x128xf32>
    %c0_17 = arith.constant 0 : index
    %c0_18 = arith.constant 0 : index
    %21 = vector.load %arg9[%c0_17, %c0_18] : memref<1x128xf32, #tpu.memory_space<vmem>>, vector<1x128xf32>
    %22 = vector.broadcast %21 : vector<1x128xf32> to vector<256x128xf32>
    %23 = arith.addf %20, %22 : vector<256x128xf32>
    %24 = arith.truncf %23 : vector<256x128xf32> to vector<256x128xbf16>
    %25 = tpu.iota {dimensions = array<i32: 0>} : vector<128x256xi32>
    %26 = vector.broadcast %0 : i32 to vector<128x256xi32>
    %27 = arith.addi %25, %26 : vector<128x256xi32>
    %28 = tpu.iota {dimensions = array<i32: 1>} : vector<128x256xi32>
    %29 = arith.subi %27, %28 : vector<128x256xi32>
    %c0_i32 = arith.constant 0 : i32
    %30 = vector.broadcast %c0_i32 : i32 to vector<128x256xi32>
    %31 = arith.cmpi sge, %29, %30 : vector<128x256xi32>
    %32 = arith.sitofp %29 : vector<128x256xi32> to vector<128x256xf32>
    %cst_19 = arith.constant 0.000000e+00 : f32
    %33 = vector.broadcast %cst_19 : f32 to vector<128x256xf32>
    %34 = arith.select %31, %32, %33 : vector<128x256xi1>, vector<128x256xf32>
    %c0_20 = arith.constant 0 : index
    %c0_21 = arith.constant 0 : index
    %35 = vector.load %arg12[%c0_20, %c0_21] : memref<8x1xf32, #tpu.memory_space<vmem>>, vector<8x1xf32>
    %36 = vector.extract_strided_slice %12 {offsets = [0, 0], sizes = [128, 16], strides = [1, 1]} : vector<128x128xbf16> to vector<128x16xbf16>
    %37 = vector.extract_strided_slice %18 {offsets = [0, 0], sizes = [256, 16], strides = [1, 1]} : vector<256x128xbf16> to vector<256x16xbf16>
    %38 = vector.extract_strided_slice %24 {offsets = [0, 0], sizes = [256, 16], strides = [1, 1]} : vector<256x128xbf16> to vector<256x16xbf16>
    %cst_22 = arith.constant dense<0.000000e+00> : vector<128x256xf32>
    %39 = tpu.matmul %36, %37, %cst_22 {dimension_numbers = #tpu.dot_dimension_numbers<[1], [1], [0], [0], [0, 0, 1, 0], [], []>} : vector<128x16xbf16>, vector<256x16xbf16>, vector<128x256xf32> -> vector<128x256xf32>
    %40 = vector.extract_strided_slice %35 {offsets = [0, 0], sizes = [1, 1], strides = [1, 1]} : vector<8x1xf32> to vector<1x1xf32>
    %41 = vector.broadcast %40 : vector<1x1xf32> to vector<128x256xf32>
    %42 = arith.mulf %34, %41 : vector<128x256xf32>
    %43 = math.exp %42 : vector<128x256xf32>
    %cst_23 = arith.constant 0.000000e+00 : f32
    %44 = vector.broadcast %cst_23 : f32 to vector<128x256xf32>
    %45 = arith.select %31, %43, %44 : vector<128x256xi1>, vector<128x256xf32>
    %46 = arith.mulf %39, %45 : vector<128x256xf32>
    %cst_24 = arith.constant dense<0xFF800000> : vector<128xf32>
    %47 = vector.multi_reduction <maximumf>, %46, %cst_24 [1] : vector<128x256xf32> to vector<128xf32>
    %48 = vector.shape_cast %47 : vector<128xf32> to vector<128x1xf32>
    %49 = vector.broadcast %48 : vector<128x1xf32> to vector<128x256xf32>
    %50 = arith.subf %46, %49 : vector<128x256xf32>
    %51 = math.exp %50 : vector<128x256xf32>
    %cst_25 = arith.constant dense<0.000000e+00> : vector<128xf32>
    %52 = vector.multi_reduction <add>, %51, %cst_25 [1] : vector<128x256xf32> to vector<128xf32>
    %53 = vector.shape_cast %52 : vector<128xf32> to vector<128x1xf32>
    %54 = tpu.reciprocal %53 {approx = true} : vector<128x1xf32> -> vector<128x1xf32>
    %55 = vector.broadcast %54 : vector<128x1xf32> to vector<128x256xf32>
    %56 = arith.mulf %51, %55 : vector<128x256xf32>
    %57 = arith.truncf %56 : vector<128x256xf32> to vector<128x256xbf16>
    %cst_26 = arith.constant dense<0.000000e+00> : vector<128x16xf32>
    %58 = tpu.matmul %57, %38, %cst_26 {dimension_numbers = #tpu.dot_dimension_numbers<[1], [0], [0], [1], [0, 0, 1, 1], [], []>} : vector<128x256xbf16>, vector<256x16xbf16>, vector<128x16xf32> -> vector<128x16xf32>
    %c0_27 = arith.constant 0 : index
    %c0_28 = arith.constant 0 : index
    %59 = vector.load %arg14[%c0_27, %c0_28] : memref<128x128xf32, #tpu.memory_space<vmem>>, vector<128x16xf32>
    tpu.vector_store %arg14[%c0_27, %c0_28], %58 {strides = array<i32>} : memref<128x128xf32, #tpu.memory_space<vmem>>, vector<128x16xf32>,
    %60 = vector.extract_strided_slice %12 {offsets = [0, 16], sizes = [128, 16], strides = [1, 1]} : vector<128x128xbf16> to vector<128x16xbf16>
    %61 = vector.extract_strided_slice %18 {offsets = [0, 16], sizes = [256, 16], strides = [1, 1]} : vector<256x128xbf16> to vector<256x16xbf16>
    %62 = vector.extract_strided_slice %24 {offsets = [0, 16], sizes = [256, 16], strides = [1, 1]} : vector<256x128xbf16> to vector<256x16xbf16>
    %cst_29 = arith.constant dense<0.000000e+00> : vector<128x256xf32>
    %63 = tpu.matmul %60, %61, %cst_29 {dimension_numbers = #tpu.dot_dimension_numbers<[1], [1], [0], [0], [0, 0, 1, 0], [], []>} : vector<128x16xbf16>, vector<256x16xbf16>, vector<128x256xf32> -> vector<128x256xf32>
    %64 = vector.extract_strided_slice %35 {offsets = [1, 0], sizes = [1, 1], strides = [1, 1]} : vector<8x1xf32> to vector<1x1xf32>
    %65 = vector.broadcast %64 : vector<1x1xf32> to vector<128x256xf32>
    %66 = arith.mulf %34, %65 : vector<128x256xf32>
    %67 = math.exp %66 : vector<128x256xf32>
    %cst_30 = arith.constant 0.000000e+00 : f32
    %68 = vector.broadcast %cst_30 : f32 to vector<128x256xf32>
    %69 = arith.select %31, %67, %68 : vector<128x256xi1>, vector<128x256xf32>
    %70 = arith.mulf %63, %69 : vector<128x256xf32>
    %cst_31 = arith.constant dense<0xFF800000> : vector<128xf32>
    %71 = vector.multi_reduction <maximumf>, %70, %cst_31 [1] : vector<128x256xf32> to vector<128xf32>
    %72 = vector.shape_cast %71 : vector<128xf32> to vector<128x1xf32>
    %73 = vector.broadcast %72 : vector<128x1xf32> to vector<128x256xf32>
    %74 = arith.subf %70, %73 : vector<128x256xf32>
    %75 = math.exp %74 : vector<128x256xf32>
    %cst_32 = arith.constant dense<0.000000e+00> : vector<128xf32>
    %76 = vector.multi_reduction <add>, %75, %cst_32 [1] : vector<128x256xf32> to vector<128xf32>
    %77 = vector.shape_cast %76 : vector<128xf32> to vector<128x1xf32>
    %78 = tpu.reciprocal %77 {approx = true} : vector<128x1xf32> -> vector<128x1xf32>
    %79 = vector.broadcast %78 : vector<128x1xf32> to vector<128x256xf32>
    %80 = arith.mulf %75, %79 : vector<128x256xf32>
    %81 = arith.truncf %80 : vector<128x256xf32> to vector<128x256xbf16>
    %cst_33 = arith.constant dense<0.000000e+00> : vector<128x16xf32>
    %82 = tpu.matmul %81, %62, %cst_33 {dimension_numbers = #tpu.dot_dimension_numbers<[1], [0], [0], [1], [0, 0, 1, 1], [], []>} : vector<128x256xbf16>, vector<256x16xbf16>, vector<128x16xf32> -> vector<128x16xf32>
    %c0_34 = arith.constant 0 : index
    %c16 = arith.constant 16 : index
    %83 = vector.load %arg14[%c0_34, %c16] : memref<128x128xf32, #tpu.memory_space<vmem>>, vector<128x16xf32>
    tpu.vector_store %arg14[%c0_34, %c16], %82 {strides = array<i32>} : memref<128x128xf32, #tpu.memory_space<vmem>>, vector<128x16xf32>,
    %84 = vector.extract_strided_slice %12 {offsets = [0, 32], sizes = [128, 16], strides = [1, 1]} : vector<128x128xbf16> to vector<128x16xbf16>
    %85 = vector.extract_strided_slice %18 {offsets = [0, 32], sizes = [256, 16], strides = [1, 1]} : vector<256x128xbf16> to vector<256x16xbf16>
    %86 = vector.extract_strided_slice %24 {offsets = [0, 32], sizes = [256, 16], strides = [1, 1]} : vector<256x128xbf16> to vector<256x16xbf16>
    %cst_35 = arith.constant dense<0.000000e+00> : vector<128x256xf32>
    %87 = tpu.matmul %84, %85, %cst_35 {dimension_numbers = #tpu.dot_dimension_numbers<[1], [1], [0], [0], [0, 0, 1, 0], [], []>} : vector<128x16xbf16>, vector<256x16xbf16>, vector<128x256xf32> -> vector<128x256xf32>
    %88 = vector.extract_strided_slice %35 {offsets = [2, 0], sizes = [1, 1], strides = [1, 1]} : vector<8x1xf32> to vector<1x1xf32>
    %89 = vector.broadcast %88 : vector<1x1xf32> to vector<128x256xf32>
    %90 = arith.mulf %34, %89 : vector<128x256xf32>
    %91 = math.exp %90 : vector<128x256xf32>
    %cst_36 = arith.constant 0.000000e+00 : f32
    %92 = vector.broadcast %cst_36 : f32 to vector<128x256xf32>
    %93 = arith.select %31, %91, %92 : vector<128x256xi1>, vector<128x256xf32>
    %94 = arith.mulf %87, %93 : vector<128x256xf32>
    %cst_37 = arith.constant dense<0xFF800000> : vector<128xf32>
    %95 = vector.multi_reduction <maximumf>, %94, %cst_37 [1] : vector<128x256xf32> to vector<128xf32>
    %96 = vector.shape_cast %95 : vector<128xf32> to vector<128x1xf32>
    %97 = vector.broadcast %96 : vector<128x1xf32> to vector<128x256xf32>
    %98 = arith.subf %94, %97 : vector<128x256xf32>
    %99 = math.exp %98 : vector<128x256xf32>
    %cst_38 = arith.constant dense<0.000000e+00> : vector<128xf32>
    %100 = vector.multi_reduction <add>, %99, %cst_38 [1] : vector<128x256xf32> to vector<128xf32>
    %101 = vector.shape_cast %100 : vector<128xf32> to vector<128x1xf32>
    %102 = tpu.reciprocal %101 {approx = true} : vector<128x1xf32> -> vector<128x1xf32>
    %103 = vector.broadcast %102 : vector<128x1xf32> to vector<128x256xf32>
    %104 = arith.mulf %99, %103 : vector<128x256xf32>
    %105 = arith.truncf %104 : vector<128x256xf32> to vector<128x256xbf16>
    %cst_39 = arith.constant dense<0.000000e+00> : vector<128x16xf32>
    %106 = tpu.matmul %105, %86, %cst_39 {dimension_numbers = #tpu.dot_dimension_numbers<[1], [0], [0], [1], [0, 0, 1, 1], [], []>} : vector<128x256xbf16>, vector<256x16xbf16>, vector<128x16xf32> -> vector<128x16xf32>
    %c0_40 = arith.constant 0 : index
    %c32 = arith.constant 32 : index
    %107 = vector.load %arg14[%c0_40, %c32] : memref<128x128xf32, #tpu.memory_space<vmem>>, vector<128x16xf32>
    tpu.vector_store %arg14[%c0_40, %c32], %106 {strides = array<i32>} : memref<128x128xf32, #tpu.memory_space<vmem>>, vector<128x16xf32>,
    %108 = vector.extract_strided_slice %12 {offsets = [0, 48], sizes = [128, 16], strides = [1, 1]} : vector<128x128xbf16> to vector<128x16xbf16>
    %109 = vector.extract_strided_slice %18 {offsets = [0, 48], sizes = [256, 16], strides = [1, 1]} : vector<256x128xbf16> to vector<256x16xbf16>
    %110 = vector.extract_strided_slice %24 {offsets = [0, 48], sizes = [256, 16], strides = [1, 1]} : vector<256x128xbf16> to vector<256x16xbf16>
    %cst_41 = arith.constant dense<0.000000e+00> : vector<128x256xf32>
    %111 = tpu.matmul %108, %109, %cst_41 {dimension_numbers = #tpu.dot_dimension_numbers<[1], [1], [0], [0], [0, 0, 1, 0], [], []>} : vector<128x16xbf16>, vector<256x16xbf16>, vector<128x256xf32> -> vector<128x256xf32>
    %112 = vector.extract_strided_slice %35 {offsets = [3, 0], sizes = [1, 1], strides = [1, 1]} : vector<8x1xf32> to vector<1x1xf32>
    %113 = vector.broadcast %112 : vector<1x1xf32> to vector<128x256xf32>
    %114 = arith.mulf %34, %113 : vector<128x256xf32>
    %115 = math.exp %114 : vector<128x256xf32>
    %cst_42 = arith.constant 0.000000e+00 : f32
    %116 = vector.broadcast %cst_42 : f32 to vector<128x256xf32>
    %117 = arith.select %31, %115, %116 : vector<128x256xi1>, vector<128x256xf32>
    %118 = arith.mulf %111, %117 : vector<128x256xf32>
    %cst_43 = arith.constant dense<0xFF800000> : vector<128xf32>
    %119 = vector.multi_reduction <maximumf>, %118, %cst_43 [1] : vector<128x256xf32> to vector<128xf32>
    %120 = vector.shape_cast %119 : vector<128xf32> to vector<128x1xf32>
    %121 = vector.broadcast %120 : vector<128x1xf32> to vector<128x256xf32>
    %122 = arith.subf %118, %121 : vector<128x256xf32>
    %123 = math.exp %122 : vector<128x256xf32>
    %cst_44 = arith.constant dense<0.000000e+00> : vector<128xf32>
    %124 = vector.multi_reduction <add>, %123, %cst_44 [1] : vector<128x256xf32> to vector<128xf32>
    %125 = vector.shape_cast %124 : vector<128xf32> to vector<128x1xf32>
    %126 = tpu.reciprocal %125 {approx = true} : vector<128x1xf32> -> vector<128x1xf32>
    %127 = vector.broadcast %126 : vector<128x1xf32> to vector<128x256xf32>
    %128 = arith.mulf %123, %127 : vector<128x256xf32>
    %129 = arith.truncf %128 : vector<128x256xf32> to vector<128x256xbf16>
    %cst_45 = arith.constant dense<0.000000e+00> : vector<128x16xf32>
    %130 = tpu.matmul %129, %110, %cst_45 {dimension_numbers = #tpu.dot_dimension_numbers<[1], [0], [0], [1], [0, 0, 1, 1], [], []>} : vector<128x256xbf16>, vector<256x16xbf16>, vector<128x16xf32> -> vector<128x16xf32>
    %c0_46 = arith.constant 0 : index
    %c48 = arith.constant 48 : index
    %131 = vector.load %arg14[%c0_46, %c48] : memref<128x128xf32, #tpu.memory_space<vmem>>, vector<128x16xf32>
    tpu.vector_store %arg14[%c0_46, %c48], %130 {strides = array<i32>} : memref<128x128xf32, #tpu.memory_space<vmem>>, vector<128x16xf32>,
    %132 = vector.extract_strided_slice %12 {offsets = [0, 64], sizes = [128, 16], strides = [1, 1]} : vector<128x128xbf16> to vector<128x16xbf16>
    %133 = vector.extract_strided_slice %18 {offsets = [0, 64], sizes = [256, 16], strides = [1, 1]} : vector<256x128xbf16> to vector<256x16xbf16>
    %134 = vector.extract_strided_slice %24 {offsets = [0, 64], sizes = [256, 16], strides = [1, 1]} : vector<256x128xbf16> to vector<256x16xbf16>
    %cst_47 = arith.constant dense<0.000000e+00> : vector<128x256xf32>
    %135 = tpu.matmul %132, %133, %cst_47 {dimension_numbers = #tpu.dot_dimension_numbers<[1], [1], [0], [0], [0, 0, 1, 0], [], []>} : vector<128x16xbf16>, vector<256x16xbf16>, vector<128x256xf32> -> vector<128x256xf32>
    %136 = vector.extract_strided_slice %35 {offsets = [4, 0], sizes = [1, 1], strides = [1, 1]} : vector<8x1xf32> to vector<1x1xf32>
    %137 = vector.broadcast %136 : vector<1x1xf32> to vector<128x256xf32>
    %138 = arith.mulf %34, %137 : vector<128x256xf32>
    %139 = math.exp %138 : vector<128x256xf32>
    %cst_48 = arith.constant 0.000000e+00 : f32
    %140 = vector.broadcast %cst_48 : f32 to vector<128x256xf32>
    %141 = arith.select %31, %139, %140 : vector<128x256xi1>, vector<128x256xf32>
    %142 = arith.mulf %135, %141 : vector<128x256xf32>
    %cst_49 = arith.constant dense<0xFF800000> : vector<128xf32>
    %143 = vector.multi_reduction <maximumf>, %142, %cst_49 [1] : vector<128x256xf32> to vector<128xf32>
    %144 = vector.shape_cast %143 : vector<128xf32> to vector<128x1xf32>
    %145 = vector.broadcast %144 : vector<128x1xf32> to vector<128x256xf32>
    %146 = arith.subf %142, %145 : vector<128x256xf32>
    %147 = math.exp %146 : vector<128x256xf32>
    %cst_50 = arith.constant dense<0.000000e+00> : vector<128xf32>
    %148 = vector.multi_reduction <add>, %147, %cst_50 [1] : vector<128x256xf32> to vector<128xf32>
    %149 = vector.shape_cast %148 : vector<128xf32> to vector<128x1xf32>
    %150 = tpu.reciprocal %149 {approx = true} : vector<128x1xf32> -> vector<128x1xf32>
    %151 = vector.broadcast %150 : vector<128x1xf32> to vector<128x256xf32>
    %152 = arith.mulf %147, %151 : vector<128x256xf32>
    %153 = arith.truncf %152 : vector<128x256xf32> to vector<128x256xbf16>
    %cst_51 = arith.constant dense<0.000000e+00> : vector<128x16xf32>
    %154 = tpu.matmul %153, %134, %cst_51 {dimension_numbers = #tpu.dot_dimension_numbers<[1], [0], [0], [1], [0, 0, 1, 1], [], []>} : vector<128x256xbf16>, vector<256x16xbf16>, vector<128x16xf32> -> vector<128x16xf32>
    %c0_52 = arith.constant 0 : index
    %c64 = arith.constant 64 : index
    %155 = vector.load %arg14[%c0_52, %c64] : memref<128x128xf32, #tpu.memory_space<vmem>>, vector<128x16xf32>
    tpu.vector_store %arg14[%c0_52, %c64], %154 {strides = array<i32>} : memref<128x128xf32, #tpu.memory_space<vmem>>, vector<128x16xf32>,
    %156 = vector.extract_strided_slice %12 {offsets = [0, 80], sizes = [128, 16], strides = [1, 1]} : vector<128x128xbf16> to vector<128x16xbf16>
    %157 = vector.extract_strided_slice %18 {offsets = [0, 80], sizes = [256, 16], strides = [1, 1]} : vector<256x128xbf16> to vector<256x16xbf16>
    %158 = vector.extract_strided_slice %24 {offsets = [0, 80], sizes = [256, 16], strides = [1, 1]} : vector<256x128xbf16> to vector<256x16xbf16>
    %cst_53 = arith.constant dense<0.000000e+00> : vector<128x256xf32>
    %159 = tpu.matmul %156, %157, %cst_53 {dimension_numbers = #tpu.dot_dimension_numbers<[1], [1], [0], [0], [0, 0, 1, 0], [], []>} : vector<128x16xbf16>, vector<256x16xbf16>, vector<128x256xf32> -> vector<128x256xf32>
    %160 = vector.extract_strided_slice %35 {offsets = [5, 0], sizes = [1, 1], strides = [1, 1]} : vector<8x1xf32> to vector<1x1xf32>
    %161 = vector.broadcast %160 : vector<1x1xf32> to vector<128x256xf32>
    %162 = arith.mulf %34, %161 : vector<128x256xf32>
    %163 = math.exp %162 : vector<128x256xf32>
    %cst_54 = arith.constant 0.000000e+00 : f32
    %164 = vector.broadcast %cst_54 : f32 to vector<128x256xf32>
    %165 = arith.select %31, %163, %164 : vector<128x256xi1>, vector<128x256xf32>
    %166 = arith.mulf %159, %165 : vector<128x256xf32>
    %cst_55 = arith.constant dense<0xFF800000> : vector<128xf32>
    %167 = vector.multi_reduction <maximumf>, %166, %cst_55 [1] : vector<128x256xf32> to vector<128xf32>
    %168 = vector.shape_cast %167 : vector<128xf32> to vector<128x1xf32>
    %169 = vector.broadcast %168 : vector<128x1xf32> to vector<128x256xf32>
    %170 = arith.subf %166, %169 : vector<128x256xf32>
    %171 = math.exp %170 : vector<128x256xf32>
    %cst_56 = arith.constant dense<0.000000e+00> : vector<128xf32>
    %172 = vector.multi_reduction <add>, %171, %cst_56 [1] : vector<128x256xf32> to vector<128xf32>
    %173 = vector.shape_cast %172 : vector<128xf32> to vector<128x1xf32>
    %174 = tpu.reciprocal %173 {approx = true} : vector<128x1xf32> -> vector<128x1xf32>
    %175 = vector.broadcast %174 : vector<128x1xf32> to vector<128x256xf32>
    %176 = arith.mulf %171, %175 : vector<128x256xf32>
    %177 = arith.truncf %176 : vector<128x256xf32> to vector<128x256xbf16>
    %cst_57 = arith.constant dense<0.000000e+00> : vector<128x16xf32>
    %178 = tpu.matmul %177, %158, %cst_57 {dimension_numbers = #tpu.dot_dimension_numbers<[1], [0], [0], [1], [0, 0, 1, 1], [], []>} : vector<128x256xbf16>, vector<256x16xbf16>, vector<128x16xf32> -> vector<128x16xf32>
    %c0_58 = arith.constant 0 : index
    %c80 = arith.constant 80 : index
    %179 = vector.load %arg14[%c0_58, %c80] : memref<128x128xf32, #tpu.memory_space<vmem>>, vector<128x16xf32>
    tpu.vector_store %arg14[%c0_58, %c80], %178 {strides = array<i32>} : memref<128x128xf32, #tpu.memory_space<vmem>>, vector<128x16xf32>,
    %180 = vector.extract_strided_slice %12 {offsets = [0, 96], sizes = [128, 16], strides = [1, 1]} : vector<128x128xbf16> to vector<128x16xbf16>
    %181 = vector.extract_strided_slice %18 {offsets = [0, 96], sizes = [256, 16], strides = [1, 1]} : vector<256x128xbf16> to vector<256x16xbf16>
    %182 = vector.extract_strided_slice %24 {offsets = [0, 96], sizes = [256, 16], strides = [1, 1]} : vector<256x128xbf16> to vector<256x16xbf16>
    %cst_59 = arith.constant dense<0.000000e+00> : vector<128x256xf32>
    %183 = tpu.matmul %180, %181, %cst_59 {dimension_numbers = #tpu.dot_dimension_numbers<[1], [1], [0], [0], [0, 0, 1, 0], [], []>} : vector<128x16xbf16>, vector<256x16xbf16>, vector<128x256xf32> -> vector<128x256xf32>
    %184 = vector.extract_strided_slice %35 {offsets = [6, 0], sizes = [1, 1], strides = [1, 1]} : vector<8x1xf32> to vector<1x1xf32>
    %185 = vector.broadcast %184 : vector<1x1xf32> to vector<128x256xf32>
    %186 = arith.mulf %34, %185 : vector<128x256xf32>
    %187 = math.exp %186 : vector<128x256xf32>
    %cst_60 = arith.constant 0.000000e+00 : f32
    %188 = vector.broadcast %cst_60 : f32 to vector<128x256xf32>
    %189 = arith.select %31, %187, %188 : vector<128x256xi1>, vector<128x256xf32>
    %190 = arith.mulf %183, %189 : vector<128x256xf32>
    %cst_61 = arith.constant dense<0xFF800000> : vector<128xf32>
    %191 = vector.multi_reduction <maximumf>, %190, %cst_61 [1] : vector<128x256xf32> to vector<128xf32>
    %192 = vector.shape_cast %191 : vector<128xf32> to vector<128x1xf32>
    %193 = vector.broadcast %192 : vector<128x1xf32> to vector<128x256xf32>
    %194 = arith.subf %190, %193 : vector<128x256xf32>
    %195 = math.exp %194 : vector<128x256xf32>
    %cst_62 = arith.constant dense<0.000000e+00> : vector<128xf32>
    %196 = vector.multi_reduction <add>, %195, %cst_62 [1] : vector<128x256xf32> to vector<128xf32>
    %197 = vector.shape_cast %196 : vector<128xf32> to vector<128x1xf32>
    %198 = tpu.reciprocal %197 {approx = true} : vector<128x1xf32> -> vector<128x1xf32>
    %199 = vector.broadcast %198 : vector<128x1xf32> to vector<128x256xf32>
    %200 = arith.mulf %195, %199 : vector<128x256xf32>
    %201 = arith.truncf %200 : vector<128x256xf32> to vector<128x256xbf16>
    %cst_63 = arith.constant dense<0.000000e+00> : vector<128x16xf32>
    %202 = tpu.matmul %201, %182, %cst_63 {dimension_numbers = #tpu.dot_dimension_numbers<[1], [0], [0], [1], [0, 0, 1, 1], [], []>} : vector<128x256xbf16>, vector<256x16xbf16>, vector<128x16xf32> -> vector<128x16xf32>
    %c0_64 = arith.constant 0 : index
    %c96 = arith.constant 96 : index
    %203 = vector.load %arg14[%c0_64, %c96] : memref<128x128xf32, #tpu.memory_space<vmem>>, vector<128x16xf32>
    tpu.vector_store %arg14[%c0_64, %c96], %202 {strides = array<i32>} : memref<128x128xf32, #tpu.memory_space<vmem>>, vector<128x16xf32>,
    %204 = vector.extract_strided_slice %12 {offsets = [0, 112], sizes = [128, 16], strides = [1, 1]} : vector<128x128xbf16> to vector<128x16xbf16>
    %205 = vector.extract_strided_slice %18 {offsets = [0, 112], sizes = [256, 16], strides = [1, 1]} : vector<256x128xbf16> to vector<256x16xbf16>
    %206 = vector.extract_strided_slice %24 {offsets = [0, 112], sizes = [256, 16], strides = [1, 1]} : vector<256x128xbf16> to vector<256x16xbf16>
    %cst_65 = arith.constant dense<0.000000e+00> : vector<128x256xf32>
    %207 = tpu.matmul %204, %205, %cst_65 {dimension_numbers = #tpu.dot_dimension_numbers<[1], [1], [0], [0], [0, 0, 1, 0], [], []>} : vector<128x16xbf16>, vector<256x16xbf16>, vector<128x256xf32> -> vector<128x256xf32>
    %208 = vector.extract_strided_slice %35 {offsets = [7, 0], sizes = [1, 1], strides = [1, 1]} : vector<8x1xf32> to vector<1x1xf32>
    %209 = vector.broadcast %208 : vector<1x1xf32> to vector<128x256xf32>
    %210 = arith.mulf %34, %209 : vector<128x256xf32>
    %211 = math.exp %210 : vector<128x256xf32>
    %cst_66 = arith.constant 0.000000e+00 : f32
    %212 = vector.broadcast %cst_66 : f32 to vector<128x256xf32>
    %213 = arith.select %31, %211, %212 : vector<128x256xi1>, vector<128x256xf32>
    %214 = arith.mulf %207, %213 : vector<128x256xf32>
    %cst_67 = arith.constant dense<0xFF800000> : vector<128xf32>
    %215 = vector.multi_reduction <maximumf>, %214, %cst_67 [1] : vector<128x256xf32> to vector<128xf32>
    %216 = vector.shape_cast %215 : vector<128xf32> to vector<128x1xf32>
    %217 = vector.broadcast %216 : vector<128x1xf32> to vector<128x256xf32>
    %218 = arith.subf %214, %217 : vector<128x256xf32>
    %219 = math.exp %218 : vector<128x256xf32>
    %cst_68 = arith.constant dense<0.000000e+00> : vector<128xf32>
    %220 = vector.multi_reduction <add>, %219, %cst_68 [1] : vector<128x256xf32> to vector<128xf32>
    %221 = vector.shape_cast %220 : vector<128xf32> to vector<128x1xf32>
    %222 = tpu.reciprocal %221 {approx = true} : vector<128x1xf32> -> vector<128x1xf32>
    %223 = vector.broadcast %222 : vector<128x1xf32> to vector<128x256xf32>
    %224 = arith.mulf %219, %223 : vector<128x256xf32>
    %225 = arith.truncf %224 : vector<128x256xf32> to vector<128x256xbf16>
    %cst_69 = arith.constant dense<0.000000e+00> : vector<128x16xf32>
    %226 = tpu.matmul %225, %206, %cst_69 {dimension_numbers = #tpu.dot_dimension_numbers<[1], [0], [0], [1], [0, 0, 1, 1], [], []>} : vector<128x256xbf16>, vector<256x16xbf16>, vector<128x16xf32> -> vector<128x16xf32>
    %c0_70 = arith.constant 0 : index
    %c112 = arith.constant 112 : index
    %227 = vector.load %arg14[%c0_70, %c112] : memref<128x128xf32, #tpu.memory_space<vmem>>, vector<128x16xf32>
    tpu.vector_store %arg14[%c0_70, %c112], %226 {strides = array<i32>} : memref<128x128xf32, #tpu.memory_space<vmem>>, vector<128x16xf32>,
    %c0_71 = arith.constant 0 : index
    %c0_72 = arith.constant 0 : index
    %228 = vector.load %arg14[%c0_71, %c0_72] : memref<128x128xf32, #tpu.memory_space<vmem>>, vector<128x128xf32>
    %229 = arith.truncf %228 : vector<128x128xf32> to vector<128x128xbf16>
    %c0_73 = arith.constant 0 : index
    %c0_74 = arith.constant 0 : index
    %230 = vector.load %arg10[%c0_73, %c0_74] : memref<128x128xbf16, #tpu.memory_space<vmem>>, vector<128x128xbf16>
    %cst_75 = arith.constant dense<0.000000e+00> : vector<128x128xf32>
    %231 = tpu.matmul %229, %230, %cst_75 {dimension_numbers = #tpu.dot_dimension_numbers<[1], [0], [0], [1], [0, 0, 1, 1], [], []>} : vector<128x128xbf16>, vector<128x128xbf16>, vector<128x128xf32> -> vector<128x128xf32>
    %c0_76 = arith.constant 0 : index
    %c0_77 = arith.constant 0 : index
    %232 = vector.load %arg11[%c0_76, %c0_77] : memref<1x128xf32, #tpu.memory_space<vmem>>, vector<1x128xf32>
    %233 = vector.broadcast %232 : vector<1x128xf32> to vector<128x128xf32>
    %234 = arith.addf %231, %233 : vector<128x128xf32>
    %c0_78 = arith.constant 0 : index
    %c0_79 = arith.constant 0 : index
    %c0_80 = arith.constant 0 : index
    %235 = vector.load %arg13[%c0_78, %c0_79, %c0_80] : memref<1x128x128xf32, #tpu.memory_space<vmem>>, vector<1x128x128xf32>
    %236 = vector.shape_cast %235 : vector<1x128x128xf32> to vector<128x128xf32>
    %237 = vector.shape_cast %234 : vector<128x128xf32> to vector<1x128x128xf32>
    tpu.vector_store %arg13[%c0_78, %c0_79, %c0_80], %237 {strides = array<i32>} : memref<1x128x128xf32, #tpu.memory_space<vmem>>, vector<1x128x128xf32>,
    return
  }
  func.func @transform_0(%arg0: i32, %arg1: i32) -> (i32, i32, i32) {
    %c0_i32 = arith.constant 0 : i32
    %c0_i32_0 = arith.constant 0 : i32
    return %arg0, %arg1, %c0_i32 : i32, i32, i32
  }
  func.func @transform_1(%arg0: i32, %arg1: i32) -> (i32, i32, i32) {
    %c0_i32 = arith.constant 0 : i32
    %c0_i32_0 = arith.constant 0 : i32
    %c0_i32_1 = arith.constant 0 : i32
    return %arg0, %c0_i32, %c0_i32_0 : i32, i32, i32
  }
  func.func @transform_2(%arg0: i32, %arg1: i32) -> (i32, i32) {
    %c0_i32 = arith.constant 0 : i32
    %c0_i32_0 = arith.constant 0 : i32
    %c0_i32_1 = arith.constant 0 : i32
    return %c0_i32, %c0_i32_0 : i32, i32
  }
  func.func @transform_3(%arg0: i32, %arg1: i32) -> (i32, i32) {
    %c0_i32 = arith.constant 0 : i32
    %c0_i32_0 = arith.constant 0 : i32
    %c0_i32_1 = arith.constant 0 : i32
    return %c0_i32, %c0_i32_0 : i32, i32
  }
  func.func @transform_4(%arg0: i32, %arg1: i32) -> (i32, i32) {
    %c0_i32 = arith.constant 0 : i32
    %c0_i32_0 = arith.constant 0 : i32
    %c0_i32_1 = arith.constant 0 : i32
    return %c0_i32, %c0_i32_0 : i32, i32
  }
  func.func @transform_5(%arg0: i32, %arg1: i32) -> (i32, i32) {
    %c0_i32 = arith.constant 0 : i32
    %c0_i32_0 = arith.constant 0 : i32
    %c0_i32_1 = arith.constant 0 : i32
    return %c0_i32, %c0_i32_0 : i32, i32
  }
  func.func @transform_6(%arg0: i32, %arg1: i32) -> (i32, i32) {
    %c0_i32 = arith.constant 0 : i32
    %c0_i32_0 = arith.constant 0 : i32
    %c0_i32_1 = arith.constant 0 : i32
    return %c0_i32, %c0_i32_0 : i32, i32
  }
  func.func @transform_7(%arg0: i32, %arg1: i32) -> (i32, i32) {
    %c0_i32 = arith.constant 0 : i32
    %c0_i32_0 = arith.constant 0 : i32
    %c0_i32_1 = arith.constant 0 : i32
    return %c0_i32, %c0_i32_0 : i32, i32
  }
  func.func @transform_8(%arg0: i32, %arg1: i32) -> (i32, i32) {
    %c0_i32 = arith.constant 0 : i32
    %c0_i32_0 = arith.constant 0 : i32
    %c0_i32_1 = arith.constant 0 : i32
    return %c0_i32, %c0_i32_0 : i32, i32
  }
  func.func @transform_9(%arg0: i32, %arg1: i32) -> (i32, i32) {
    %c0_i32 = arith.constant 0 : i32
    %c0_i32_0 = arith.constant 0 : i32
    %c0_i32_1 = arith.constant 0 : i32
    return %c0_i32, %c0_i32_0 : i32, i32
  }
  func.func @transform_10(%arg0: i32, %arg1: i32) -> (i32, i32) {
    %c0_i32 = arith.constant 0 : i32
    %c0_i32_0 = arith.constant 0 : i32
    %c0_i32_1 = arith.constant 0 : i32
    return %c0_i32, %c0_i32_0 : i32, i32
  }
  func.func @transform_11(%arg0: i32, %arg1: i32) -> (i32, i32, i32) {
    %c0_i32 = arith.constant 0 : i32
    %c0_i32_0 = arith.constant 0 : i32
    return %arg0, %arg1, %c0_i32 : i32, i32, i32
  }
}

</mosaic_0001>

<llo_original>
// kernel: tpu_custom_call.1
$region0: #{tpu_custom_call.1}
  #allocation0 [shape = 'u32[]', space=smem, size = 0x4, offset = 0x4, fixed_abs, tag = 'smem constant byte address 0x4 - core index']
  #allocation1 [shape = 'u32[144,128]{1,0:T(1,128)}', space=vmem, size = 0x12000, scoped, tag = 'internal scratch']
  #allocation2 [shape = 'f32[128,128]{1,0:T(8,128)}', space=vmem, size = 0x10000, scoped, tag = 'scratch operand']
  %s0 = inlined_call_operand.hbm [shape: f32[2,256,128], index: 0, kind: input, shape index: {}]
  %s1 = inlined_call_operand.hbm [shape: f32[2,256,128], index: 1, kind: input, shape index: {}]
  %s2 = inlined_call_operand.hbm [shape: bf16[128,128], index: 2, kind: input, shape index: {}]
  %s3 = inlined_call_operand.hbm [shape: bf16[128,128], index: 3, kind: input, shape index: {}]
  %s4 = inlined_call_operand.hbm [shape: bf16[128,128], index: 4, kind: input, shape index: {}]
  %s5 = inlined_call_operand.vmem [shape: f32[1,128], index: 5, kind: input, shape index: {}]
  %s6 = inlined_call_operand.vmem [shape: f32[1,128], index: 6, kind: input, shape index: {}]
  %s7 = inlined_call_operand.vmem [shape: f32[1,128], index: 7, kind: input, shape index: {}]
  %s8 = inlined_call_operand.hbm [shape: bf16[128,128], index: 8, kind: input, shape index: {}]
  %s9 = inlined_call_operand.vmem [shape: f32[1,128], index: 9, kind: input, shape index: {}]
  %s10 = inlined_call_operand.vmem [shape: f32[8,1], index: 10, kind: input, shape index: {}]
  %s11 = inlined_call_operand.hbm [shape: f32[2,256,128], index: 11, kind: output, shape index: {}]
  %s12 = sld [smem:[#allocation0]]
  $region101: #{tpu_custom_call.1} parent=0
    _
  %s14 = ssub.s32 1, %s12
  %s15 = scalar_select 0, %s14, %s12
  $region1: #{tpu_custom_call.1} parent=0
    #allocation3 [shape = 'u8[131072]{0}', space=vmem, size = 0x20000, scoped, tag = 'input window, operand 0']
    #allocation4 [shape = 's32[2]{0}', space=sflag, size = 0x8, scoped, tag = 'scoped memory for tpu_custom_call.1']
    #allocation5 [shape = 's32[2]{0}', space=sflag, size = 0x8, scoped, tag = 'scoped memory for tpu_custom_call.1']
    #allocation6 [shape = 'u8[262144]{0}', space=vmem, size = 0x40000, scoped, tag = 'input window, operand 1']
    #allocation7 [shape = 's32[2]{0}', space=sflag, size = 0x8, scoped, tag = 'scoped memory for tpu_custom_call.1']
    #allocation8 [shape = 'u8[32768]{0}', space=vmem, size = 0x8000, scoped, tag = 'input window, operand 2, single buffered']
    #allocation9 [shape = 'u8[32768]{0}', space=vmem, size = 0x8000, scoped, tag = 'input window, operand 3, single buffered']
    #allocation10 [shape = 's32[1]{0}', space=sflag, size = 0x4, scoped, tag = 'scoped memory for tpu_custom_call.1']
    #allocation11 [shape = 'u8[32768]{0}', space=vmem, size = 0x8000, scoped, tag = 'input window, operand 4, single buffered']
    #allocation12 [shape = 'u8[32768]{0}', space=vmem, size = 0x8000, scoped, tag = 'input window, operand 8, single buffered']
    #allocation13 [shape = 's32[1]{0}', space=sflag, size = 0x4, scoped, tag = 'scoped memory for tpu_custom_call.1']
    #allocation14 [shape = 'u8[131072]{0}', space=vmem, size = 0x20000, scoped, tag = 'output window, operand 0']
    %16 = vsyncpa [#allocation4], 0
    %s17 = scalar_lea.sflag [#allocation4], 1
    %18 = vsyncpa %s17, 0
    %19 = vsyncpa [#allocation7], 0
    %s20 = scalar_lea.sflag [#allocation7], 1
    %21 = vsyncpa %s20, 0
    %22 = vsyncpa [#allocation10], 0
    %23 = vsyncpa [#allocation13], 0
    %24 = vsyncpa [#allocation5], 0
    %s25 = scalar_lea.sflag [#allocation5], 1
    %26 = vsyncpa %s25, 0
    loop: start=0, step=1, limit=6
    $region2: #{tpu_custom_call.1} parent=1 // loop_pre_header
      _
    $region3: #{tpu_custom_call.1} parent=1 // loop_header
      %s28 = sphi 0, %s32
      %p29 = scmp.ge.s32.totalorder %s28, 6
      %s35 = sphi 0, %s47
      %s36 = sphi 0, %s43
      %s37 = sphi 0, %s35
      %s38 = sphi 0, %s36
      %s39 = sphi 0, %s37
      %s40 = sphi 0, %s38
      %s52 = sphi 0, %s54
      %s55 = sphi 0, %s52
      %s56 = sphi 0, %s55
      %s72 = sphi 0, %s56
      %s78 = sphi 0, %s80
      %s81 = sphi 0, %s78
      %s82 = sphi 0, %s81
      %s98 = sphi 0, %s82
      %s102 = sphi 0, %s102
      %s104 = sphi 0, %s102
      %s105 = sphi 0, %s104
      %s119 = sphi 0, %s105
      %s123 = sphi 0, %s123
      %s125 = sphi 0, %s123
      %s126 = sphi 0, %s125
      %s140 = sphi 0, %s126
      %s144 = sphi 0, %s144
      %s146 = sphi 0, %s144
      %s147 = sphi 0, %s146
      %s161 = sphi 0, %s147
      %s165 = sphi 0, %s165
      %s167 = sphi 0, %s165
      %s168 = sphi 0, %s167
      %s182 = sphi 0, %s168
      %s186 = sphi 0, %s186
      %s188 = sphi 0, %s186
      %s189 = sphi 0, %s188
      %s203 = sphi 0, %s189
      %s207 = sphi 0, %s207
      %s209 = sphi 0, %s207
      %s210 = sphi 0, %s209
      %s224 = sphi 0, %s210
      %s228 = sphi 0, %s228
      %s230 = sphi 0, %s228
      %s231 = sphi 0, %s230
      %s245 = sphi 0, %s231
      %s249 = sphi 0, %s249
      %s251 = sphi 0, %s249
      %s252 = sphi 0, %s251
      %s266 = sphi 0, %s252
      %s270 = sphi 0, %s270
      %s272 = sphi 0, %s270
      %s273 = sphi 0, %s272
      %s287 = sphi 0, %s273
      %s295 = sphi 0, %s297
      %s298 = sphi 0, %s295
      %s299 = sphi 0, %s298
      %s315 = sphi 0, %s299
    $region4: #{tpu_custom_call.1} parent=1 // loop_header_branch
      %31 = sbr.rel (%p29) target = $region8
    $region5: #{tpu_custom_call.1} parent=1 // loop_body
      %s33 = ssub.s32 %s28, 1
      %s34 = ssub.s32 %s28, 2
      %s41 = sadd.s32 1, %s36
      %p42 = scmp.ge.s32.totalorder %s41, 2
      %s43 = scalar_select %p42, 0, %s41
      %s44 = sadd.s32 1, %s35
      %s45 = scalar_select %p42, %s44, %s35
      %p46 = scmp.ge.s32.totalorder %s45, 2
      %s47 = scalar_select %p46, 0, %s45
      %s48 = ssub.s32 %s35, %s47
      %s49 = ssub.s32 %s36, %s43
      %s50 = sor.u32 %s48, %s49
      %p51 = scmp.eq.s32.totalorder %s50, 0
      %s53 = sadd.s32 %s52, 1
      %s54 = scalar_select %p51, %s52, %s53
      %p57 = pneg %p51
      %p58 = scmp.eq.s32.totalorder %s28, 3
      %p59 = por %p57, %p58
      %p60 = scmp.ne.s32.totalorder %s52, %s55
      %p61 = scmp.eq.s32.totalorder %s28, 0
      %p62 = por %p60, %p61
      %p63 = scmp.ne.s32.totalorder %s52, %s55
      %p64 = scmp.eq.s32.totalorder %s33, 3
      %p65 = por %p63, %p64
      %p66 = scmp.ne.s32.totalorder %s55, %s56
      %p67 = scmp.eq.s32.totalorder %s33, 0
      %p68 = por %p66, %p67
      %p69 = scmp.ne.s32.totalorder %s55, %s56
      %p70 = scmp.eq.s32.totalorder %s34, 3
      %p71 = por %p69, %p70
      %p73 = scmp.ne.s32.totalorder %s56, %s72
      %p74 = scmp.eq.s32.totalorder %s34, 0
      %p75 = por %p73, %p74
      %s76 = ssub.s32 %s35, %s47
      %p77 = scmp.eq.s32.totalorder %s76, 0
      %s79 = sadd.s32 %s78, 1
      %s80 = scalar_select %p77, %s78, %s79
      %p83 = pneg %p77
      %p84 = scmp.eq.s32.totalorder %s28, 3
      %p85 = por %p83, %p84
      %p86 = scmp.ne.s32.totalorder %s78, %s81
      %p87 = scmp.eq.s32.totalorder %s28, 0
      %p88 = por %p86, %p87
      %p89 = scmp.ne.s32.totalorder %s78, %s81
      %p90 = scmp.eq.s32.totalorder %s33, 3
      %p91 = por %p89, %p90
      %p92 = scmp.ne.s32.totalorder %s81, %s82
      %p93 = scmp.eq.s32.totalorder %s33, 0
      %p94 = por %p92, %p93
      %p95 = scmp.ne.s32.totalorder %s81, %s82
      %p96 = scmp.eq.s32.totalorder %s34, 3
      %p97 = por %p95, %p96
      %p99 = scmp.ne.s32.totalorder %s82, %s98
      %p100 = scmp.eq.s32.totalorder %s34, 0
      %p101 = por %p99, %p100
      %s103 = sadd.s32 %s102, 1
      %p106 = scmp.eq.s32.totalorder %s28, 3
      %p107 = scmp.ne.s32.totalorder %s102, %s104
      %p108 = scmp.eq.s32.totalorder %s28, 0
      %p109 = por %p107, %p108
      %p110 = scmp.ne.s32.totalorder %s102, %s104
      %p111 = scmp.eq.s32.totalorder %s33, 3
      %p112 = por %p110, %p111
      %p113 = scmp.ne.s32.totalorder %s104, %s105
      %p114 = scmp.eq.s32.totalorder %s33, 0
      %p115 = por %p113, %p114
      %p116 = scmp.ne.s32.totalorder %s104, %s105
      %p117 = scmp.eq.s32.totalorder %s34, 3
      %p118 = por %p116, %p117
      %p120 = scmp.ne.s32.totalorder %s105, %s119
      %p121 = scmp.eq.s32.totalorder %s34, 0
      %p122 = por %p120, %p121
      %s124 = sadd.s32 %s123, 1
      %p127 = scmp.eq.s32.totalorder %s28, 3
      %p128 = scmp.ne.s32.totalorder %s123, %s125
      %p129 = scmp.eq.s32.totalorder %s28, 0
      %p130 = por %p128, %p129
      %p131 = scmp.ne.s32.totalorder %s123, %s125
      %p132 = scmp.eq.s32.totalorder %s33, 3
      %p133 = por %p131, %p132
      %p134 = scmp.ne.s32.totalorder %s125, %s126
      %p135 = scmp.eq.s32.totalorder %s33, 0
      %p136 = por %p134, %p135
      %p137 = scmp.ne.s32.totalorder %s125, %s126
      %p138 = scmp.eq.s32.totalorder %s34, 3
      %p139 = por %p137, %p138
      %p141 = scmp.ne.s32.totalorder %s126, %s140
      %p142 = scmp.eq.s32.totalorder %s34, 0
      %p143 = por %p141, %p142
      %s145 = sadd.s32 %s144, 1
      %p148 = scmp.eq.s32.totalorder %s28, 3
      %p149 = scmp.ne.s32.totalorder %s144, %s146
      %p150 = scmp.eq.s32.totalorder %s28, 0
      %p151 = por %p149, %p150
      %p152 = scmp.ne.s32.totalorder %s144, %s146
      %p153 = scmp.eq.s32.totalorder %s33, 3
      %p154 = por %p152, %p153
      %p155 = scmp.ne.s32.totalorder %s146, %s147
      %p156 = scmp.eq.s32.totalorder %s33, 0
      %p157 = por %p155, %p156
      %p158 = scmp.ne.s32.totalorder %s146, %s147
      %p159 = scmp.eq.s32.totalorder %s34, 3
      %p160 = por %p158, %p159
      %p162 = scmp.ne.s32.totalorder %s147, %s161
      %p163 = scmp.eq.s32.totalorder %s34, 0
      %p164 = por %p162, %p163
      %s166 = sadd.s32 %s165, 1
      %p169 = scmp.eq.s32.totalorder %s28, 3
      %p170 = scmp.ne.s32.totalorder %s165, %s167
      %p171 = scmp.eq.s32.totalorder %s28, 0
      %p172 = por %p170, %p171
      %p173 = scmp.ne.s32.totalorder %s165, %s167
      %p174 = scmp.eq.s32.totalorder %s33, 3
      %p175 = por %p173, %p174
      %p176 = scmp.ne.s32.totalorder %s167, %s168
      %p177 = scmp.eq.s32.totalorder %s33, 0
      %p178 = por %p176, %p177
      %p179 = scmp.ne.s32.totalorder %s167, %s168
      %p180 = scmp.eq.s32.totalorder %s34, 3
      %p181 = por %p179, %p180
      %p183 = scmp.ne.s32.totalorder %s168, %s182
      %p184 = scmp.eq.s32.totalorder %s34, 0
      %p185 = por %p183, %p184
      %s187 = sadd.s32 %s186, 1
      %p190 = scmp.eq.s32.totalorder %s28, 3
      %p191 = scmp.ne.s32.totalorder %s186, %s188
      %p192 = scmp.eq.s32.totalorder %s28, 0
      %p193 = por %p191, %p192
      %p194 = scmp.ne.s32.totalorder %s186, %s188
      %p195 = scmp.eq.s32.totalorder %s33, 3
      %p196 = por %p194, %p195
      %p197 = scmp.ne.s32.totalorder %s188, %s189
      %p198 = scmp.eq.s32.totalorder %s33, 0
      %p199 = por %p197, %p198
      %p200 = scmp.ne.s32.totalorder %s188, %s189
      %p201 = scmp.eq.s32.totalorder %s34, 3
      %p202 = por %p200, %p201
      %p204 = scmp.ne.s32.totalorder %s189, %s203
      %p205 = scmp.eq.s32.totalorder %s34, 0
      %p206 = por %p204, %p205
      %s208 = sadd.s32 %s207, 1
      %p211 = scmp.eq.s32.totalorder %s28, 3
      %p212 = scmp.ne.s32.totalorder %s207, %s209
      %p213 = scmp.eq.s32.totalorder %s28, 0
      %p214 = por %p212, %p213
      %p215 = scmp.ne.s32.totalorder %s207, %s209
      %p216 = scmp.eq.s32.totalorder %s33, 3
      %p217 = por %p215, %p216
      %p218 = scmp.ne.s32.totalorder %s209, %s210
      %p219 = scmp.eq.s32.totalorder %s33, 0
      %p220 = por %p218, %p219
      %p221 = scmp.ne.s32.totalorder %s209, %s210
      %p222 = scmp.eq.s32.totalorder %s34, 3
      %p223 = por %p221, %p222
      %p225 = scmp.ne.s32.totalorder %s210, %s224
      %p226 = scmp.eq.s32.totalorder %s34, 0
      %p227 = por %p225, %p226
      %s229 = sadd.s32 %s228, 1
      %p232 = scmp.eq.s32.totalorder %s28, 3
      %p233 = scmp.ne.s32.totalorder %s228, %s230
      %p234 = scmp.eq.s32.totalorder %s28, 0
      %p235 = por %p233, %p234
      %p236 = scmp.ne.s32.totalorder %s228, %s230
      %p237 = scmp.eq.s32.totalorder %s33, 3
      %p238 = por %p236, %p237
      %p239 = scmp.ne.s32.totalorder %s230, %s231
      %p240 = scmp.eq.s32.totalorder %s33, 0
      %p241 = por %p239, %p240
      %p242 = scmp.ne.s32.totalorder %s230, %s231
      %p243 = scmp.eq.s32.totalorder %s34, 3
      %p244 = por %p242, %p243
      %p246 = scmp.ne.s32.totalorder %s231, %s245
      %p247 = scmp.eq.s32.totalorder %s34, 0
      %p248 = por %p246, %p247
      %s250 = sadd.s32 %s249, 1
      %p253 = scmp.eq.s32.totalorder %s28, 3
      %p254 = scmp.ne.s32.totalorder %s249, %s251
      %p255 = scmp.eq.s32.totalorder %s28, 0
      %p256 = por %p254, %p255
      %p257 = scmp.ne.s32.totalorder %s249, %s251
      %p258 = scmp.eq.s32.totalorder %s33, 3
      %p259 = por %p257, %p258
      %p260 = scmp.ne.s32.totalorder %s251, %s252
      %p261 = scmp.eq.s32.totalorder %s33, 0
      %p262 = por %p260, %p261
      %p263 = scmp.ne.s32.totalorder %s251, %s252
      %p264 = scmp.eq.s32.totalorder %s34, 3
      %p265 = por %p263, %p264
      %p267 = scmp.ne.s32.totalorder %s252, %s266
      %p268 = scmp.eq.s32.totalorder %s34, 0
      %p269 = por %p267, %p268
      %s271 = sadd.s32 %s270, 1
      %p274 = scmp.eq.s32.totalorder %s28, 3
      %p275 = scmp.ne.s32.totalorder %s270, %s272
      %p276 = scmp.eq.s32.totalorder %s28, 0
      %p277 = por %p275, %p276
      %p278 = scmp.ne.s32.totalorder %s270, %s272
      %p279 = scmp.eq.s32.totalorder %s33, 3
      %p280 = por %p278, %p279
      %p281 = scmp.ne.s32.totalorder %s272, %s273
      %p282 = scmp.eq.s32.totalorder %s33, 0
      %p283 = por %p281, %p282
      %p284 = scmp.ne.s32.totalorder %s272, %s273
      %p285 = scmp.eq.s32.totalorder %s34, 3
      %p286 = por %p284, %p285
      %p288 = scmp.ne.s32.totalorder %s273, %s287
      %p289 = scmp.eq.s32.totalorder %s34, 0
      %p290 = por %p288, %p289
      %s291 = ssub.s32 %s35, %s47
      %s292 = ssub.s32 %s36, %s43
      %s293 = sor.u32 %s291, %s292
      %p294 = scmp.eq.s32.totalorder %s293, 0
      %s296 = sadd.s32 %s295, 1
      %s297 = scalar_select %p294, %s295, %s296
      %p300 = pneg %p294
      %p301 = scmp.eq.s32.totalorder %s28, 3
      %p302 = por %p300, %p301
      %p303 = scmp.ne.s32.totalorder %s295, %s298
      %p304 = scmp.eq.s32.totalorder %s28, 0
      %p305 = por %p303, %p304
      %p306 = scmp.ne.s32.totalorder %s295, %s298
      %p307 = scmp.eq.s32.totalorder %s33, 3
      %p308 = por %p306, %p307
      %p309 = scmp.ne.s32.totalorder %s298, %s299
      %p310 = scmp.eq.s32.totalorder %s33, 0
      %p311 = por %p309, %p310
      %p312 = scmp.ne.s32.totalorder %s298, %s299
      %p313 = scmp.eq.s32.totalorder %s34, 3
      %p314 = por %p312, %p313
      %p316 = scmp.ne.s32.totalorder %s299, %s315
      %p317 = scmp.eq.s32.totalorder %s34, 0
      %p318 = por %p316, %p317
      %p319 = scmp.le.s32.totalorder 1, %s28
      %p320 = scmp.lt.s32.totalorder %s28, 5
      %p321 = pnand %p319, %p320
      %p322 = pneg %p321
      // Predicated region
      $region9: #{tpu_custom_call.1} parent=5 // pred_check
        _
      $region10: #{tpu_custom_call.1} parent=5 // pred_check_branch
        %324 = sbr.rel (%p321) target = $region12
      $region11: #{tpu_custom_call.1} parent=5 // pred_region
        %s325 = ssub.s32 %s28, 1
        // Predicated region
        $region13: #{tpu_custom_call.1} parent=11 // pred_check
          %p326 = pneg %p115
        $region14: #{tpu_custom_call.1} parent=11 // pred_check_branch
          %328 = sbr.rel (%p326) target = $region16
        $region15: #{tpu_custom_call.1} parent=11 // pred_region
          %s330 = ssub.s32 1024, 1024
          %331 = vsyncadd [#allocation7], %s330
          %s332 = sshll.u32 [#allocation8], 4
          %s333 = int_to_ptr.vmem [resolvable:$true] %s332
          %338 = dma.hbm_to_vmem [thread:$0]  %s2, 1024, %s333, [#allocation7], 64, 64, 4
        $region16: #{tpu_custom_call.1} parent=11 // pred_fallthru
          _
        // Predicated region
        $region17: #{tpu_custom_call.1} parent=11 // pred_check
          %p339 = pneg %p136
        $region18: #{tpu_custom_call.1} parent=11 // pred_check_branch
          %341 = sbr.rel (%p339) target = $region20
        $region19: #{tpu_custom_call.1} parent=11 // pred_region
          %s343 = ssub.s32 1024, 1024
          %344 = vsyncadd [#allocation10], %s343
          %s345 = sshll.u32 [#allocation9], 4
          %s346 = int_to_ptr.vmem [resolvable:$true] %s345
          %351 = dma.hbm_to_vmem [thread:$0]  %s3, 1024, %s346, [#allocation10], 64, 64, 4
        $region20: #{tpu_custom_call.1} parent=11 // pred_fallthru
          _
        // Predicated region
        $region21: #{tpu_custom_call.1} parent=11 // pred_check
          %p352 = pneg %p157
        $region22: #{tpu_custom_call.1} parent=11 // pred_check_branch
          %354 = sbr.rel (%p352) target = $region24
        $region23: #{tpu_custom_call.1} parent=11 // pred_region
          %s356 = ssub.s32 1024, 1024
          %357 = vsyncadd [#allocation10], %s356
          %s358 = sshll.u32 [#allocation11], 4
          %s359 = int_to_ptr.vmem [resolvable:$true] %s358
          %364 = dma.hbm_to_vmem [thread:$0]  %s4, 1024, %s359, [#allocation10], 64, 64, 4
        $region24: #{tpu_custom_call.1} parent=11 // pred_fallthru
          _
        // Predicated region
        $region25: #{tpu_custom_call.1} parent=11 // pred_check
          %p365 = pneg %p178
        $region26: #{tpu_custom_call.1} parent=11 // pred_check_branch
          %367 = sbr.rel (%p365) target = $region28
        $region27: #{tpu_custom_call.1} parent=11 // pred_region
          _
        $region28: #{tpu_custom_call.1} parent=11 // pred_fallthru
          _
        // Predicated region
        $region29: #{tpu_custom_call.1} parent=11 // pred_check
          %p368 = pneg %p199
        $region30: #{tpu_custom_call.1} parent=11 // pred_check_branch
          %370 = sbr.rel (%p368) target = $region32
        $region31: #{tpu_custom_call.1} parent=11 // pred_region
          _
        $region32: #{tpu_custom_call.1} parent=11 // pred_fallthru
          _
        // Predicated region
        $region33: #{tpu_custom_call.1} parent=11 // pred_check
          %p371 = pneg %p220
        $region34: #{tpu_custom_call.1} parent=11 // pred_check_branch
          %373 = sbr.rel (%p371) target = $region36
        $region35: #{tpu_custom_call.1} parent=11 // pred_region
          _
        $region36: #{tpu_custom_call.1} parent=11 // pred_fallthru
          _
        // Predicated region
        $region37: #{tpu_custom_call.1} parent=11 // pred_check
          %p374 = pneg %p241
        $region38: #{tpu_custom_call.1} parent=11 // pred_check_branch
          %376 = sbr.rel (%p374) target = $region40
        $region39: #{tpu_custom_call.1} parent=11 // pred_region
          %s378 = ssub.s32 1024, 1024
          %379 = vsyncadd [#allocation13], %s378
          %s380 = sshll.u32 [#allocation12], 4
          %s381 = int_to_ptr.vmem [resolvable:$true] %s380
          %386 = dma.hbm_to_vmem [thread:$0]  %s8, 1024, %s381, [#allocation13], 64, 64, 4
        $region40: #{tpu_custom_call.1} parent=11 // pred_fallthru
          _
        // Predicated region
        $region41: #{tpu_custom_call.1} parent=11 // pred_check
          %p387 = pneg %p262
        $region42: #{tpu_custom_call.1} parent=11 // pred_check_branch
          %389 = sbr.rel (%p387) target = $region44
        $region43: #{tpu_custom_call.1} parent=11 // pred_region
          _
        $region44: #{tpu_custom_call.1} parent=11 // pred_fallthru
          _
        // Predicated region
        $region45: #{tpu_custom_call.1} parent=11 // pred_check
          %p390 = pneg %p283
        $region46: #{tpu_custom_call.1} parent=11 // pred_check_branch
          %392 = sbr.rel (%p390) target = $region48
        $region47: #{tpu_custom_call.1} parent=11 // pred_region
          _
        $region48: #{tpu_custom_call.1} parent=11 // pred_fallthru
          _
      $region12: #{tpu_custom_call.1} parent=5 // pred_fallthru
        _
      %p393 = scmp.lt.s32.totalorder %s28, 4
      // Predicated region
      $region49: #{tpu_custom_call.1} parent=5 // pred_check
        %p394 = pneg %p393
      $region50: #{tpu_custom_call.1} parent=5 // pred_check_branch
        %396 = sbr.rel (%p394) target = $region52
      $region51: #{tpu_custom_call.1} parent=5 // pred_region
        // Predicated region
        $region53: #{tpu_custom_call.1} parent=51 // pred_check
          %p397 = pneg %p62
        $region54: #{tpu_custom_call.1} parent=51 // pred_check_branch
          %399 = sbr.rel (%p397) target = $region56
        $region55: #{tpu_custom_call.1} parent=51 // pred_region
          %s400 = sand.u32 %s52, 1
          %s401 = scalar_lea.sflag [#allocation4], %s400
          %s402 = sand.u32 %s52, 1
          %s403 = smul.addr %s402, 128
          %s404 = scalar_lea.vmem [#allocation3], %s403
          %s405 = smul.u32 16, %s36
          %s407 = ssub.s32 2048, 2048
          %408 = vsyncadd %s401, %s407
          %s409 = smul.addr %s35, 32
          %s410 = sadd.s32 %s405, %s409
          %s411 = smul.addr %s410, 128
          %s412 = scalar_lea.hbm %s0, %s411
          %s413 = sshll.u32 %s404, 4
          %s414 = int_to_ptr.vmem [resolvable:$true] %s413
          %419 = dma.hbm_to_vmem [thread:$0]  %s412, 2048, %s414, %s401, 128, 128, 8
        $region56: #{tpu_custom_call.1} parent=51 // pred_fallthru
          _
        // Predicated region
        $region57: #{tpu_custom_call.1} parent=51 // pred_check
          %p420 = pneg %p88
        $region58: #{tpu_custom_call.1} parent=51 // pred_check_branch
          %422 = sbr.rel (%p420) target = $region60
        $region59: #{tpu_custom_call.1} parent=51 // pred_region
          %s423 = sand.u32 %s28, 1
          %s424 = scalar_lea.sflag [#allocation7], %s423
          %s425 = sand.u32 %s78, 1
          %s426 = smul.addr %s425, 256
          %s427 = scalar_lea.vmem [#allocation6], %s426
          %s429 = ssub.s32 4096, 4096
          %430 = vsyncadd %s424, %s429
          %s431 = smul.addr %s35, 32
          %s432 = smul.addr %s431, 128
          %s433 = scalar_lea.hbm %s1, %s432
          %s434 = sshll.u32 %s427, 4
          %s435 = int_to_ptr.vmem [resolvable:$true] %s434
          %440 = dma.hbm_to_vmem [thread:$0]  %s433, 4096, %s435, %s424, 128, 128, 8
        $region60: #{tpu_custom_call.1} parent=51 // pred_fallthru
          _
      $region52: #{tpu_custom_call.1} parent=5 // pred_fallthru
        _
      %p441 = scmp.le.s32.totalorder 1, %s28
      %p442 = scmp.lt.s32.totalorder %s28, 5
      %p443 = pnand %p441, %p442
      %p444 = pneg %p443
      // Predicated region
      $region61: #{tpu_custom_call.1} parent=5 // pred_check
        _
      $region62: #{tpu_custom_call.1} parent=5 // pred_check_branch
        %446 = sbr.rel (%p443) target = $region64
      $region63: #{tpu_custom_call.1} parent=5 // pred_region
        %s447 = ssub.s32 %s28, 1
        %s448 = sand.u32 %s55, 1
        %s449 = scalar_lea.sflag [#allocation4], %s448
        %s450 = sand.u32 %s55, 1
        %s451 = smul.addr %s450, 128
        %s452 = scalar_lea.vmem [#allocation3], %s451
        // Predicated region
        $region65: #{tpu_custom_call.1} parent=63 // pred_check
          %p453 = pneg %p68
        $region66: #{tpu_custom_call.1} parent=63 // pred_check_branch
          %455 = sbr.rel (%p453) target = $region68
        $region67: #{tpu_custom_call.1} parent=63 // pred_region
          %456 = dma.done %s449, 2048
        $region68: #{tpu_custom_call.1} parent=63 // pred_fallthru
          _
        %s457 = sand.u32 %s33, 1
        %s458 = scalar_lea.sflag [#allocation7], %s457
        %s459 = sand.u32 %s81, 1
        %s460 = smul.addr %s459, 256
        %s461 = scalar_lea.vmem [#allocation6], %s460
        // Predicated region
        $region69: #{tpu_custom_call.1} parent=63 // pred_check
          %p462 = pneg %p94
        $region70: #{tpu_custom_call.1} parent=63 // pred_check_branch
          %464 = sbr.rel (%p462) target = $region72
        $region71: #{tpu_custom_call.1} parent=63 // pred_region
          %465 = dma.done %s458, 4096
        $region72: #{tpu_custom_call.1} parent=63 // pred_fallthru
          _
        // Predicated region
        $region73: #{tpu_custom_call.1} parent=63 // pred_check
          %p466 = pneg %p115
        $region74: #{tpu_custom_call.1} parent=63 // pred_check_branch
          %468 = sbr.rel (%p466) target = $region76
        $region75: #{tpu_custom_call.1} parent=63 // pred_region
          %469 = dma.done [#allocation7], 1024
        $region76: #{tpu_custom_call.1} parent=63 // pred_fallthru
          _
        // Predicated region
        $region77: #{tpu_custom_call.1} parent=63 // pred_check
          %p470 = pneg %p136
        $region78: #{tpu_custom_call.1} parent=63 // pred_check_branch
          %472 = sbr.rel (%p470) target = $region80
        $region79: #{tpu_custom_call.1} parent=63 // pred_region
          %473 = dma.done [#allocation10], 1024
        $region80: #{tpu_custom_call.1} parent=63 // pred_fallthru
          _
        // Predicated region
        $region81: #{tpu_custom_call.1} parent=63 // pred_check
          %p474 = pneg %p157
        $region82: #{tpu_custom_call.1} parent=63 // pred_check_branch
          %476 = sbr.rel (%p474) target = $region84
        $region83: #{tpu_custom_call.1} parent=63 // pred_region
          %477 = dma.done [#allocation10], 1024
        $region84: #{tpu_custom_call.1} parent=63 // pred_fallthru
          _
        // Predicated region
        $region85: #{tpu_custom_call.1} parent=63 // pred_check
          %p478 = pneg %p241
        $region86: #{tpu_custom_call.1} parent=63 // pred_check_branch
          %480 = sbr.rel (%p478) target = $region88
        $region87: #{tpu_custom_call.1} parent=63 // pred_region
          %481 = dma.done [#allocation13], 1024
        $region88: #{tpu_custom_call.1} parent=63 // pred_fallthru
          _
        %s482 = sand.u32 %s55, 1
        %s483 = scalar_lea.sflag [#allocation4], %s482
        %s484 = sand.u32 %s55, 1
        %s485 = smul.addr %s484, 128
        %s486 = scalar_lea.vmem [#allocation3], %s485
        %p487 = pneg %p68
        %p488 = pneg %p65
        %s489 = sand.u32 %s33, 1
        %s490 = scalar_lea.sflag [#allocation7], %s489
        %s491 = sand.u32 %s81, 1
        %s492 = smul.addr %s491, 256
        %s493 = scalar_lea.vmem [#allocation6], %s492
        %p494 = pneg %p94
        %p495 = pneg %p91
        %p496 = pneg %p115
        %p497 = pneg %p112
        %p498 = pneg %p136
        %p499 = pneg %p133
        %p500 = pneg %p157
        %p501 = pneg %p154
        %p502 = pneg %p178
        %p503 = pneg %p175
        %p504 = pneg %p199
        %p505 = pneg %p196
        %p506 = pneg %p220
        %p507 = pneg %p217
        %p508 = pneg %p241
        %p509 = pneg %p238
        %p510 = pneg %p262
        %p511 = pneg %p259
        %p512 = pneg %p283
        %p513 = pneg %p280
        %p514 = pneg %p311
        %p515 = pneg %p308
        %s516 = sand.u32 %s298, 1
        %s517 = scalar_lea.sflag [#allocation5], %s516
        %s518 = sand.u32 %s298, 1
        %s519 = smul.addr %s518, 128
        %s520 = scalar_lea.vmem [#allocation14], %s519
        %s521 = smul.u32 16, %s38
        %s522 = smul.u32 16, %s38
        %s524 = smul.u32 %s38, 128
        %v525 = vld [vmem:[%s452] sm:$0xff]
        %v526 = vld [vmem:[%s452 + $0x8] sm:$0xff]
        %v527 = vld [vmem:[%s452 + $0x10] sm:$0xff]
        %v528 = vld [vmem:[%s452 + $0x18] sm:$0xff]
        %v529 = vld [vmem:[%s452 + $0x20] sm:$0xff]
        %v530 = vld [vmem:[%s452 + $0x28] sm:$0xff]
        %v531 = vld [vmem:[%s452 + $0x30] sm:$0xff]
        %v532 = vld [vmem:[%s452 + $0x38] sm:$0xff]
        %v533 = vld [vmem:[%s452 + $0x40] sm:$0xff]
        %v534 = vld [vmem:[%s452 + $0x48] sm:$0xff]
        %v535 = vld [vmem:[%s452 + $0x50] sm:$0xff]
        %v536 = vld [vmem:[%s452 + $0x58] sm:$0xff]
        %v537 = vld [vmem:[%s452 + $0x60] sm:$0xff]
        %v538 = vld [vmem:[%s452 + $0x68] sm:$0xff]
        %v539 = vld [vmem:[%s452 + $0x70] sm:$0xff]
        %v540 = vld [vmem:[%s452 + $0x78] sm:$0xff]
        %v541 = vpack.c.bf16 %v526, %v525
        %v542 = vpack.c.bf16 %v528, %v527
        %v543 = vpack.c.bf16 %v530, %v529
        %v544 = vpack.c.bf16 %v532, %v531
        %v545 = vpack.c.bf16 %v534, %v533
        %v546 = vpack.c.bf16 %v536, %v535
        %v547 = vpack.c.bf16 %v538, %v537
        %v548 = vpack.c.bf16 %v540, %v539
        %v549 = vld [vmem:[%s461] sm:$0xff]
        %v550 = vld [vmem:[%s461 + $0x8] sm:$0xff]
        %v551 = vld [vmem:[%s461 + $0x10] sm:$0xff]
        %v552 = vld [vmem:[%s461 + $0x18] sm:$0xff]
        %v553 = vld [vmem:[%s461 + $0x20] sm:$0xff]
        %v554 = vld [vmem:[%s461 + $0x28] sm:$0xff]
        %v555 = vld [vmem:[%s461 + $0x30] sm:$0xff]
        %v556 = vld [vmem:[%s461 + $0x38] sm:$0xff]
        %v557 = vld [vmem:[%s461 + $0x40] sm:$0xff]
        %v558 = vld [vmem:[%s461 + $0x48] sm:$0xff]
        %v559 = vld [vmem:[%s461 + $0x50] sm:$0xff]
        %v560 = vld [vmem:[%s461 + $0x58] sm:$0xff]
        %v561 = vld [vmem:[%s461 + $0x60] sm:$0xff]
        %v562 = vld [vmem:[%s461 + $0x68] sm:$0xff]
        %v563 = vld [vmem:[%s461 + $0x70] sm:$0xff]
        %v564 = vld [vmem:[%s461 + $0x78] sm:$0xff]
        %v565 = vld [vmem:[%s461 + $0x80] sm:$0xff]
        %v566 = vld [vmem:[%s461 + $0x88] sm:$0xff]
        %v567 = vld [vmem:[%s461 + $0x90] sm:$0xff]
        %v568 = vld [vmem:[%s461 + $0x98] sm:$0xff]
        %v569 = vld [vmem:[%s461 + $0xa0] sm:$0xff]
        %v570 = vld [vmem:[%s461 + $0xa8] sm:$0xff]
        %v571 = vld [vmem:[%s461 + $0xb0] sm:$0xff]
        %v572 = vld [vmem:[%s461 + $0xb8] sm:$0xff]
        %v573 = vld [vmem:[%s461 + $0xc0] sm:$0xff]
        %v574 = vld [vmem:[%s461 + $0xc8] sm:$0xff]
        %v575 = vld [vmem:[%s461 + $0xd0] sm:$0xff]
        %v576 = vld [vmem:[%s461 + $0xd8] sm:$0xff]
        %v577 = vld [vmem:[%s461 + $0xe0] sm:$0xff]
        %v578 = vld [vmem:[%s461 + $0xe8] sm:$0xff]
        %v579 = vld [vmem:[%s461 + $0xf0] sm:$0xff]
        %v580 = vld [vmem:[%s461 + $0xf8] sm:$0xff]
        %v581 = vpack.c.bf16 %v550, %v549
        %v582 = vpack.c.bf16 %v552, %v551
        %v583 = vpack.c.bf16 %v554, %v553
        %v584 = vpack.c.bf16 %v556, %v555
        %v585 = vpack.c.bf16 %v558, %v557
        %v586 = vpack.c.bf16 %v560, %v559
        %v587 = vpack.c.bf16 %v562, %v561
        %v588 = vpack.c.bf16 %v564, %v563
        %v589 = vpack.c.bf16 %v566, %v565
        %v590 = vpack.c.bf16 %v568, %v567
        %v591 = vpack.c.bf16 %v570, %v569
        %v592 = vpack.c.bf16 %v572, %v571
        %v593 = vpack.c.bf16 %v574, %v573
        %v594 = vpack.c.bf16 %v576, %v575
        %v595 = vpack.c.bf16 %v578, %v577
        %v596 = vpack.c.bf16 %v580, %v579
        %v597 = vld [vmem:[#allocation8] sm:$0xf]
        %v598 = vld [vmem:[#allocation8 + $0x4] sm:$0xf]
        %v599 = vld [vmem:[#allocation8 + $0x8] sm:$0xf]
        %v600 = vld [vmem:[#allocation8 + $0xc] sm:$0xf]
        %v601 = vld [vmem:[#allocation8 + $0x10] sm:$0xf]
        %v602 = vld [vmem:[#allocation8 + $0x14] sm:$0xf]
        %v603 = vld [vmem:[#allocation8 + $0x18] sm:$0xf]
        %v604 = vld [vmem:[#allocation8 + $0x1c] sm:$0xf]
        %v605 = vld [vmem:[#allocation8 + $0x20] sm:$0xf]
        %v606 = vld [vmem:[#allocation8 + $0x24] sm:$0xf]
        %v607 = vld [vmem:[#allocation8 + $0x28] sm:$0xf]
        %v608 = vld [vmem:[#allocation8 + $0x2c] sm:$0xf]
        %v609 = vld [vmem:[#allocation8 + $0x30] sm:$0xf]
        %v610 = vld [vmem:[#allocation8 + $0x34] sm:$0xf]
        %v611 = vld [vmem:[#allocation8 + $0x38] sm:$0xf]
        %v612 = vld [vmem:[#allocation8 + $0x3c] sm:$0xf]
        %v613 = vld [vmem:[%s5] sm:$0x1]
        %v615 = vlaneseq
        %v616 = vshrl.u32 %v615, 7
        %v617 = vsub.s32 0, %v616
        %v618 = vrot.slane %v613, %v617
        %v636 = vunpack.c.l.b16 %v597
        %v637 = vunpack.c.l.b16 %v598
        %v638 = vunpack.c.l.b16 %v599
        %v639 = vunpack.c.l.b16 %v600
        %v640 = vunpack.c.l.b16 %v601
        %v641 = vunpack.c.l.b16 %v602
        %v642 = vunpack.c.l.b16 %v603
        %v643 = vunpack.c.l.b16 %v604
        %v644 = vunpack.c.l.b16 %v605
        %v645 = vunpack.c.l.b16 %v606
        %v646 = vunpack.c.l.b16 %v607
        %v647 = vunpack.c.l.b16 %v608
        %v648 = vunpack.c.l.b16 %v609
        %v649 = vunpack.c.l.b16 %v610
        %v650 = vunpack.c.l.b16 %v611
        %v651 = vunpack.c.l.b16 %v612
        %v652 = vpack.c.b16 %v637, %v636
        %v653 = vpack.c.b16 %v639, %v638
        %v654 = vpack.c.b16 %v641, %v640
        %v655 = vpack.c.b16 %v643, %v642
        %v656 = vpack.c.b16 %v645, %v644
        %v657 = vpack.c.b16 %v647, %v646
        %v658 = vpack.c.b16 %v649, %v648
        %v659 = vpack.c.b16 %v651, %v650
        %668 = vmatprep.subr.bf16.mxu0 0
        %669 = vmatpush1.bf16.msra.mxu0 %v652
        %670 = vmatprep.subr.bf16.mxu0 0
        %671 = vmatpush1.bf16.msra.mxu0 %v653
        %672 = vmatprep.subr.bf16.mxu0 0
        %673 = vmatpush1.bf16.msra.mxu0 %v654
        %674 = vmatprep.subr.bf16.mxu0 0
        %675 = vmatpush1.bf16.msra.mxu0 %v655
        %676 = vmatprep.subr.bf16.mxu0 0
        %677 = vmatpush1.bf16.msra.mxu0 %v656
        %678 = vmatprep.subr.bf16.mxu0 0
        %679 = vmatpush1.bf16.msra.mxu0 %v657
        %680 = vmatprep.subr.bf16.mxu0 0
        %681 = vmatpush1.bf16.msra.mxu0 %v658
        %682 = vmatprep.subr.bf16.mxu0 0
        %683 = vmatpush1.bf16.msra.mxu0 %v659
        %684 = vmatprep.subr.bf16.mxu0 0
        %685 = vmatpush1.bf16.msra.mxu0 0
        %686 = vmatprep.subr.bf16.mxu0 0
        %687 = vmatpush1.bf16.msra.mxu0 0
        %688 = vmatprep.subr.bf16.mxu0 0
        %689 = vmatpush1.bf16.msra.mxu0 0
        %690 = vmatprep.subr.bf16.mxu0 0
        %691 = vmatpush1.bf16.msra.mxu0 0
        %692 = vmatprep.subr.bf16.mxu0 0
        %693 = vmatpush1.bf16.msra.mxu0 0
        %694 = vmatprep.subr.bf16.mxu0 0
        %695 = vmatpush1.bf16.msra.mxu0 0
        %696 = vmatprep.subr.bf16.mxu0 0
        %697 = vmatpush1.bf16.msra.mxu0 0
        %698 = vmatprep.subr.bf16.mxu0 0
        %699 = vmatpush1.bf16.msra.mxu0 0
        %700 = vmatprep.mubr.bf16.mxu0 0
        %701 = vmatmul.mubr.bf16.gmra.mrb[0].mxu0 %v541
        %v702 = vpop.f32.mrb[0].mxu0
        %v703 = vadd.f32 %v618, %v702
        %v704 = vpop.f32.mrb[0].mxu0
        %v705 = vpop.f32.mrb[0].mxu0
        %v706 = vadd.f32 %v618, %v705
        %v707 = vpop.f32.mrb[0].mxu0
        %708 = vmatprep.mubr.bf16.mxu0 0
        %709 = vmatmul.mubr.bf16.gmra.mrb[0].mxu0 %v542
        %v710 = vpop.f32.mrb[0].mxu0
        %v711 = vadd.f32 %v618, %v710
        %v712 = vpop.f32.mrb[0].mxu0
        %v713 = vpop.f32.mrb[0].mxu0
        %v714 = vadd.f32 %v618, %v713
        %v715 = vpop.f32.mrb[0].mxu0
        %716 = vmatprep.mubr.bf16.mxu0 0
        %717 = vmatmul.mubr.bf16.gmra.mrb[0].mxu0 %v543
        %v718 = vpop.f32.mrb[0].mxu0
        %v719 = vadd.f32 %v618, %v718
        %v720 = vpop.f32.mrb[0].mxu0
        %v721 = vpop.f32.mrb[0].mxu0
        %v722 = vadd.f32 %v618, %v721
        %v723 = vpop.f32.mrb[0].mxu0
        %724 = vmatprep.mubr.bf16.mxu0 0
        %725 = vmatmul.mubr.bf16.gmra.mrb[0].mxu0 %v544
        %v726 = vpop.f32.mrb[0].mxu0
        %v727 = vadd.f32 %v618, %v726
        %v728 = vpop.f32.mrb[0].mxu0
        %v729 = vpop.f32.mrb[0].mxu0
        %v730 = vadd.f32 %v618, %v729
        %v731 = vpop.f32.mrb[0].mxu0
        %732 = vmatprep.mubr.bf16.mxu0 0
        %733 = vmatmul.mubr.bf16.gmra.mrb[0].mxu0 %v545
        %v734 = vpop.f32.mrb[0].mxu0
        %v735 = vadd.f32 %v618, %v734
        %v736 = vpop.f32.mrb[0].mxu0
        %v737 = vpop.f32.mrb[0].mxu0
        %v738 = vadd.f32 %v618, %v737
        %v739 = vpop.f32.mrb[0].mxu0
        %740 = vmatprep.mubr.bf16.mxu0 0
        %741 = vmatmul.mubr.bf16.gmra.mrb[0].mxu0 %v546
        %v742 = vpop.f32.mrb[0].mxu0
        %v743 = vadd.f32 %v618, %v742
        %v744 = vpop.f32.mrb[0].mxu0
        %v745 = vpop.f32.mrb[0].mxu0
        %v746 = vadd.f32 %v618, %v745
        %v747 = vpop.f32.mrb[0].mxu0
        %748 = vmatprep.mubr.bf16.mxu0 0
        %749 = vmatmul.mubr.bf16.gmra.mrb[0].mxu0 %v547
        %v750 = vpop.f32.mrb[0].mxu0
        %v751 = vadd.f32 %v618, %v750
        %v752 = vpop.f32.mrb[0].mxu0
        %v753 = vpop.f32.mrb[0].mxu0
        %v754 = vadd.f32 %v618, %v753
        %v755 = vpop.f32.mrb[0].mxu0
        %756 = vmatprep.mubr.bf16.mxu0 0
        %757 = vmatmul.mubr.bf16.gmra.mrb[0].mxu0 %v548
        %v758 = vpop.f32.mrb[0].mxu0
        %v759 = vadd.f32 %v618, %v758
        %v760 = vpop.f32.mrb[0].mxu0
        %v761 = vpop.f32.mrb[0].mxu0
        %v762 = vadd.f32 %v618, %v761
        %v763 = vpop.f32.mrb[0].mxu0
        %764 = vdwg.mxu0
        %v765 = vpack.c.bf16 %v706, %v703
        %v766 = vpack.c.bf16 %v714, %v711
        %v767 = vpack.c.bf16 %v722, %v719
        %v768 = vpack.c.bf16 %v730, %v727
        %v769 = vpack.c.bf16 %v738, %v735
        %v770 = vpack.c.bf16 %v746, %v743
        %v771 = vpack.c.bf16 %v754, %v751
        %v772 = vpack.c.bf16 %v762, %v759
        %v773 = vld [vmem:[#allocation9] sm:$0xf]
        %v774 = vld [vmem:[#allocation9 + $0x4] sm:$0xf]
        %v775 = vld [vmem:[#allocation9 + $0x8] sm:$0xf]
        %v776 = vld [vmem:[#allocation9 + $0xc] sm:$0xf]
        %v777 = vld [vmem:[#allocation9 + $0x10] sm:$0xf]
        %v778 = vld [vmem:[#allocation9 + $0x14] sm:$0xf]
        %v779 = vld [vmem:[#allocation9 + $0x18] sm:$0xf]
        %v780 = vld [vmem:[#allocation9 + $0x1c] sm:$0xf]
        %v781 = vld [vmem:[#allocation9 + $0x20] sm:$0xf]
        %v782 = vld [vmem:[#allocation9 + $0x24] sm:$0xf]
        %v783 = vld [vmem:[#allocation9 + $0x28] sm:$0xf]
        %v784 = vld [vmem:[#allocation9 + $0x2c] sm:$0xf]
        %v785 = vld [vmem:[#allocation9 + $0x30] sm:$0xf]
        %v786 = vld [vmem:[#allocation9 + $0x34] sm:$0xf]
        %v787 = vld [vmem:[#allocation9 + $0x38] sm:$0xf]
        %v788 = vld [vmem:[#allocation9 + $0x3c] sm:$0xf]
        %v789 = vld [vmem:[%s6] sm:$0x1]
        %v791 = vlaneseq
        %v792 = vshrl.u32 %v791, 7
        %v793 = vsub.s32 0, %v792
        %v794 = vrot.slane %v789, %v793
        %v812 = vunpack.c.l.b16 %v773
        %v813 = vunpack.c.l.b16 %v774
        %v814 = vunpack.c.l.b16 %v775
        %v815 = vunpack.c.l.b16 %v776
        %v816 = vunpack.c.l.b16 %v777
        %v817 = vunpack.c.l.b16 %v778
        %v818 = vunpack.c.l.b16 %v779
        %v819 = vunpack.c.l.b16 %v780
        %v820 = vunpack.c.l.b16 %v781
        %v821 = vunpack.c.l.b16 %v782
        %v822 = vunpack.c.l.b16 %v783
        %v823 = vunpack.c.l.b16 %v784
        %v824 = vunpack.c.l.b16 %v785
        %v825 = vunpack.c.l.b16 %v786
        %v826 = vunpack.c.l.b16 %v787
        %v827 = vunpack.c.l.b16 %v788
        %v828 = vpack.c.b16 %v813, %v812
        %v829 = vpack.c.b16 %v815, %v814
        %v830 = vpack.c.b16 %v817, %v816
        %v831 = vpack.c.b16 %v819, %v818
        %v832 = vpack.c.b16 %v821, %v820
        %v833 = vpack.c.b16 %v823, %v822
        %v834 = vpack.c.b16 %v825, %v824
        %v835 = vpack.c.b16 %v827, %v826
        %844 = vmatprep.subr.bf16.mxu0 0
        %845 = vmatpush1.bf16.msra.mxu0 %v828
        %846 = vmatprep.subr.bf16.mxu0 0
        %847 = vmatpush1.bf16.msra.mxu0 %v829
        %848 = vmatprep.subr.bf16.mxu0 0
        %849 = vmatpush1.bf16.msra.mxu0 %v830
        %850 = vmatprep.subr.bf16.mxu0 0
        %851 = vmatpush1.bf16.msra.mxu0 %v831
        %852 = vmatprep.subr.bf16.mxu0 0
        %853 = vmatpush1.bf16.msra.mxu0 %v832
        %854 = vmatprep.subr.bf16.mxu0 0
        %855 = vmatpush1.bf16.msra.mxu0 %v833
        %856 = vmatprep.subr.bf16.mxu0 0
        %857 = vmatpush1.bf16.msra.mxu0 %v834
        %858 = vmatprep.subr.bf16.mxu0 0
        %859 = vmatpush1.bf16.msra.mxu0 %v835
        %860 = vmatprep.subr.bf16.mxu0 0
        %861 = vmatpush1.bf16.msra.mxu0 0
        %862 = vmatprep.subr.bf16.mxu0 0
        %863 = vmatpush1.bf16.msra.mxu0 0
        %864 = vmatprep.subr.bf16.mxu0 0
        %865 = vmatpush1.bf16.msra.mxu0 0
        %866 = vmatprep.subr.bf16.mxu0 0
        %867 = vmatpush1.bf16.msra.mxu0 0
        %868 = vmatprep.subr.bf16.mxu0 0
        %869 = vmatpush1.bf16.msra.mxu0 0
        %870 = vmatprep.subr.bf16.mxu0 0
        %871 = vmatpush1.bf16.msra.mxu0 0
        %872 = vmatprep.subr.bf16.mxu0 0
        %873 = vmatpush1.bf16.msra.mxu0 0
        %874 = vmatprep.subr.bf16.mxu0 0
        %875 = vmatpush1.bf16.msra.mxu0 0
        %876 = vmatprep.mubr.bf16.mxu0 0
        %877 = vmatmul.mubr.bf16.gmra.mrb[0].mxu0 %v581
        %v878 = vpop.f32.mrb[0].mxu0
        %v879 = vadd.f32 %v794, %v878
        %v880 = vpop.f32.mrb[0].mxu0
        %v881 = vpop.f32.mrb[0].mxu0
        %v882 = vadd.f32 %v794, %v881
        %v883 = vpop.f32.mrb[0].mxu0
        %884 = vmatprep.mubr.bf16.mxu0 0
        %885 = vmatmul.mubr.bf16.gmra.mrb[0].mxu0 %v582
        %v886 = vpop.f32.mrb[0].mxu0
        %v887 = vadd.f32 %v794, %v886
        %v888 = vpop.f32.mrb[0].mxu0
        %v889 = vpop.f32.mrb[0].mxu0
        %v890 = vadd.f32 %v794, %v889
        %v891 = vpop.f32.mrb[0].mxu0
        %892 = vmatprep.mubr.bf16.mxu0 0
        %893 = vmatmul.mubr.bf16.gmra.mrb[0].mxu0 %v583
        %v894 = vpop.f32.mrb[0].mxu0
        %v895 = vadd.f32 %v794, %v894
        %v896 = vpop.f32.mrb[0].mxu0
        %v897 = vpop.f32.mrb[0].mxu0
        %v898 = vadd.f32 %v794, %v897
        %v899 = vpop.f32.mrb[0].mxu0
        %900 = vmatprep.mubr.bf16.mxu0 0
        %901 = vmatmul.mubr.bf16.gmra.mrb[0].mxu0 %v584
        %v902 = vpop.f32.mrb[0].mxu0
        %v903 = vadd.f32 %v794, %v902
        %v904 = vpop.f32.mrb[0].mxu0
        %v905 = vpop.f32.mrb[0].mxu0
        %v906 = vadd.f32 %v794, %v905
        %v907 = vpop.f32.mrb[0].mxu0
        %908 = vmatprep.mubr.bf16.mxu0 0
        %909 = vmatmul.mubr.bf16.gmra.mrb[0].mxu0 %v585
        %v910 = vpop.f32.mrb[0].mxu0
        %v911 = vadd.f32 %v794, %v910
        %v912 = vpop.f32.mrb[0].mxu0
        %v913 = vpop.f32.mrb[0].mxu0
        %v914 = vadd.f32 %v794, %v913
        %v915 = vpop.f32.mrb[0].mxu0
        %916 = vmatprep.mubr.bf16.mxu0 0
        %917 = vmatmul.mubr.bf16.gmra.mrb[0].mxu0 %v586
        %v918 = vpop.f32.mrb[0].mxu0
        %v919 = vadd.f32 %v794, %v918
        %v920 = vpop.f32.mrb[0].mxu0
        %v921 = vpop.f32.mrb[0].mxu0
        %v922 = vadd.f32 %v794, %v921
        %v923 = vpop.f32.mrb[0].mxu0
        %924 = vmatprep.mubr.bf16.mxu0 0
        %925 = vmatmul.mubr.bf16.gmra.mrb[0].mxu0 %v587
        %v926 = vpop.f32.mrb[0].mxu0
        %v927 = vadd.f32 %v794, %v926
        %v928 = vpop.f32.mrb[0].mxu0
        %v929 = vpop.f32.mrb[0].mxu0
        %v930 = vadd.f32 %v794, %v929
        %v931 = vpop.f32.mrb[0].mxu0
        %932 = vmatprep.mubr.bf16.mxu0 0
        %933 = vmatmul.mubr.bf16.gmra.mrb[0].mxu0 %v588
        %v934 = vpop.f32.mrb[0].mxu0
        %v935 = vadd.f32 %v794, %v934
        %v936 = vpop.f32.mrb[0].mxu0
        %v937 = vpop.f32.mrb[0].mxu0
        %v938 = vadd.f32 %v794, %v937
        %v939 = vpop.f32.mrb[0].mxu0
        %940 = vmatprep.mubr.bf16.mxu0 0
        %941 = vmatmul.mubr.bf16.gmra.mrb[0].mxu0 %v589
        %v942 = vpop.f32.mrb[0].mxu0
        %v943 = vadd.f32 %v794, %v942
        %v944 = vpop.f32.mrb[0].mxu0
        %v945 = vpop.f32.mrb[0].mxu0
        %v946 = vadd.f32 %v794, %v945
        %v947 = vpop.f32.mrb[0].mxu0
        %948 = vmatprep.mubr.bf16.mxu0 0
        %949 = vmatmul.mubr.bf16.gmra.mrb[0].mxu0 %v590
        %v950 = vpop.f32.mrb[0].mxu0
        %v951 = vadd.f32 %v794, %v950
        %v952 = vpop.f32.mrb[0].mxu0
        %v953 = vpop.f32.mrb[0].mxu0
        %v954 = vadd.f32 %v794, %v953
        %v955 = vpop.f32.mrb[0].mxu0
        %956 = vmatprep.mubr.bf16.mxu0 0
        %957 = vmatmul.mubr.bf16.gmra.mrb[0].mxu0 %v591
        %v958 = vpop.f32.mrb[0].mxu0
        %v959 = vadd.f32 %v794, %v958
        %v960 = vpop.f32.mrb[0].mxu0
        %v961 = vpop.f32.mrb[0].mxu0
        %v962 = vadd.f32 %v794, %v961
        %v963 = vpop.f32.mrb[0].mxu0
        %964 = vmatprep.mubr.bf16.mxu0 0
        %965 = vmatmul.mubr.bf16.gmra.mrb[0].mxu0 %v592
        %v966 = vpop.f32.mrb[0].mxu0
        %v967 = vadd.f32 %v794, %v966
        %v968 = vpop.f32.mrb[0].mxu0
        %v969 = vpop.f32.mrb[0].mxu0
        %v970 = vadd.f32 %v794, %v969
        %v971 = vpop.f32.mrb[0].mxu0
        %972 = vmatprep.mubr.bf16.mxu0 0
        %973 = vmatmul.mubr.bf16.gmra.mrb[0].mxu0 %v593
        %v974 = vpop.f32.mrb[0].mxu0
        %v975 = vadd.f32 %v794, %v974
        %v976 = vpop.f32.mrb[0].mxu0
        %v977 = vpop.f32.mrb[0].mxu0
        %v978 = vadd.f32 %v794, %v977
        %v979 = vpop.f32.mrb[0].mxu0
        %980 = vmatprep.mubr.bf16.mxu0 0
        %981 = vmatmul.mubr.bf16.gmra.mrb[0].mxu0 %v594
        %v982 = vpop.f32.mrb[0].mxu0
        %v983 = vadd.f32 %v794, %v982
        %v984 = vpop.f32.mrb[0].mxu0
        %v985 = vpop.f32.mrb[0].mxu0
        %v986 = vadd.f32 %v794, %v985
        %v987 = vpop.f32.mrb[0].mxu0
        %988 = vmatprep.mubr.bf16.mxu0 0
        %989 = vmatmul.mubr.bf16.gmra.mrb[0].mxu0 %v595
        %v990 = vpop.f32.mrb[0].mxu0
        %v991 = vadd.f32 %v794, %v990
        %v992 = vpop.f32.mrb[0].mxu0
        %v993 = vpop.f32.mrb[0].mxu0
        %v994 = vadd.f32 %v794, %v993
        %v995 = vpop.f32.mrb[0].mxu0
        %996 = vmatprep.mubr.bf16.mxu0 0
        %997 = vmatmul.mubr.bf16.gmra.mrb[0].mxu0 %v596
        %v998 = vpop.f32.mrb[0].mxu0
        %v999 = vadd.f32 %v794, %v998
        %v1000 = vpop.f32.mrb[0].mxu0
        %v1001 = vpop.f32.mrb[0].mxu0
        %v1002 = vadd.f32 %v794, %v1001
        %v1003 = vpop.f32.mrb[0].mxu0
        %1004 = vdwg.mxu0
        %v1005 = vpack.c.bf16 %v882, %v879
        %v1006 = vpack.c.bf16 %v890, %v887
        %v1007 = vpack.c.bf16 %v898, %v895
        %v1008 = vpack.c.bf16 %v906, %v903
        %v1009 = vpack.c.bf16 %v914, %v911
        %v1010 = vpack.c.bf16 %v922, %v919
        %v1011 = vpack.c.bf16 %v930, %v927
        %v1012 = vpack.c.bf16 %v938, %v935
        %v1013 = vpack.c.bf16 %v946, %v943
        %v1014 = vpack.c.bf16 %v954, %v951
        %v1015 = vpack.c.bf16 %v962, %v959
        %v1016 = vpack.c.bf16 %v970, %v967
        %v1017 = vpack.c.bf16 %v978, %v975
        %v1018 = vpack.c.bf16 %v986, %v983
        %v1019 = vpack.c.bf16 %v994, %v991
        %v1020 = vpack.c.bf16 %v1002, %v999
        %v1021 = vld [vmem:[#allocation11] sm:$0xf]
        %v1022 = vld [vmem:[#allocation11 + $0x4] sm:$0xf]
        %v1023 = vld [vmem:[#allocation11 + $0x8] sm:$0xf]
        %v1024 = vld [vmem:[#allocation11 + $0xc] sm:$0xf]
        %v1025 = vld [vmem:[#allocation11 + $0x10] sm:$0xf]
        %v1026 = vld [vmem:[#allocation11 + $0x14] sm:$0xf]
        %v1027 = vld [vmem:[#allocation11 + $0x18] sm:$0xf]
        %v1028 = vld [vmem:[#allocation11 + $0x1c] sm:$0xf]
        %v1029 = vld [vmem:[#allocation11 + $0x20] sm:$0xf]
        %v1030 = vld [vmem:[#allocation11 + $0x24] sm:$0xf]
        %v1031 = vld [vmem:[#allocation11 + $0x28] sm:$0xf]
        %v1032 = vld [vmem:[#allocation11 + $0x2c] sm:$0xf]
        %v1033 = vld [vmem:[#allocation11 + $0x30] sm:$0xf]
        %v1034 = vld [vmem:[#allocation11 + $0x34] sm:$0xf]
        %v1035 = vld [vmem:[#allocation11 + $0x38] sm:$0xf]
        %v1036 = vld [vmem:[#allocation11 + $0x3c] sm:$0xf]
        %v1037 = vld [vmem:[%s7] sm:$0x1]
        %v1039 = vlaneseq
        %v1040 = vshrl.u32 %v1039, 7
        %v1041 = vsub.s32 0, %v1040
        %v1042 = vrot.slane %v1037, %v1041
        %v1060 = vunpack.c.l.b16 %v1021
        %v1061 = vunpack.c.l.b16 %v1022
        %v1062 = vunpack.c.l.b16 %v1023
        %v1063 = vunpack.c.l.b16 %v1024
        %v1064 = vunpack.c.l.b16 %v1025
        %v1065 = vunpack.c.l.b16 %v1026
        %v1066 = vunpack.c.l.b16 %v1027
        %v1067 = vunpack.c.l.b16 %v1028
        %v1068 = vunpack.c.l.b16 %v1029
        %v1069 = vunpack.c.l.b16 %v1030
        %v1070 = vunpack.c.l.b16 %v1031
        %v1071 = vunpack.c.l.b16 %v1032
        %v1072 = vunpack.c.l.b16 %v1033
        %v1073 = vunpack.c.l.b16 %v1034
        %v1074 = vunpack.c.l.b16 %v1035
        %v1075 = vunpack.c.l.b16 %v1036
        %v1076 = vpack.c.b16 %v1061, %v1060
        %v1077 = vpack.c.b16 %v1063, %v1062
        %v1078 = vpack.c.b16 %v1065, %v1064
        %v1079 = vpack.c.b16 %v1067, %v1066
        %v1080 = vpack.c.b16 %v1069, %v1068
        %v1081 = vpack.c.b16 %v1071, %v1070
        %v1082 = vpack.c.b16 %v1073, %v1072
        %v1083 = vpack.c.b16 %v1075, %v1074
        %1092 = vmatprep.subr.bf16.mxu0 0
        %1093 = vmatpush1.bf16.msra.mxu0 %v1076
        %1094 = vmatprep.subr.bf16.mxu0 0
        %1095 = vmatpush1.bf16.msra.mxu0 %v1077
        %1096 = vmatprep.subr.bf16.mxu0 0
        %1097 = vmatpush1.bf16.msra.mxu0 %v1078
        %1098 = vmatprep.subr.bf16.mxu0 0
        %1099 = vmatpush1.bf16.msra.mxu0 %v1079
        %1100 = vmatprep.subr.bf16.mxu0 0
        %1101 = vmatpush1.bf16.msra.mxu0 %v1080
        %1102 = vmatprep.subr.bf16.mxu0 0
        %1103 = vmatpush1.bf16.msra.mxu0 %v1081
        %1104 = vmatprep.subr.bf16.mxu0 0
        %1105 = vmatpush1.bf16.msra.mxu0 %v1082
        %1106 = vmatprep.subr.bf16.mxu0 0
        %1107 = vmatpush1.bf16.msra.mxu0 %v1083
        %1108 = vmatprep.subr.bf16.mxu0 0
        %1109 = vmatpush1.bf16.msra.mxu0 0
        %1110 = vmatprep.subr.bf16.mxu0 0
        %1111 = vmatpush1.bf16.msra.mxu0 0
        %1112 = vmatprep.subr.bf16.mxu0 0
        %1113 = vmatpush1.bf16.msra.mxu0 0
        %1114 = vmatprep.subr.bf16.mxu0 0
        %1115 = vmatpush1.bf16.msra.mxu0 0
        %1116 = vmatprep.subr.bf16.mxu0 0
        %1117 = vmatpush1.bf16.msra.mxu0 0
        %1118 = vmatprep.subr.bf16.mxu0 0
        %1119 = vmatpush1.bf16.msra.mxu0 0
        %1120 = vmatprep.subr.bf16.mxu0 0
        %1121 = vmatpush1.bf16.msra.mxu0 0
        %1122 = vmatprep.subr.bf16.mxu0 0
        %1123 = vmatpush1.bf16.msra.mxu0 0
        %1124 = vmatprep.mubr.bf16.mxu0 0
        %1125 = vmatmul.mubr.bf16.gmra.mrb[0].mxu0 %v581
        %v1126 = vpop.f32.mrb[0].mxu0
        %v1127 = vadd.f32 %v1042, %v1126
        %v1128 = vpop.f32.mrb[0].mxu0
        %v1129 = vpop.f32.mrb[0].mxu0
        %v1130 = vadd.f32 %v1042, %v1129
        %v1131 = vpop.f32.mrb[0].mxu0
        %1132 = vmatprep.mubr.bf16.mxu0 0
        %1133 = vmatmul.mubr.bf16.gmra.mrb[0].mxu0 %v582
        %v1134 = vpop.f32.mrb[0].mxu0
        %v1135 = vadd.f32 %v1042, %v1134
        %v1136 = vpop.f32.mrb[0].mxu0
        %v1137 = vpop.f32.mrb[0].mxu0
        %v1138 = vadd.f32 %v1042, %v1137
        %v1139 = vpop.f32.mrb[0].mxu0
        %1140 = vmatprep.mubr.bf16.mxu0 0
        %1141 = vmatmul.mubr.bf16.gmra.mrb[0].mxu0 %v583
        %v1142 = vpop.f32.mrb[0].mxu0
        %v1143 = vadd.f32 %v1042, %v1142
        %v1144 = vpop.f32.mrb[0].mxu0
        %v1145 = vpop.f32.mrb[0].mxu0
        %v1146 = vadd.f32 %v1042, %v1145
        %v1147 = vpop.f32.mrb[0].mxu0
        %1148 = vmatprep.mubr.bf16.mxu0 0
        %1149 = vmatmul.mubr.bf16.gmra.mrb[0].mxu0 %v584
        %v1150 = vpop.f32.mrb[0].mxu0
        %v1151 = vadd.f32 %v1042, %v1150
        %v1152 = vpop.f32.mrb[0].mxu0
        %v1153 = vpop.f32.mrb[0].mxu0
        %v1154 = vadd.f32 %v1042, %v1153
        %v1155 = vpop.f32.mrb[0].mxu0
        %1156 = vmatprep.mubr.bf16.mxu0 0
        %1157 = vmatmul.mubr.bf16.gmra.mrb[0].mxu0 %v585
        %v1158 = vpop.f32.mrb[0].mxu0
        %v1159 = vadd.f32 %v1042, %v1158
        %v1160 = vpop.f32.mrb[0].mxu0
        %v1161 = vpop.f32.mrb[0].mxu0
        %v1162 = vadd.f32 %v1042, %v1161
        %v1163 = vpop.f32.mrb[0].mxu0
        %1164 = vmatprep.mubr.bf16.mxu0 0
        %1165 = vmatmul.mubr.bf16.gmra.mrb[0].mxu0 %v586
        %v1166 = vpop.f32.mrb[0].mxu0
        %v1167 = vadd.f32 %v1042, %v1166
        %v1168 = vpop.f32.mrb[0].mxu0
        %v1169 = vpop.f32.mrb[0].mxu0
        %v1170 = vadd.f32 %v1042, %v1169
        %v1171 = vpop.f32.mrb[0].mxu0
        %1172 = vmatprep.mubr.bf16.mxu0 0
        %1173 = vmatmul.mubr.bf16.gmra.mrb[0].mxu0 %v587
        %v1174 = vpop.f32.mrb[0].mxu0
        %v1175 = vadd.f32 %v1042, %v1174
        %v1176 = vpop.f32.mrb[0].mxu0
        %v1177 = vpop.f32.mrb[0].mxu0
        %v1178 = vadd.f32 %v1042, %v1177
        %v1179 = vpop.f32.mrb[0].mxu0
        %1180 = vmatprep.mubr.bf16.mxu0 0
        %1181 = vmatmul.mubr.bf16.gmra.mrb[0].mxu0 %v588
        %v1182 = vpop.f32.mrb[0].mxu0
        %v1183 = vadd.f32 %v1042, %v1182
        %v1184 = vpop.f32.mrb[0].mxu0
        %v1185 = vpop.f32.mrb[0].mxu0
        %v1186 = vadd.f32 %v1042, %v1185
        %v1187 = vpop.f32.mrb[0].mxu0
        %1188 = vmatprep.mubr.bf16.mxu0 0
        %1189 = vmatmul.mubr.bf16.gmra.mrb[0].mxu0 %v589
        %v1190 = vpop.f32.mrb[0].mxu0
        %v1191 = vadd.f32 %v1042, %v1190
        %v1192 = vpop.f32.mrb[0].mxu0
        %v1193 = vpop.f32.mrb[0].mxu0
        %v1194 = vadd.f32 %v1042, %v1193
        %v1195 = vpop.f32.mrb[0].mxu0
        %1196 = vmatprep.mubr.bf16.mxu0 0
        %1197 = vmatmul.mubr.bf16.gmra.mrb[0].mxu0 %v590
        %v1198 = vpop.f32.mrb[0].mxu0
        %v1199 = vadd.f32 %v1042, %v1198
        %v1200 = vpop.f32.mrb[0].mxu0
        %v1201 = vpop.f32.mrb[0].mxu0
        %v1202 = vadd.f32 %v1042, %v1201
        %v1203 = vpop.f32.mrb[0].mxu0
        %1204 = vmatprep.mubr.bf16.mxu0 0
        %1205 = vmatmul.mubr.bf16.gmra.mrb[0].mxu0 %v591
        %v1206 = vpop.f32.mrb[0].mxu0
        %v1207 = vadd.f32 %v1042, %v1206
        %v1208 = vpop.f32.mrb[0].mxu0
        %v1209 = vpop.f32.mrb[0].mxu0
        %v1210 = vadd.f32 %v1042, %v1209
        %v1211 = vpop.f32.mrb[0].mxu0
        %1212 = vmatprep.mubr.bf16.mxu0 0
        %1213 = vmatmul.mubr.bf16.gmra.mrb[0].mxu0 %v592
        %v1214 = vpop.f32.mrb[0].mxu0
        %v1215 = vadd.f32 %v1042, %v1214
        %v1216 = vpop.f32.mrb[0].mxu0
        %v1217 = vpop.f32.mrb[0].mxu0
        %v1218 = vadd.f32 %v1042, %v1217
        %v1219 = vpop.f32.mrb[0].mxu0
        %1220 = vmatprep.mubr.bf16.mxu0 0
        %1221 = vmatmul.mubr.bf16.gmra.mrb[0].mxu0 %v593
        %v1222 = vpop.f32.mrb[0].mxu0
        %v1223 = vadd.f32 %v1042, %v1222
        %v1224 = vpop.f32.mrb[0].mxu0
        %v1225 = vpop.f32.mrb[0].mxu0
        %v1226 = vadd.f32 %v1042, %v1225
        %v1227 = vpop.f32.mrb[0].mxu0
        %1228 = vmatprep.mubr.bf16.mxu0 0
        %1229 = vmatmul.mubr.bf16.gmra.mrb[0].mxu0 %v594
        %v1230 = vpop.f32.mrb[0].mxu0
        %v1231 = vadd.f32 %v1042, %v1230
        %v1232 = vpop.f32.mrb[0].mxu0
        %v1233 = vpop.f32.mrb[0].mxu0
        %v1234 = vadd.f32 %v1042, %v1233
        %v1235 = vpop.f32.mrb[0].mxu0
        %1236 = vmatprep.mubr.bf16.mxu0 0
        %1237 = vmatmul.mubr.bf16.gmra.mrb[0].mxu0 %v595
        %v1238 = vpop.f32.mrb[0].mxu0
        %v1239 = vadd.f32 %v1042, %v1238
        %v1240 = vpop.f32.mrb[0].mxu0
        %v1241 = vpop.f32.mrb[0].mxu0
        %v1242 = vadd.f32 %v1042, %v1241
        %v1243 = vpop.f32.mrb[0].mxu0
        %1244 = vmatprep.mubr.bf16.mxu0 0
        %1245 = vmatmul.mubr.bf16.gmra.mrb[0].mxu0 %v596
        %v1246 = vpop.f32.mrb[0].mxu0
        %v1247 = vadd.f32 %v1042, %v1246
        %v1248 = vpop.f32.mrb[0].mxu0
        %v1249 = vpop.f32.mrb[0].mxu0
        %v1250 = vadd.f32 %v1042, %v1249
        %v1251 = vpop.f32.mrb[0].mxu0
        %1252 = vdwg.mxu0
        %v1253 = vpack.c.bf16 %v1130, %v1127
        %v1254 = vpack.c.bf16 %v1138, %v1135
        %v1255 = vpack.c.bf16 %v1146, %v1143
        %v1256 = vpack.c.bf16 %v1154, %v1151
        %v1257 = vpack.c.bf16 %v1162, %v1159
        %v1258 = vpack.c.bf16 %v1170, %v1167
        %v1259 = vpack.c.bf16 %v1178, %v1175
        %v1260 = vpack.c.bf16 %v1186, %v1183
        %v1261 = vpack.c.bf16 %v1194, %v1191
        %v1262 = vpack.c.bf16 %v1202, %v1199
        %v1263 = vpack.c.bf16 %v1210, %v1207
        %v1264 = vpack.c.bf16 %v1218, %v1215
        %v1265 = vpack.c.bf16 %v1226, %v1223
        %v1266 = vpack.c.bf16 %v1234, %v1231
        %v1267 = vpack.c.bf16 %v1242, %v1239
        %v1268 = vpack.c.bf16 %v1250, %v1247
        %v1269 = vlaneseq
        %v1270 = vshrl.u32 %v1269, 7
        %v1271 = vadd.s32 %v1270, 8
        %v1272 = vadd.s32 %v1270, 16
        %v1273 = vadd.s32 %v1270, 24
        %v1274 = vadd.s32 %v1270, 32
        %v1275 = vadd.s32 %v1270, 40
        %v1276 = vadd.s32 %v1270, 48
        %v1277 = vadd.s32 %v1270, 56
        %v1278 = vadd.s32 %v1270, 64
        %v1279 = vadd.s32 %v1270, 72
        %v1280 = vadd.s32 %v1270, 80
        %v1281 = vadd.s32 %v1270, 88
        %v1282 = vadd.s32 %v1270, 96
        %v1283 = vadd.s32 %v1270, 104
        %v1284 = vadd.s32 %v1270, 112
        %v1285 = vadd.s32 %v1270, 120
        %v1286 = vstv %s524
        %v1287 = vadd.s32 %v1270, %v1286
        %v1288 = vadd.s32 %v1271, %v1286
        %v1289 = vadd.s32 %v1272, %v1286
        %v1290 = vadd.s32 %v1273, %v1286
        %v1291 = vadd.s32 %v1274, %v1286
        %v1292 = vadd.s32 %v1275, %v1286
        %v1293 = vadd.s32 %v1276, %v1286
        %v1294 = vadd.s32 %v1277, %v1286
        %v1295 = vadd.s32 %v1278, %v1286
        %v1296 = vadd.s32 %v1279, %v1286
        %v1297 = vadd.s32 %v1280, %v1286
        %v1298 = vadd.s32 %v1281, %v1286
        %v1299 = vadd.s32 %v1282, %v1286
        %v1300 = vadd.s32 %v1283, %v1286
        %v1301 = vadd.s32 %v1284, %v1286
        %v1302 = vadd.s32 %v1285, %v1286
        %v1303 = vlaneseq
        %v1304 = vand.u32 %v1303, 127
        %v1305 = vadd.s32 %v1304, 128
        %v1306 = vsub.s32 %v1287, %v1304
        %v1307 = vsub.s32 %v1287, %v1305
        %v1308 = vsub.s32 %v1288, %v1304
        %v1309 = vsub.s32 %v1288, %v1305
        %v1310 = vsub.s32 %v1289, %v1304
        %v1311 = vsub.s32 %v1289, %v1305
        %v1312 = vsub.s32 %v1290, %v1304
        %v1313 = vsub.s32 %v1290, %v1305
        %v1314 = vsub.s32 %v1291, %v1304
        %v1315 = vsub.s32 %v1291, %v1305
        %v1316 = vsub.s32 %v1292, %v1304
        %v1317 = vsub.s32 %v1292, %v1305
        %v1318 = vsub.s32 %v1293, %v1304
        %v1319 = vsub.s32 %v1293, %v1305
        %v1320 = vsub.s32 %v1294, %v1304
        %v1321 = vsub.s32 %v1294, %v1305
        %v1322 = vsub.s32 %v1295, %v1304
        %v1323 = vsub.s32 %v1295, %v1305
        %v1324 = vsub.s32 %v1296, %v1304
        %v1325 = vsub.s32 %v1296, %v1305
        %v1326 = vsub.s32 %v1297, %v1304
        %v1327 = vsub.s32 %v1297, %v1305
        %v1328 = vsub.s32 %v1298, %v1304
        %v1329 = vsub.s32 %v1298, %v1305
        %v1330 = vsub.s32 %v1299, %v1304
        %v1331 = vsub.s32 %v1299, %v1305
        %v1332 = vsub.s32 %v1300, %v1304
        %v1333 = vsub.s32 %v1300, %v1305
        %v1334 = vsub.s32 %v1301, %v1304
        %v1335 = vsub.s32 %v1301, %v1305
        %v1336 = vsub.s32 %v1302, %v1304
        %v1337 = vsub.s32 %v1302, %v1305
        %vm1338 = vcmp.ge.s32.totalorder %v1306, 0
        %vm1339 = vcmp.ge.s32.totalorder %v1307, 0
        %vm1340 = vcmp.ge.s32.totalorder %v1308, 0
        %vm1341 = vcmp.ge.s32.totalorder %v1309, 0
        %vm1342 = vcmp.ge.s32.totalorder %v1310, 0
        %vm1343 = vcmp.ge.s32.totalorder %v1311, 0
        %vm1344 = vcmp.ge.s32.totalorder %v1312, 0
        %vm1345 = vcmp.ge.s32.totalorder %v1313, 0
        %vm1346 = vcmp.ge.s32.totalorder %v1314, 0
        %vm1347 = vcmp.ge.s32.totalorder %v1315, 0
        %vm1348 = vcmp.ge.s32.totalorder %v1316, 0
        %vm1349 = vcmp.ge.s32.totalorder %v1317, 0
        %vm1350 = vcmp.ge.s32.totalorder %v1318, 0
        %vm1351 = vcmp.ge.s32.totalorder %v1319, 0
        %vm1352 = vcmp.ge.s32.totalorder %v1320, 0
        %vm1353 = vcmp.ge.s32.totalorder %v1321, 0
        %vm1354 = vcmp.ge.s32.totalorder %v1322, 0
        %vm1355 = vcmp.ge.s32.totalorder %v1323, 0
        %vm1356 = vcmp.ge.s32.totalorder %v1324, 0
        %vm1357 = vcmp.ge.s32.totalorder %v1325, 0
        %vm1358 = vcmp.ge.s32.totalorder %v1326, 0
        %vm1359 = vcmp.ge.s32.totalorder %v1327, 0
        %vm1360 = vcmp.ge.s32.totalorder %v1328, 0
        %vm1361 = vcmp.ge.s32.totalorder %v1329, 0
        %vm1362 = vcmp.ge.s32.totalorder %v1330, 0
        %vm1363 = vcmp.ge.s32.totalorder %v1331, 0
        %vm1364 = vcmp.ge.s32.totalorder %v1332, 0
        %vm1365 = vcmp.ge.s32.totalorder %v1333, 0
        %vm1366 = vcmp.ge.s32.totalorder %v1334, 0
        %vm1367 = vcmp.ge.s32.totalorder %v1335, 0
        %vm1368 = vcmp.ge.s32.totalorder %v1336, 0
        %vm1369 = vcmp.ge.s32.totalorder %v1337, 0
        %v1370 = vcvt.s32.f32 %v1306
        %v1371 = vcvt.s32.f32 %v1307
        %v1372 = vcvt.s32.f32 %v1308
        %v1373 = vcvt.s32.f32 %v1309
        %v1374 = vcvt.s32.f32 %v1310
        %v1375 = vcvt.s32.f32 %v1311
        %v1376 = vcvt.s32.f32 %v1312
        %v1377 = vcvt.s32.f32 %v1313
        %v1378 = vcvt.s32.f32 %v1314
        %v1379 = vcvt.s32.f32 %v1315
        %v1380 = vcvt.s32.f32 %v1316
        %v1381 = vcvt.s32.f32 %v1317
        %v1382 = vcvt.s32.f32 %v1318
        %v1383 = vcvt.s32.f32 %v1319
        %v1384 = vcvt.s32.f32 %v1320
        %v1385 = vcvt.s32.f32 %v1321
        %v1386 = vcvt.s32.f32 %v1322
        %v1387 = vcvt.s32.f32 %v1323
        %v1388 = vcvt.s32.f32 %v1324
        %v1389 = vcvt.s32.f32 %v1325
        %v1390 = vcvt.s32.f32 %v1326
        %v1391 = vcvt.s32.f32 %v1327
        %v1392 = vcvt.s32.f32 %v1328
        %v1393 = vcvt.s32.f32 %v1329
        %v1394 = vcvt.s32.f32 %v1330
        %v1395 = vcvt.s32.f32 %v1331
        %v1396 = vcvt.s32.f32 %v1332
        %v1397 = vcvt.s32.f32 %v1333
        %v1398 = vcvt.s32.f32 %v1334
        %v1399 = vcvt.s32.f32 %v1335
        %v1400 = vcvt.s32.f32 %v1336
        %v1401 = vcvt.s32.f32 %v1337
        %v1402 = vsel %vm1338, %v1370, 0.0
        %v1403 = vsel %vm1339, %v1371, 0.0
        %v1404 = vsel %vm1340, %v1372, 0.0
        %v1405 = vsel %vm1341, %v1373, 0.0
        %v1406 = vsel %vm1342, %v1374, 0.0
        %v1407 = vsel %vm1343, %v1375, 0.0
        %v1408 = vsel %vm1344, %v1376, 0.0
        %v1409 = vsel %vm1345, %v1377, 0.0
        %v1410 = vsel %vm1346, %v1378, 0.0
        %v1411 = vsel %vm1347, %v1379, 0.0
        %v1412 = vsel %vm1348, %v1380, 0.0
        %v1413 = vsel %vm1349, %v1381, 0.0
        %v1414 = vsel %vm1350, %v1382, 0.0
        %v1415 = vsel %vm1351, %v1383, 0.0
        %v1416 = vsel %vm1352, %v1384, 0.0
        %v1417 = vsel %vm1353, %v1385, 0.0
        %v1418 = vsel %vm1354, %v1386, 0.0
        %v1419 = vsel %vm1355, %v1387, 0.0
        %v1420 = vsel %vm1356, %v1388, 0.0
        %v1421 = vsel %vm1357, %v1389, 0.0
        %v1422 = vsel %vm1358, %v1390, 0.0
        %v1423 = vsel %vm1359, %v1391, 0.0
        %v1424 = vsel %vm1360, %v1392, 0.0
        %v1425 = vsel %vm1361, %v1393, 0.0
        %v1426 = vsel %vm1362, %v1394, 0.0
        %v1427 = vsel %vm1363, %v1395, 0.0
        %v1428 = vsel %vm1364, %v1396, 0.0
        %v1429 = vsel %vm1365, %v1397, 0.0
        %v1430 = vsel %vm1366, %v1398, 0.0
        %v1431 = vsel %vm1367, %v1399, 0.0
        %v1432 = vsel %vm1368, %v1400, 0.0
        %v1433 = vsel %vm1369, %v1401, 0.0
        %v1434 = vld [vmem:[%s10] sm:$0xff]
        %vm1435 = vcmask 130048
        %v1437 = vsel %vm1435, %v765, 0
        %v1440 = vsel %vm1435, %v766, 0
        %v1443 = vsel %vm1435, %v767, 0
        %v1446 = vsel %vm1435, %v768, 0
        %v1449 = vsel %vm1435, %v769, 0
        %v1452 = vsel %vm1435, %v770, 0
        %v1455 = vsel %vm1435, %v771, 0
        %v1458 = vsel %vm1435, %v772, 0
        %v1461 = vsel %vm1435, %v1005, 0
        %v1464 = vsel %vm1435, %v1006, 0
        %v1467 = vsel %vm1435, %v1007, 0
        %v1470 = vsel %vm1435, %v1008, 0
        %v1473 = vsel %vm1435, %v1009, 0
        %v1476 = vsel %vm1435, %v1010, 0
        %v1479 = vsel %vm1435, %v1011, 0
        %v1482 = vsel %vm1435, %v1012, 0
        %v1485 = vsel %vm1435, %v1013, 0
        %v1488 = vsel %vm1435, %v1014, 0
        %v1491 = vsel %vm1435, %v1015, 0
        %v1494 = vsel %vm1435, %v1016, 0
        %v1497 = vsel %vm1435, %v1017, 0
        %v1500 = vsel %vm1435, %v1018, 0
        %v1503 = vsel %vm1435, %v1019, 0
        %v1506 = vsel %vm1435, %v1020, 0
        %1508 = vmatprep.subr.bf16.mxu0 0
        %1509 = vmatpush1.bf16.xpose.msra.mxu0 %v1461
        %1510 = vmatprep.subr.bf16.mxu0 0
        %1511 = vmatpush1.bf16.xpose.msra.mxu0 %v1464
        %1512 = vmatprep.subr.bf16.mxu0 0
        %1513 = vmatpush1.bf16.xpose.msra.mxu0 %v1467
        %1514 = vmatprep.subr.bf16.mxu0 0
        %1515 = vmatpush1.bf16.xpose.msra.mxu0 %v1470
        %1516 = vmatprep.subr.bf16.mxu0 0
        %1517 = vmatpush1.bf16.xpose.msra.mxu0 %v1473
        %1518 = vmatprep.subr.bf16.mxu0 0
        %1519 = vmatpush1.bf16.xpose.msra.mxu0 %v1476
        %1520 = vmatprep.subr.bf16.mxu0 0
        %1521 = vmatpush1.bf16.xpose.msra.mxu0 %v1479
        %1522 = vmatprep.subr.bf16.mxu0 0
        %1523 = vmatpush1.bf16.xpose.msra.mxu0 %v1482
        %1524 = vmatprep.subr.bf16.mxu0 0
        %1525 = vmatpush1.bf16.xpose.msra.mxu0 %v1485
        %1526 = vmatprep.subr.bf16.mxu0 0
        %1527 = vmatpush1.bf16.xpose.msra.mxu0 %v1488
        %1528 = vmatprep.subr.bf16.mxu0 0
        %1529 = vmatpush1.bf16.xpose.msra.mxu0 %v1491
        %1530 = vmatprep.subr.bf16.mxu0 0
        %1531 = vmatpush1.bf16.xpose.msra.mxu0 %v1494
        %1532 = vmatprep.subr.bf16.mxu0 0
        %1533 = vmatpush1.bf16.xpose.msra.mxu0 %v1497
        %1534 = vmatprep.subr.bf16.mxu0 0
        %1535 = vmatpush1.bf16.xpose.msra.mxu0 %v1500
        %1536 = vmatprep.subr.bf16.mxu0 0
        %1537 = vmatpush1.bf16.xpose.msra.mxu0 %v1503
        %1538 = vmatprep.subr.bf16.mxu0 0
        %1539 = vmatpush1.bf16.xpose.msra.mxu0 %v1506
        %1540 = vmatprep.mubr.bf16.mxu0 0
        %1541 = vmatmul.mubr.bf16.gmra.mrb[0].mxu0 %v1437
        %v1542 = vpop.f32.mrb[0].mxu0
        %v1543 = vadd.f32 0.0, %v1542
        %v1544 = vpop.f32.mrb[0].mxu0
        %v1545 = vadd.f32 0.0, %v1544
        %v1546 = vpop.f32.mrb[0].mxu0
        %v1547 = vadd.f32 0.0, %v1546
        %v1548 = vpop.f32.mrb[0].mxu0
        %v1549 = vadd.f32 0.0, %v1548
        %1550 = vmatprep.mubr.bf16.mxu0 0
        %1551 = vmatmul.mubr.bf16.gmra.mrb[0].mxu0 %v1440
        %v1552 = vpop.f32.mrb[0].mxu0
        %v1553 = vadd.f32 0.0, %v1552
        %v1554 = vpop.f32.mrb[0].mxu0
        %v1555 = vadd.f32 0.0, %v1554
        %v1556 = vpop.f32.mrb[0].mxu0
        %v1557 = vadd.f32 0.0, %v1556
        %v1558 = vpop.f32.mrb[0].mxu0
        %v1559 = vadd.f32 0.0, %v1558
        %1560 = vmatprep.mubr.bf16.mxu0 0
        %1561 = vmatmul.mubr.bf16.gmra.mrb[0].mxu0 %v1443
        %v1562 = vpop.f32.mrb[0].mxu0
        %v1563 = vadd.f32 0.0, %v1562
        %v1564 = vpop.f32.mrb[0].mxu0
        %v1565 = vadd.f32 0.0, %v1564
        %v1566 = vpop.f32.mrb[0].mxu0
        %v1567 = vadd.f32 0.0, %v1566
        %v1568 = vpop.f32.mrb[0].mxu0
        %v1569 = vadd.f32 0.0, %v1568
        %1570 = vmatprep.mubr.bf16.mxu0 0
        %1571 = vmatmul.mubr.bf16.gmra.mrb[0].mxu0 %v1446
        %v1572 = vpop.f32.mrb[0].mxu0
        %v1573 = vadd.f32 0.0, %v1572
        %v1574 = vpop.f32.mrb[0].mxu0
        %v1575 = vadd.f32 0.0, %v1574
        %v1576 = vpop.f32.mrb[0].mxu0
        %v1577 = vadd.f32 0.0, %v1576
        %v1578 = vpop.f32.mrb[0].mxu0
        %v1579 = vadd.f32 0.0, %v1578
        %1580 = vmatprep.mubr.bf16.mxu0 0
        %1581 = vmatmul.mubr.bf16.gmra.mrb[0].mxu0 %v1449
        %v1582 = vpop.f32.mrb[0].mxu0
        %v1583 = vadd.f32 0.0, %v1582
        %v1584 = vpop.f32.mrb[0].mxu0
        %v1585 = vadd.f32 0.0, %v1584
        %v1586 = vpop.f32.mrb[0].mxu0
        %v1587 = vadd.f32 0.0, %v1586
        %v1588 = vpop.f32.mrb[0].mxu0
        %v1589 = vadd.f32 0.0, %v1588
        %1590 = vmatprep.mubr.bf16.mxu0 0
        %1591 = vmatmul.mubr.bf16.gmra.mrb[0].mxu0 %v1452
        %v1592 = vpop.f32.mrb[0].mxu0
        %v1593 = vadd.f32 0.0, %v1592
        %v1594 = vpop.f32.mrb[0].mxu0
        %v1595 = vadd.f32 0.0, %v1594
        %v1596 = vpop.f32.mrb[0].mxu0
        %v1597 = vadd.f32 0.0, %v1596
        %v1598 = vpop.f32.mrb[0].mxu0
        %v1599 = vadd.f32 0.0, %v1598
        %1600 = vmatprep.mubr.bf16.mxu0 0
        %1601 = vmatmul.mubr.bf16.gmra.mrb[0].mxu0 %v1455
        %v1602 = vpop.f32.mrb[0].mxu0
        %v1603 = vadd.f32 0.0, %v1602
        %v1604 = vpop.f32.mrb[0].mxu0
        %v1605 = vadd.f32 0.0, %v1604
        %v1606 = vpop.f32.mrb[0].mxu0
        %v1607 = vadd.f32 0.0, %v1606
        %v1608 = vpop.f32.mrb[0].mxu0
        %v1609 = vadd.f32 0.0, %v1608
        %1610 = vmatprep.mubr.bf16.mxu0 0
        %1611 = vmatmul.mubr.bf16.gmra.mrb[0].mxu0 %v1458
        %v1612 = vpop.f32.mrb[0].mxu0
        %v1613 = vadd.f32 0.0, %v1612
        %v1614 = vpop.f32.mrb[0].mxu0
        %v1615 = vadd.f32 0.0, %v1614
        %v1616 = vpop.f32.mrb[0].mxu0
        %v1617 = vadd.f32 0.0, %v1616
        %v1618 = vpop.f32.mrb[0].mxu0
        %v1619 = vadd.f32 0.0, %v1618
        %1620 = vdwg.mxu0
        %s1622 = vtos %v1434
        %v1623 = vstv %s1622
        %v1625 = vmul.f32 %v1402, %v1623
        %v1626 = vmul.f32 %v1403, %v1623
        %v1627 = vmul.f32 %v1404, %v1623
        %v1628 = vmul.f32 %v1405, %v1623
        %v1629 = vmul.f32 %v1406, %v1623
        %v1630 = vmul.f32 %v1407, %v1623
        %v1631 = vmul.f32 %v1408, %v1623
        %v1632 = vmul.f32 %v1409, %v1623
        %v1633 = vmul.f32 %v1410, %v1623
        %v1634 = vmul.f32 %v1411, %v1623
        %v1635 = vmul.f32 %v1412, %v1623
        %v1636 = vmul.f32 %v1413, %v1623
        %v1637 = vmul.f32 %v1414, %v1623
        %v1638 = vmul.f32 %v1415, %v1623
        %v1639 = vmul.f32 %v1416, %v1623
        %v1640 = vmul.f32 %v1417, %v1623
        %v1641 = vmul.f32 %v1418, %v1623
        %v1642 = vmul.f32 %v1419, %v1623
        %v1643 = vmul.f32 %v1420, %v1623
        %v1644 = vmul.f32 %v1421, %v1623
        %v1645 = vmul.f32 %v1422, %v1623
        %v1646 = vmul.f32 %v1423, %v1623
        %v1647 = vmul.f32 %v1424, %v1623
        %v1648 = vmul.f32 %v1425, %v1623
        %v1649 = vmul.f32 %v1426, %v1623
        %v1650 = vmul.f32 %v1427, %v1623
        %v1651 = vmul.f32 %v1428, %v1623
        %v1652 = vmul.f32 %v1429, %v1623
        %v1653 = vmul.f32 %v1430, %v1623
        %v1654 = vmul.f32 %v1431, %v1623
        %v1655 = vmul.f32 %v1432, %v1623
        %v1656 = vmul.f32 %v1433, %v1623
        %v1657 = vmul.f32 %v1625, 1.442695
        %v1658 = vpow.pop %v1657
        %v1659 = vmul.f32 %v1626, 1.442695
        %v1660 = vpow.pop %v1659
        %v1661 = vmul.f32 %v1627, 1.442695
        %v1662 = vpow.pop %v1661
        %v1663 = vmul.f32 %v1628, 1.442695
        %v1664 = vpow.pop %v1663
        %v1665 = vmul.f32 %v1629, 1.442695
        %v1666 = vpow.pop %v1665
        %v1667 = vmul.f32 %v1630, 1.442695
        %v1668 = vpow.pop %v1667
        %v1669 = vmul.f32 %v1631, 1.442695
        %v1670 = vpow.pop %v1669
        %v1671 = vmul.f32 %v1632, 1.442695
        %v1672 = vpow.pop %v1671
        %v1673 = vmul.f32 %v1633, 1.442695
        %v1674 = vpow.pop %v1673
        %v1675 = vmul.f32 %v1634, 1.442695
        %v1676 = vpow.pop %v1675
        %v1677 = vmul.f32 %v1635, 1.442695
        %v1678 = vpow.pop %v1677
        %v1679 = vmul.f32 %v1636, 1.442695
        %v1680 = vpow.pop %v1679
        %v1681 = vmul.f32 %v1637, 1.442695
        %v1682 = vpow.pop %v1681
        %v1683 = vmul.f32 %v1638, 1.442695
        %v1684 = vpow.pop %v1683
        %v1685 = vmul.f32 %v1639, 1.442695
        %v1686 = vpow.pop %v1685
        %v1687 = vmul.f32 %v1640, 1.442695
        %v1688 = vpow.pop %v1687
        %v1689 = vmul.f32 %v1641, 1.442695
        %v1690 = vpow.pop %v1689
        %v1691 = vmul.f32 %v1642, 1.442695
        %v1692 = vpow.pop %v1691
        %v1693 = vmul.f32 %v1643, 1.442695
        %v1694 = vpow.pop %v1693
        %v1695 = vmul.f32 %v1644, 1.442695
        %v1696 = vpow.pop %v1695
        %v1697 = vmul.f32 %v1645, 1.442695
        %v1698 = vpow.pop %v1697
        %v1699 = vmul.f32 %v1646, 1.442695
        %v1700 = vpow.pop %v1699
        %v1701 = vmul.f32 %v1647, 1.442695
        %v1702 = vpow.pop %v1701
        %v1703 = vmul.f32 %v1648, 1.442695
        %v1704 = vpow.pop %v1703
        %v1705 = vmul.f32 %v1649, 1.442695
        %v1706 = vpow.pop %v1705
        %v1707 = vmul.f32 %v1650, 1.442695
        %v1708 = vpow.pop %v1707
        %v1709 = vmul.f32 %v1651, 1.442695
        %v1710 = vpow.pop %v1709
        %v1711 = vmul.f32 %v1652, 1.442695
        %v1712 = vpow.pop %v1711
        %v1713 = vmul.f32 %v1653, 1.442695
        %v1714 = vpow.pop %v1713
        %v1715 = vmul.f32 %v1654, 1.442695
        %v1716 = vpow.pop %v1715
        %v1717 = vmul.f32 %v1655, 1.442695
        %v1718 = vpow.pop %v1717
        %v1719 = vmul.f32 %v1656, 1.442695
        %v1720 = vpow.pop %v1719
        %v1721 = vsel %vm1338, %v1658, 0.0
        %v1722 = vsel %vm1339, %v1660, 0.0
        %v1723 = vsel %vm1340, %v1662, 0.0
        %v1724 = vsel %vm1341, %v1664, 0.0
        %v1725 = vsel %vm1342, %v1666, 0.0
        %v1726 = vsel %vm1343, %v1668, 0.0
        %v1727 = vsel %vm1344, %v1670, 0.0
        %v1728 = vsel %vm1345, %v1672, 0.0
        %v1729 = vsel %vm1346, %v1674, 0.0
        %v1730 = vsel %vm1347, %v1676, 0.0
        %v1731 = vsel %vm1348, %v1678, 0.0
        %v1732 = vsel %vm1349, %v1680, 0.0
        %v1733 = vsel %vm1350, %v1682, 0.0
        %v1734 = vsel %vm1351, %v1684, 0.0
        %v1735 = vsel %vm1352, %v1686, 0.0
        %v1736 = vsel %vm1353, %v1688, 0.0
        %v1737 = vsel %vm1354, %v1690, 0.0
        %v1738 = vsel %vm1355, %v1692, 0.0
        %v1739 = vsel %vm1356, %v1694, 0.0
        %v1740 = vsel %vm1357, %v1696, 0.0
        %v1741 = vsel %vm1358, %v1698, 0.0
        %v1742 = vsel %vm1359, %v1700, 0.0
        %v1743 = vsel %vm1360, %v1702, 0.0
        %v1744 = vsel %vm1361, %v1704, 0.0
        %v1745 = vsel %vm1362, %v1706, 0.0
        %v1746 = vsel %vm1363, %v1708, 0.0
        %v1747 = vsel %vm1364, %v1710, 0.0
        %v1748 = vsel %vm1365, %v1712, 0.0
        %v1749 = vsel %vm1366, %v1714, 0.0
        %v1750 = vsel %vm1367, %v1716, 0.0
        %v1751 = vsel %vm1368, %v1718, 0.0
        %v1752 = vsel %vm1369, %v1720, 0.0
        %v1753 = vmul.f32 %v1543, %v1721
        %v1754 = vmul.f32 %v1545, %v1722
        %v1755 = vmul.f32 %v1547, %v1723
        %v1756 = vmul.f32 %v1549, %v1724
        %v1757 = vmul.f32 %v1553, %v1725
        %v1758 = vmul.f32 %v1555, %v1726
        %v1759 = vmul.f32 %v1557, %v1727
        %v1760 = vmul.f32 %v1559, %v1728
        %v1761 = vmul.f32 %v1563, %v1729
        %v1762 = vmul.f32 %v1565, %v1730
        %v1763 = vmul.f32 %v1567, %v1731
        %v1764 = vmul.f32 %v1569, %v1732
        %v1765 = vmul.f32 %v1573, %v1733
        %v1766 = vmul.f32 %v1575, %v1734
        %v1767 = vmul.f32 %v1577, %v1735
        %v1768 = vmul.f32 %v1579, %v1736
        %v1769 = vmul.f32 %v1583, %v1737
        %v1770 = vmul.f32 %v1585, %v1738
        %v1771 = vmul.f32 %v1587, %v1739
        %v1772 = vmul.f32 %v1589, %v1740
        %v1773 = vmul.f32 %v1593, %v1741
        %v1774 = vmul.f32 %v1595, %v1742
        %v1775 = vmul.f32 %v1597, %v1743
        %v1776 = vmul.f32 %v1599, %v1744
        %v1777 = vmul.f32 %v1603, %v1745
        %v1778 = vmul.f32 %v1605, %v1746
        %v1779 = vmul.f32 %v1607, %v1747
        %v1780 = vmul.f32 %v1609, %v1748
        %v1781 = vmul.f32 %v1613, %v1749
        %v1782 = vmul.f32 %v1615, %v1750
        %v1783 = vmul.f32 %v1617, %v1751
        %v1784 = vmul.f32 %v1619, %v1752
        %v1785 = vmax.f32 %v1753, %v1754
        %1786 = vmax.xlane.f32.xlu0 %v1785
        %v1787 = vpop.xlane.xlu0 %1786
        %v1788 = vmax.f32 %v1755, %v1756
        %1789 = vmax.xlane.f32.xlu0 %v1788
        %v1790 = vpop.xlane.xlu0 %1789
        %v1791 = vmax.f32 %v1757, %v1758
        %1792 = vmax.xlane.f32.xlu0 %v1791
        %v1793 = vpop.xlane.xlu0 %1792
        %v1794 = vmax.f32 %v1759, %v1760
        %1795 = vmax.xlane.f32.xlu0 %v1794
        %v1796 = vpop.xlane.xlu0 %1795
        %v1797 = vmax.f32 %v1761, %v1762
        %1798 = vmax.xlane.f32.xlu0 %v1797
        %v1799 = vpop.xlane.xlu0 %1798
        %v1800 = vmax.f32 %v1763, %v1764
        %1801 = vmax.xlane.f32.xlu0 %v1800
        %v1802 = vpop.xlane.xlu0 %1801
        %v1803 = vmax.f32 %v1765, %v1766
        %1804 = vmax.xlane.f32.xlu0 %v1803
        %v1805 = vpop.xlane.xlu0 %1804
        %v1806 = vmax.f32 %v1767, %v1768
        %1807 = vmax.xlane.f32.xlu0 %v1806
        %v1808 = vpop.xlane.xlu0 %1807
        %v1809 = vmax.f32 %v1769, %v1770
        %1810 = vmax.xlane.f32.xlu0 %v1809
        %v1811 = vpop.xlane.xlu0 %1810
        %v1812 = vmax.f32 %v1771, %v1772
        %1813 = vmax.xlane.f32.xlu0 %v1812
        %v1814 = vpop.xlane.xlu0 %1813
        %v1815 = vmax.f32 %v1773, %v1774
        %1816 = vmax.xlane.f32.xlu0 %v1815
        %v1817 = vpop.xlane.xlu0 %1816
        %v1818 = vmax.f32 %v1775, %v1776
        %1819 = vmax.xlane.f32.xlu0 %v1818
        %v1820 = vpop.xlane.xlu0 %1819
        %v1821 = vmax.f32 %v1777, %v1778
        %1822 = vmax.xlane.f32.xlu0 %v1821
        %v1823 = vpop.xlane.xlu0 %1822
        %v1824 = vmax.f32 %v1779, %v1780
        %1825 = vmax.xlane.f32.xlu0 %v1824
        %v1826 = vpop.xlane.xlu0 %1825
        %v1827 = vmax.f32 %v1781, %v1782
        %1828 = vmax.xlane.f32.xlu0 %v1827
        %v1829 = vpop.xlane.xlu0 %1828
        %v1830 = vmax.f32 %v1783, %v1784
        %1831 = vmax.xlane.f32.xlu0 %v1830
        %v1832 = vpop.xlane.xlu0 %1831
        %v1833 = vsub.f32 %v1753, %v1787
        %v1834 = vsub.f32 %v1754, %v1787
        %v1835 = vsub.f32 %v1755, %v1790
        %v1836 = vsub.f32 %v1756, %v1790
        %v1837 = vsub.f32 %v1757, %v1793
        %v1838 = vsub.f32 %v1758, %v1793
        %v1839 = vsub.f32 %v1759, %v1796
        %v1840 = vsub.f32 %v1760, %v1796
        %v1841 = vsub.f32 %v1761, %v1799
        %v1842 = vsub.f32 %v1762, %v1799
        %v1843 = vsub.f32 %v1763, %v1802
        %v1844 = vsub.f32 %v1764, %v1802
        %v1845 = vsub.f32 %v1765, %v1805
        %v1846 = vsub.f32 %v1766, %v1805
        %v1847 = vsub.f32 %v1767, %v1808
        %v1848 = vsub.f32 %v1768, %v1808
        %v1849 = vsub.f32 %v1769, %v1811
        %v1850 = vsub.f32 %v1770, %v1811
        %v1851 = vsub.f32 %v1771, %v1814
        %v1852 = vsub.f32 %v1772, %v1814
        %v1853 = vsub.f32 %v1773, %v1817
        %v1854 = vsub.f32 %v1774, %v1817
        %v1855 = vsub.f32 %v1775, %v1820
        %v1856 = vsub.f32 %v1776, %v1820
        %v1857 = vsub.f32 %v1777, %v1823
        %v1858 = vsub.f32 %v1778, %v1823
        %v1859 = vsub.f32 %v1779, %v1826
        %v1860 = vsub.f32 %v1780, %v1826
        %v1861 = vsub.f32 %v1781, %v1829
        %v1862 = vsub.f32 %v1782, %v1829
        %v1863 = vsub.f32 %v1783, %v1832
        %v1864 = vsub.f32 %v1784, %v1832
        %v1865 = vmul.f32 %v1833, 1.442695
        %v1866 = vpow.pop %v1865
        %v1867 = vmul.f32 %v1834, 1.442695
        %v1868 = vpow.pop %v1867
        %v1869 = vmul.f32 %v1835, 1.442695
        %v1870 = vpow.pop %v1869
        %v1871 = vmul.f32 %v1836, 1.442695
        %v1872 = vpow.pop %v1871
        %v1873 = vmul.f32 %v1837, 1.442695
        %v1874 = vpow.pop %v1873
        %v1875 = vmul.f32 %v1838, 1.442695
        %v1876 = vpow.pop %v1875
        %v1877 = vmul.f32 %v1839, 1.442695
        %v1878 = vpow.pop %v1877
        %v1879 = vmul.f32 %v1840, 1.442695
        %v1880 = vpow.pop %v1879
        %v1881 = vmul.f32 %v1841, 1.442695
        %v1882 = vpow.pop %v1881
        %v1883 = vmul.f32 %v1842, 1.442695
        %v1884 = vpow.pop %v1883
        %v1885 = vmul.f32 %v1843, 1.442695
        %v1886 = vpow.pop %v1885
        %v1887 = vmul.f32 %v1844, 1.442695
        %v1888 = vpow.pop %v1887
        %v1889 = vmul.f32 %v1845, 1.442695
        %v1890 = vpow.pop %v1889
        %v1891 = vmul.f32 %v1846, 1.442695
        %v1892 = vpow.pop %v1891
        %v1893 = vmul.f32 %v1847, 1.442695
        %v1894 = vpow.pop %v1893
        %v1895 = vmul.f32 %v1848, 1.442695
        %v1896 = vpow.pop %v1895
        %v1897 = vmul.f32 %v1849, 1.442695
        %v1898 = vpow.pop %v1897
        %v1899 = vmul.f32 %v1850, 1.442695
        %v1900 = vpow.pop %v1899
        %v1901 = vmul.f32 %v1851, 1.442695
        %v1902 = vpow.pop %v1901
        %v1903 = vmul.f32 %v1852, 1.442695
        %v1904 = vpow.pop %v1903
        %v1905 = vmul.f32 %v1853, 1.442695
        %v1906 = vpow.pop %v1905
        %v1907 = vmul.f32 %v1854, 1.442695
        %v1908 = vpow.pop %v1907
        %v1909 = vmul.f32 %v1855, 1.442695
        %v1910 = vpow.pop %v1909
        %v1911 = vmul.f32 %v1856, 1.442695
        %v1912 = vpow.pop %v1911
        %v1913 = vmul.f32 %v1857, 1.442695
        %v1914 = vpow.pop %v1913
        %v1915 = vmul.f32 %v1858, 1.442695
        %v1916 = vpow.pop %v1915
        %v1917 = vmul.f32 %v1859, 1.442695
        %v1918 = vpow.pop %v1917
        %v1919 = vmul.f32 %v1860, 1.442695
        %v1920 = vpow.pop %v1919
        %v1921 = vmul.f32 %v1861, 1.442695
        %v1922 = vpow.pop %v1921
        %v1923 = vmul.f32 %v1862, 1.442695
        %v1924 = vpow.pop %v1923
        %v1925 = vmul.f32 %v1863, 1.442695
        %v1926 = vpow.pop %v1925
        %v1927 = vmul.f32 %v1864, 1.442695
        %v1928 = vpow.pop %v1927
        %v1929 = vadd.f32 %v1866, %v1868
        %1930 = vadd.xlane.f32.xlu0 %v1929
        %v1931 = vpop.xlane.xlu0 %1930
        %v1932 = vadd.f32 %v1870, %v1872
        %1933 = vadd.xlane.f32.xlu0 %v1932
        %v1934 = vpop.xlane.xlu0 %1933
        %v1935 = vadd.f32 %v1874, %v1876
        %1936 = vadd.xlane.f32.xlu0 %v1935
        %v1937 = vpop.xlane.xlu0 %1936
        %v1938 = vadd.f32 %v1878, %v1880
        %1939 = vadd.xlane.f32.xlu0 %v1938
        %v1940 = vpop.xlane.xlu0 %1939
        %v1941 = vadd.f32 %v1882, %v1884
        %1942 = vadd.xlane.f32.xlu0 %v1941
        %v1943 = vpop.xlane.xlu0 %1942
        %v1944 = vadd.f32 %v1886, %v1888
        %1945 = vadd.xlane.f32.xlu0 %v1944
        %v1946 = vpop.xlane.xlu0 %1945
        %v1947 = vadd.f32 %v1890, %v1892
        %1948 = vadd.xlane.f32.xlu0 %v1947
        %v1949 = vpop.xlane.xlu0 %1948
        %v1950 = vadd.f32 %v1894, %v1896
        %1951 = vadd.xlane.f32.xlu0 %v1950
        %v1952 = vpop.xlane.xlu0 %1951
        %v1953 = vadd.f32 %v1898, %v1900
        %1954 = vadd.xlane.f32.xlu0 %v1953
        %v1955 = vpop.xlane.xlu0 %1954
        %v1956 = vadd.f32 %v1902, %v1904
        %1957 = vadd.xlane.f32.xlu0 %v1956
        %v1958 = vpop.xlane.xlu0 %1957
        %v1959 = vadd.f32 %v1906, %v1908
        %1960 = vadd.xlane.f32.xlu0 %v1959
        %v1961 = vpop.xlane.xlu0 %1960
        %v1962 = vadd.f32 %v1910, %v1912
        %1963 = vadd.xlane.f32.xlu0 %v1962
        %v1964 = vpop.xlane.xlu0 %1963
        %v1965 = vadd.f32 %v1914, %v1916
        %1966 = vadd.xlane.f32.xlu0 %v1965
        %v1967 = vpop.xlane.xlu0 %1966
        %v1968 = vadd.f32 %v1918, %v1920
        %1969 = vadd.xlane.f32.xlu0 %v1968
        %v1970 = vpop.xlane.xlu0 %1969
        %v1971 = vadd.f32 %v1922, %v1924
        %1972 = vadd.xlane.f32.xlu0 %v1971
        %v1973 = vpop.xlane.xlu0 %1972
        %v1974 = vadd.f32 %v1926, %v1928
        %1975 = vadd.xlane.f32.xlu0 %v1974
        %v1976 = vpop.xlane.xlu0 %1975
        %v1977 = vrcp.pop %v1931
        %v1978 = vrcp.pop %v1934
        %v1979 = vrcp.pop %v1937
        %v1980 = vrcp.pop %v1940
        %v1981 = vrcp.pop %v1943
        %v1982 = vrcp.pop %v1946
        %v1983 = vrcp.pop %v1949
        %v1984 = vrcp.pop %v1952
        %v1985 = vrcp.pop %v1955
        %v1986 = vrcp.pop %v1958
        %v1987 = vrcp.pop %v1961
        %v1988 = vrcp.pop %v1964
        %v1989 = vrcp.pop %v1967
        %v1990 = vrcp.pop %v1970
        %v1991 = vrcp.pop %v1973
        %v1992 = vrcp.pop %v1976
        %v1993 = vmul.f32 %v1866, %v1977
        %v1994 = vmul.f32 %v1868, %v1977
        %v1995 = vmul.f32 %v1870, %v1978
        %v1996 = vmul.f32 %v1872, %v1978
        %v1997 = vmul.f32 %v1874, %v1979
        %v1998 = vmul.f32 %v1876, %v1979
        %v1999 = vmul.f32 %v1878, %v1980
        %v2000 = vmul.f32 %v1880, %v1980
        %v2001 = vmul.f32 %v1882, %v1981
        %v2002 = vmul.f32 %v1884, %v1981
        %v2003 = vmul.f32 %v1886, %v1982
        %v2004 = vmul.f32 %v1888, %v1982
        %v2005 = vmul.f32 %v1890, %v1983
        %v2006 = vmul.f32 %v1892, %v1983
        %v2007 = vmul.f32 %v1894, %v1984
        %v2008 = vmul.f32 %v1896, %v1984
        %v2009 = vmul.f32 %v1898, %v1985
        %v2010 = vmul.f32 %v1900, %v1985
        %v2011 = vmul.f32 %v1902, %v1986
        %v2012 = vmul.f32 %v1904, %v1986
        %v2013 = vmul.f32 %v1906, %v1987
        %v2014 = vmul.f32 %v1908, %v1987
        %v2015 = vmul.f32 %v1910, %v1988
        %v2016 = vmul.f32 %v1912, %v1988
        %v2017 = vmul.f32 %v1914, %v1989
        %v2018 = vmul.f32 %v1916, %v1989
        %v2019 = vmul.f32 %v1918, %v1990
        %v2020 = vmul.f32 %v1920, %v1990
        %v2021 = vmul.f32 %v1922, %v1991
        %v2022 = vmul.f32 %v1924, %v1991
        %v2023 = vmul.f32 %v1926, %v1992
        %v2024 = vmul.f32 %v1928, %v1992
        %v2025 = vpack.c.bf16 %v1995, %v1993
        %v2026 = vpack.c.bf16 %v1996, %v1994
        %v2027 = vpack.c.bf16 %v1999, %v1997
        %v2028 = vpack.c.bf16 %v2000, %v1998
        %v2029 = vpack.c.bf16 %v2003, %v2001
        %v2030 = vpack.c.bf16 %v2004, %v2002
        %v2031 = vpack.c.bf16 %v2007, %v2005
        %v2032 = vpack.c.bf16 %v2008, %v2006
        %v2033 = vpack.c.bf16 %v2011, %v2009
        %v2034 = vpack.c.bf16 %v2012, %v2010
        %v2035 = vpack.c.bf16 %v2015, %v2013
        %v2036 = vpack.c.bf16 %v2016, %v2014
        %v2037 = vpack.c.bf16 %v2019, %v2017
        %v2038 = vpack.c.bf16 %v2020, %v2018
        %v2039 = vpack.c.bf16 %v2023, %v2021
        %v2040 = vpack.c.bf16 %v2024, %v2022
        %2041 = vmatprep.subr.bf16.mxu0 0
        %2042 = vmatpush1.bf16.msra.mxu0 %v1253
        %2043 = vmatprep.subr.bf16.mxu0 0
        %2044 = vmatpush1.bf16.msra.mxu0 %v1254
        %2045 = vmatprep.subr.bf16.mxu0 0
        %2046 = vmatpush1.bf16.msra.mxu0 %v1255
        %2047 = vmatprep.subr.bf16.mxu0 0
        %2048 = vmatpush1.bf16.msra.mxu0 %v1256
        %2049 = vmatprep.subr.bf16.mxu0 0
        %2050 = vmatpush1.bf16.msra.mxu0 %v1257
        %2051 = vmatprep.subr.bf16.mxu0 0
        %2052 = vmatpush1.bf16.msra.mxu0 %v1258
        %2053 = vmatprep.subr.bf16.mxu0 0
        %2054 = vmatpush1.bf16.msra.mxu0 %v1259
        %2055 = vmatprep.subr.bf16.mxu0 0
        %2056 = vmatpush1.bf16.msra.mxu0 %v1260
        %2057 = vmatprep.subr.bf16.mxu0 0
        %2058 = vmatpush1.bf16.msra.mxu0 %v1261
        %2059 = vmatprep.subr.bf16.mxu0 0
        %2060 = vmatpush1.bf16.msra.mxu0 %v1262
        %2061 = vmatprep.subr.bf16.mxu0 0
        %2062 = vmatpush1.bf16.msra.mxu0 %v1263
        %2063 = vmatprep.subr.bf16.mxu0 0
        %2064 = vmatpush1.bf16.msra.mxu0 %v1264
        %2065 = vmatprep.subr.bf16.mxu0 0
        %2066 = vmatpush1.bf16.msra.mxu0 %v1265
        %2067 = vmatprep.subr.bf16.mxu0 0
        %2068 = vmatpush1.bf16.msra.mxu0 %v1266
        %2069 = vmatprep.subr.bf16.mxu0 0
        %2070 = vmatpush1.bf16.msra.mxu0 %v1267
        %2071 = vmatprep.subr.bf16.mxu0 0
        %2072 = vmatpush1.bf16.msra.mxu0 %v1268
        %2073 = vmatprep.mubr.bf16.mxu0 %v2026
        %2074 = vmatmul.mubr.bf16.gmra.mrb[0].mxu0 %v2025
        %v2075 = vpop.f32.mrb[0].mxu0
        %v2076 = vadd.f32 0.0, %v2075
        %v2077 = vpop.f32.mrb[0].mxu0
        %v2078 = vpop.f32.mrb[0].mxu0
        %v2079 = vadd.f32 0.0, %v2078
        %v2080 = vpop.f32.mrb[0].mxu0
        %2081 = vmatprep.mubr.bf16.mxu0 %v2028
        %2082 = vmatmul.mubr.bf16.gmra.mrb[0].mxu0 %v2027
        %v2083 = vpop.f32.mrb[0].mxu0
        %v2084 = vadd.f32 0.0, %v2083
        %v2085 = vpop.f32.mrb[0].mxu0
        %v2086 = vpop.f32.mrb[0].mxu0
        %v2087 = vadd.f32 0.0, %v2086
        %v2088 = vpop.f32.mrb[0].mxu0
        %2089 = vmatprep.mubr.bf16.mxu0 %v2030
        %2090 = vmatmul.mubr.bf16.gmra.mrb[0].mxu0 %v2029
        %v2091 = vpop.f32.mrb[0].mxu0
        %v2092 = vadd.f32 0.0, %v2091
        %v2093 = vpop.f32.mrb[0].mxu0
        %v2094 = vpop.f32.mrb[0].mxu0
        %v2095 = vadd.f32 0.0, %v2094
        %v2096 = vpop.f32.mrb[0].mxu0
        %2097 = vmatprep.mubr.bf16.mxu0 %v2032
        %2098 = vmatmul.mubr.bf16.gmra.mrb[0].mxu0 %v2031
        %v2099 = vpop.f32.mrb[0].mxu0
        %v2100 = vadd.f32 0.0, %v2099
        %v2101 = vpop.f32.mrb[0].mxu0
        %v2102 = vpop.f32.mrb[0].mxu0
        %v2103 = vadd.f32 0.0, %v2102
        %v2104 = vpop.f32.mrb[0].mxu0
        %2105 = vmatprep.mubr.bf16.mxu0 %v2034
        %2106 = vmatmul.mubr.bf16.gmra.mrb[0].mxu0 %v2033
        %v2107 = vpop.f32.mrb[0].mxu0
        %v2108 = vadd.f32 0.0, %v2107
        %v2109 = vpop.f32.mrb[0].mxu0
        %v2110 = vpop.f32.mrb[0].mxu0
        %v2111 = vadd.f32 0.0, %v2110
        %v2112 = vpop.f32.mrb[0].mxu0
        %2113 = vmatprep.mubr.bf16.mxu0 %v2036
        %2114 = vmatmul.mubr.bf16.gmra.mrb[0].mxu0 %v2035
        %v2115 = vpop.f32.mrb[0].mxu0
        %v2116 = vadd.f32 0.0, %v2115
        %v2117 = vpop.f32.mrb[0].mxu0
        %v2118 = vpop.f32.mrb[0].mxu0
        %v2119 = vadd.f32 0.0, %v2118
        %v2120 = vpop.f32.mrb[0].mxu0
        %2121 = vmatprep.mubr.bf16.mxu0 %v2038
        %2122 = vmatmul.mubr.bf16.gmra.mrb[0].mxu0 %v2037
        %v2123 = vpop.f32.mrb[0].mxu0
        %v2124 = vadd.f32 0.0, %v2123
        %v2125 = vpop.f32.mrb[0].mxu0
        %v2126 = vpop.f32.mrb[0].mxu0
        %v2127 = vadd.f32 0.0, %v2126
        %v2128 = vpop.f32.mrb[0].mxu0
        %2129 = vmatprep.mubr.bf16.mxu0 %v2040
        %2130 = vmatmul.mubr.bf16.gmra.mrb[0].mxu0 %v2039
        %v2131 = vpop.f32.mrb[0].mxu0
        %v2132 = vadd.f32 0.0, %v2131
        %v2133 = vpop.f32.mrb[0].mxu0
        %v2134 = vpop.f32.mrb[0].mxu0
        %v2135 = vadd.f32 0.0, %v2134
        %v2136 = vpop.f32.mrb[0].mxu0
        %2137 = vdwg.mxu0
        %2138 = vst.msk [vmem:[#allocation2] sm:$0xff] %vm1435, %v2076
        %2139 = vst.msk [vmem:[#allocation2 + $0x8] sm:$0xff] %vm1435, %v2079
        %2140 = vst.msk [vmem:[#allocation2 + $0x10] sm:$0xff] %vm1435, %v2084
        %2141 = vst.msk [vmem:[#allocation2 + $0x18] sm:$0xff] %vm1435, %v2087
        %2142 = vst.msk [vmem:[#allocation2 + $0x20] sm:$0xff] %vm1435, %v2092
        %2143 = vst.msk [vmem:[#allocation2 + $0x28] sm:$0xff] %vm1435, %v2095
        %2144 = vst.msk [vmem:[#allocation2 + $0x30] sm:$0xff] %vm1435, %v2100
        %2145 = vst.msk [vmem:[#allocation2 + $0x38] sm:$0xff] %vm1435, %v2103
        %2146 = vst.msk [vmem:[#allocation2 + $0x40] sm:$0xff] %vm1435, %v2108
        %2147 = vst.msk [vmem:[#allocation2 + $0x48] sm:$0xff] %vm1435, %v2111
        %2148 = vst.msk [vmem:[#allocation2 + $0x50] sm:$0xff] %vm1435, %v2116
        %2149 = vst.msk [vmem:[#allocation2 + $0x58] sm:$0xff] %vm1435, %v2119
        %2150 = vst.msk [vmem:[#allocation2 + $0x60] sm:$0xff] %vm1435, %v2124
        %2151 = vst.msk [vmem:[#allocation2 + $0x68] sm:$0xff] %vm1435, %v2127
        %2152 = vst.msk [vmem:[#allocation2 + $0x70] sm:$0xff] %vm1435, %v2132
        %2153 = vst.msk [vmem:[#allocation2 + $0x78] sm:$0xff] %vm1435, %v2135
        %2162 = vrot.lane.b32.xlu0 %v765, 112
        %v2163 = vpop.permute.xlu0 %2162
        %2164 = vrot.lane.b32.xlu0 %v766, 112
        %v2165 = vpop.permute.xlu0 %2164
        %2166 = vrot.lane.b32.xlu0 %v767, 112
        %v2167 = vpop.permute.xlu0 %2166
        %2168 = vrot.lane.b32.xlu0 %v768, 112
        %v2169 = vpop.permute.xlu0 %2168
        %2170 = vrot.lane.b32.xlu0 %v769, 112
        %v2171 = vpop.permute.xlu0 %2170
        %2172 = vrot.lane.b32.xlu0 %v770, 112
        %v2173 = vpop.permute.xlu0 %2172
        %2174 = vrot.lane.b32.xlu0 %v771, 112
        %v2175 = vpop.permute.xlu0 %2174
        %2176 = vrot.lane.b32.xlu0 %v772, 112
        %v2177 = vpop.permute.xlu0 %2176
        %2194 = vrot.lane.b32.xlu0 %v1005, 112
        %v2195 = vpop.permute.xlu0 %2194
        %2196 = vrot.lane.b32.xlu0 %v1006, 112
        %v2197 = vpop.permute.xlu0 %2196
        %2198 = vrot.lane.b32.xlu0 %v1007, 112
        %v2199 = vpop.permute.xlu0 %2198
        %2200 = vrot.lane.b32.xlu0 %v1008, 112
        %v2201 = vpop.permute.xlu0 %2200
        %2202 = vrot.lane.b32.xlu0 %v1009, 112
        %v2203 = vpop.permute.xlu0 %2202
        %2204 = vrot.lane.b32.xlu0 %v1010, 112
        %v2205 = vpop.permute.xlu0 %2204
        %2206 = vrot.lane.b32.xlu0 %v1011, 112
        %v2207 = vpop.permute.xlu0 %2206
        %2208 = vrot.lane.b32.xlu0 %v1012, 112
        %v2209 = vpop.permute.xlu0 %2208
        %2210 = vrot.lane.b32.xlu0 %v1013, 112
        %v2211 = vpop.permute.xlu0 %2210
        %2212 = vrot.lane.b32.xlu0 %v1014, 112
        %v2213 = vpop.permute.xlu0 %2212
        %2214 = vrot.lane.b32.xlu0 %v1015, 112
        %v2215 = vpop.permute.xlu0 %2214
        %2216 = vrot.lane.b32.xlu0 %v1016, 112
        %v2217 = vpop.permute.xlu0 %2216
        %2218 = vrot.lane.b32.xlu0 %v1017, 112
        %v2219 = vpop.permute.xlu0 %2218
        %2220 = vrot.lane.b32.xlu0 %v1018, 112
        %v2221 = vpop.permute.xlu0 %2220
        %2222 = vrot.lane.b32.xlu0 %v1019, 112
        %v2223 = vpop.permute.xlu0 %2222
        %2224 = vrot.lane.b32.xlu0 %v1020, 112
        %v2225 = vpop.permute.xlu0 %2224
        %v2227 = vsel %vm1435, %v2163, 0
        %v2230 = vsel %vm1435, %v2165, 0
        %v2233 = vsel %vm1435, %v2167, 0
        %v2236 = vsel %vm1435, %v2169, 0
        %v2239 = vsel %vm1435, %v2171, 0
        %v2242 = vsel %vm1435, %v2173, 0
        %v2245 = vsel %vm1435, %v2175, 0
        %v2248 = vsel %vm1435, %v2177, 0
        %v2251 = vsel %vm1435, %v2195, 0
        %v2254 = vsel %vm1435, %v2197, 0
        %v2257 = vsel %vm1435, %v2199, 0
        %v2260 = vsel %vm1435, %v2201, 0
        %v2263 = vsel %vm1435, %v2203, 0
        %v2266 = vsel %vm1435, %v2205, 0
        %v2269 = vsel %vm1435, %v2207, 0
        %v2272 = vsel %vm1435, %v2209, 0
        %v2275 = vsel %vm1435, %v2211, 0
        %v2278 = vsel %vm1435, %v2213, 0
        %v2281 = vsel %vm1435, %v2215, 0
        %v2284 = vsel %vm1435, %v2217, 0
        %v2287 = vsel %vm1435, %v2219, 0
        %v2290 = vsel %vm1435, %v2221, 0
        %v2293 = vsel %vm1435, %v2223, 0
        %v2296 = vsel %vm1435, %v2225, 0
        %2298 = vmatprep.subr.bf16.mxu0 0
        %2299 = vmatpush1.bf16.xpose.msra.mxu0 %v2251
        %2300 = vmatprep.subr.bf16.mxu0 0
        %2301 = vmatpush1.bf16.xpose.msra.mxu0 %v2254
        %2302 = vmatprep.subr.bf16.mxu0 0
        %2303 = vmatpush1.bf16.xpose.msra.mxu0 %v2257
        %2304 = vmatprep.subr.bf16.mxu0 0
        %2305 = vmatpush1.bf16.xpose.msra.mxu0 %v2260
        %2306 = vmatprep.subr.bf16.mxu0 0
        %2307 = vmatpush1.bf16.xpose.msra.mxu0 %v2263
        %2308 = vmatprep.subr.bf16.mxu0 0
        %2309 = vmatpush1.bf16.xpose.msra.mxu0 %v2266
        %2310 = vmatprep.subr.bf16.mxu0 0
        %2311 = vmatpush1.bf16.xpose.msra.mxu0 %v2269
        %2312 = vmatprep.subr.bf16.mxu0 0
        %2313 = vmatpush1.bf16.xpose.msra.mxu0 %v2272
        %2314 = vmatprep.subr.bf16.mxu0 0
        %2315 = vmatpush1.bf16.xpose.msra.mxu0 %v2275
        %2316 = vmatprep.subr.bf16.mxu0 0
        %2317 = vmatpush1.bf16.xpose.msra.mxu0 %v2278
        %2318 = vmatprep.subr.bf16.mxu0 0
        %2319 = vmatpush1.bf16.xpose.msra.mxu0 %v2281
        %2320 = vmatprep.subr.bf16.mxu0 0
        %2321 = vmatpush1.bf16.xpose.msra.mxu0 %v2284
        %2322 = vmatprep.subr.bf16.mxu0 0
        %2323 = vmatpush1.bf16.xpose.msra.mxu0 %v2287
        %2324 = vmatprep.subr.bf16.mxu0 0
        %2325 = vmatpush1.bf16.xpose.msra.mxu0 %v2290
        %2326 = vmatprep.subr.bf16.mxu0 0
        %2327 = vmatpush1.bf16.xpose.msra.mxu0 %v2293
        %2328 = vmatprep.subr.bf16.mxu0 0
        %2329 = vmatpush1.bf16.xpose.msra.mxu0 %v2296
        %2330 = vmatprep.mubr.bf16.mxu0 0
        %2331 = vmatmul.mubr.bf16.gmra.mrb[0].mxu0 %v2227
        %v2332 = vpop.f32.mrb[0].mxu0
        %v2333 = vadd.f32 0.0, %v2332
        %v2334 = vpop.f32.mrb[0].mxu0
        %v2335 = vadd.f32 0.0, %v2334
        %v2336 = vpop.f32.mrb[0].mxu0
        %v2337 = vadd.f32 0.0, %v2336
        %v2338 = vpop.f32.mrb[0].mxu0
        %v2339 = vadd.f32 0.0, %v2338
        %2340 = vmatprep.mubr.bf16.mxu0 0
        %2341 = vmatmul.mubr.bf16.gmra.mrb[0].mxu0 %v2230
        %v2342 = vpop.f32.mrb[0].mxu0
        %v2343 = vadd.f32 0.0, %v2342
        %v2344 = vpop.f32.mrb[0].mxu0
        %v2345 = vadd.f32 0.0, %v2344
        %v2346 = vpop.f32.mrb[0].mxu0
        %v2347 = vadd.f32 0.0, %v2346
        %v2348 = vpop.f32.mrb[0].mxu0
        %v2349 = vadd.f32 0.0, %v2348
        %2350 = vmatprep.mubr.bf16.mxu0 0
        %2351 = vmatmul.mubr.bf16.gmra.mrb[0].mxu0 %v2233
        %v2352 = vpop.f32.mrb[0].mxu0
        %v2353 = vadd.f32 0.0, %v2352
        %v2354 = vpop.f32.mrb[0].mxu0
        %v2355 = vadd.f32 0.0, %v2354
        %v2356 = vpop.f32.mrb[0].mxu0
        %v2357 = vadd.f32 0.0, %v2356
        %v2358 = vpop.f32.mrb[0].mxu0
        %v2359 = vadd.f32 0.0, %v2358
        %2360 = vmatprep.mubr.bf16.mxu0 0
        %2361 = vmatmul.mubr.bf16.gmra.mrb[0].mxu0 %v2236
        %v2362 = vpop.f32.mrb[0].mxu0
        %v2363 = vadd.f32 0.0, %v2362
        %v2364 = vpop.f32.mrb[0].mxu0
        %v2365 = vadd.f32 0.0, %v2364
        %v2366 = vpop.f32.mrb[0].mxu0
        %v2367 = vadd.f32 0.0, %v2366
        %v2368 = vpop.f32.mrb[0].mxu0
        %v2369 = vadd.f32 0.0, %v2368
        %2370 = vmatprep.mubr.bf16.mxu0 0
        %2371 = vmatmul.mubr.bf16.gmra.mrb[0].mxu0 %v2239
        %v2372 = vpop.f32.mrb[0].mxu0
        %v2373 = vadd.f32 0.0, %v2372
        %v2374 = vpop.f32.mrb[0].mxu0
        %v2375 = vadd.f32 0.0, %v2374
        %v2376 = vpop.f32.mrb[0].mxu0
        %v2377 = vadd.f32 0.0, %v2376
        %v2378 = vpop.f32.mrb[0].mxu0
        %v2379 = vadd.f32 0.0, %v2378
        %2380 = vmatprep.mubr.bf16.mxu0 0
        %2381 = vmatmul.mubr.bf16.gmra.mrb[0].mxu0 %v2242
        %v2382 = vpop.f32.mrb[0].mxu0
        %v2383 = vadd.f32 0.0, %v2382
        %v2384 = vpop.f32.mrb[0].mxu0
        %v2385 = vadd.f32 0.0, %v2384
        %v2386 = vpop.f32.mrb[0].mxu0
        %v2387 = vadd.f32 0.0, %v2386
        %v2388 = vpop.f32.mrb[0].mxu0
        %v2389 = vadd.f32 0.0, %v2388
        %2390 = vmatprep.mubr.bf16.mxu0 0
        %2391 = vmatmul.mubr.bf16.gmra.mrb[0].mxu0 %v2245
        %v2392 = vpop.f32.mrb[0].mxu0
        %v2393 = vadd.f32 0.0, %v2392
        %v2394 = vpop.f32.mrb[0].mxu0
        %v2395 = vadd.f32 0.0, %v2394
        %v2396 = vpop.f32.mrb[0].mxu0
        %v2397 = vadd.f32 0.0, %v2396
        %v2398 = vpop.f32.mrb[0].mxu0
        %v2399 = vadd.f32 0.0, %v2398
        %2400 = vmatprep.mubr.bf16.mxu0 0
        %2401 = vmatmul.mubr.bf16.gmra.mrb[0].mxu0 %v2248
        %v2402 = vpop.f32.mrb[0].mxu0
        %v2403 = vadd.f32 0.0, %v2402
        %v2404 = vpop.f32.mrb[0].mxu0
        %v2405 = vadd.f32 0.0, %v2404
        %v2406 = vpop.f32.mrb[0].mxu0
        %v2407 = vadd.f32 0.0, %v2406
        %v2408 = vpop.f32.mrb[0].mxu0
        %v2409 = vadd.f32 0.0, %v2408
        %2410 = vdwg.mxu0
        %v2411 = vrot.slane %v1434, 1
        %s2412 = vtos %v2411
        %v2413 = vstv %s2412
        %v2415 = vmul.f32 %v1402, %v2413
        %v2416 = vmul.f32 %v1403, %v2413
        %v2417 = vmul.f32 %v1404, %v2413
        %v2418 = vmul.f32 %v1405, %v2413
        %v2419 = vmul.f32 %v1406, %v2413
        %v2420 = vmul.f32 %v1407, %v2413
        %v2421 = vmul.f32 %v1408, %v2413
        %v2422 = vmul.f32 %v1409, %v2413
        %v2423 = vmul.f32 %v1410, %v2413
        %v2424 = vmul.f32 %v1411, %v2413
        %v2425 = vmul.f32 %v1412, %v2413
        %v2426 = vmul.f32 %v1413, %v2413
        %v2427 = vmul.f32 %v1414, %v2413
        %v2428 = vmul.f32 %v1415, %v2413
        %v2429 = vmul.f32 %v1416, %v2413
        %v2430 = vmul.f32 %v1417, %v2413
        %v2431 = vmul.f32 %v1418, %v2413
        %v2432 = vmul.f32 %v1419, %v2413
        %v2433 = vmul.f32 %v1420, %v2413
        %v2434 = vmul.f32 %v1421, %v2413
        %v2435 = vmul.f32 %v1422, %v2413
        %v2436 = vmul.f32 %v1423, %v2413
        %v2437 = vmul.f32 %v1424, %v2413
        %v2438 = vmul.f32 %v1425, %v2413
        %v2439 = vmul.f32 %v1426, %v2413
        %v2440 = vmul.f32 %v1427, %v2413
        %v2441 = vmul.f32 %v1428, %v2413
        %v2442 = vmul.f32 %v1429, %v2413
        %v2443 = vmul.f32 %v1430, %v2413
        %v2444 = vmul.f32 %v1431, %v2413
        %v2445 = vmul.f32 %v1432, %v2413
        %v2446 = vmul.f32 %v1433, %v2413
        %v2447 = vmul.f32 %v2415, 1.442695
        %v2448 = vpow.pop %v2447
        %v2449 = vmul.f32 %v2416, 1.442695
        %v2450 = vpow.pop %v2449
        %v2451 = vmul.f32 %v2417, 1.442695
        %v2452 = vpow.pop %v2451
        %v2453 = vmul.f32 %v2418, 1.442695
        %v2454 = vpow.pop %v2453
        %v2455 = vmul.f32 %v2419, 1.442695
        %v2456 = vpow.pop %v2455
        %v2457 = vmul.f32 %v2420, 1.442695
        %v2458 = vpow.pop %v2457
        %v2459 = vmul.f32 %v2421, 1.442695
        %v2460 = vpow.pop %v2459
        %v2461 = vmul.f32 %v2422, 1.442695
        %v2462 = vpow.pop %v2461
        %v2463 = vmul.f32 %v2423, 1.442695
        %v2464 = vpow.pop %v2463
        %v2465 = vmul.f32 %v2424, 1.442695
        %v2466 = vpow.pop %v2465
        %v2467 = vmul.f32 %v2425, 1.442695
        %v2468 = vpow.pop %v2467
        %v2469 = vmul.f32 %v2426, 1.442695
        %v2470 = vpow.pop %v2469
        %v2471 = vmul.f32 %v2427, 1.442695
        %v2472 = vpow.pop %v2471
        %v2473 = vmul.f32 %v2428, 1.442695
        %v2474 = vpow.pop %v2473
        %v2475 = vmul.f32 %v2429, 1.442695
        %v2476 = vpow.pop %v2475
        %v2477 = vmul.f32 %v2430, 1.442695
        %v2478 = vpow.pop %v2477
        %v2479 = vmul.f32 %v2431, 1.442695
        %v2480 = vpow.pop %v2479
        %v2481 = vmul.f32 %v2432, 1.442695
        %v2482 = vpow.pop %v2481
        %v2483 = vmul.f32 %v2433, 1.442695
        %v2484 = vpow.pop %v2483
        %v2485 = vmul.f32 %v2434, 1.442695
        %v2486 = vpow.pop %v2485
        %v2487 = vmul.f32 %v2435, 1.442695
        %v2488 = vpow.pop %v2487
        %v2489 = vmul.f32 %v2436, 1.442695
        %v2490 = vpow.pop %v2489
        %v2491 = vmul.f32 %v2437, 1.442695
        %v2492 = vpow.pop %v2491
        %v2493 = vmul.f32 %v2438, 1.442695
        %v2494 = vpow.pop %v2493
        %v2495 = vmul.f32 %v2439, 1.442695
        %v2496 = vpow.pop %v2495
        %v2497 = vmul.f32 %v2440, 1.442695
        %v2498 = vpow.pop %v2497
        %v2499 = vmul.f32 %v2441, 1.442695
        %v2500 = vpow.pop %v2499
        %v2501 = vmul.f32 %v2442, 1.442695
        %v2502 = vpow.pop %v2501
        %v2503 = vmul.f32 %v2443, 1.442695
        %v2504 = vpow.pop %v2503
        %v2505 = vmul.f32 %v2444, 1.442695
        %v2506 = vpow.pop %v2505
        %v2507 = vmul.f32 %v2445, 1.442695
        %v2508 = vpow.pop %v2507
        %v2509 = vmul.f32 %v2446, 1.442695
        %v2510 = vpow.pop %v2509
        %v2511 = vsel %vm1338, %v2448, 0.0
        %v2512 = vsel %vm1339, %v2450, 0.0
        %v2513 = vsel %vm1340, %v2452, 0.0
        %v2514 = vsel %vm1341, %v2454, 0.0
        %v2515 = vsel %vm1342, %v2456, 0.0
        %v2516 = vsel %vm1343, %v2458, 0.0
        %v2517 = vsel %vm1344, %v2460, 0.0
        %v2518 = vsel %vm1345, %v2462, 0.0
        %v2519 = vsel %vm1346, %v2464, 0.0
        %v2520 = vsel %vm1347, %v2466, 0.0
        %v2521 = vsel %vm1348, %v2468, 0.0
        %v2522 = vsel %vm1349, %v2470, 0.0
        %v2523 = vsel %vm1350, %v2472, 0.0
        %v2524 = vsel %vm1351, %v2474, 0.0
        %v2525 = vsel %vm1352, %v2476, 0.0
        %v2526 = vsel %vm1353, %v2478, 0.0
        %v2527 = vsel %vm1354, %v2480, 0.0
        %v2528 = vsel %vm1355, %v2482, 0.0
        %v2529 = vsel %vm1356, %v2484, 0.0
        %v2530 = vsel %vm1357, %v2486, 0.0
        %v2531 = vsel %vm1358, %v2488, 0.0
        %v2532 = vsel %vm1359, %v2490, 0.0
        %v2533 = vsel %vm1360, %v2492, 0.0
        %v2534 = vsel %vm1361, %v2494, 0.0
        %v2535 = vsel %vm1362, %v2496, 0.0
        %v2536 = vsel %vm1363, %v2498, 0.0
        %v2537 = vsel %vm1364, %v2500, 0.0
        %v2538 = vsel %vm1365, %v2502, 0.0
        %v2539 = vsel %vm1366, %v2504, 0.0
        %v2540 = vsel %vm1367, %v2506, 0.0
        %v2541 = vsel %vm1368, %v2508, 0.0
        %v2542 = vsel %vm1369, %v2510, 0.0
        %v2543 = vmul.f32 %v2333, %v2511
        %v2544 = vmul.f32 %v2335, %v2512
        %v2545 = vmul.f32 %v2337, %v2513
        %v2546 = vmul.f32 %v2339, %v2514
        %v2547 = vmul.f32 %v2343, %v2515
        %v2548 = vmul.f32 %v2345, %v2516
        %v2549 = vmul.f32 %v2347, %v2517
        %v2550 = vmul.f32 %v2349, %v2518
        %v2551 = vmul.f32 %v2353, %v2519
        %v2552 = vmul.f32 %v2355, %v2520
        %v2553 = vmul.f32 %v2357, %v2521
        %v2554 = vmul.f32 %v2359, %v2522
        %v2555 = vmul.f32 %v2363, %v2523
        %v2556 = vmul.f32 %v2365, %v2524
        %v2557 = vmul.f32 %v2367, %v2525
        %v2558 = vmul.f32 %v2369, %v2526
        %v2559 = vmul.f32 %v2373, %v2527
        %v2560 = vmul.f32 %v2375, %v2528
        %v2561 = vmul.f32 %v2377, %v2529
        %v2562 = vmul.f32 %v2379, %v2530
        %v2563 = vmul.f32 %v2383, %v2531
        %v2564 = vmul.f32 %v2385, %v2532
        %v2565 = vmul.f32 %v2387, %v2533
        %v2566 = vmul.f32 %v2389, %v2534
        %v2567 = vmul.f32 %v2393, %v2535
        %v2568 = vmul.f32 %v2395, %v2536
        %v2569 = vmul.f32 %v2397, %v2537
        %v2570 = vmul.f32 %v2399, %v2538
        %v2571 = vmul.f32 %v2403, %v2539
        %v2572 = vmul.f32 %v2405, %v2540
        %v2573 = vmul.f32 %v2407, %v2541
        %v2574 = vmul.f32 %v2409, %v2542
        %v2575 = vmax.f32 %v2543, %v2544
        %2576 = vmax.xlane.f32.xlu0 %v2575
        %v2577 = vpop.xlane.xlu0 %2576
        %v2578 = vmax.f32 %v2545, %v2546
        %2579 = vmax.xlane.f32.xlu0 %v2578
        %v2580 = vpop.xlane.xlu0 %2579
        %v2581 = vmax.f32 %v2547, %v2548
        %2582 = vmax.xlane.f32.xlu0 %v2581
        %v2583 = vpop.xlane.xlu0 %2582
        %v2584 = vmax.f32 %v2549, %v2550
        %2585 = vmax.xlane.f32.xlu0 %v2584
        %v2586 = vpop.xlane.xlu0 %2585
        %v2587 = vmax.f32 %v2551, %v2552
        %2588 = vmax.xlane.f32.xlu0 %v2587
        %v2589 = vpop.xlane.xlu0 %2588
        %v2590 = vmax.f32 %v2553, %v2554
        %2591 = vmax.xlane.f32.xlu0 %v2590
        %v2592 = vpop.xlane.xlu0 %2591
        %v2593 = vmax.f32 %v2555, %v2556
        %2594 = vmax.xlane.f32.xlu0 %v2593
        %v2595 = vpop.xlane.xlu0 %2594
        %v2596 = vmax.f32 %v2557, %v2558
        %2597 = vmax.xlane.f32.xlu0 %v2596
        %v2598 = vpop.xlane.xlu0 %2597
        %v2599 = vmax.f32 %v2559, %v2560
        %2600 = vmax.xlane.f32.xlu0 %v2599
        %v2601 = vpop.xlane.xlu0 %2600
        %v2602 = vmax.f32 %v2561, %v2562
        %2603 = vmax.xlane.f32.xlu0 %v2602
        %v2604 = vpop.xlane.xlu0 %2603
        %v2605 = vmax.f32 %v2563, %v2564
        %2606 = vmax.xlane.f32.xlu0 %v2605
        %v2607 = vpop.xlane.xlu0 %2606
        %v2608 = vmax.f32 %v2565, %v2566
        %2609 = vmax.xlane.f32.xlu0 %v2608
        %v2610 = vpop.xlane.xlu0 %2609
        %v2611 = vmax.f32 %v2567, %v2568
        %2612 = vmax.xlane.f32.xlu0 %v2611
        %v2613 = vpop.xlane.xlu0 %2612
        %v2614 = vmax.f32 %v2569, %v2570
        %2615 = vmax.xlane.f32.xlu0 %v2614
        %v2616 = vpop.xlane.xlu0 %2615
        %v2617 = vmax.f32 %v2571, %v2572
        %2618 = vmax.xlane.f32.xlu0 %v2617
        %v2619 = vpop.xlane.xlu0 %2618
        %v2620 = vmax.f32 %v2573, %v2574
        %2621 = vmax.xlane.f32.xlu0 %v2620
        %v2622 = vpop.xlane.xlu0 %2621
        %v2623 = vsub.f32 %v2543, %v2577
        %v2624 = vsub.f32 %v2544, %v2577
        %v2625 = vsub.f32 %v2545, %v2580
        %v2626 = vsub.f32 %v2546, %v2580
        %v2627 = vsub.f32 %v2547, %v2583
        %v2628 = vsub.f32 %v2548, %v2583
        %v2629 = vsub.f32 %v2549, %v2586
        %v2630 = vsub.f32 %v2550, %v2586
        %v2631 = vsub.f32 %v2551, %v2589
        %v2632 = vsub.f32 %v2552, %v2589
        %v2633 = vsub.f32 %v2553, %v2592
        %v2634 = vsub.f32 %v2554, %v2592
        %v2635 = vsub.f32 %v2555, %v2595
        %v2636 = vsub.f32 %v2556, %v2595
        %v2637 = vsub.f32 %v2557, %v2598
        %v2638 = vsub.f32 %v2558, %v2598
        %v2639 = vsub.f32 %v2559, %v2601
        %v2640 = vsub.f32 %v2560, %v2601
        %v2641 = vsub.f32 %v2561, %v2604
        %v2642 = vsub.f32 %v2562, %v2604
        %v2643 = vsub.f32 %v2563, %v2607
        %v2644 = vsub.f32 %v2564, %v2607
        %v2645 = vsub.f32 %v2565, %v2610
        %v2646 = vsub.f32 %v2566, %v2610
        %v2647 = vsub.f32 %v2567, %v2613
        %v2648 = vsub.f32 %v2568, %v2613
        %v2649 = vsub.f32 %v2569, %v2616
        %v2650 = vsub.f32 %v2570, %v2616
        %v2651 = vsub.f32 %v2571, %v2619
        %v2652 = vsub.f32 %v2572, %v2619
        %v2653 = vsub.f32 %v2573, %v2622
        %v2654 = vsub.f32 %v2574, %v2622
        %v2655 = vmul.f32 %v2623, 1.442695
        %v2656 = vpow.pop %v2655
        %v2657 = vmul.f32 %v2624, 1.442695
        %v2658 = vpow.pop %v2657
        %v2659 = vmul.f32 %v2625, 1.442695
        %v2660 = vpow.pop %v2659
        %v2661 = vmul.f32 %v2626, 1.442695
        %v2662 = vpow.pop %v2661
        %v2663 = vmul.f32 %v2627, 1.442695
        %v2664 = vpow.pop %v2663
        %v2665 = vmul.f32 %v2628, 1.442695
        %v2666 = vpow.pop %v2665
        %v2667 = vmul.f32 %v2629, 1.442695
        %v2668 = vpow.pop %v2667
        %v2669 = vmul.f32 %v2630, 1.442695
        %v2670 = vpow.pop %v2669
        %v2671 = vmul.f32 %v2631, 1.442695
        %v2672 = vpow.pop %v2671
        %v2673 = vmul.f32 %v2632, 1.442695
        %v2674 = vpow.pop %v2673
        %v2675 = vmul.f32 %v2633, 1.442695
        %v2676 = vpow.pop %v2675
        %v2677 = vmul.f32 %v2634, 1.442695
        %v2678 = vpow.pop %v2677
        %v2679 = vmul.f32 %v2635, 1.442695
        %v2680 = vpow.pop %v2679
        %v2681 = vmul.f32 %v2636, 1.442695
        %v2682 = vpow.pop %v2681
        %v2683 = vmul.f32 %v2637, 1.442695
        %v2684 = vpow.pop %v2683
        %v2685 = vmul.f32 %v2638, 1.442695
        %v2686 = vpow.pop %v2685
        %v2687 = vmul.f32 %v2639, 1.442695
        %v2688 = vpow.pop %v2687
        %v2689 = vmul.f32 %v2640, 1.442695
        %v2690 = vpow.pop %v2689
        %v2691 = vmul.f32 %v2641, 1.442695
        %v2692 = vpow.pop %v2691
        %v2693 = vmul.f32 %v2642, 1.442695
        %v2694 = vpow.pop %v2693
        %v2695 = vmul.f32 %v2643, 1.442695
        %v2696 = vpow.pop %v2695
        %v2697 = vmul.f32 %v2644, 1.442695
        %v2698 = vpow.pop %v2697
        %v2699 = vmul.f32 %v2645, 1.442695
        %v2700 = vpow.pop %v2699
        %v2701 = vmul.f32 %v2646, 1.442695
        %v2702 = vpow.pop %v2701
        %v2703 = vmul.f32 %v2647, 1.442695
        %v2704 = vpow.pop %v2703
        %v2705 = vmul.f32 %v2648, 1.442695
        %v2706 = vpow.pop %v2705
        %v2707 = vmul.f32 %v2649, 1.442695
        %v2708 = vpow.pop %v2707
        %v2709 = vmul.f32 %v2650, 1.442695
        %v2710 = vpow.pop %v2709
        %v2711 = vmul.f32 %v2651, 1.442695
        %v2712 = vpow.pop %v2711
        %v2713 = vmul.f32 %v2652, 1.442695
        %v2714 = vpow.pop %v2713
        %v2715 = vmul.f32 %v2653, 1.442695
        %v2716 = vpow.pop %v2715
        %v2717 = vmul.f32 %v2654, 1.442695
        %v2718 = vpow.pop %v2717
        %v2719 = vadd.f32 %v2656, %v2658
        %2720 = vadd.xlane.f32.xlu0 %v2719
        %v2721 = vpop.xlane.xlu0 %2720
        %v2722 = vadd.f32 %v2660, %v2662
        %2723 = vadd.xlane.f32.xlu0 %v2722
        %v2724 = vpop.xlane.xlu0 %2723
        %v2725 = vadd.f32 %v2664, %v2666
        %2726 = vadd.xlane.f32.xlu0 %v2725
        %v2727 = vpop.xlane.xlu0 %2726
        %v2728 = vadd.f32 %v2668, %v2670
        %2729 = vadd.xlane.f32.xlu0 %v2728
        %v2730 = vpop.xlane.xlu0 %2729
        %v2731 = vadd.f32 %v2672, %v2674
        %2732 = vadd.xlane.f32.xlu0 %v2731
        %v2733 = vpop.xlane.xlu0 %2732
        %v2734 = vadd.f32 %v2676, %v2678
        %2735 = vadd.xlane.f32.xlu0 %v2734
        %v2736 = vpop.xlane.xlu0 %2735
        %v2737 = vadd.f32 %v2680, %v2682
        %2738 = vadd.xlane.f32.xlu0 %v2737
        %v2739 = vpop.xlane.xlu0 %2738
        %v2740 = vadd.f32 %v2684, %v2686
        %2741 = vadd.xlane.f32.xlu0 %v2740
        %v2742 = vpop.xlane.xlu0 %2741
        %v2743 = vadd.f32 %v2688, %v2690
        %2744 = vadd.xlane.f32.xlu0 %v2743
        %v2745 = vpop.xlane.xlu0 %2744
        %v2746 = vadd.f32 %v2692, %v2694
        %2747 = vadd.xlane.f32.xlu0 %v2746
        %v2748 = vpop.xlane.xlu0 %2747
        %v2749 = vadd.f32 %v2696, %v2698
        %2750 = vadd.xlane.f32.xlu0 %v2749
        %v2751 = vpop.xlane.xlu0 %2750
        %v2752 = vadd.f32 %v2700, %v2702
        %2753 = vadd.xlane.f32.xlu0 %v2752
        %v2754 = vpop.xlane.xlu0 %2753
        %v2755 = vadd.f32 %v2704, %v2706
        %2756 = vadd.xlane.f32.xlu0 %v2755
        %v2757 = vpop.xlane.xlu0 %2756
        %v2758 = vadd.f32 %v2708, %v2710
        %2759 = vadd.xlane.f32.xlu0 %v2758
        %v2760 = vpop.xlane.xlu0 %2759
        %v2761 = vadd.f32 %v2712, %v2714
        %2762 = vadd.xlane.f32.xlu0 %v2761
        %v2763 = vpop.xlane.xlu0 %2762
        %v2764 = vadd.f32 %v2716, %v2718
        %2765 = vadd.xlane.f32.xlu0 %v2764
        %v2766 = vpop.xlane.xlu0 %2765
        %v2767 = vrcp.pop %v2721
        %v2768 = vrcp.pop %v2724
        %v2769 = vrcp.pop %v2727
        %v2770 = vrcp.pop %v2730
        %v2771 = vrcp.pop %v2733
        %v2772 = vrcp.pop %v2736
        %v2773 = vrcp.pop %v2739
        %v2774 = vrcp.pop %v2742
        %v2775 = vrcp.pop %v2745
        %v2776 = vrcp.pop %v2748
        %v2777 = vrcp.pop %v2751
        %v2778 = vrcp.pop %v2754
        %v2779 = vrcp.pop %v2757
        %v2780 = vrcp.pop %v2760
        %v2781 = vrcp.pop %v2763
        %v2782 = vrcp.pop %v2766
        %v2783 = vmul.f32 %v2656, %v2767
        %v2784 = vmul.f32 %v2658, %v2767
        %v2785 = vmul.f32 %v2660, %v2768
        %v2786 = vmul.f32 %v2662, %v2768
        %v2787 = vmul.f32 %v2664, %v2769
        %v2788 = vmul.f32 %v2666, %v2769
        %v2789 = vmul.f32 %v2668, %v2770
        %v2790 = vmul.f32 %v2670, %v2770
        %v2791 = vmul.f32 %v2672, %v2771
        %v2792 = vmul.f32 %v2674, %v2771
        %v2793 = vmul.f32 %v2676, %v2772
        %v2794 = vmul.f32 %v2678, %v2772
        %v2795 = vmul.f32 %v2680, %v2773
        %v2796 = vmul.f32 %v2682, %v2773
        %v2797 = vmul.f32 %v2684, %v2774
        %v2798 = vmul.f32 %v2686, %v2774
        %v2799 = vmul.f32 %v2688, %v2775
        %v2800 = vmul.f32 %v2690, %v2775
        %v2801 = vmul.f32 %v2692, %v2776
        %v2802 = vmul.f32 %v2694, %v2776
        %v2803 = vmul.f32 %v2696, %v2777
        %v2804 = vmul.f32 %v2698, %v2777
        %v2805 = vmul.f32 %v2700, %v2778
        %v2806 = vmul.f32 %v2702, %v2778
        %v2807 = vmul.f32 %v2704, %v2779
        %v2808 = vmul.f32 %v2706, %v2779
        %v2809 = vmul.f32 %v2708, %v2780
        %v2810 = vmul.f32 %v2710, %v2780
        %v2811 = vmul.f32 %v2712, %v2781
        %v2812 = vmul.f32 %v2714, %v2781
        %v2813 = vmul.f32 %v2716, %v2782
        %v2814 = vmul.f32 %v2718, %v2782
        %v2815 = vpack.c.bf16 %v2785, %v2783
        %v2816 = vpack.c.bf16 %v2786, %v2784
        %v2817 = vpack.c.bf16 %v2789, %v2787
        %v2818 = vpack.c.bf16 %v2790, %v2788
        %v2819 = vpack.c.bf16 %v2793, %v2791
        %v2820 = vpack.c.bf16 %v2794, %v2792
        %v2821 = vpack.c.bf16 %v2797, %v2795
        %v2822 = vpack.c.bf16 %v2798, %v2796
        %v2823 = vpack.c.bf16 %v2801, %v2799
        %v2824 = vpack.c.bf16 %v2802, %v2800
        %v2825 = vpack.c.bf16 %v2805, %v2803
        %v2826 = vpack.c.bf16 %v2806, %v2804
        %v2827 = vpack.c.bf16 %v2809, %v2807
        %v2828 = vpack.c.bf16 %v2810, %v2808
        %v2829 = vpack.c.bf16 %v2813, %v2811
        %v2830 = vpack.c.bf16 %v2814, %v2812
        %2847 = vrot.lane.b32.xlu0 %v1253, 112
        %v2848 = vpop.permute.xlu0 %2847
        %2849 = vrot.lane.b32.xlu0 %v1254, 112
        %v2850 = vpop.permute.xlu0 %2849
        %2851 = vrot.lane.b32.xlu0 %v1255, 112
        %v2852 = vpop.permute.xlu0 %2851
        %2853 = vrot.lane.b32.xlu0 %v1256, 112
        %v2854 = vpop.permute.xlu0 %2853
        %2855 = vrot.lane.b32.xlu0 %v1257, 112
        %v2856 = vpop.permute.xlu0 %2855
        %2857 = vrot.lane.b32.xlu0 %v1258, 112
        %v2858 = vpop.permute.xlu0 %2857
        %2859 = vrot.lane.b32.xlu0 %v1259, 112
        %v2860 = vpop.permute.xlu0 %2859
        %2861 = vrot.lane.b32.xlu0 %v1260, 112
        %v2862 = vpop.permute.xlu0 %2861
        %2863 = vrot.lane.b32.xlu0 %v1261, 112
        %v2864 = vpop.permute.xlu0 %2863
        %2865 = vrot.lane.b32.xlu0 %v1262, 112
        %v2866 = vpop.permute.xlu0 %2865
        %2867 = vrot.lane.b32.xlu0 %v1263, 112
        %v2868 = vpop.permute.xlu0 %2867
        %2869 = vrot.lane.b32.xlu0 %v1264, 112
        %v2870 = vpop.permute.xlu0 %2869
        %2871 = vrot.lane.b32.xlu0 %v1265, 112
        %v2872 = vpop.permute.xlu0 %2871
        %2873 = vrot.lane.b32.xlu0 %v1266, 112
        %v2874 = vpop.permute.xlu0 %2873
        %2875 = vrot.lane.b32.xlu0 %v1267, 112
        %v2876 = vpop.permute.xlu0 %2875
        %2877 = vrot.lane.b32.xlu0 %v1268, 112
        %v2878 = vpop.permute.xlu0 %2877
        %2895 = vmatprep.subr.bf16.mxu0 0
        %2896 = vmatpush1.bf16.msra.mxu0 %v2848
        %2897 = vmatprep.subr.bf16.mxu0 0
        %2898 = vmatpush1.bf16.msra.mxu0 %v2850
        %2899 = vmatprep.subr.bf16.mxu0 0
        %2900 = vmatpush1.bf16.msra.mxu0 %v2852
        %2901 = vmatprep.subr.bf16.mxu0 0
        %2902 = vmatpush1.bf16.msra.mxu0 %v2854
        %2903 = vmatprep.subr.bf16.mxu0 0
        %2904 = vmatpush1.bf16.msra.mxu0 %v2856
        %2905 = vmatprep.subr.bf16.mxu0 0
        %2906 = vmatpush1.bf16.msra.mxu0 %v2858
        %2907 = vmatprep.subr.bf16.mxu0 0
        %2908 = vmatpush1.bf16.msra.mxu0 %v2860
        %2909 = vmatprep.subr.bf16.mxu0 0
        %2910 = vmatpush1.bf16.msra.mxu0 %v2862
        %2911 = vmatprep.subr.bf16.mxu0 0
        %2912 = vmatpush1.bf16.msra.mxu0 %v2864
        %2913 = vmatprep.subr.bf16.mxu0 0
        %2914 = vmatpush1.bf16.msra.mxu0 %v2866
        %2915 = vmatprep.subr.bf16.mxu0 0
        %2916 = vmatpush1.bf16.msra.mxu0 %v2868
        %2917 = vmatprep.subr.bf16.mxu0 0
        %2918 = vmatpush1.bf16.msra.mxu0 %v2870
        %2919 = vmatprep.subr.bf16.mxu0 0
        %2920 = vmatpush1.bf16.msra.mxu0 %v2872
        %2921 = vmatprep.subr.bf16.mxu0 0
        %2922 = vmatpush1.bf16.msra.mxu0 %v2874
        %2923 = vmatprep.subr.bf16.mxu0 0
        %2924 = vmatpush1.bf16.msra.mxu0 %v2876
        %2925 = vmatprep.subr.bf16.mxu0 0
        %2926 = vmatpush1.bf16.msra.mxu0 %v2878
        %2927 = vmatprep.mubr.bf16.mxu0 %v2816
        %2928 = vmatmul.mubr.bf16.gmra.mrb[0].mxu0 %v2815
        %v2929 = vpop.f32.mrb[0].mxu0
        %v2930 = vadd.f32 0.0, %v2929
        %v2931 = vpop.f32.mrb[0].mxu0
        %v2932 = vpop.f32.mrb[0].mxu0
        %v2933 = vadd.f32 0.0, %v2932
        %v2934 = vpop.f32.mrb[0].mxu0
        %2935 = vmatprep.mubr.bf16.mxu0 %v2818
        %2936 = vmatmul.mubr.bf16.gmra.mrb[0].mxu0 %v2817
        %v2937 = vpop.f32.mrb[0].mxu0
        %v2938 = vadd.f32 0.0, %v2937
        %v2939 = vpop.f32.mrb[0].mxu0
        %v2940 = vpop.f32.mrb[0].mxu0
        %v2941 = vadd.f32 0.0, %v2940
        %v2942 = vpop.f32.mrb[0].mxu0
        %2943 = vmatprep.mubr.bf16.mxu0 %v2820
        %2944 = vmatmul.mubr.bf16.gmra.mrb[0].mxu0 %v2819
        %v2945 = vpop.f32.mrb[0].mxu0
        %v2946 = vadd.f32 0.0, %v2945
        %v2947 = vpop.f32.mrb[0].mxu0
        %v2948 = vpop.f32.mrb[0].mxu0
        %v2949 = vadd.f32 0.0, %v2948
        %v2950 = vpop.f32.mrb[0].mxu0
        %2951 = vmatprep.mubr.bf16.mxu0 %v2822
        %2952 = vmatmul.mubr.bf16.gmra.mrb[0].mxu0 %v2821
        %v2953 = vpop.f32.mrb[0].mxu0
        %v2954 = vadd.f32 0.0, %v2953
        %v2955 = vpop.f32.mrb[0].mxu0
        %v2956 = vpop.f32.mrb[0].mxu0
        %v2957 = vadd.f32 0.0, %v2956
        %v2958 = vpop.f32.mrb[0].mxu0
        %2959 = vmatprep.mubr.bf16.mxu0 %v2824
        %2960 = vmatmul.mubr.bf16.gmra.mrb[0].mxu0 %v2823
        %v2961 = vpop.f32.mrb[0].mxu0
        %v2962 = vadd.f32 0.0, %v2961
        %v2963 = vpop.f32.mrb[0].mxu0
        %v2964 = vpop.f32.mrb[0].mxu0
        %v2965 = vadd.f32 0.0, %v2964
        %v2966 = vpop.f32.mrb[0].mxu0
        %2967 = vmatprep.mubr.bf16.mxu0 %v2826
        %2968 = vmatmul.mubr.bf16.gmra.mrb[0].mxu0 %v2825
        %v2969 = vpop.f32.mrb[0].mxu0
        %v2970 = vadd.f32 0.0, %v2969
        %v2971 = vpop.f32.mrb[0].mxu0
        %v2972 = vpop.f32.mrb[0].mxu0
        %v2973 = vadd.f32 0.0, %v2972
        %v2974 = vpop.f32.mrb[0].mxu0
        %2975 = vmatprep.mubr.bf16.mxu0 %v2828
        %2976 = vmatmul.mubr.bf16.gmra.mrb[0].mxu0 %v2827
        %v2977 = vpop.f32.mrb[0].mxu0
        %v2978 = vadd.f32 0.0, %v2977
        %v2979 = vpop.f32.mrb[0].mxu0
        %v2980 = vpop.f32.mrb[0].mxu0
        %v2981 = vadd.f32 0.0, %v2980
        %v2982 = vpop.f32.mrb[0].mxu0
        %2983 = vmatprep.mubr.bf16.mxu0 %v2830
        %2984 = vmatmul.mubr.bf16.gmra.mrb[0].mxu0 %v2829
        %v2985 = vpop.f32.mrb[0].mxu0
        %v2986 = vadd.f32 0.0, %v2985
        %v2987 = vpop.f32.mrb[0].mxu0
        %v2988 = vpop.f32.mrb[0].mxu0
        %v2989 = vadd.f32 0.0, %v2988
        %v2990 = vpop.f32.mrb[0].mxu0
        %2991 = vdwg.mxu0
        %3008 = vrot.lane.b32.xlu0 %v2930, 16
        %v3009 = vpop.permute.xlu0 %3008
        %3010 = vrot.lane.b32.xlu0 %v2933, 16
        %v3011 = vpop.permute.xlu0 %3010
        %3012 = vrot.lane.b32.xlu0 %v2938, 16
        %v3013 = vpop.permute.xlu0 %3012
        %3014 = vrot.lane.b32.xlu0 %v2941, 16
        %v3015 = vpop.permute.xlu0 %3014
        %3016 = vrot.lane.b32.xlu0 %v2946, 16
        %v3017 = vpop.permute.xlu0 %3016
        %3018 = vrot.lane.b32.xlu0 %v2949, 16
        %v3019 = vpop.permute.xlu0 %3018
        %3020 = vrot.lane.b32.xlu0 %v2954, 16
        %v3021 = vpop.permute.xlu0 %3020
        %3022 = vrot.lane.b32.xlu0 %v2957, 16
        %v3023 = vpop.permute.xlu0 %3022
        %3024 = vrot.lane.b32.xlu0 %v2962, 16
        %v3025 = vpop.permute.xlu0 %3024
        %3026 = vrot.lane.b32.xlu0 %v2965, 16
        %v3027 = vpop.permute.xlu0 %3026
        %3028 = vrot.lane.b32.xlu0 %v2970, 16
        %v3029 = vpop.permute.xlu0 %3028
        %3030 = vrot.lane.b32.xlu0 %v2973, 16
        %v3031 = vpop.permute.xlu0 %3030
        %3032 = vrot.lane.b32.xlu0 %v2978, 16
        %v3033 = vpop.permute.xlu0 %3032
        %3034 = vrot.lane.b32.xlu0 %v2981, 16
        %v3035 = vpop.permute.xlu0 %3034
        %3036 = vrot.lane.b32.xlu0 %v2986, 16
        %v3037 = vpop.permute.xlu0 %3036
        %3038 = vrot.lane.b32.xlu0 %v2989, 16
        %v3039 = vpop.permute.xlu0 %3038
        %vm3056 = vcmask 261248
        %3057 = vst.msk [vmem:[#allocation2] sm:$0xff] %vm3056, %v3009
        %3058 = vst.msk [vmem:[#allocation2 + $0x8] sm:$0xff] %vm3056, %v3011
        %3059 = vst.msk [vmem:[#allocation2 + $0x10] sm:$0xff] %vm3056, %v3013
        %3060 = vst.msk [vmem:[#allocation2 + $0x18] sm:$0xff] %vm3056, %v3015
        %3061 = vst.msk [vmem:[#allocation2 + $0x20] sm:$0xff] %vm3056, %v3017
        %3062 = vst.msk [vmem:[#allocation2 + $0x28] sm:$0xff] %vm3056, %v3019
        %3063 = vst.msk [vmem:[#allocation2 + $0x30] sm:$0xff] %vm3056, %v3021
        %3064 = vst.msk [vmem:[#allocation2 + $0x38] sm:$0xff] %vm3056, %v3023
        %3065 = vst.msk [vmem:[#allocation2 + $0x40] sm:$0xff] %vm3056, %v3025
        %3066 = vst.msk [vmem:[#allocation2 + $0x48] sm:$0xff] %vm3056, %v3027
        %3067 = vst.msk [vmem:[#allocation2 + $0x50] sm:$0xff] %vm3056, %v3029
        %3068 = vst.msk [vmem:[#allocation2 + $0x58] sm:$0xff] %vm3056, %v3031
        %3069 = vst.msk [vmem:[#allocation2 + $0x60] sm:$0xff] %vm3056, %v3033
        %3070 = vst.msk [vmem:[#allocation2 + $0x68] sm:$0xff] %vm3056, %v3035
        %3071 = vst.msk [vmem:[#allocation2 + $0x70] sm:$0xff] %vm3056, %v3037
        %3072 = vst.msk [vmem:[#allocation2 + $0x78] sm:$0xff] %vm3056, %v3039
        %3073 = vrot.lane.b32.xlu0 %v765, 96
        %v3074 = vpop.permute.xlu0 %3073
        %3075 = vrot.lane.b32.xlu0 %v766, 96
        %v3076 = vpop.permute.xlu0 %3075
        %3077 = vrot.lane.b32.xlu0 %v767, 96
        %v3078 = vpop.permute.xlu0 %3077
        %3079 = vrot.lane.b32.xlu0 %v768, 96
        %v3080 = vpop.permute.xlu0 %3079
        %3081 = vrot.lane.b32.xlu0 %v769, 96
        %v3082 = vpop.permute.xlu0 %3081
        %3083 = vrot.lane.b32.xlu0 %v770, 96
        %v3084 = vpop.permute.xlu0 %3083
        %3085 = vrot.lane.b32.xlu0 %v771, 96
        %v3086 = vpop.permute.xlu0 %3085
        %3087 = vrot.lane.b32.xlu0 %v772, 96
        %v3088 = vpop.permute.xlu0 %3087
        %3089 = vrot.lane.b32.xlu0 %v1005, 96
        %v3090 = vpop.permute.xlu0 %3089
        %3091 = vrot.lane.b32.xlu0 %v1006, 96
        %v3092 = vpop.permute.xlu0 %3091
        %3093 = vrot.lane.b32.xlu0 %v1007, 96
        %v3094 = vpop.permute.xlu0 %3093
        %3095 = vrot.lane.b32.xlu0 %v1008, 96
        %v3096 = vpop.permute.xlu0 %3095
        %3097 = vrot.lane.b32.xlu0 %v1009, 96
        %v3098 = vpop.permute.xlu0 %3097
        %3099 = vrot.lane.b32.xlu0 %v1010, 96
        %v3100 = vpop.permute.xlu0 %3099
        %3101 = vrot.lane.b32.xlu0 %v1011, 96
        %v3102 = vpop.permute.xlu0 %3101
        %3103 = vrot.lane.b32.xlu0 %v1012, 96
        %v3104 = vpop.permute.xlu0 %3103
        %3105 = vrot.lane.b32.xlu0 %v1013, 96
        %v3106 = vpop.permute.xlu0 %3105
        %3107 = vrot.lane.b32.xlu0 %v1014, 96
        %v3108 = vpop.permute.xlu0 %3107
        %3109 = vrot.lane.b32.xlu0 %v1015, 96
        %v3110 = vpop.permute.xlu0 %3109
        %3111 = vrot.lane.b32.xlu0 %v1016, 96
        %v3112 = vpop.permute.xlu0 %3111
        %3113 = vrot.lane.b32.xlu0 %v1017, 96
        %v3114 = vpop.permute.xlu0 %3113
        %3115 = vrot.lane.b32.xlu0 %v1018, 96
        %v3116 = vpop.permute.xlu0 %3115
        %3117 = vrot.lane.b32.xlu0 %v1019, 96
        %v3118 = vpop.permute.xlu0 %3117
        %3119 = vrot.lane.b32.xlu0 %v1020, 96
        %v3120 = vpop.permute.xlu0 %3119
        %v3122 = vsel %vm1435, %v3074, 0
        %v3125 = vsel %vm1435, %v3076, 0
        %v3128 = vsel %vm1435, %v3078, 0
        %v3131 = vsel %vm1435, %v3080, 0
        %v3134 = vsel %vm1435, %v3082, 0
        %v3137 = vsel %vm1435, %v3084, 0
        %v3140 = vsel %vm1435, %v3086, 0
        %v3143 = vsel %vm1435, %v3088, 0
        %v3146 = vsel %vm1435, %v3090, 0
        %v3149 = vsel %vm1435, %v3092, 0
        %v3152 = vsel %vm1435, %v3094, 0
        %v3155 = vsel %vm1435, %v3096, 0
        %v3158 = vsel %vm1435, %v3098, 0
        %v3161 = vsel %vm1435, %v3100, 0
        %v3164 = vsel %vm1435, %v3102, 0
        %v3167 = vsel %vm1435, %v3104, 0
        %v3170 = vsel %vm1435, %v3106, 0
        %v3173 = vsel %vm1435, %v3108, 0
        %v3176 = vsel %vm1435, %v3110, 0
        %v3179 = vsel %vm1435, %v3112, 0
        %v3182 = vsel %vm1435, %v3114, 0
        %v3185 = vsel %vm1435, %v3116, 0
        %v3188 = vsel %vm1435, %v3118, 0
        %v3191 = vsel %vm1435, %v3120, 0
        %3193 = vmatprep.subr.bf16.mxu0 0
        %3194 = vmatpush1.bf16.xpose.msra.mxu0 %v3146
        %3195 = vmatprep.subr.bf16.mxu0 0
        %3196 = vmatpush1.bf16.xpose.msra.mxu0 %v3149
        %3197 = vmatprep.subr.bf16.mxu0 0
        %3198 = vmatpush1.bf16.xpose.msra.mxu0 %v3152
        %3199 = vmatprep.subr.bf16.mxu0 0
        %3200 = vmatpush1.bf16.xpose.msra.mxu0 %v3155
        %3201 = vmatprep.subr.bf16.mxu0 0
        %3202 = vmatpush1.bf16.xpose.msra.mxu0 %v3158
        %3203 = vmatprep.subr.bf16.mxu0 0
        %3204 = vmatpush1.bf16.xpose.msra.mxu0 %v3161
        %3205 = vmatprep.subr.bf16.mxu0 0
        %3206 = vmatpush1.bf16.xpose.msra.mxu0 %v3164
        %3207 = vmatprep.subr.bf16.mxu0 0
        %3208 = vmatpush1.bf16.xpose.msra.mxu0 %v3167
        %3209 = vmatprep.subr.bf16.mxu0 0
        %3210 = vmatpush1.bf16.xpose.msra.mxu0 %v3170
        %3211 = vmatprep.subr.bf16.mxu0 0
        %3212 = vmatpush1.bf16.xpose.msra.mxu0 %v3173
        %3213 = vmatprep.subr.bf16.mxu0 0
        %3214 = vmatpush1.bf16.xpose.msra.mxu0 %v3176
        %3215 = vmatprep.subr.bf16.mxu0 0
        %3216 = vmatpush1.bf16.xpose.msra.mxu0 %v3179
        %3217 = vmatprep.subr.bf16.mxu0 0
        %3218 = vmatpush1.bf16.xpose.msra.mxu0 %v3182
        %3219 = vmatprep.subr.bf16.mxu0 0
        %3220 = vmatpush1.bf16.xpose.msra.mxu0 %v3185
        %3221 = vmatprep.subr.bf16.mxu0 0
        %3222 = vmatpush1.bf16.xpose.msra.mxu0 %v3188
        %3223 = vmatprep.subr.bf16.mxu0 0
        %3224 = vmatpush1.bf16.xpose.msra.mxu0 %v3191
        %3225 = vmatprep.mubr.bf16.mxu0 0
        %3226 = vmatmul.mubr.bf16.gmra.mrb[0].mxu0 %v3122
        %v3227 = vpop.f32.mrb[0].mxu0
        %v3228 = vadd.f32 0.0, %v3227
        %v3229 = vpop.f32.mrb[0].mxu0
        %v3230 = vadd.f32 0.0, %v3229
        %v3231 = vpop.f32.mrb[0].mxu0
        %v3232 = vadd.f32 0.0, %v3231
        %v3233 = vpop.f32.mrb[0].mxu0
        %v3234 = vadd.f32 0.0, %v3233
        %3235 = vmatprep.mubr.bf16.mxu0 0
        %3236 = vmatmul.mubr.bf16.gmra.mrb[0].mxu0 %v3125
        %v3237 = vpop.f32.mrb[0].mxu0
        %v3238 = vadd.f32 0.0, %v3237
        %v3239 = vpop.f32.mrb[0].mxu0
        %v3240 = vadd.f32 0.0, %v3239
        %v3241 = vpop.f32.mrb[0].mxu0
        %v3242 = vadd.f32 0.0, %v3241
        %v3243 = vpop.f32.mrb[0].mxu0
        %v3244 = vadd.f32 0.0, %v3243
        %3245 = vmatprep.mubr.bf16.mxu0 0
        %3246 = vmatmul.mubr.bf16.gmra.mrb[0].mxu0 %v3128
        %v3247 = vpop.f32.mrb[0].mxu0
        %v3248 = vadd.f32 0.0, %v3247
        %v3249 = vpop.f32.mrb[0].mxu0
        %v3250 = vadd.f32 0.0, %v3249
        %v3251 = vpop.f32.mrb[0].mxu0
        %v3252 = vadd.f32 0.0, %v3251
        %v3253 = vpop.f32.mrb[0].mxu0
        %v3254 = vadd.f32 0.0, %v3253
        %3255 = vmatprep.mubr.bf16.mxu0 0
        %3256 = vmatmul.mubr.bf16.gmra.mrb[0].mxu0 %v3131
        %v3257 = vpop.f32.mrb[0].mxu0
        %v3258 = vadd.f32 0.0, %v3257
        %v3259 = vpop.f32.mrb[0].mxu0
        %v3260 = vadd.f32 0.0, %v3259
        %v3261 = vpop.f32.mrb[0].mxu0
        %v3262 = vadd.f32 0.0, %v3261
        %v3263 = vpop.f32.mrb[0].mxu0
        %v3264 = vadd.f32 0.0, %v3263
        %3265 = vmatprep.mubr.bf16.mxu0 0
        %3266 = vmatmul.mubr.bf16.gmra.mrb[0].mxu0 %v3134
        %v3267 = vpop.f32.mrb[0].mxu0
        %v3268 = vadd.f32 0.0, %v3267
        %v3269 = vpop.f32.mrb[0].mxu0
        %v3270 = vadd.f32 0.0, %v3269
        %v3271 = vpop.f32.mrb[0].mxu0
        %v3272 = vadd.f32 0.0, %v3271
        %v3273 = vpop.f32.mrb[0].mxu0
        %v3274 = vadd.f32 0.0, %v3273
        %3275 = vmatprep.mubr.bf16.mxu0 0
        %3276 = vmatmul.mubr.bf16.gmra.mrb[0].mxu0 %v3137
        %v3277 = vpop.f32.mrb[0].mxu0
        %v3278 = vadd.f32 0.0, %v3277
        %v3279 = vpop.f32.mrb[0].mxu0
        %v3280 = vadd.f32 0.0, %v3279
        %v3281 = vpop.f32.mrb[0].mxu0
        %v3282 = vadd.f32 0.0, %v3281
        %v3283 = vpop.f32.mrb[0].mxu0
        %v3284 = vadd.f32 0.0, %v3283
        %3285 = vmatprep.mubr.bf16.mxu0 0
        %3286 = vmatmul.mubr.bf16.gmra.mrb[0].mxu0 %v3140
        %v3287 = vpop.f32.mrb[0].mxu0
        %v3288 = vadd.f32 0.0, %v3287
        %v3289 = vpop.f32.mrb[0].mxu0
        %v3290 = vadd.f32 0.0, %v3289
        %v3291 = vpop.f32.mrb[0].mxu0
        %v3292 = vadd.f32 0.0, %v3291
        %v3293 = vpop.f32.mrb[0].mxu0
        %v3294 = vadd.f32 0.0, %v3293
        %3295 = vmatprep.mubr.bf16.mxu0 0
        %3296 = vmatmul.mubr.bf16.gmra.mrb[0].mxu0 %v3143
        %v3297 = vpop.f32.mrb[0].mxu0
        %v3298 = vadd.f32 0.0, %v3297
        %v3299 = vpop.f32.mrb[0].mxu0
        %v3300 = vadd.f32 0.0, %v3299
        %v3301 = vpop.f32.mrb[0].mxu0
        %v3302 = vadd.f32 0.0, %v3301
        %v3303 = vpop.f32.mrb[0].mxu0
        %v3304 = vadd.f32 0.0, %v3303
        %3305 = vdwg.mxu0
        %v3306 = vrot.slane %v1434, 2
        %s3307 = vtos %v3306
        %v3308 = vstv %s3307
        %v3310 = vmul.f32 %v1402, %v3308
        %v3311 = vmul.f32 %v1403, %v3308
        %v3312 = vmul.f32 %v1404, %v3308
        %v3313 = vmul.f32 %v1405, %v3308
        %v3314 = vmul.f32 %v1406, %v3308
        %v3315 = vmul.f32 %v1407, %v3308
        %v3316 = vmul.f32 %v1408, %v3308
        %v3317 = vmul.f32 %v1409, %v3308
        %v3318 = vmul.f32 %v1410, %v3308
        %v3319 = vmul.f32 %v1411, %v3308
        %v3320 = vmul.f32 %v1412, %v3308
        %v3321 = vmul.f32 %v1413, %v3308
        %v3322 = vmul.f32 %v1414, %v3308
        %v3323 = vmul.f32 %v1415, %v3308
        %v3324 = vmul.f32 %v1416, %v3308
        %v3325 = vmul.f32 %v1417, %v3308
        %v3326 = vmul.f32 %v1418, %v3308
        %v3327 = vmul.f32 %v1419, %v3308
        %v3328 = vmul.f32 %v1420, %v3308
        %v3329 = vmul.f32 %v1421, %v3308
        %v3330 = vmul.f32 %v1422, %v3308
        %v3331 = vmul.f32 %v1423, %v3308
        %v3332 = vmul.f32 %v1424, %v3308
        %v3333 = vmul.f32 %v1425, %v3308
        %v3334 = vmul.f32 %v1426, %v3308
        %v3335 = vmul.f32 %v1427, %v3308
        %v3336 = vmul.f32 %v1428, %v3308
        %v3337 = vmul.f32 %v1429, %v3308
        %v3338 = vmul.f32 %v1430, %v3308
        %v3339 = vmul.f32 %v1431, %v3308
        %v3340 = vmul.f32 %v1432, %v3308
        %v3341 = vmul.f32 %v1433, %v3308
        %v3342 = vmul.f32 %v3310, 1.442695
        %v3343 = vpow.pop %v3342
        %v3344 = vmul.f32 %v3311, 1.442695
        %v3345 = vpow.pop %v3344
        %v3346 = vmul.f32 %v3312, 1.442695
        %v3347 = vpow.pop %v3346
        %v3348 = vmul.f32 %v3313, 1.442695
        %v3349 = vpow.pop %v3348
        %v3350 = vmul.f32 %v3314, 1.442695
        %v3351 = vpow.pop %v3350
        %v3352 = vmul.f32 %v3315, 1.442695
        %v3353 = vpow.pop %v3352
        %v3354 = vmul.f32 %v3316, 1.442695
        %v3355 = vpow.pop %v3354
        %v3356 = vmul.f32 %v3317, 1.442695
        %v3357 = vpow.pop %v3356
        %v3358 = vmul.f32 %v3318, 1.442695
        %v3359 = vpow.pop %v3358
        %v3360 = vmul.f32 %v3319, 1.442695
        %v3361 = vpow.pop %v3360
        %v3362 = vmul.f32 %v3320, 1.442695
        %v3363 = vpow.pop %v3362
        %v3364 = vmul.f32 %v3321, 1.442695
        %v3365 = vpow.pop %v3364
        %v3366 = vmul.f32 %v3322, 1.442695
        %v3367 = vpow.pop %v3366
        %v3368 = vmul.f32 %v3323, 1.442695
        %v3369 = vpow.pop %v3368
        %v3370 = vmul.f32 %v3324, 1.442695
        %v3371 = vpow.pop %v3370
        %v3372 = vmul.f32 %v3325, 1.442695
        %v3373 = vpow.pop %v3372
        %v3374 = vmul.f32 %v3326, 1.442695
        %v3375 = vpow.pop %v3374
        %v3376 = vmul.f32 %v3327, 1.442695
        %v3377 = vpow.pop %v3376
        %v3378 = vmul.f32 %v3328, 1.442695
        %v3379 = vpow.pop %v3378
        %v3380 = vmul.f32 %v3329, 1.442695
        %v3381 = vpow.pop %v3380
        %v3382 = vmul.f32 %v3330, 1.442695
        %v3383 = vpow.pop %v3382
        %v3384 = vmul.f32 %v3331, 1.442695
        %v3385 = vpow.pop %v3384
        %v3386 = vmul.f32 %v3332, 1.442695
        %v3387 = vpow.pop %v3386
        %v3388 = vmul.f32 %v3333, 1.442695
        %v3389 = vpow.pop %v3388
        %v3390 = vmul.f32 %v3334, 1.442695
        %v3391 = vpow.pop %v3390
        %v3392 = vmul.f32 %v3335, 1.442695
        %v3393 = vpow.pop %v3392
        %v3394 = vmul.f32 %v3336, 1.442695
        %v3395 = vpow.pop %v3394
        %v3396 = vmul.f32 %v3337, 1.442695
        %v3397 = vpow.pop %v3396
        %v3398 = vmul.f32 %v3338, 1.442695
        %v3399 = vpow.pop %v3398
        %v3400 = vmul.f32 %v3339, 1.442695
        %v3401 = vpow.pop %v3400
        %v3402 = vmul.f32 %v3340, 1.442695
        %v3403 = vpow.pop %v3402
        %v3404 = vmul.f32 %v3341, 1.442695
        %v3405 = vpow.pop %v3404
        %v3406 = vsel %vm1338, %v3343, 0.0
        %v3407 = vsel %vm1339, %v3345, 0.0
        %v3408 = vsel %vm1340, %v3347, 0.0
        %v3409 = vsel %vm1341, %v3349, 0.0
        %v3410 = vsel %vm1342, %v3351, 0.0
        %v3411 = vsel %vm1343, %v3353, 0.0
        %v3412 = vsel %vm1344, %v3355, 0.0
        %v3413 = vsel %vm1345, %v3357, 0.0
        %v3414 = vsel %vm1346, %v3359, 0.0
        %v3415 = vsel %vm1347, %v3361, 0.0
        %v3416 = vsel %vm1348, %v3363, 0.0
        %v3417 = vsel %vm1349, %v3365, 0.0
        %v3418 = vsel %vm1350, %v3367, 0.0
        %v3419 = vsel %vm1351, %v3369, 0.0
        %v3420 = vsel %vm1352, %v3371, 0.0
        %v3421 = vsel %vm1353, %v3373, 0.0
        %v3422 = vsel %vm1354, %v3375, 0.0
        %v3423 = vsel %vm1355, %v3377, 0.0
        %v3424 = vsel %vm1356, %v3379, 0.0
        %v3425 = vsel %vm1357, %v3381, 0.0
        %v3426 = vsel %vm1358, %v3383, 0.0
        %v3427 = vsel %vm1359, %v3385, 0.0
        %v3428 = vsel %vm1360, %v3387, 0.0
        %v3429 = vsel %vm1361, %v3389, 0.0
        %v3430 = vsel %vm1362, %v3391, 0.0
        %v3431 = vsel %vm1363, %v3393, 0.0
        %v3432 = vsel %vm1364, %v3395, 0.0
        %v3433 = vsel %vm1365, %v3397, 0.0
        %v3434 = vsel %vm1366, %v3399, 0.0
        %v3435 = vsel %vm1367, %v3401, 0.0
        %v3436 = vsel %vm1368, %v3403, 0.0
        %v3437 = vsel %vm1369, %v3405, 0.0
        %v3438 = vmul.f32 %v3228, %v3406
        %v3439 = vmul.f32 %v3230, %v3407
        %v3440 = vmul.f32 %v3232, %v3408
        %v3441 = vmul.f32 %v3234, %v3409
        %v3442 = vmul.f32 %v3238, %v3410
        %v3443 = vmul.f32 %v3240, %v3411
        %v3444 = vmul.f32 %v3242, %v3412
        %v3445 = vmul.f32 %v3244, %v3413
        %v3446 = vmul.f32 %v3248, %v3414
        %v3447 = vmul.f32 %v3250, %v3415
        %v3448 = vmul.f32 %v3252, %v3416
        %v3449 = vmul.f32 %v3254, %v3417
        %v3450 = vmul.f32 %v3258, %v3418
        %v3451 = vmul.f32 %v3260, %v3419
        %v3452 = vmul.f32 %v3262, %v3420
        %v3453 = vmul.f32 %v3264, %v3421
        %v3454 = vmul.f32 %v3268, %v3422
        %v3455 = vmul.f32 %v3270, %v3423
        %v3456 = vmul.f32 %v3272, %v3424
        %v3457 = vmul.f32 %v3274, %v3425
        %v3458 = vmul.f32 %v3278, %v3426
        %v3459 = vmul.f32 %v3280, %v3427
        %v3460 = vmul.f32 %v3282, %v3428
        %v3461 = vmul.f32 %v3284, %v3429
        %v3462 = vmul.f32 %v3288, %v3430
        %v3463 = vmul.f32 %v3290, %v3431
        %v3464 = vmul.f32 %v3292, %v3432
        %v3465 = vmul.f32 %v3294, %v3433
        %v3466 = vmul.f32 %v3298, %v3434
        %v3467 = vmul.f32 %v3300, %v3435
        %v3468 = vmul.f32 %v3302, %v3436
        %v3469 = vmul.f32 %v3304, %v3437
        %v3470 = vmax.f32 %v3438, %v3439
        %3471 = vmax.xlane.f32.xlu0 %v3470
        %v3472 = vpop.xlane.xlu0 %3471
        %v3473 = vmax.f32 %v3440, %v3441
        %3474 = vmax.xlane.f32.xlu0 %v3473
        %v3475 = vpop.xlane.xlu0 %3474
        %v3476 = vmax.f32 %v3442, %v3443
        %3477 = vmax.xlane.f32.xlu0 %v3476
        %v3478 = vpop.xlane.xlu0 %3477
        %v3479 = vmax.f32 %v3444, %v3445
        %3480 = vmax.xlane.f32.xlu0 %v3479
        %v3481 = vpop.xlane.xlu0 %3480
        %v3482 = vmax.f32 %v3446, %v3447
        %3483 = vmax.xlane.f32.xlu0 %v3482
        %v3484 = vpop.xlane.xlu0 %3483
        %v3485 = vmax.f32 %v3448, %v3449
        %3486 = vmax.xlane.f32.xlu0 %v3485
        %v3487 = vpop.xlane.xlu0 %3486
        %v3488 = vmax.f32 %v3450, %v3451
        %3489 = vmax.xlane.f32.xlu0 %v3488
        %v3490 = vpop.xlane.xlu0 %3489
        %v3491 = vmax.f32 %v3452, %v3453
        %3492 = vmax.xlane.f32.xlu0 %v3491
        %v3493 = vpop.xlane.xlu0 %3492
        %v3494 = vmax.f32 %v3454, %v3455
        %3495 = vmax.xlane.f32.xlu0 %v3494
        %v3496 = vpop.xlane.xlu0 %3495
        %v3497 = vmax.f32 %v3456, %v3457
        %3498 = vmax.xlane.f32.xlu0 %v3497
        %v3499 = vpop.xlane.xlu0 %3498
        %v3500 = vmax.f32 %v3458, %v3459
        %3501 = vmax.xlane.f32.xlu0 %v3500
        %v3502 = vpop.xlane.xlu0 %3501
        %v3503 = vmax.f32 %v3460, %v3461
        %3504 = vmax.xlane.f32.xlu0 %v3503
        %v3505 = vpop.xlane.xlu0 %3504
        %v3506 = vmax.f32 %v3462, %v3463
        %3507 = vmax.xlane.f32.xlu0 %v3506
        %v3508 = vpop.xlane.xlu0 %3507
        %v3509 = vmax.f32 %v3464, %v3465
        %3510 = vmax.xlane.f32.xlu0 %v3509
        %v3511 = vpop.xlane.xlu0 %3510
        %v3512 = vmax.f32 %v3466, %v3467
        %3513 = vmax.xlane.f32.xlu0 %v3512
        %v3514 = vpop.xlane.xlu0 %3513
        %v3515 = vmax.f32 %v3468, %v3469
        %3516 = vmax.xlane.f32.xlu0 %v3515
        %v3517 = vpop.xlane.xlu0 %3516
        %v3518 = vsub.f32 %v3438, %v3472
        %v3519 = vsub.f32 %v3439, %v3472
        %v3520 = vsub.f32 %v3440, %v3475
        %v3521 = vsub.f32 %v3441, %v3475
        %v3522 = vsub.f32 %v3442, %v3478
        %v3523 = vsub.f32 %v3443, %v3478
        %v3524 = vsub.f32 %v3444, %v3481
        %v3525 = vsub.f32 %v3445, %v3481
        %v3526 = vsub.f32 %v3446, %v3484
        %v3527 = vsub.f32 %v3447, %v3484
        %v3528 = vsub.f32 %v3448, %v3487
        %v3529 = vsub.f32 %v3449, %v3487
        %v3530 = vsub.f32 %v3450, %v3490
        %v3531 = vsub.f32 %v3451, %v3490
        %v3532 = vsub.f32 %v3452, %v3493
        %v3533 = vsub.f32 %v3453, %v3493
        %v3534 = vsub.f32 %v3454, %v3496
        %v3535 = vsub.f32 %v3455, %v3496
        %v3536 = vsub.f32 %v3456, %v3499
        %v3537 = vsub.f32 %v3457, %v3499
        %v3538 = vsub.f32 %v3458, %v3502
        %v3539 = vsub.f32 %v3459, %v3502
        %v3540 = vsub.f32 %v3460, %v3505
        %v3541 = vsub.f32 %v3461, %v3505
        %v3542 = vsub.f32 %v3462, %v3508
        %v3543 = vsub.f32 %v3463, %v3508
        %v3544 = vsub.f32 %v3464, %v3511
        %v3545 = vsub.f32 %v3465, %v3511
        %v3546 = vsub.f32 %v3466, %v3514
        %v3547 = vsub.f32 %v3467, %v3514
        %v3548 = vsub.f32 %v3468, %v3517
        %v3549 = vsub.f32 %v3469, %v3517
        %v3550 = vmul.f32 %v3518, 1.442695
        %v3551 = vpow.pop %v3550
        %v3552 = vmul.f32 %v3519, 1.442695
        %v3553 = vpow.pop %v3552
        %v3554 = vmul.f32 %v3520, 1.442695
        %v3555 = vpow.pop %v3554
        %v3556 = vmul.f32 %v3521, 1.442695
        %v3557 = vpow.pop %v3556
        %v3558 = vmul.f32 %v3522, 1.442695
        %v3559 = vpow.pop %v3558
        %v3560 = vmul.f32 %v3523, 1.442695
        %v3561 = vpow.pop %v3560
        %v3562 = vmul.f32 %v3524, 1.442695
        %v3563 = vpow.pop %v3562
        %v3564 = vmul.f32 %v3525, 1.442695
        %v3565 = vpow.pop %v3564
        %v3566 = vmul.f32 %v3526, 1.442695
        %v3567 = vpow.pop %v3566
        %v3568 = vmul.f32 %v3527, 1.442695
        %v3569 = vpow.pop %v3568
        %v3570 = vmul.f32 %v3528, 1.442695
        %v3571 = vpow.pop %v3570
        %v3572 = vmul.f32 %v3529, 1.442695
        %v3573 = vpow.pop %v3572
        %v3574 = vmul.f32 %v3530, 1.442695
        %v3575 = vpow.pop %v3574
        %v3576 = vmul.f32 %v3531, 1.442695
        %v3577 = vpow.pop %v3576
        %v3578 = vmul.f32 %v3532, 1.442695
        %v3579 = vpow.pop %v3578
        %v3580 = vmul.f32 %v3533, 1.442695
        %v3581 = vpow.pop %v3580
        %v3582 = vmul.f32 %v3534, 1.442695
        %v3583 = vpow.pop %v3582
        %v3584 = vmul.f32 %v3535, 1.442695
        %v3585 = vpow.pop %v3584
        %v3586 = vmul.f32 %v3536, 1.442695
        %v3587 = vpow.pop %v3586
        %v3588 = vmul.f32 %v3537, 1.442695
        %v3589 = vpow.pop %v3588
        %v3590 = vmul.f32 %v3538, 1.442695
        %v3591 = vpow.pop %v3590
        %v3592 = vmul.f32 %v3539, 1.442695
        %v3593 = vpow.pop %v3592
        %v3594 = vmul.f32 %v3540, 1.442695
        %v3595 = vpow.pop %v3594
        %v3596 = vmul.f32 %v3541, 1.442695
        %v3597 = vpow.pop %v3596
        %v3598 = vmul.f32 %v3542, 1.442695
        %v3599 = vpow.pop %v3598
        %v3600 = vmul.f32 %v3543, 1.442695
        %v3601 = vpow.pop %v3600
        %v3602 = vmul.f32 %v3544, 1.442695
        %v3603 = vpow.pop %v3602
        %v3604 = vmul.f32 %v3545, 1.442695
        %v3605 = vpow.pop %v3604
        %v3606 = vmul.f32 %v3546, 1.442695
        %v3607 = vpow.pop %v3606
        %v3608 = vmul.f32 %v3547, 1.442695
        %v3609 = vpow.pop %v3608
        %v3610 = vmul.f32 %v3548, 1.442695
        %v3611 = vpow.pop %v3610
        %v3612 = vmul.f32 %v3549, 1.442695
        %v3613 = vpow.pop %v3612
        %v3614 = vadd.f32 %v3551, %v3553
        %3615 = vadd.xlane.f32.xlu0 %v3614
        %v3616 = vpop.xlane.xlu0 %3615
        %v3617 = vadd.f32 %v3555, %v3557
        %3618 = vadd.xlane.f32.xlu0 %v3617
        %v3619 = vpop.xlane.xlu0 %3618
        %v3620 = vadd.f32 %v3559, %v3561
        %3621 = vadd.xlane.f32.xlu0 %v3620
        %v3622 = vpop.xlane.xlu0 %3621
        %v3623 = vadd.f32 %v3563, %v3565
        %3624 = vadd.xlane.f32.xlu0 %v3623
        %v3625 = vpop.xlane.xlu0 %3624
        %v3626 = vadd.f32 %v3567, %v3569
        %3627 = vadd.xlane.f32.xlu0 %v3626
        %v3628 = vpop.xlane.xlu0 %3627
        %v3629 = vadd.f32 %v3571, %v3573
        %3630 = vadd.xlane.f32.xlu0 %v3629
        %v3631 = vpop.xlane.xlu0 %3630
        %v3632 = vadd.f32 %v3575, %v3577
        %3633 = vadd.xlane.f32.xlu0 %v3632
        %v3634 = vpop.xlane.xlu0 %3633
        %v3635 = vadd.f32 %v3579, %v3581
        %3636 = vadd.xlane.f32.xlu0 %v3635
        %v3637 = vpop.xlane.xlu0 %3636
        %v3638 = vadd.f32 %v3583, %v3585
        %3639 = vadd.xlane.f32.xlu0 %v3638
        %v3640 = vpop.xlane.xlu0 %3639
        %v3641 = vadd.f32 %v3587, %v3589
        %3642 = vadd.xlane.f32.xlu0 %v3641
        %v3643 = vpop.xlane.xlu0 %3642
        %v3644 = vadd.f32 %v3591, %v3593
        %3645 = vadd.xlane.f32.xlu0 %v3644
        %v3646 = vpop.xlane.xlu0 %3645
        %v3647 = vadd.f32 %v3595, %v3597
        %3648 = vadd.xlane.f32.xlu0 %v3647
        %v3649 = vpop.xlane.xlu0 %3648
        %v3650 = vadd.f32 %v3599, %v3601
        %3651 = vadd.xlane.f32.xlu0 %v3650
        %v3652 = vpop.xlane.xlu0 %3651
        %v3653 = vadd.f32 %v3603, %v3605
        %3654 = vadd.xlane.f32.xlu0 %v3653
        %v3655 = vpop.xlane.xlu0 %3654
        %v3656 = vadd.f32 %v3607, %v3609
        %3657 = vadd.xlane.f32.xlu0 %v3656
        %v3658 = vpop.xlane.xlu0 %3657
        %v3659 = vadd.f32 %v3611, %v3613
        %3660 = vadd.xlane.f32.xlu0 %v3659
        %v3661 = vpop.xlane.xlu0 %3660
        %v3662 = vrcp.pop %v3616
        %v3663 = vrcp.pop %v3619
        %v3664 = vrcp.pop %v3622
        %v3665 = vrcp.pop %v3625
        %v3666 = vrcp.pop %v3628
        %v3667 = vrcp.pop %v3631
        %v3668 = vrcp.pop %v3634
        %v3669 = vrcp.pop %v3637
        %v3670 = vrcp.pop %v3640
        %v3671 = vrcp.pop %v3643
        %v3672 = vrcp.pop %v3646
        %v3673 = vrcp.pop %v3649
        %v3674 = vrcp.pop %v3652
        %v3675 = vrcp.pop %v3655
        %v3676 = vrcp.pop %v3658
        %v3677 = vrcp.pop %v3661
        %v3678 = vmul.f32 %v3551, %v3662
        %v3679 = vmul.f32 %v3553, %v3662
        %v3680 = vmul.f32 %v3555, %v3663
        %v3681 = vmul.f32 %v3557, %v3663
        %v3682 = vmul.f32 %v3559, %v3664
        %v3683 = vmul.f32 %v3561, %v3664
        %v3684 = vmul.f32 %v3563, %v3665
        %v3685 = vmul.f32 %v3565, %v3665
        %v3686 = vmul.f32 %v3567, %v3666
        %v3687 = vmul.f32 %v3569, %v3666
        %v3688 = vmul.f32 %v3571, %v3667
        %v3689 = vmul.f32 %v3573, %v3667
        %v3690 = vmul.f32 %v3575, %v3668
        %v3691 = vmul.f32 %v3577, %v3668
        %v3692 = vmul.f32 %v3579, %v3669
        %v3693 = vmul.f32 %v3581, %v3669
        %v3694 = vmul.f32 %v3583, %v3670
        %v3695 = vmul.f32 %v3585, %v3670
        %v3696 = vmul.f32 %v3587, %v3671
        %v3697 = vmul.f32 %v3589, %v3671
        %v3698 = vmul.f32 %v3591, %v3672
        %v3699 = vmul.f32 %v3593, %v3672
        %v3700 = vmul.f32 %v3595, %v3673
        %v3701 = vmul.f32 %v3597, %v3673
        %v3702 = vmul.f32 %v3599, %v3674
        %v3703 = vmul.f32 %v3601, %v3674
        %v3704 = vmul.f32 %v3603, %v3675
        %v3705 = vmul.f32 %v3605, %v3675
        %v3706 = vmul.f32 %v3607, %v3676
        %v3707 = vmul.f32 %v3609, %v3676
        %v3708 = vmul.f32 %v3611, %v3677
        %v3709 = vmul.f32 %v3613, %v3677
        %v3710 = vpack.c.bf16 %v3680, %v3678
        %v3711 = vpack.c.bf16 %v3681, %v3679
        %v3712 = vpack.c.bf16 %v3684, %v3682
        %v3713 = vpack.c.bf16 %v3685, %v3683
        %v3714 = vpack.c.bf16 %v3688, %v3686
        %v3715 = vpack.c.bf16 %v3689, %v3687
        %v3716 = vpack.c.bf16 %v3692, %v3690
        %v3717 = vpack.c.bf16 %v3693, %v3691
        %v3718 = vpack.c.bf16 %v3696, %v3694
        %v3719 = vpack.c.bf16 %v3697, %v3695
        %v3720 = vpack.c.bf16 %v3700, %v3698
        %v3721 = vpack.c.bf16 %v3701, %v3699
        %v3722 = vpack.c.bf16 %v3704, %v3702
        %v3723 = vpack.c.bf16 %v3705, %v3703
        %v3724 = vpack.c.bf16 %v3708, %v3706
        %v3725 = vpack.c.bf16 %v3709, %v3707
        %3726 = vrot.lane.b32.xlu0 %v1253, 96
        %v3727 = vpop.permute.xlu0 %3726
        %3728 = vrot.lane.b32.xlu0 %v1254, 96
        %v3729 = vpop.permute.xlu0 %3728
        %3730 = vrot.lane.b32.xlu0 %v1255, 96
        %v3731 = vpop.permute.xlu0 %3730
        %3732 = vrot.lane.b32.xlu0 %v1256, 96
        %v3733 = vpop.permute.xlu0 %3732
        %3734 = vrot.lane.b32.xlu0 %v1257, 96
        %v3735 = vpop.permute.xlu0 %3734
        %3736 = vrot.lane.b32.xlu0 %v1258, 96
        %v3737 = vpop.permute.xlu0 %3736
        %3738 = vrot.lane.b32.xlu0 %v1259, 96
        %v3739 = vpop.permute.xlu0 %3738
        %3740 = vrot.lane.b32.xlu0 %v1260, 96
        %v3741 = vpop.permute.xlu0 %3740
        %3742 = vrot.lane.b32.xlu0 %v1261, 96
        %v3743 = vpop.permute.xlu0 %3742
        %3744 = vrot.lane.b32.xlu0 %v1262, 96
        %v3745 = vpop.permute.xlu0 %3744
        %3746 = vrot.lane.b32.xlu0 %v1263, 96
        %v3747 = vpop.permute.xlu0 %3746
        %3748 = vrot.lane.b32.xlu0 %v1264, 96
        %v3749 = vpop.permute.xlu0 %3748
        %3750 = vrot.lane.b32.xlu0 %v1265, 96
        %v3751 = vpop.permute.xlu0 %3750
        %3752 = vrot.lane.b32.xlu0 %v1266, 96
        %v3753 = vpop.permute.xlu0 %3752
        %3754 = vrot.lane.b32.xlu0 %v1267, 96
        %v3755 = vpop.permute.xlu0 %3754
        %3756 = vrot.lane.b32.xlu0 %v1268, 96
        %v3757 = vpop.permute.xlu0 %3756
        %3774 = vmatprep.subr.bf16.mxu0 0
        %3775 = vmatpush1.bf16.msra.mxu0 %v3727
        %3776 = vmatprep.subr.bf16.mxu0 0
        %3777 = vmatpush1.bf16.msra.mxu0 %v3729
        %3778 = vmatprep.subr.bf16.mxu0 0
        %3779 = vmatpush1.bf16.msra.mxu0 %v3731
        %3780 = vmatprep.subr.bf16.mxu0 0
        %3781 = vmatpush1.bf16.msra.mxu0 %v3733
        %3782 = vmatprep.subr.bf16.mxu0 0
        %3783 = vmatpush1.bf16.msra.mxu0 %v3735
        %3784 = vmatprep.subr.bf16.mxu0 0
        %3785 = vmatpush1.bf16.msra.mxu0 %v3737
        %3786 = vmatprep.subr.bf16.mxu0 0
        %3787 = vmatpush1.bf16.msra.mxu0 %v3739
        %3788 = vmatprep.subr.bf16.mxu0 0
        %3789 = vmatpush1.bf16.msra.mxu0 %v3741
        %3790 = vmatprep.subr.bf16.mxu0 0
        %3791 = vmatpush1.bf16.msra.mxu0 %v3743
        %3792 = vmatprep.subr.bf16.mxu0 0
        %3793 = vmatpush1.bf16.msra.mxu0 %v3745
        %3794 = vmatprep.subr.bf16.mxu0 0
        %3795 = vmatpush1.bf16.msra.mxu0 %v3747
        %3796 = vmatprep.subr.bf16.mxu0 0
        %3797 = vmatpush1.bf16.msra.mxu0 %v3749
        %3798 = vmatprep.subr.bf16.mxu0 0
        %3799 = vmatpush1.bf16.msra.mxu0 %v3751
        %3800 = vmatprep.subr.bf16.mxu0 0
        %3801 = vmatpush1.bf16.msra.mxu0 %v3753
        %3802 = vmatprep.subr.bf16.mxu0 0
        %3803 = vmatpush1.bf16.msra.mxu0 %v3755
        %3804 = vmatprep.subr.bf16.mxu0 0
        %3805 = vmatpush1.bf16.msra.mxu0 %v3757
        %3806 = vmatprep.mubr.bf16.mxu0 %v3711
        %3807 = vmatmul.mubr.bf16.gmra.mrb[0].mxu0 %v3710
        %v3808 = vpop.f32.mrb[0].mxu0
        %v3809 = vadd.f32 0.0, %v3808
        %v3810 = vpop.f32.mrb[0].mxu0
        %v3811 = vpop.f32.mrb[0].mxu0
        %v3812 = vadd.f32 0.0, %v3811
        %v3813 = vpop.f32.mrb[0].mxu0
        %3814 = vmatprep.mubr.bf16.mxu0 %v3713
        %3815 = vmatmul.mubr.bf16.gmra.mrb[0].mxu0 %v3712
        %v3816 = vpop.f32.mrb[0].mxu0
        %v3817 = vadd.f32 0.0, %v3816
        %v3818 = vpop.f32.mrb[0].mxu0
        %v3819 = vpop.f32.mrb[0].mxu0
        %v3820 = vadd.f32 0.0, %v3819
        %v3821 = vpop.f32.mrb[0].mxu0
        %3822 = vmatprep.mubr.bf16.mxu0 %v3715
        %3823 = vmatmul.mubr.bf16.gmra.mrb[0].mxu0 %v3714
        %v3824 = vpop.f32.mrb[0].mxu0
        %v3825 = vadd.f32 0.0, %v3824
        %v3826 = vpop.f32.mrb[0].mxu0
        %v3827 = vpop.f32.mrb[0].mxu0
        %v3828 = vadd.f32 0.0, %v3827
        %v3829 = vpop.f32.mrb[0].mxu0
        %3830 = vmatprep.mubr.bf16.mxu0 %v3717
        %3831 = vmatmul.mubr.bf16.gmra.mrb[0].mxu0 %v3716
        %v3832 = vpop.f32.mrb[0].mxu0
        %v3833 = vadd.f32 0.0, %v3832
        %v3834 = vpop.f32.mrb[0].mxu0
        %v3835 = vpop.f32.mrb[0].mxu0
        %v3836 = vadd.f32 0.0, %v3835
        %v3837 = vpop.f32.mrb[0].mxu0
        %3838 = vmatprep.mubr.bf16.mxu0 %v3719
        %3839 = vmatmul.mubr.bf16.gmra.mrb[0].mxu0 %v3718
        %v3840 = vpop.f32.mrb[0].mxu0
        %v3841 = vadd.f32 0.0, %v3840
        %v3842 = vpop.f32.mrb[0].mxu0
        %v3843 = vpop.f32.mrb[0].mxu0
        %v3844 = vadd.f32 0.0, %v3843
        %v3845 = vpop.f32.mrb[0].mxu0
        %3846 = vmatprep.mubr.bf16.mxu0 %v3721
        %3847 = vmatmul.mubr.bf16.gmra.mrb[0].mxu0 %v3720
        %v3848 = vpop.f32.mrb[0].mxu0
        %v3849 = vadd.f32 0.0, %v3848
        %v3850 = vpop.f32.mrb[0].mxu0
        %v3851 = vpop.f32.mrb[0].mxu0
        %v3852 = vadd.f32 0.0, %v3851
        %v3853 = vpop.f32.mrb[0].mxu0
        %3854 = vmatprep.mubr.bf16.mxu0 %v3723
        %3855 = vmatmul.mubr.bf16.gmra.mrb[0].mxu0 %v3722
        %v3856 = vpop.f32.mrb[0].mxu0
        %v3857 = vadd.f32 0.0, %v3856
        %v3858 = vpop.f32.mrb[0].mxu0
        %v3859 = vpop.f32.mrb[0].mxu0
        %v3860 = vadd.f32 0.0, %v3859
        %v3861 = vpop.f32.mrb[0].mxu0
        %3862 = vmatprep.mubr.bf16.mxu0 %v3725
        %3863 = vmatmul.mubr.bf16.gmra.mrb[0].mxu0 %v3724
        %v3864 = vpop.f32.mrb[0].mxu0
        %v3865 = vadd.f32 0.0, %v3864
        %v3866 = vpop.f32.mrb[0].mxu0
        %v3867 = vpop.f32.mrb[0].mxu0
        %v3868 = vadd.f32 0.0, %v3867
        %v3869 = vpop.f32.mrb[0].mxu0
        %3870 = vdwg.mxu0
        %3887 = vrot.lane.b32.xlu0 %v3809, 32
        %v3888 = vpop.permute.xlu0 %3887
        %3889 = vrot.lane.b32.xlu0 %v3812, 32
        %v3890 = vpop.permute.xlu0 %3889
        %3891 = vrot.lane.b32.xlu0 %v3817, 32
        %v3892 = vpop.permute.xlu0 %3891
        %3893 = vrot.lane.b32.xlu0 %v3820, 32
        %v3894 = vpop.permute.xlu0 %3893
        %3895 = vrot.lane.b32.xlu0 %v3825, 32
        %v3896 = vpop.permute.xlu0 %3895
        %3897 = vrot.lane.b32.xlu0 %v3828, 32
        %v3898 = vpop.permute.xlu0 %3897
        %3899 = vrot.lane.b32.xlu0 %v3833, 32
        %v3900 = vpop.permute.xlu0 %3899
        %3901 = vrot.lane.b32.xlu0 %v3836, 32
        %v3902 = vpop.permute.xlu0 %3901
        %3903 = vrot.lane.b32.xlu0 %v3841, 32
        %v3904 = vpop.permute.xlu0 %3903
        %3905 = vrot.lane.b32.xlu0 %v3844, 32
        %v3906 = vpop.permute.xlu0 %3905
        %3907 = vrot.lane.b32.xlu0 %v3849, 32
        %v3908 = vpop.permute.xlu0 %3907
        %3909 = vrot.lane.b32.xlu0 %v3852, 32
        %v3910 = vpop.permute.xlu0 %3909
        %3911 = vrot.lane.b32.xlu0 %v3857, 32
        %v3912 = vpop.permute.xlu0 %3911
        %3913 = vrot.lane.b32.xlu0 %v3860, 32
        %v3914 = vpop.permute.xlu0 %3913
        %3915 = vrot.lane.b32.xlu0 %v3865, 32
        %v3916 = vpop.permute.xlu0 %3915
        %3917 = vrot.lane.b32.xlu0 %v3868, 32
        %v3918 = vpop.permute.xlu0 %3917
        %vm3935 = vcmask 392448
        %3936 = vst.msk [vmem:[#allocation2] sm:$0xff] %vm3935, %v3888
        %3937 = vst.msk [vmem:[#allocation2 + $0x8] sm:$0xff] %vm3935, %v3890
        %3938 = vst.msk [vmem:[#allocation2 + $0x10] sm:$0xff] %vm3935, %v3892
        %3939 = vst.msk [vmem:[#allocation2 + $0x18] sm:$0xff] %vm3935, %v3894
        %3940 = vst.msk [vmem:[#allocation2 + $0x20] sm:$0xff] %vm3935, %v3896
        %3941 = vst.msk [vmem:[#allocation2 + $0x28] sm:$0xff] %vm3935, %v3898
        %3942 = vst.msk [vmem:[#allocation2 + $0x30] sm:$0xff] %vm3935, %v3900
        %3943 = vst.msk [vmem:[#allocation2 + $0x38] sm:$0xff] %vm3935, %v3902
        %3944 = vst.msk [vmem:[#allocation2 + $0x40] sm:$0xff] %vm3935, %v3904
        %3945 = vst.msk [vmem:[#allocation2 + $0x48] sm:$0xff] %vm3935, %v3906
        %3946 = vst.msk [vmem:[#allocation2 + $0x50] sm:$0xff] %vm3935, %v3908
        %3947 = vst.msk [vmem:[#allocation2 + $0x58] sm:$0xff] %vm3935, %v3910
        %3948 = vst.msk [vmem:[#allocation2 + $0x60] sm:$0xff] %vm3935, %v3912
        %3949 = vst.msk [vmem:[#allocation2 + $0x68] sm:$0xff] %vm3935, %v3914
        %3950 = vst.msk [vmem:[#allocation2 + $0x70] sm:$0xff] %vm3935, %v3916
        %3951 = vst.msk [vmem:[#allocation2 + $0x78] sm:$0xff] %vm3935, %v3918
        %3952 = vrot.lane.b32.xlu0 %v765, 80
        %v3953 = vpop.permute.xlu0 %3952
        %3954 = vrot.lane.b32.xlu0 %v766, 80
        %v3955 = vpop.permute.xlu0 %3954
        %3956 = vrot.lane.b32.xlu0 %v767, 80
        %v3957 = vpop.permute.xlu0 %3956
        %3958 = vrot.lane.b32.xlu0 %v768, 80
        %v3959 = vpop.permute.xlu0 %3958
        %3960 = vrot.lane.b32.xlu0 %v769, 80
        %v3961 = vpop.permute.xlu0 %3960
        %3962 = vrot.lane.b32.xlu0 %v770, 80
        %v3963 = vpop.permute.xlu0 %3962
        %3964 = vrot.lane.b32.xlu0 %v771, 80
        %v3965 = vpop.permute.xlu0 %3964
        %3966 = vrot.lane.b32.xlu0 %v772, 80
        %v3967 = vpop.permute.xlu0 %3966
        %3968 = vrot.lane.b32.xlu0 %v1005, 80
        %v3969 = vpop.permute.xlu0 %3968
        %3970 = vrot.lane.b32.xlu0 %v1006, 80
        %v3971 = vpop.permute.xlu0 %3970
        %3972 = vrot.lane.b32.xlu0 %v1007, 80
        %v3973 = vpop.permute.xlu0 %3972
        %3974 = vrot.lane.b32.xlu0 %v1008, 80
        %v3975 = vpop.permute.xlu0 %3974
        %3976 = vrot.lane.b32.xlu0 %v1009, 80
        %v3977 = vpop.permute.xlu0 %3976
        %3978 = vrot.lane.b32.xlu0 %v1010, 80
        %v3979 = vpop.permute.xlu0 %3978
        %3980 = vrot.lane.b32.xlu0 %v1011, 80
        %v3981 = vpop.permute.xlu0 %3980
        %3982 = vrot.lane.b32.xlu0 %v1012, 80
        %v3983 = vpop.permute.xlu0 %3982
        %3984 = vrot.lane.b32.xlu0 %v1013, 80
        %v3985 = vpop.permute.xlu0 %3984
        %3986 = vrot.lane.b32.xlu0 %v1014, 80
        %v3987 = vpop.permute.xlu0 %3986
        %3988 = vrot.lane.b32.xlu0 %v1015, 80
        %v3989 = vpop.permute.xlu0 %3988
        %3990 = vrot.lane.b32.xlu0 %v1016, 80
        %v3991 = vpop.permute.xlu0 %3990
        %3992 = vrot.lane.b32.xlu0 %v1017, 80
        %v3993 = vpop.permute.xlu0 %3992
        %3994 = vrot.lane.b32.xlu0 %v1018, 80
        %v3995 = vpop.permute.xlu0 %3994
        %3996 = vrot.lane.b32.xlu0 %v1019, 80
        %v3997 = vpop.permute.xlu0 %3996
        %3998 = vrot.lane.b32.xlu0 %v1020, 80
        %v3999 = vpop.permute.xlu0 %3998
        %v4001 = vsel %vm1435, %v3953, 0
        %v4004 = vsel %vm1435, %v3955, 0
        %v4007 = vsel %vm1435, %v3957, 0
        %v4010 = vsel %vm1435, %v3959, 0
        %v4013 = vsel %vm1435, %v3961, 0
        %v4016 = vsel %vm1435, %v3963, 0
        %v4019 = vsel %vm1435, %v3965, 0
        %v4022 = vsel %vm1435, %v3967, 0
        %v4025 = vsel %vm1435, %v3969, 0
        %v4028 = vsel %vm1435, %v3971, 0
        %v4031 = vsel %vm1435, %v3973, 0
        %v4034 = vsel %vm1435, %v3975, 0
        %v4037 = vsel %vm1435, %v3977, 0
        %v4040 = vsel %vm1435, %v3979, 0
        %v4043 = vsel %vm1435, %v3981, 0
        %v4046 = vsel %vm1435, %v3983, 0
        %v4049 = vsel %vm1435, %v3985, 0
        %v4052 = vsel %vm1435, %v3987, 0
        %v4055 = vsel %vm1435, %v3989, 0
        %v4058 = vsel %vm1435, %v3991, 0
        %v4061 = vsel %vm1435, %v3993, 0
        %v4064 = vsel %vm1435, %v3995, 0
        %v4067 = vsel %vm1435, %v3997, 0
        %v4070 = vsel %vm1435, %v3999, 0
        %4072 = vmatprep.subr.bf16.mxu0 0
        %4073 = vmatpush1.bf16.xpose.msra.mxu0 %v4025
        %4074 = vmatprep.subr.bf16.mxu0 0
        %4075 = vmatpush1.bf16.xpose.msra.mxu0 %v4028
        %4076 = vmatprep.subr.bf16.mxu0 0
        %4077 = vmatpush1.bf16.xpose.msra.mxu0 %v4031
        %4078 = vmatprep.subr.bf16.mxu0 0
        %4079 = vmatpush1.bf16.xpose.msra.mxu0 %v4034
        %4080 = vmatprep.subr.bf16.mxu0 0
        %4081 = vmatpush1.bf16.xpose.msra.mxu0 %v4037
        %4082 = vmatprep.subr.bf16.mxu0 0
        %4083 = vmatpush1.bf16.xpose.msra.mxu0 %v4040
        %4084 = vmatprep.subr.bf16.mxu0 0
        %4085 = vmatpush1.bf16.xpose.msra.mxu0 %v4043
        %4086 = vmatprep.subr.bf16.mxu0 0
        %4087 = vmatpush1.bf16.xpose.msra.mxu0 %v4046
        %4088 = vmatprep.subr.bf16.mxu0 0
        %4089 = vmatpush1.bf16.xpose.msra.mxu0 %v4049
        %4090 = vmatprep.subr.bf16.mxu0 0
        %4091 = vmatpush1.bf16.xpose.msra.mxu0 %v4052
        %4092 = vmatprep.subr.bf16.mxu0 0
        %4093 = vmatpush1.bf16.xpose.msra.mxu0 %v4055
        %4094 = vmatprep.subr.bf16.mxu0 0
        %4095 = vmatpush1.bf16.xpose.msra.mxu0 %v4058
        %4096 = vmatprep.subr.bf16.mxu0 0
        %4097 = vmatpush1.bf16.xpose.msra.mxu0 %v4061
        %4098 = vmatprep.subr.bf16.mxu0 0
        %4099 = vmatpush1.bf16.xpose.msra.mxu0 %v4064
        %4100 = vmatprep.subr.bf16.mxu0 0
        %4101 = vmatpush1.bf16.xpose.msra.mxu0 %v4067
        %4102 = vmatprep.subr.bf16.mxu0 0
        %4103 = vmatpush1.bf16.xpose.msra.mxu0 %v4070
        %4104 = vmatprep.mubr.bf16.mxu0 0
        %4105 = vmatmul.mubr.bf16.gmra.mrb[0].mxu0 %v4001
        %v4106 = vpop.f32.mrb[0].mxu0
        %v4107 = vadd.f32 0.0, %v4106
        %v4108 = vpop.f32.mrb[0].mxu0
        %v4109 = vadd.f32 0.0, %v4108
        %v4110 = vpop.f32.mrb[0].mxu0
        %v4111 = vadd.f32 0.0, %v4110
        %v4112 = vpop.f32.mrb[0].mxu0
        %v4113 = vadd.f32 0.0, %v4112
        %4114 = vmatprep.mubr.bf16.mxu0 0
        %4115 = vmatmul.mubr.bf16.gmra.mrb[0].mxu0 %v4004
        %v4116 = vpop.f32.mrb[0].mxu0
        %v4117 = vadd.f32 0.0, %v4116
        %v4118 = vpop.f32.mrb[0].mxu0
        %v4119 = vadd.f32 0.0, %v4118
        %v4120 = vpop.f32.mrb[0].mxu0
        %v4121 = vadd.f32 0.0, %v4120
        %v4122 = vpop.f32.mrb[0].mxu0
        %v4123 = vadd.f32 0.0, %v4122
        %4124 = vmatprep.mubr.bf16.mxu0 0
        %4125 = vmatmul.mubr.bf16.gmra.mrb[0].mxu0 %v4007
        %v4126 = vpop.f32.mrb[0].mxu0
        %v4127 = vadd.f32 0.0, %v4126
        %v4128 = vpop.f32.mrb[0].mxu0
        %v4129 = vadd.f32 0.0, %v4128
        %v4130 = vpop.f32.mrb[0].mxu0
        %v4131 = vadd.f32 0.0, %v4130
        %v4132 = vpop.f32.mrb[0].mxu0
        %v4133 = vadd.f32 0.0, %v4132
        %4134 = vmatprep.mubr.bf16.mxu0 0
        %4135 = vmatmul.mubr.bf16.gmra.mrb[0].mxu0 %v4010
        %v4136 = vpop.f32.mrb[0].mxu0
        %v4137 = vadd.f32 0.0, %v4136
        %v4138 = vpop.f32.mrb[0].mxu0
        %v4139 = vadd.f32 0.0, %v4138
        %v4140 = vpop.f32.mrb[0].mxu0
        %v4141 = vadd.f32 0.0, %v4140
        %v4142 = vpop.f32.mrb[0].mxu0
        %v4143 = vadd.f32 0.0, %v4142
        %4144 = vmatprep.mubr.bf16.mxu0 0
        %4145 = vmatmul.mubr.bf16.gmra.mrb[0].mxu0 %v4013
        %v4146 = vpop.f32.mrb[0].mxu0
        %v4147 = vadd.f32 0.0, %v4146
        %v4148 = vpop.f32.mrb[0].mxu0
        %v4149 = vadd.f32 0.0, %v4148
        %v4150 = vpop.f32.mrb[0].mxu0
        %v4151 = vadd.f32 0.0, %v4150
        %v4152 = vpop.f32.mrb[0].mxu0
        %v4153 = vadd.f32 0.0, %v4152
        %4154 = vmatprep.mubr.bf16.mxu0 0
        %4155 = vmatmul.mubr.bf16.gmra.mrb[0].mxu0 %v4016
        %v4156 = vpop.f32.mrb[0].mxu0
        %v4157 = vadd.f32 0.0, %v4156
        %v4158 = vpop.f32.mrb[0].mxu0
        %v4159 = vadd.f32 0.0, %v4158
        %v4160 = vpop.f32.mrb[0].mxu0
        %v4161 = vadd.f32 0.0, %v4160
        %v4162 = vpop.f32.mrb[0].mxu0
        %v4163 = vadd.f32 0.0, %v4162
        %4164 = vmatprep.mubr.bf16.mxu0 0
        %4165 = vmatmul.mubr.bf16.gmra.mrb[0].mxu0 %v4019
        %v4166 = vpop.f32.mrb[0].mxu0
        %v4167 = vadd.f32 0.0, %v4166
        %v4168 = vpop.f32.mrb[0].mxu0
        %v4169 = vadd.f32 0.0, %v4168
        %v4170 = vpop.f32.mrb[0].mxu0
        %v4171 = vadd.f32 0.0, %v4170
        %v4172 = vpop.f32.mrb[0].mxu0
        %v4173 = vadd.f32 0.0, %v4172
        %4174 = vmatprep.mubr.bf16.mxu0 0
        %4175 = vmatmul.mubr.bf16.gmra.mrb[0].mxu0 %v4022
        %v4176 = vpop.f32.mrb[0].mxu0
        %v4177 = vadd.f32 0.0, %v4176
        %v4178 = vpop.f32.mrb[0].mxu0
        %v4179 = vadd.f32 0.0, %v4178
        %v4180 = vpop.f32.mrb[0].mxu0
        %v4181 = vadd.f32 0.0, %v4180
        %v4182 = vpop.f32.mrb[0].mxu0
        %v4183 = vadd.f32 0.0, %v4182
        %4184 = vdwg.mxu0
        %v4185 = vrot.slane %v1434, 3
        %s4186 = vtos %v4185
        %v4187 = vstv %s4186
        %v4189 = vmul.f32 %v1402, %v4187
        %v4190 = vmul.f32 %v1403, %v4187
        %v4191 = vmul.f32 %v1404, %v4187
        %v4192 = vmul.f32 %v1405, %v4187
        %v4193 = vmul.f32 %v1406, %v4187
        %v4194 = vmul.f32 %v1407, %v4187
        %v4195 = vmul.f32 %v1408, %v4187
        %v4196 = vmul.f32 %v1409, %v4187
        %v4197 = vmul.f32 %v1410, %v4187
        %v4198 = vmul.f32 %v1411, %v4187
        %v4199 = vmul.f32 %v1412, %v4187
        %v4200 = vmul.f32 %v1413, %v4187
        %v4201 = vmul.f32 %v1414, %v4187
        %v4202 = vmul.f32 %v1415, %v4187
        %v4203 = vmul.f32 %v1416, %v4187
        %v4204 = vmul.f32 %v1417, %v4187
        %v4205 = vmul.f32 %v1418, %v4187
        %v4206 = vmul.f32 %v1419, %v4187
        %v4207 = vmul.f32 %v1420, %v4187
        %v4208 = vmul.f32 %v1421, %v4187
        %v4209 = vmul.f32 %v1422, %v4187
        %v4210 = vmul.f32 %v1423, %v4187
        %v4211 = vmul.f32 %v1424, %v4187
        %v4212 = vmul.f32 %v1425, %v4187
        %v4213 = vmul.f32 %v1426, %v4187
        %v4214 = vmul.f32 %v1427, %v4187
        %v4215 = vmul.f32 %v1428, %v4187
        %v4216 = vmul.f32 %v1429, %v4187
        %v4217 = vmul.f32 %v1430, %v4187
        %v4218 = vmul.f32 %v1431, %v4187
        %v4219 = vmul.f32 %v1432, %v4187
        %v4220 = vmul.f32 %v1433, %v4187
        %v4221 = vmul.f32 %v4189, 1.442695
        %v4222 = vpow.pop %v4221
        %v4223 = vmul.f32 %v4190, 1.442695
        %v4224 = vpow.pop %v4223
        %v4225 = vmul.f32 %v4191, 1.442695
        %v4226 = vpow.pop %v4225
        %v4227 = vmul.f32 %v4192, 1.442695
        %v4228 = vpow.pop %v4227
        %v4229 = vmul.f32 %v4193, 1.442695
        %v4230 = vpow.pop %v4229
        %v4231 = vmul.f32 %v4194, 1.442695
        %v4232 = vpow.pop %v4231
        %v4233 = vmul.f32 %v4195, 1.442695
        %v4234 = vpow.pop %v4233
        %v4235 = vmul.f32 %v4196, 1.442695
        %v4236 = vpow.pop %v4235
        %v4237 = vmul.f32 %v4197, 1.442695
        %v4238 = vpow.pop %v4237
        %v4239 = vmul.f32 %v4198, 1.442695
        %v4240 = vpow.pop %v4239
        %v4241 = vmul.f32 %v4199, 1.442695
        %v4242 = vpow.pop %v4241
        %v4243 = vmul.f32 %v4200, 1.442695
        %v4244 = vpow.pop %v4243
        %v4245 = vmul.f32 %v4201, 1.442695
        %v4246 = vpow.pop %v4245
        %v4247 = vmul.f32 %v4202, 1.442695
        %v4248 = vpow.pop %v4247
        %v4249 = vmul.f32 %v4203, 1.442695
        %v4250 = vpow.pop %v4249
        %v4251 = vmul.f32 %v4204, 1.442695
        %v4252 = vpow.pop %v4251
        %v4253 = vmul.f32 %v4205, 1.442695
        %v4254 = vpow.pop %v4253
        %v4255 = vmul.f32 %v4206, 1.442695
        %v4256 = vpow.pop %v4255
        %v4257 = vmul.f32 %v4207, 1.442695
        %v4258 = vpow.pop %v4257
        %v4259 = vmul.f32 %v4208, 1.442695
        %v4260 = vpow.pop %v4259
        %v4261 = vmul.f32 %v4209, 1.442695
        %v4262 = vpow.pop %v4261
        %v4263 = vmul.f32 %v4210, 1.442695
        %v4264 = vpow.pop %v4263
        %v4265 = vmul.f32 %v4211, 1.442695
        %v4266 = vpow.pop %v4265
        %v4267 = vmul.f32 %v4212, 1.442695
        %v4268 = vpow.pop %v4267
        %v4269 = vmul.f32 %v4213, 1.442695
        %v4270 = vpow.pop %v4269
        %v4271 = vmul.f32 %v4214, 1.442695
        %v4272 = vpow.pop %v4271
        %v4273 = vmul.f32 %v4215, 1.442695
        %v4274 = vpow.pop %v4273
        %v4275 = vmul.f32 %v4216, 1.442695
        %v4276 = vpow.pop %v4275
        %v4277 = vmul.f32 %v4217, 1.442695
        %v4278 = vpow.pop %v4277
        %v4279 = vmul.f32 %v4218, 1.442695
        %v4280 = vpow.pop %v4279
        %v4281 = vmul.f32 %v4219, 1.442695
        %v4282 = vpow.pop %v4281
        %v4283 = vmul.f32 %v4220, 1.442695
        %v4284 = vpow.pop %v4283
        %v4285 = vsel %vm1338, %v4222, 0.0
        %v4286 = vsel %vm1339, %v4224, 0.0
        %v4287 = vsel %vm1340, %v4226, 0.0
        %v4288 = vsel %vm1341, %v4228, 0.0
        %v4289 = vsel %vm1342, %v4230, 0.0
        %v4290 = vsel %vm1343, %v4232, 0.0
        %v4291 = vsel %vm1344, %v4234, 0.0
        %v4292 = vsel %vm1345, %v4236, 0.0
        %v4293 = vsel %vm1346, %v4238, 0.0
        %v4294 = vsel %vm1347, %v4240, 0.0
        %v4295 = vsel %vm1348, %v4242, 0.0
        %v4296 = vsel %vm1349, %v4244, 0.0
        %v4297 = vsel %vm1350, %v4246, 0.0
        %v4298 = vsel %vm1351, %v4248, 0.0
        %v4299 = vsel %vm1352, %v4250, 0.0
        %v4300 = vsel %vm1353, %v4252, 0.0
        %v4301 = vsel %vm1354, %v4254, 0.0
        %v4302 = vsel %vm1355, %v4256, 0.0
        %v4303 = vsel %vm1356, %v4258, 0.0
        %v4304 = vsel %vm1357, %v4260, 0.0
        %v4305 = vsel %vm1358, %v4262, 0.0
        %v4306 = vsel %vm1359, %v4264, 0.0
        %v4307 = vsel %vm1360, %v4266, 0.0
        %v4308 = vsel %vm1361, %v4268, 0.0
        %v4309 = vsel %vm1362, %v4270, 0.0
        %v4310 = vsel %vm1363, %v4272, 0.0
        %v4311 = vsel %vm1364, %v4274, 0.0
        %v4312 = vsel %vm1365, %v4276, 0.0
        %v4313 = vsel %vm1366, %v4278, 0.0
        %v4314 = vsel %vm1367, %v4280, 0.0
        %v4315 = vsel %vm1368, %v4282, 0.0
        %v4316 = vsel %vm1369, %v4284, 0.0
        %v4317 = vmul.f32 %v4107, %v4285
        %v4318 = vmul.f32 %v4109, %v4286
        %v4319 = vmul.f32 %v4111, %v4287
        %v4320 = vmul.f32 %v4113, %v4288
        %v4321 = vmul.f32 %v4117, %v4289
        %v4322 = vmul.f32 %v4119, %v4290
        %v4323 = vmul.f32 %v4121, %v4291
        %v4324 = vmul.f32 %v4123, %v4292
        %v4325 = vmul.f32 %v4127, %v4293
        %v4326 = vmul.f32 %v4129, %v4294
        %v4327 = vmul.f32 %v4131, %v4295
        %v4328 = vmul.f32 %v4133, %v4296
        %v4329 = vmul.f32 %v4137, %v4297
        %v4330 = vmul.f32 %v4139, %v4298
        %v4331 = vmul.f32 %v4141, %v4299
        %v4332 = vmul.f32 %v4143, %v4300
        %v4333 = vmul.f32 %v4147, %v4301
        %v4334 = vmul.f32 %v4149, %v4302
        %v4335 = vmul.f32 %v4151, %v4303
        %v4336 = vmul.f32 %v4153, %v4304
        %v4337 = vmul.f32 %v4157, %v4305
        %v4338 = vmul.f32 %v4159, %v4306
        %v4339 = vmul.f32 %v4161, %v4307
        %v4340 = vmul.f32 %v4163, %v4308
        %v4341 = vmul.f32 %v4167, %v4309
        %v4342 = vmul.f32 %v4169, %v4310
        %v4343 = vmul.f32 %v4171, %v4311
        %v4344 = vmul.f32 %v4173, %v4312
        %v4345 = vmul.f32 %v4177, %v4313
        %v4346 = vmul.f32 %v4179, %v4314
        %v4347 = vmul.f32 %v4181, %v4315
        %v4348 = vmul.f32 %v4183, %v4316
        %v4349 = vmax.f32 %v4317, %v4318
        %4350 = vmax.xlane.f32.xlu0 %v4349
        %v4351 = vpop.xlane.xlu0 %4350
        %v4352 = vmax.f32 %v4319, %v4320
        %4353 = vmax.xlane.f32.xlu0 %v4352
        %v4354 = vpop.xlane.xlu0 %4353
        %v4355 = vmax.f32 %v4321, %v4322
        %4356 = vmax.xlane.f32.xlu0 %v4355
        %v4357 = vpop.xlane.xlu0 %4356
        %v4358 = vmax.f32 %v4323, %v4324
        %4359 = vmax.xlane.f32.xlu0 %v4358
        %v4360 = vpop.xlane.xlu0 %4359
        %v4361 = vmax.f32 %v4325, %v4326
        %4362 = vmax.xlane.f32.xlu0 %v4361
        %v4363 = vpop.xlane.xlu0 %4362
        %v4364 = vmax.f32 %v4327, %v4328
        %4365 = vmax.xlane.f32.xlu0 %v4364
        %v4366 = vpop.xlane.xlu0 %4365
        %v4367 = vmax.f32 %v4329, %v4330
        %4368 = vmax.xlane.f32.xlu0 %v4367
        %v4369 = vpop.xlane.xlu0 %4368
        %v4370 = vmax.f32 %v4331, %v4332
        %4371 = vmax.xlane.f32.xlu0 %v4370
        %v4372 = vpop.xlane.xlu0 %4371
        %v4373 = vmax.f32 %v4333, %v4334
        %4374 = vmax.xlane.f32.xlu0 %v4373
        %v4375 = vpop.xlane.xlu0 %4374
        %v4376 = vmax.f32 %v4335, %v4336
        %4377 = vmax.xlane.f32.xlu0 %v4376
        %v4378 = vpop.xlane.xlu0 %4377
        %v4379 = vmax.f32 %v4337, %v4338
        %4380 = vmax.xlane.f32.xlu0 %v4379
        %v4381 = vpop.xlane.xlu0 %4380
        %v4382 = vmax.f32 %v4339, %v4340
        %4383 = vmax.xlane.f32.xlu0 %v4382
        %v4384 = vpop.xlane.xlu0 %4383
        %v4385 = vmax.f32 %v4341, %v4342
        %4386 = vmax.xlane.f32.xlu0 %v4385
        %v4387 = vpop.xlane.xlu0 %4386
        %v4388 = vmax.f32 %v4343, %v4344
        %4389 = vmax.xlane.f32.xlu0 %v4388
        %v4390 = vpop.xlane.xlu0 %4389
        %v4391 = vmax.f32 %v4345, %v4346
        %4392 = vmax.xlane.f32.xlu0 %v4391
        %v4393 = vpop.xlane.xlu0 %4392
        %v4394 = vmax.f32 %v4347, %v4348
        %4395 = vmax.xlane.f32.xlu0 %v4394
        %v4396 = vpop.xlane.xlu0 %4395
        %v4397 = vsub.f32 %v4317, %v4351
        %v4398 = vsub.f32 %v4318, %v4351
        %v4399 = vsub.f32 %v4319, %v4354
        %v4400 = vsub.f32 %v4320, %v4354
        %v4401 = vsub.f32 %v4321, %v4357
        %v4402 = vsub.f32 %v4322, %v4357
        %v4403 = vsub.f32 %v4323, %v4360
        %v4404 = vsub.f32 %v4324, %v4360
        %v4405 = vsub.f32 %v4325, %v4363
        %v4406 = vsub.f32 %v4326, %v4363
        %v4407 = vsub.f32 %v4327, %v4366
        %v4408 = vsub.f32 %v4328, %v4366
        %v4409 = vsub.f32 %v4329, %v4369
        %v4410 = vsub.f32 %v4330, %v4369
        %v4411 = vsub.f32 %v4331, %v4372
        %v4412 = vsub.f32 %v4332, %v4372
        %v4413 = vsub.f32 %v4333, %v4375
        %v4414 = vsub.f32 %v4334, %v4375
        %v4415 = vsub.f32 %v4335, %v4378
        %v4416 = vsub.f32 %v4336, %v4378
        %v4417 = vsub.f32 %v4337, %v4381
        %v4418 = vsub.f32 %v4338, %v4381
        %v4419 = vsub.f32 %v4339, %v4384
        %v4420 = vsub.f32 %v4340, %v4384
        %v4421 = vsub.f32 %v4341, %v4387
        %v4422 = vsub.f32 %v4342, %v4387
        %v4423 = vsub.f32 %v4343, %v4390
        %v4424 = vsub.f32 %v4344, %v4390
        %v4425 = vsub.f32 %v4345, %v4393
        %v4426 = vsub.f32 %v4346, %v4393
        %v4427 = vsub.f32 %v4347, %v4396
        %v4428 = vsub.f32 %v4348, %v4396
        %v4429 = vmul.f32 %v4397, 1.442695
        %v4430 = vpow.pop %v4429
        %v4431 = vmul.f32 %v4398, 1.442695
        %v4432 = vpow.pop %v4431
        %v4433 = vmul.f32 %v4399, 1.442695
        %v4434 = vpow.pop %v4433
        %v4435 = vmul.f32 %v4400, 1.442695
        %v4436 = vpow.pop %v4435
        %v4437 = vmul.f32 %v4401, 1.442695
        %v4438 = vpow.pop %v4437
        %v4439 = vmul.f32 %v4402, 1.442695
        %v4440 = vpow.pop %v4439
        %v4441 = vmul.f32 %v4403, 1.442695
        %v4442 = vpow.pop %v4441
        %v4443 = vmul.f32 %v4404, 1.442695
        %v4444 = vpow.pop %v4443
        %v4445 = vmul.f32 %v4405, 1.442695
        %v4446 = vpow.pop %v4445
        %v4447 = vmul.f32 %v4406, 1.442695
        %v4448 = vpow.pop %v4447
        %v4449 = vmul.f32 %v4407, 1.442695
        %v4450 = vpow.pop %v4449
        %v4451 = vmul.f32 %v4408, 1.442695
        %v4452 = vpow.pop %v4451
        %v4453 = vmul.f32 %v4409, 1.442695
        %v4454 = vpow.pop %v4453
        %v4455 = vmul.f32 %v4410, 1.442695
        %v4456 = vpow.pop %v4455
        %v4457 = vmul.f32 %v4411, 1.442695
        %v4458 = vpow.pop %v4457
        %v4459 = vmul.f32 %v4412, 1.442695
        %v4460 = vpow.pop %v4459
        %v4461 = vmul.f32 %v4413, 1.442695
        %v4462 = vpow.pop %v4461
        %v4463 = vmul.f32 %v4414, 1.442695
        %v4464 = vpow.pop %v4463
        %v4465 = vmul.f32 %v4415, 1.442695
        %v4466 = vpow.pop %v4465
        %v4467 = vmul.f32 %v4416, 1.442695
        %v4468 = vpow.pop %v4467
        %v4469 = vmul.f32 %v4417, 1.442695
        %v4470 = vpow.pop %v4469
        %v4471 = vmul.f32 %v4418, 1.442695
        %v4472 = vpow.pop %v4471
        %v4473 = vmul.f32 %v4419, 1.442695
        %v4474 = vpow.pop %v4473
        %v4475 = vmul.f32 %v4420, 1.442695
        %v4476 = vpow.pop %v4475
        %v4477 = vmul.f32 %v4421, 1.442695
        %v4478 = vpow.pop %v4477
        %v4479 = vmul.f32 %v4422, 1.442695
        %v4480 = vpow.pop %v4479
        %v4481 = vmul.f32 %v4423, 1.442695
        %v4482 = vpow.pop %v4481
        %v4483 = vmul.f32 %v4424, 1.442695
        %v4484 = vpow.pop %v4483
        %v4485 = vmul.f32 %v4425, 1.442695
        %v4486 = vpow.pop %v4485
        %v4487 = vmul.f32 %v4426, 1.442695
        %v4488 = vpow.pop %v4487
        %v4489 = vmul.f32 %v4427, 1.442695
        %v4490 = vpow.pop %v4489
        %v4491 = vmul.f32 %v4428, 1.442695
        %v4492 = vpow.pop %v4491
        %v4493 = vadd.f32 %v4430, %v4432
        %4494 = vadd.xlane.f32.xlu0 %v4493
        %v4495 = vpop.xlane.xlu0 %4494
        %v4496 = vadd.f32 %v4434, %v4436
        %4497 = vadd.xlane.f32.xlu0 %v4496
        %v4498 = vpop.xlane.xlu0 %4497
        %v4499 = vadd.f32 %v4438, %v4440
        %4500 = vadd.xlane.f32.xlu0 %v4499
        %v4501 = vpop.xlane.xlu0 %4500
        %v4502 = vadd.f32 %v4442, %v4444
        %4503 = vadd.xlane.f32.xlu0 %v4502
        %v4504 = vpop.xlane.xlu0 %4503
        %v4505 = vadd.f32 %v4446, %v4448
        %4506 = vadd.xlane.f32.xlu0 %v4505
        %v4507 = vpop.xlane.xlu0 %4506
        %v4508 = vadd.f32 %v4450, %v4452
        %4509 = vadd.xlane.f32.xlu0 %v4508
        %v4510 = vpop.xlane.xlu0 %4509
        %v4511 = vadd.f32 %v4454, %v4456
        %4512 = vadd.xlane.f32.xlu0 %v4511
        %v4513 = vpop.xlane.xlu0 %4512
        %v4514 = vadd.f32 %v4458, %v4460
        %4515 = vadd.xlane.f32.xlu0 %v4514
        %v4516 = vpop.xlane.xlu0 %4515
        %v4517 = vadd.f32 %v4462, %v4464
        %4518 = vadd.xlane.f32.xlu0 %v4517
        %v4519 = vpop.xlane.xlu0 %4518
        %v4520 = vadd.f32 %v4466, %v4468
        %4521 = vadd.xlane.f32.xlu0 %v4520
        %v4522 = vpop.xlane.xlu0 %4521
        %v4523 = vadd.f32 %v4470, %v4472
        %4524 = vadd.xlane.f32.xlu0 %v4523
        %v4525 = vpop.xlane.xlu0 %4524
        %v4526 = vadd.f32 %v4474, %v4476
        %4527 = vadd.xlane.f32.xlu0 %v4526
        %v4528 = vpop.xlane.xlu0 %4527
        %v4529 = vadd.f32 %v4478, %v4480
        %4530 = vadd.xlane.f32.xlu0 %v4529
        %v4531 = vpop.xlane.xlu0 %4530
        %v4532 = vadd.f32 %v4482, %v4484
        %4533 = vadd.xlane.f32.xlu0 %v4532
        %v4534 = vpop.xlane.xlu0 %4533
        %v4535 = vadd.f32 %v4486, %v4488
        %4536 = vadd.xlane.f32.xlu0 %v4535
        %v4537 = vpop.xlane.xlu0 %4536
        %v4538 = vadd.f32 %v4490, %v4492
        %4539 = vadd.xlane.f32.xlu0 %v4538
        %v4540 = vpop.xlane.xlu0 %4539
        %v4541 = vrcp.pop %v4495
        %v4542 = vrcp.pop %v4498
        %v4543 = vrcp.pop %v4501
        %v4544 = vrcp.pop %v4504
        %v4545 = vrcp.pop %v4507
        %v4546 = vrcp.pop %v4510
        %v4547 = vrcp.pop %v4513
        %v4548 = vrcp.pop %v4516
        %v4549 = vrcp.pop %v4519
        %v4550 = vrcp.pop %v4522
        %v4551 = vrcp.pop %v4525
        %v4552 = vrcp.pop %v4528
        %v4553 = vrcp.pop %v4531
        %v4554 = vrcp.pop %v4534
        %v4555 = vrcp.pop %v4537
        %v4556 = vrcp.pop %v4540
        %v4557 = vmul.f32 %v4430, %v4541
        %v4558 = vmul.f32 %v4432, %v4541
        %v4559 = vmul.f32 %v4434, %v4542
        %v4560 = vmul.f32 %v4436, %v4542
        %v4561 = vmul.f32 %v4438, %v4543
        %v4562 = vmul.f32 %v4440, %v4543
        %v4563 = vmul.f32 %v4442, %v4544
        %v4564 = vmul.f32 %v4444, %v4544
        %v4565 = vmul.f32 %v4446, %v4545
        %v4566 = vmul.f32 %v4448, %v4545
        %v4567 = vmul.f32 %v4450, %v4546
        %v4568 = vmul.f32 %v4452, %v4546
        %v4569 = vmul.f32 %v4454, %v4547
        %v4570 = vmul.f32 %v4456, %v4547
        %v4571 = vmul.f32 %v4458, %v4548
        %v4572 = vmul.f32 %v4460, %v4548
        %v4573 = vmul.f32 %v4462, %v4549
        %v4574 = vmul.f32 %v4464, %v4549
        %v4575 = vmul.f32 %v4466, %v4550
        %v4576 = vmul.f32 %v4468, %v4550
        %v4577 = vmul.f32 %v4470, %v4551
        %v4578 = vmul.f32 %v4472, %v4551
        %v4579 = vmul.f32 %v4474, %v4552
        %v4580 = vmul.f32 %v4476, %v4552
        %v4581 = vmul.f32 %v4478, %v4553
        %v4582 = vmul.f32 %v4480, %v4553
        %v4583 = vmul.f32 %v4482, %v4554
        %v4584 = vmul.f32 %v4484, %v4554
        %v4585 = vmul.f32 %v4486, %v4555
        %v4586 = vmul.f32 %v4488, %v4555
        %v4587 = vmul.f32 %v4490, %v4556
        %v4588 = vmul.f32 %v4492, %v4556
        %v4589 = vpack.c.bf16 %v4559, %v4557
        %v4590 = vpack.c.bf16 %v4560, %v4558
        %v4591 = vpack.c.bf16 %v4563, %v4561
        %v4592 = vpack.c.bf16 %v4564, %v4562
        %v4593 = vpack.c.bf16 %v4567, %v4565
        %v4594 = vpack.c.bf16 %v4568, %v4566
        %v4595 = vpack.c.bf16 %v4571, %v4569
        %v4596 = vpack.c.bf16 %v4572, %v4570
        %v4597 = vpack.c.bf16 %v4575, %v4573
        %v4598 = vpack.c.bf16 %v4576, %v4574
        %v4599 = vpack.c.bf16 %v4579, %v4577
        %v4600 = vpack.c.bf16 %v4580, %v4578
        %v4601 = vpack.c.bf16 %v4583, %v4581
        %v4602 = vpack.c.bf16 %v4584, %v4582
        %v4603 = vpack.c.bf16 %v4587, %v4585
        %v4604 = vpack.c.bf16 %v4588, %v4586
        %4605 = vrot.lane.b32.xlu0 %v1253, 80
        %v4606 = vpop.permute.xlu0 %4605
        %4607 = vrot.lane.b32.xlu0 %v1254, 80
        %v4608 = vpop.permute.xlu0 %4607
        %4609 = vrot.lane.b32.xlu0 %v1255, 80
        %v4610 = vpop.permute.xlu0 %4609
        %4611 = vrot.lane.b32.xlu0 %v1256, 80
        %v4612 = vpop.permute.xlu0 %4611
        %4613 = vrot.lane.b32.xlu0 %v1257, 80
        %v4614 = vpop.permute.xlu0 %4613
        %4615 = vrot.lane.b32.xlu0 %v1258, 80
        %v4616 = vpop.permute.xlu0 %4615
        %4617 = vrot.lane.b32.xlu0 %v1259, 80
        %v4618 = vpop.permute.xlu0 %4617
        %4619 = vrot.lane.b32.xlu0 %v1260, 80
        %v4620 = vpop.permute.xlu0 %4619
        %4621 = vrot.lane.b32.xlu0 %v1261, 80
        %v4622 = vpop.permute.xlu0 %4621
        %4623 = vrot.lane.b32.xlu0 %v1262, 80
        %v4624 = vpop.permute.xlu0 %4623
        %4625 = vrot.lane.b32.xlu0 %v1263, 80
        %v4626 = vpop.permute.xlu0 %4625
        %4627 = vrot.lane.b32.xlu0 %v1264, 80
        %v4628 = vpop.permute.xlu0 %4627
        %4629 = vrot.lane.b32.xlu0 %v1265, 80
        %v4630 = vpop.permute.xlu0 %4629
        %4631 = vrot.lane.b32.xlu0 %v1266, 80
        %v4632 = vpop.permute.xlu0 %4631
        %4633 = vrot.lane.b32.xlu0 %v1267, 80
        %v4634 = vpop.permute.xlu0 %4633
        %4635 = vrot.lane.b32.xlu0 %v1268, 80
        %v4636 = vpop.permute.xlu0 %4635
        %4653 = vmatprep.subr.bf16.mxu0 0
        %4654 = vmatpush1.bf16.msra.mxu0 %v4606
        %4655 = vmatprep.subr.bf16.mxu0 0
        %4656 = vmatpush1.bf16.msra.mxu0 %v4608
        %4657 = vmatprep.subr.bf16.mxu0 0
        %4658 = vmatpush1.bf16.msra.mxu0 %v4610
        %4659 = vmatprep.subr.bf16.mxu0 0
        %4660 = vmatpush1.bf16.msra.mxu0 %v4612
        %4661 = vmatprep.subr.bf16.mxu0 0
        %4662 = vmatpush1.bf16.msra.mxu0 %v4614
        %4663 = vmatprep.subr.bf16.mxu0 0
        %4664 = vmatpush1.bf16.msra.mxu0 %v4616
        %4665 = vmatprep.subr.bf16.mxu0 0
        %4666 = vmatpush1.bf16.msra.mxu0 %v4618
        %4667 = vmatprep.subr.bf16.mxu0 0
        %4668 = vmatpush1.bf16.msra.mxu0 %v4620
        %4669 = vmatprep.subr.bf16.mxu0 0
        %4670 = vmatpush1.bf16.msra.mxu0 %v4622
        %4671 = vmatprep.subr.bf16.mxu0 0
        %4672 = vmatpush1.bf16.msra.mxu0 %v4624
        %4673 = vmatprep.subr.bf16.mxu0 0
        %4674 = vmatpush1.bf16.msra.mxu0 %v4626
        %4675 = vmatprep.subr.bf16.mxu0 0
        %4676 = vmatpush1.bf16.msra.mxu0 %v4628
        %4677 = vmatprep.subr.bf16.mxu0 0
        %4678 = vmatpush1.bf16.msra.mxu0 %v4630
        %4679 = vmatprep.subr.bf16.mxu0 0
        %4680 = vmatpush1.bf16.msra.mxu0 %v4632
        %4681 = vmatprep.subr.bf16.mxu0 0
        %4682 = vmatpush1.bf16.msra.mxu0 %v4634
        %4683 = vmatprep.subr.bf16.mxu0 0
        %4684 = vmatpush1.bf16.msra.mxu0 %v4636
        %4685 = vmatprep.mubr.bf16.mxu0 %v4590
        %4686 = vmatmul.mubr.bf16.gmra.mrb[0].mxu0 %v4589
        %v4687 = vpop.f32.mrb[0].mxu0
        %v4688 = vadd.f32 0.0, %v4687
        %v4689 = vpop.f32.mrb[0].mxu0
        %v4690 = vpop.f32.mrb[0].mxu0
        %v4691 = vadd.f32 0.0, %v4690
        %v4692 = vpop.f32.mrb[0].mxu0
        %4693 = vmatprep.mubr.bf16.mxu0 %v4592
        %4694 = vmatmul.mubr.bf16.gmra.mrb[0].mxu0 %v4591
        %v4695 = vpop.f32.mrb[0].mxu0
        %v4696 = vadd.f32 0.0, %v4695
        %v4697 = vpop.f32.mrb[0].mxu0
        %v4698 = vpop.f32.mrb[0].mxu0
        %v4699 = vadd.f32 0.0, %v4698
        %v4700 = vpop.f32.mrb[0].mxu0
        %4701 = vmatprep.mubr.bf16.mxu0 %v4594
        %4702 = vmatmul.mubr.bf16.gmra.mrb[0].mxu0 %v4593
        %v4703 = vpop.f32.mrb[0].mxu0
        %v4704 = vadd.f32 0.0, %v4703
        %v4705 = vpop.f32.mrb[0].mxu0
        %v4706 = vpop.f32.mrb[0].mxu0
        %v4707 = vadd.f32 0.0, %v4706
        %v4708 = vpop.f32.mrb[0].mxu0
        %4709 = vmatprep.mubr.bf16.mxu0 %v4596
        %4710 = vmatmul.mubr.bf16.gmra.mrb[0].mxu0 %v4595
        %v4711 = vpop.f32.mrb[0].mxu0
        %v4712 = vadd.f32 0.0, %v4711
        %v4713 = vpop.f32.mrb[0].mxu0
        %v4714 = vpop.f32.mrb[0].mxu0
        %v4715 = vadd.f32 0.0, %v4714
        %v4716 = vpop.f32.mrb[0].mxu0
        %4717 = vmatprep.mubr.bf16.mxu0 %v4598
        %4718 = vmatmul.mubr.bf16.gmra.mrb[0].mxu0 %v4597
        %v4719 = vpop.f32.mrb[0].mxu0
        %v4720 = vadd.f32 0.0, %v4719
        %v4721 = vpop.f32.mrb[0].mxu0
        %v4722 = vpop.f32.mrb[0].mxu0
        %v4723 = vadd.f32 0.0, %v4722
        %v4724 = vpop.f32.mrb[0].mxu0
        %4725 = vmatprep.mubr.bf16.mxu0 %v4600
        %4726 = vmatmul.mubr.bf16.gmra.mrb[0].mxu0 %v4599
        %v4727 = vpop.f32.mrb[0].mxu0
        %v4728 = vadd.f32 0.0, %v4727
        %v4729 = vpop.f32.mrb[0].mxu0
        %v4730 = vpop.f32.mrb[0].mxu0
        %v4731 = vadd.f32 0.0, %v4730
        %v4732 = vpop.f32.mrb[0].mxu0
        %4733 = vmatprep.mubr.bf16.mxu0 %v4602
        %4734 = vmatmul.mubr.bf16.gmra.mrb[0].mxu0 %v4601
        %v4735 = vpop.f32.mrb[0].mxu0
        %v4736 = vadd.f32 0.0, %v4735
        %v4737 = vpop.f32.mrb[0].mxu0
        %v4738 = vpop.f32.mrb[0].mxu0
        %v4739 = vadd.f32 0.0, %v4738
        %v4740 = vpop.f32.mrb[0].mxu0
        %4741 = vmatprep.mubr.bf16.mxu0 %v4604
        %4742 = vmatmul.mubr.bf16.gmra.mrb[0].mxu0 %v4603
        %v4743 = vpop.f32.mrb[0].mxu0
        %v4744 = vadd.f32 0.0, %v4743
        %v4745 = vpop.f32.mrb[0].mxu0
        %v4746 = vpop.f32.mrb[0].mxu0
        %v4747 = vadd.f32 0.0, %v4746
        %v4748 = vpop.f32.mrb[0].mxu0
        %4749 = vdwg.mxu0
        %4766 = vrot.lane.b32.xlu0 %v4688, 48
        %v4767 = vpop.permute.xlu0 %4766
        %4768 = vrot.lane.b32.xlu0 %v4691, 48
        %v4769 = vpop.permute.xlu0 %4768
        %4770 = vrot.lane.b32.xlu0 %v4696, 48
        %v4771 = vpop.permute.xlu0 %4770
        %4772 = vrot.lane.b32.xlu0 %v4699, 48
        %v4773 = vpop.permute.xlu0 %4772
        %4774 = vrot.lane.b32.xlu0 %v4704, 48
        %v4775 = vpop.permute.xlu0 %4774
        %4776 = vrot.lane.b32.xlu0 %v4707, 48
        %v4777 = vpop.permute.xlu0 %4776
        %4778 = vrot.lane.b32.xlu0 %v4712, 48
        %v4779 = vpop.permute.xlu0 %4778
        %4780 = vrot.lane.b32.xlu0 %v4715, 48
        %v4781 = vpop.permute.xlu0 %4780
        %4782 = vrot.lane.b32.xlu0 %v4720, 48
        %v4783 = vpop.permute.xlu0 %4782
        %4784 = vrot.lane.b32.xlu0 %v4723, 48
        %v4785 = vpop.permute.xlu0 %4784
        %4786 = vrot.lane.b32.xlu0 %v4728, 48
        %v4787 = vpop.permute.xlu0 %4786
        %4788 = vrot.lane.b32.xlu0 %v4731, 48
        %v4789 = vpop.permute.xlu0 %4788
        %4790 = vrot.lane.b32.xlu0 %v4736, 48
        %v4791 = vpop.permute.xlu0 %4790
        %4792 = vrot.lane.b32.xlu0 %v4739, 48
        %v4793 = vpop.permute.xlu0 %4792
        %4794 = vrot.lane.b32.xlu0 %v4744, 48
        %v4795 = vpop.permute.xlu0 %4794
        %4796 = vrot.lane.b32.xlu0 %v4747, 48
        %v4797 = vpop.permute.xlu0 %4796
        %vm4814 = vcmask 523648
        %4815 = vst.msk [vmem:[#allocation2] sm:$0xff] %vm4814, %v4767
        %4816 = vst.msk [vmem:[#allocation2 + $0x8] sm:$0xff] %vm4814, %v4769
        %4817 = vst.msk [vmem:[#allocation2 + $0x10] sm:$0xff] %vm4814, %v4771
        %4818 = vst.msk [vmem:[#allocation2 + $0x18] sm:$0xff] %vm4814, %v4773
        %4819 = vst.msk [vmem:[#allocation2 + $0x20] sm:$0xff] %vm4814, %v4775
        %4820 = vst.msk [vmem:[#allocation2 + $0x28] sm:$0xff] %vm4814, %v4777
        %4821 = vst.msk [vmem:[#allocation2 + $0x30] sm:$0xff] %vm4814, %v4779
        %4822 = vst.msk [vmem:[#allocation2 + $0x38] sm:$0xff] %vm4814, %v4781
        %4823 = vst.msk [vmem:[#allocation2 + $0x40] sm:$0xff] %vm4814, %v4783
        %4824 = vst.msk [vmem:[#allocation2 + $0x48] sm:$0xff] %vm4814, %v4785
        %4825 = vst.msk [vmem:[#allocation2 + $0x50] sm:$0xff] %vm4814, %v4787
        %4826 = vst.msk [vmem:[#allocation2 + $0x58] sm:$0xff] %vm4814, %v4789
        %4827 = vst.msk [vmem:[#allocation2 + $0x60] sm:$0xff] %vm4814, %v4791
        %4828 = vst.msk [vmem:[#allocation2 + $0x68] sm:$0xff] %vm4814, %v4793
        %4829 = vst.msk [vmem:[#allocation2 + $0x70] sm:$0xff] %vm4814, %v4795
        %4830 = vst.msk [vmem:[#allocation2 + $0x78] sm:$0xff] %vm4814, %v4797
        %4831 = vrot.lane.b32.xlu0 %v765, 64
        %v4832 = vpop.permute.xlu0 %4831
        %4833 = vrot.lane.b32.xlu0 %v766, 64
        %v4834 = vpop.permute.xlu0 %4833
        %4835 = vrot.lane.b32.xlu0 %v767, 64
        %v4836 = vpop.permute.xlu0 %4835
        %4837 = vrot.lane.b32.xlu0 %v768, 64
        %v4838 = vpop.permute.xlu0 %4837
        %4839 = vrot.lane.b32.xlu0 %v769, 64
        %v4840 = vpop.permute.xlu0 %4839
        %4841 = vrot.lane.b32.xlu0 %v770, 64
        %v4842 = vpop.permute.xlu0 %4841
        %4843 = vrot.lane.b32.xlu0 %v771, 64
        %v4844 = vpop.permute.xlu0 %4843
        %4845 = vrot.lane.b32.xlu0 %v772, 64
        %v4846 = vpop.permute.xlu0 %4845
        %4847 = vrot.lane.b32.xlu0 %v1005, 64
        %v4848 = vpop.permute.xlu0 %4847
        %4849 = vrot.lane.b32.xlu0 %v1006, 64
        %v4850 = vpop.permute.xlu0 %4849
        %4851 = vrot.lane.b32.xlu0 %v1007, 64
        %v4852 = vpop.permute.xlu0 %4851
        %4853 = vrot.lane.b32.xlu0 %v1008, 64
        %v4854 = vpop.permute.xlu0 %4853
        %4855 = vrot.lane.b32.xlu0 %v1009, 64
        %v4856 = vpop.permute.xlu0 %4855
        %4857 = vrot.lane.b32.xlu0 %v1010, 64
        %v4858 = vpop.permute.xlu0 %4857
        %4859 = vrot.lane.b32.xlu0 %v1011, 64
        %v4860 = vpop.permute.xlu0 %4859
        %4861 = vrot.lane.b32.xlu0 %v1012, 64
        %v4862 = vpop.permute.xlu0 %4861
        %4863 = vrot.lane.b32.xlu0 %v1013, 64
        %v4864 = vpop.permute.xlu0 %4863
        %4865 = vrot.lane.b32.xlu0 %v1014, 64
        %v4866 = vpop.permute.xlu0 %4865
        %4867 = vrot.lane.b32.xlu0 %v1015, 64
        %v4868 = vpop.permute.xlu0 %4867
        %4869 = vrot.lane.b32.xlu0 %v1016, 64
        %v4870 = vpop.permute.xlu0 %4869
        %4871 = vrot.lane.b32.xlu0 %v1017, 64
        %v4872 = vpop.permute.xlu0 %4871
        %4873 = vrot.lane.b32.xlu0 %v1018, 64
        %v4874 = vpop.permute.xlu0 %4873
        %4875 = vrot.lane.b32.xlu0 %v1019, 64
        %v4876 = vpop.permute.xlu0 %4875
        %4877 = vrot.lane.b32.xlu0 %v1020, 64
        %v4878 = vpop.permute.xlu0 %4877
        %v4880 = vsel %vm1435, %v4832, 0
        %v4883 = vsel %vm1435, %v4834, 0
        %v4886 = vsel %vm1435, %v4836, 0
        %v4889 = vsel %vm1435, %v4838, 0
        %v4892 = vsel %vm1435, %v4840, 0
        %v4895 = vsel %vm1435, %v4842, 0
        %v4898 = vsel %vm1435, %v4844, 0
        %v4901 = vsel %vm1435, %v4846, 0
        %v4904 = vsel %vm1435, %v4848, 0
        %v4907 = vsel %vm1435, %v4850, 0
        %v4910 = vsel %vm1435, %v4852, 0
        %v4913 = vsel %vm1435, %v4854, 0
        %v4916 = vsel %vm1435, %v4856, 0
        %v4919 = vsel %vm1435, %v4858, 0
        %v4922 = vsel %vm1435, %v4860, 0
        %v4925 = vsel %vm1435, %v4862, 0
        %v4928 = vsel %vm1435, %v4864, 0
        %v4931 = vsel %vm1435, %v4866, 0
        %v4934 = vsel %vm1435, %v4868, 0
        %v4937 = vsel %vm1435, %v4870, 0
        %v4940 = vsel %vm1435, %v4872, 0
        %v4943 = vsel %vm1435, %v4874, 0
        %v4946 = vsel %vm1435, %v4876, 0
        %v4949 = vsel %vm1435, %v4878, 0
        %4951 = vmatprep.subr.bf16.mxu0 0
        %4952 = vmatpush1.bf16.xpose.msra.mxu0 %v4904
        %4953 = vmatprep.subr.bf16.mxu0 0
        %4954 = vmatpush1.bf16.xpose.msra.mxu0 %v4907
        %4955 = vmatprep.subr.bf16.mxu0 0
        %4956 = vmatpush1.bf16.xpose.msra.mxu0 %v4910
        %4957 = vmatprep.subr.bf16.mxu0 0
        %4958 = vmatpush1.bf16.xpose.msra.mxu0 %v4913
        %4959 = vmatprep.subr.bf16.mxu0 0
        %4960 = vmatpush1.bf16.xpose.msra.mxu0 %v4916
        %4961 = vmatprep.subr.bf16.mxu0 0
        %4962 = vmatpush1.bf16.xpose.msra.mxu0 %v4919
        %4963 = vmatprep.subr.bf16.mxu0 0
        %4964 = vmatpush1.bf16.xpose.msra.mxu0 %v4922
        %4965 = vmatprep.subr.bf16.mxu0 0
        %4966 = vmatpush1.bf16.xpose.msra.mxu0 %v4925
        %4967 = vmatprep.subr.bf16.mxu0 0
        %4968 = vmatpush1.bf16.xpose.msra.mxu0 %v4928
        %4969 = vmatprep.subr.bf16.mxu0 0
        %4970 = vmatpush1.bf16.xpose.msra.mxu0 %v4931
        %4971 = vmatprep.subr.bf16.mxu0 0
        %4972 = vmatpush1.bf16.xpose.msra.mxu0 %v4934
        %4973 = vmatprep.subr.bf16.mxu0 0
        %4974 = vmatpush1.bf16.xpose.msra.mxu0 %v4937
        %4975 = vmatprep.subr.bf16.mxu0 0
        %4976 = vmatpush1.bf16.xpose.msra.mxu0 %v4940
        %4977 = vmatprep.subr.bf16.mxu0 0
        %4978 = vmatpush1.bf16.xpose.msra.mxu0 %v4943
        %4979 = vmatprep.subr.bf16.mxu0 0
        %4980 = vmatpush1.bf16.xpose.msra.mxu0 %v4946
        %4981 = vmatprep.subr.bf16.mxu0 0
        %4982 = vmatpush1.bf16.xpose.msra.mxu0 %v4949
        %4983 = vmatprep.mubr.bf16.mxu0 0
        %4984 = vmatmul.mubr.bf16.gmra.mrb[0].mxu0 %v4880
        %v4985 = vpop.f32.mrb[0].mxu0
        %v4986 = vadd.f32 0.0, %v4985
        %v4987 = vpop.f32.mrb[0].mxu0
        %v4988 = vadd.f32 0.0, %v4987
        %v4989 = vpop.f32.mrb[0].mxu0
        %v4990 = vadd.f32 0.0, %v4989
        %v4991 = vpop.f32.mrb[0].mxu0
        %v4992 = vadd.f32 0.0, %v4991
        %4993 = vmatprep.mubr.bf16.mxu0 0
        %4994 = vmatmul.mubr.bf16.gmra.mrb[0].mxu0 %v4883
        %v4995 = vpop.f32.mrb[0].mxu0
        %v4996 = vadd.f32 0.0, %v4995
        %v4997 = vpop.f32.mrb[0].mxu0
        %v4998 = vadd.f32 0.0, %v4997
        %v4999 = vpop.f32.mrb[0].mxu0
        %v5000 = vadd.f32 0.0, %v4999
        %v5001 = vpop.f32.mrb[0].mxu0
        %v5002 = vadd.f32 0.0, %v5001
        %5003 = vmatprep.mubr.bf16.mxu0 0
        %5004 = vmatmul.mubr.bf16.gmra.mrb[0].mxu0 %v4886
        %v5005 = vpop.f32.mrb[0].mxu0
        %v5006 = vadd.f32 0.0, %v5005
        %v5007 = vpop.f32.mrb[0].mxu0
        %v5008 = vadd.f32 0.0, %v5007
        %v5009 = vpop.f32.mrb[0].mxu0
        %v5010 = vadd.f32 0.0, %v5009
        %v5011 = vpop.f32.mrb[0].mxu0
        %v5012 = vadd.f32 0.0, %v5011
        %5013 = vmatprep.mubr.bf16.mxu0 0
        %5014 = vmatmul.mubr.bf16.gmra.mrb[0].mxu0 %v4889
        %v5015 = vpop.f32.mrb[0].mxu0
        %v5016 = vadd.f32 0.0, %v5015
        %v5017 = vpop.f32.mrb[0].mxu0
        %v5018 = vadd.f32 0.0, %v5017
        %v5019 = vpop.f32.mrb[0].mxu0
        %v5020 = vadd.f32 0.0, %v5019
        %v5021 = vpop.f32.mrb[0].mxu0
        %v5022 = vadd.f32 0.0, %v5021
        %5023 = vmatprep.mubr.bf16.mxu0 0
        %5024 = vmatmul.mubr.bf16.gmra.mrb[0].mxu0 %v4892
        %v5025 = vpop.f32.mrb[0].mxu0
        %v5026 = vadd.f32 0.0, %v5025
        %v5027 = vpop.f32.mrb[0].mxu0
        %v5028 = vadd.f32 0.0, %v5027
        %v5029 = vpop.f32.mrb[0].mxu0
        %v5030 = vadd.f32 0.0, %v5029
        %v5031 = vpop.f32.mrb[0].mxu0
        %v5032 = vadd.f32 0.0, %v5031
        %5033 = vmatprep.mubr.bf16.mxu0 0
        %5034 = vmatmul.mubr.bf16.gmra.mrb[0].mxu0 %v4895
        %v5035 = vpop.f32.mrb[0].mxu0
        %v5036 = vadd.f32 0.0, %v5035
        %v5037 = vpop.f32.mrb[0].mxu0
        %v5038 = vadd.f32 0.0, %v5037
        %v5039 = vpop.f32.mrb[0].mxu0
        %v5040 = vadd.f32 0.0, %v5039
        %v5041 = vpop.f32.mrb[0].mxu0
        %v5042 = vadd.f32 0.0, %v5041
        %5043 = vmatprep.mubr.bf16.mxu0 0
        %5044 = vmatmul.mubr.bf16.gmra.mrb[0].mxu0 %v4898
        %v5045 = vpop.f32.mrb[0].mxu0
        %v5046 = vadd.f32 0.0, %v5045
        %v5047 = vpop.f32.mrb[0].mxu0
        %v5048 = vadd.f32 0.0, %v5047
        %v5049 = vpop.f32.mrb[0].mxu0
        %v5050 = vadd.f32 0.0, %v5049
        %v5051 = vpop.f32.mrb[0].mxu0
        %v5052 = vadd.f32 0.0, %v5051
        %5053 = vmatprep.mubr.bf16.mxu0 0
        %5054 = vmatmul.mubr.bf16.gmra.mrb[0].mxu0 %v4901
        %v5055 = vpop.f32.mrb[0].mxu0
        %v5056 = vadd.f32 0.0, %v5055
        %v5057 = vpop.f32.mrb[0].mxu0
        %v5058 = vadd.f32 0.0, %v5057
        %v5059 = vpop.f32.mrb[0].mxu0
        %v5060 = vadd.f32 0.0, %v5059
        %v5061 = vpop.f32.mrb[0].mxu0
        %v5062 = vadd.f32 0.0, %v5061
        %5063 = vdwg.mxu0
        %v5064 = vrot.slane %v1434, 4
        %s5065 = vtos %v5064
        %v5066 = vstv %s5065
        %v5068 = vmul.f32 %v1402, %v5066
        %v5069 = vmul.f32 %v1403, %v5066
        %v5070 = vmul.f32 %v1404, %v5066
        %v5071 = vmul.f32 %v1405, %v5066
        %v5072 = vmul.f32 %v1406, %v5066
        %v5073 = vmul.f32 %v1407, %v5066
        %v5074 = vmul.f32 %v1408, %v5066
        %v5075 = vmul.f32 %v1409, %v5066
        %v5076 = vmul.f32 %v1410, %v5066
        %v5077 = vmul.f32 %v1411, %v5066
        %v5078 = vmul.f32 %v1412, %v5066
        %v5079 = vmul.f32 %v1413, %v5066
        %v5080 = vmul.f32 %v1414, %v5066
        %v5081 = vmul.f32 %v1415, %v5066
        %v5082 = vmul.f32 %v1416, %v5066
        %v5083 = vmul.f32 %v1417, %v5066
        %v5084 = vmul.f32 %v1418, %v5066
        %v5085 = vmul.f32 %v1419, %v5066
        %v5086 = vmul.f32 %v1420, %v5066
        %v5087 = vmul.f32 %v1421, %v5066
        %v5088 = vmul.f32 %v1422, %v5066
        %v5089 = vmul.f32 %v1423, %v5066
        %v5090 = vmul.f32 %v1424, %v5066
        %v5091 = vmul.f32 %v1425, %v5066
        %v5092 = vmul.f32 %v1426, %v5066
        %v5093 = vmul.f32 %v1427, %v5066
        %v5094 = vmul.f32 %v1428, %v5066
        %v5095 = vmul.f32 %v1429, %v5066
        %v5096 = vmul.f32 %v1430, %v5066
        %v5097 = vmul.f32 %v1431, %v5066
        %v5098 = vmul.f32 %v1432, %v5066
        %v5099 = vmul.f32 %v1433, %v5066
        %v5100 = vmul.f32 %v5068, 1.442695
        %v5101 = vpow.pop %v5100
        %v5102 = vmul.f32 %v5069, 1.442695
        %v5103 = vpow.pop %v5102
        %v5104 = vmul.f32 %v5070, 1.442695
        %v5105 = vpow.pop %v5104
        %v5106 = vmul.f32 %v5071, 1.442695
        %v5107 = vpow.pop %v5106
        %v5108 = vmul.f32 %v5072, 1.442695
        %v5109 = vpow.pop %v5108
        %v5110 = vmul.f32 %v5073, 1.442695
        %v5111 = vpow.pop %v5110
        %v5112 = vmul.f32 %v5074, 1.442695
        %v5113 = vpow.pop %v5112
        %v5114 = vmul.f32 %v5075, 1.442695
        %v5115 = vpow.pop %v5114
        %v5116 = vmul.f32 %v5076, 1.442695
        %v5117 = vpow.pop %v5116
        %v5118 = vmul.f32 %v5077, 1.442695
        %v5119 = vpow.pop %v5118
        %v5120 = vmul.f32 %v5078, 1.442695
        %v5121 = vpow.pop %v5120
        %v5122 = vmul.f32 %v5079, 1.442695
        %v5123 = vpow.pop %v5122
        %v5124 = vmul.f32 %v5080, 1.442695
        %v5125 = vpow.pop %v5124
        %v5126 = vmul.f32 %v5081, 1.442695
        %v5127 = vpow.pop %v5126
        %v5128 = vmul.f32 %v5082, 1.442695
        %v5129 = vpow.pop %v5128
        %v5130 = vmul.f32 %v5083, 1.442695
        %v5131 = vpow.pop %v5130
        %v5132 = vmul.f32 %v5084, 1.442695
        %v5133 = vpow.pop %v5132
        %v5134 = vmul.f32 %v5085, 1.442695
        %v5135 = vpow.pop %v5134
        %v5136 = vmul.f32 %v5086, 1.442695
        %v5137 = vpow.pop %v5136
        %v5138 = vmul.f32 %v5087, 1.442695
        %v5139 = vpow.pop %v5138
        %v5140 = vmul.f32 %v5088, 1.442695
        %v5141 = vpow.pop %v5140
        %v5142 = vmul.f32 %v5089, 1.442695
        %v5143 = vpow.pop %v5142
        %v5144 = vmul.f32 %v5090, 1.442695
        %v5145 = vpow.pop %v5144
        %v5146 = vmul.f32 %v5091, 1.442695
        %v5147 = vpow.pop %v5146
        %v5148 = vmul.f32 %v5092, 1.442695
        %v5149 = vpow.pop %v5148
        %v5150 = vmul.f32 %v5093, 1.442695
        %v5151 = vpow.pop %v5150
        %v5152 = vmul.f32 %v5094, 1.442695
        %v5153 = vpow.pop %v5152
        %v5154 = vmul.f32 %v5095, 1.442695
        %v5155 = vpow.pop %v5154
        %v5156 = vmul.f32 %v5096, 1.442695
        %v5157 = vpow.pop %v5156
        %v5158 = vmul.f32 %v5097, 1.442695
        %v5159 = vpow.pop %v5158
        %v5160 = vmul.f32 %v5098, 1.442695
        %v5161 = vpow.pop %v5160
        %v5162 = vmul.f32 %v5099, 1.442695
        %v5163 = vpow.pop %v5162
        %v5164 = vsel %vm1338, %v5101, 0.0
        %v5165 = vsel %vm1339, %v5103, 0.0
        %v5166 = vsel %vm1340, %v5105, 0.0
        %v5167 = vsel %vm1341, %v5107, 0.0
        %v5168 = vsel %vm1342, %v5109, 0.0
        %v5169 = vsel %vm1343, %v5111, 0.0
        %v5170 = vsel %vm1344, %v5113, 0.0
        %v5171 = vsel %vm1345, %v5115, 0.0
        %v5172 = vsel %vm1346, %v5117, 0.0
        %v5173 = vsel %vm1347, %v5119, 0.0
        %v5174 = vsel %vm1348, %v5121, 0.0
        %v5175 = vsel %vm1349, %v5123, 0.0
        %v5176 = vsel %vm1350, %v5125, 0.0
        %v5177 = vsel %vm1351, %v5127, 0.0
        %v5178 = vsel %vm1352, %v5129, 0.0
        %v5179 = vsel %vm1353, %v5131, 0.0
        %v5180 = vsel %vm1354, %v5133, 0.0
        %v5181 = vsel %vm1355, %v5135, 0.0
        %v5182 = vsel %vm1356, %v5137, 0.0
        %v5183 = vsel %vm1357, %v5139, 0.0
        %v5184 = vsel %vm1358, %v5141, 0.0
        %v5185 = vsel %vm1359, %v5143, 0.0
        %v5186 = vsel %vm1360, %v5145, 0.0
        %v5187 = vsel %vm1361, %v5147, 0.0
        %v5188 = vsel %vm1362, %v5149, 0.0
        %v5189 = vsel %vm1363, %v5151, 0.0
        %v5190 = vsel %vm1364, %v5153, 0.0
        %v5191 = vsel %vm1365, %v5155, 0.0
        %v5192 = vsel %vm1366, %v5157, 0.0
        %v5193 = vsel %vm1367, %v5159, 0.0
        %v5194 = vsel %vm1368, %v5161, 0.0
        %v5195 = vsel %vm1369, %v5163, 0.0
        %v5196 = vmul.f32 %v4986, %v5164
        %v5197 = vmul.f32 %v4988, %v5165
        %v5198 = vmul.f32 %v4990, %v5166
        %v5199 = vmul.f32 %v4992, %v5167
        %v5200 = vmul.f32 %v4996, %v5168
        %v5201 = vmul.f32 %v4998, %v5169
        %v5202 = vmul.f32 %v5000, %v5170
        %v5203 = vmul.f32 %v5002, %v5171
        %v5204 = vmul.f32 %v5006, %v5172
        %v5205 = vmul.f32 %v5008, %v5173
        %v5206 = vmul.f32 %v5010, %v5174
        %v5207 = vmul.f32 %v5012, %v5175
        %v5208 = vmul.f32 %v5016, %v5176
        %v5209 = vmul.f32 %v5018, %v5177
        %v5210 = vmul.f32 %v5020, %v5178
        %v5211 = vmul.f32 %v5022, %v5179
        %v5212 = vmul.f32 %v5026, %v5180
        %v5213 = vmul.f32 %v5028, %v5181
        %v5214 = vmul.f32 %v5030, %v5182
        %v5215 = vmul.f32 %v5032, %v5183
        %v5216 = vmul.f32 %v5036, %v5184
        %v5217 = vmul.f32 %v5038, %v5185
        %v5218 = vmul.f32 %v5040, %v5186
        %v5219 = vmul.f32 %v5042, %v5187
        %v5220 = vmul.f32 %v5046, %v5188
        %v5221 = vmul.f32 %v5048, %v5189
        %v5222 = vmul.f32 %v5050, %v5190
        %v5223 = vmul.f32 %v5052, %v5191
        %v5224 = vmul.f32 %v5056, %v5192
        %v5225 = vmul.f32 %v5058, %v5193
        %v5226 = vmul.f32 %v5060, %v5194
        %v5227 = vmul.f32 %v5062, %v5195
        %v5228 = vmax.f32 %v5196, %v5197
        %5229 = vmax.xlane.f32.xlu0 %v5228
        %v5230 = vpop.xlane.xlu0 %5229
        %v5231 = vmax.f32 %v5198, %v5199
        %5232 = vmax.xlane.f32.xlu0 %v5231
        %v5233 = vpop.xlane.xlu0 %5232
        %v5234 = vmax.f32 %v5200, %v5201
        %5235 = vmax.xlane.f32.xlu0 %v5234
        %v5236 = vpop.xlane.xlu0 %5235
        %v5237 = vmax.f32 %v5202, %v5203
        %5238 = vmax.xlane.f32.xlu0 %v5237
        %v5239 = vpop.xlane.xlu0 %5238
        %v5240 = vmax.f32 %v5204, %v5205
        %5241 = vmax.xlane.f32.xlu0 %v5240
        %v5242 = vpop.xlane.xlu0 %5241
        %v5243 = vmax.f32 %v5206, %v5207
        %5244 = vmax.xlane.f32.xlu0 %v5243
        %v5245 = vpop.xlane.xlu0 %5244
        %v5246 = vmax.f32 %v5208, %v5209
        %5247 = vmax.xlane.f32.xlu0 %v5246
        %v5248 = vpop.xlane.xlu0 %5247
        %v5249 = vmax.f32 %v5210, %v5211
        %5250 = vmax.xlane.f32.xlu0 %v5249
        %v5251 = vpop.xlane.xlu0 %5250
        %v5252 = vmax.f32 %v5212, %v5213
        %5253 = vmax.xlane.f32.xlu0 %v5252
        %v5254 = vpop.xlane.xlu0 %5253
        %v5255 = vmax.f32 %v5214, %v5215
        %5256 = vmax.xlane.f32.xlu0 %v5255
        %v5257 = vpop.xlane.xlu0 %5256
        %v5258 = vmax.f32 %v5216, %v5217
        %5259 = vmax.xlane.f32.xlu0 %v5258
        %v5260 = vpop.xlane.xlu0 %5259
        %v5261 = vmax.f32 %v5218, %v5219
        %5262 = vmax.xlane.f32.xlu0 %v5261
        %v5263 = vpop.xlane.xlu0 %5262
        %v5264 = vmax.f32 %v5220, %v5221
        %5265 = vmax.xlane.f32.xlu0 %v5264
        %v5266 = vpop.xlane.xlu0 %5265
        %v5267 = vmax.f32 %v5222, %v5223
        %5268 = vmax.xlane.f32.xlu0 %v5267
        %v5269 = vpop.xlane.xlu0 %5268
        %v5270 = vmax.f32 %v5224, %v5225
        %5271 = vmax.xlane.f32.xlu0 %v5270
        %v5272 = vpop.xlane.xlu0 %5271
        %v5273 = vmax.f32 %v5226, %v5227
        %5274 = vmax.xlane.f32.xlu0 %v5273
        %v5275 = vpop.xlane.xlu0 %5274
        %v5276 = vsub.f32 %v5196, %v5230
        %v5277 = vsub.f32 %v5197, %v5230
        %v5278 = vsub.f32 %v5198, %v5233
        %v5279 = vsub.f32 %v5199, %v5233
        %v5280 = vsub.f32 %v5200, %v5236
        %v5281 = vsub.f32 %v5201, %v5236
        %v5282 = vsub.f32 %v5202, %v5239
        %v5283 = vsub.f32 %v5203, %v5239
        %v5284 = vsub.f32 %v5204, %v5242
        %v5285 = vsub.f32 %v5205, %v5242
        %v5286 = vsub.f32 %v5206, %v5245
        %v5287 = vsub.f32 %v5207, %v5245
        %v5288 = vsub.f32 %v5208, %v5248
        %v5289 = vsub.f32 %v5209, %v5248
        %v5290 = vsub.f32 %v5210, %v5251
        %v5291 = vsub.f32 %v5211, %v5251
        %v5292 = vsub.f32 %v5212, %v5254
        %v5293 = vsub.f32 %v5213, %v5254
        %v5294 = vsub.f32 %v5214, %v5257
        %v5295 = vsub.f32 %v5215, %v5257
        %v5296 = vsub.f32 %v5216, %v5260
        %v5297 = vsub.f32 %v5217, %v5260
        %v5298 = vsub.f32 %v5218, %v5263
        %v5299 = vsub.f32 %v5219, %v5263
        %v5300 = vsub.f32 %v5220, %v5266
        %v5301 = vsub.f32 %v5221, %v5266
        %v5302 = vsub.f32 %v5222, %v5269
        %v5303 = vsub.f32 %v5223, %v5269
        %v5304 = vsub.f32 %v5224, %v5272
        %v5305 = vsub.f32 %v5225, %v5272
        %v5306 = vsub.f32 %v5226, %v5275
        %v5307 = vsub.f32 %v5227, %v5275
        %v5308 = vmul.f32 %v5276, 1.442695
        %v5309 = vpow.pop %v5308
        %v5310 = vmul.f32 %v5277, 1.442695
        %v5311 = vpow.pop %v5310
        %v5312 = vmul.f32 %v5278, 1.442695
        %v5313 = vpow.pop %v5312
        %v5314 = vmul.f32 %v5279, 1.442695
        %v5315 = vpow.pop %v5314
        %v5316 = vmul.f32 %v5280, 1.442695
        %v5317 = vpow.pop %v5316
        %v5318 = vmul.f32 %v5281, 1.442695
        %v5319 = vpow.pop %v5318
        %v5320 = vmul.f32 %v5282, 1.442695
        %v5321 = vpow.pop %v5320
        %v5322 = vmul.f32 %v5283, 1.442695
        %v5323 = vpow.pop %v5322
        %v5324 = vmul.f32 %v5284, 1.442695
        %v5325 = vpow.pop %v5324
        %v5326 = vmul.f32 %v5285, 1.442695
        %v5327 = vpow.pop %v5326
        %v5328 = vmul.f32 %v5286, 1.442695
        %v5329 = vpow.pop %v5328
        %v5330 = vmul.f32 %v5287, 1.442695
        %v5331 = vpow.pop %v5330
        %v5332 = vmul.f32 %v5288, 1.442695
        %v5333 = vpow.pop %v5332
        %v5334 = vmul.f32 %v5289, 1.442695
        %v5335 = vpow.pop %v5334
        %v5336 = vmul.f32 %v5290, 1.442695
        %v5337 = vpow.pop %v5336
        %v5338 = vmul.f32 %v5291, 1.442695
        %v5339 = vpow.pop %v5338
        %v5340 = vmul.f32 %v5292, 1.442695
        %v5341 = vpow.pop %v5340
        %v5342 = vmul.f32 %v5293, 1.442695
        %v5343 = vpow.pop %v5342
        %v5344 = vmul.f32 %v5294, 1.442695
        %v5345 = vpow.pop %v5344
        %v5346 = vmul.f32 %v5295, 1.442695
        %v5347 = vpow.pop %v5346
        %v5348 = vmul.f32 %v5296, 1.442695
        %v5349 = vpow.pop %v5348
        %v5350 = vmul.f32 %v5297, 1.442695
        %v5351 = vpow.pop %v5350
        %v5352 = vmul.f32 %v5298, 1.442695
        %v5353 = vpow.pop %v5352
        %v5354 = vmul.f32 %v5299, 1.442695
        %v5355 = vpow.pop %v5354
        %v5356 = vmul.f32 %v5300, 1.442695
        %v5357 = vpow.pop %v5356
        %v5358 = vmul.f32 %v5301, 1.442695
        %v5359 = vpow.pop %v5358
        %v5360 = vmul.f32 %v5302, 1.442695
        %v5361 = vpow.pop %v5360
        %v5362 = vmul.f32 %v5303, 1.442695
        %v5363 = vpow.pop %v5362
        %v5364 = vmul.f32 %v5304, 1.442695
        %v5365 = vpow.pop %v5364
        %v5366 = vmul.f32 %v5305, 1.442695
        %v5367 = vpow.pop %v5366
        %v5368 = vmul.f32 %v5306, 1.442695
        %v5369 = vpow.pop %v5368
        %v5370 = vmul.f32 %v5307, 1.442695
        %v5371 = vpow.pop %v5370
        %v5372 = vadd.f32 %v5309, %v5311
        %5373 = vadd.xlane.f32.xlu0 %v5372
        %v5374 = vpop.xlane.xlu0 %5373
        %v5375 = vadd.f32 %v5313, %v5315
        %5376 = vadd.xlane.f32.xlu0 %v5375
        %v5377 = vpop.xlane.xlu0 %5376
        %v5378 = vadd.f32 %v5317, %v5319
        %5379 = vadd.xlane.f32.xlu0 %v5378
        %v5380 = vpop.xlane.xlu0 %5379
        %v5381 = vadd.f32 %v5321, %v5323
        %5382 = vadd.xlane.f32.xlu0 %v5381
        %v5383 = vpop.xlane.xlu0 %5382
        %v5384 = vadd.f32 %v5325, %v5327
        %5385 = vadd.xlane.f32.xlu0 %v5384
        %v5386 = vpop.xlane.xlu0 %5385
        %v5387 = vadd.f32 %v5329, %v5331
        %5388 = vadd.xlane.f32.xlu0 %v5387
        %v5389 = vpop.xlane.xlu0 %5388
        %v5390 = vadd.f32 %v5333, %v5335
        %5391 = vadd.xlane.f32.xlu0 %v5390
        %v5392 = vpop.xlane.xlu0 %5391
        %v5393 = vadd.f32 %v5337, %v5339
        %5394 = vadd.xlane.f32.xlu0 %v5393
        %v5395 = vpop.xlane.xlu0 %5394
        %v5396 = vadd.f32 %v5341, %v5343
        %5397 = vadd.xlane.f32.xlu0 %v5396
        %v5398 = vpop.xlane.xlu0 %5397
        %v5399 = vadd.f32 %v5345, %v5347
        %5400 = vadd.xlane.f32.xlu0 %v5399
        %v5401 = vpop.xlane.xlu0 %5400
        %v5402 = vadd.f32 %v5349, %v5351
        %5403 = vadd.xlane.f32.xlu0 %v5402
        %v5404 = vpop.xlane.xlu0 %5403
        %v5405 = vadd.f32 %v5353, %v5355
        %5406 = vadd.xlane.f32.xlu0 %v5405
        %v5407 = vpop.xlane.xlu0 %5406
        %v5408 = vadd.f32 %v5357, %v5359
        %5409 = vadd.xlane.f32.xlu0 %v5408
        %v5410 = vpop.xlane.xlu0 %5409
        %v5411 = vadd.f32 %v5361, %v5363
        %5412 = vadd.xlane.f32.xlu0 %v5411
        %v5413 = vpop.xlane.xlu0 %5412
        %v5414 = vadd.f32 %v5365, %v5367
        %5415 = vadd.xlane.f32.xlu0 %v5414
        %v5416 = vpop.xlane.xlu0 %5415
        %v5417 = vadd.f32 %v5369, %v5371
        %5418 = vadd.xlane.f32.xlu0 %v5417
        %v5419 = vpop.xlane.xlu0 %5418
        %v5420 = vrcp.pop %v5374
        %v5421 = vrcp.pop %v5377
        %v5422 = vrcp.pop %v5380
        %v5423 = vrcp.pop %v5383
        %v5424 = vrcp.pop %v5386
        %v5425 = vrcp.pop %v5389
        %v5426 = vrcp.pop %v5392
        %v5427 = vrcp.pop %v5395
        %v5428 = vrcp.pop %v5398
        %v5429 = vrcp.pop %v5401
        %v5430 = vrcp.pop %v5404
        %v5431 = vrcp.pop %v5407
        %v5432 = vrcp.pop %v5410
        %v5433 = vrcp.pop %v5413
        %v5434 = vrcp.pop %v5416
        %v5435 = vrcp.pop %v5419
        %v5436 = vmul.f32 %v5309, %v5420
        %v5437 = vmul.f32 %v5311, %v5420
        %v5438 = vmul.f32 %v5313, %v5421
        %v5439 = vmul.f32 %v5315, %v5421
        %v5440 = vmul.f32 %v5317, %v5422
        %v5441 = vmul.f32 %v5319, %v5422
        %v5442 = vmul.f32 %v5321, %v5423
        %v5443 = vmul.f32 %v5323, %v5423
        %v5444 = vmul.f32 %v5325, %v5424
        %v5445 = vmul.f32 %v5327, %v5424
        %v5446 = vmul.f32 %v5329, %v5425
        %v5447 = vmul.f32 %v5331, %v5425
        %v5448 = vmul.f32 %v5333, %v5426
        %v5449 = vmul.f32 %v5335, %v5426
        %v5450 = vmul.f32 %v5337, %v5427
        %v5451 = vmul.f32 %v5339, %v5427
        %v5452 = vmul.f32 %v5341, %v5428
        %v5453 = vmul.f32 %v5343, %v5428
        %v5454 = vmul.f32 %v5345, %v5429
        %v5455 = vmul.f32 %v5347, %v5429
        %v5456 = vmul.f32 %v5349, %v5430
        %v5457 = vmul.f32 %v5351, %v5430
        %v5458 = vmul.f32 %v5353, %v5431
        %v5459 = vmul.f32 %v5355, %v5431
        %v5460 = vmul.f32 %v5357, %v5432
        %v5461 = vmul.f32 %v5359, %v5432
        %v5462 = vmul.f32 %v5361, %v5433
        %v5463 = vmul.f32 %v5363, %v5433
        %v5464 = vmul.f32 %v5365, %v5434
        %v5465 = vmul.f32 %v5367, %v5434
        %v5466 = vmul.f32 %v5369, %v5435
        %v5467 = vmul.f32 %v5371, %v5435
        %v5468 = vpack.c.bf16 %v5438, %v5436
        %v5469 = vpack.c.bf16 %v5439, %v5437
        %v5470 = vpack.c.bf16 %v5442, %v5440
        %v5471 = vpack.c.bf16 %v5443, %v5441
        %v5472 = vpack.c.bf16 %v5446, %v5444
        %v5473 = vpack.c.bf16 %v5447, %v5445
        %v5474 = vpack.c.bf16 %v5450, %v5448
        %v5475 = vpack.c.bf16 %v5451, %v5449
        %v5476 = vpack.c.bf16 %v5454, %v5452
        %v5477 = vpack.c.bf16 %v5455, %v5453
        %v5478 = vpack.c.bf16 %v5458, %v5456
        %v5479 = vpack.c.bf16 %v5459, %v5457
        %v5480 = vpack.c.bf16 %v5462, %v5460
        %v5481 = vpack.c.bf16 %v5463, %v5461
        %v5482 = vpack.c.bf16 %v5466, %v5464
        %v5483 = vpack.c.bf16 %v5467, %v5465
        %5484 = vrot.lane.b32.xlu0 %v1253, 64
        %v5485 = vpop.permute.xlu0 %5484
        %5486 = vrot.lane.b32.xlu0 %v1254, 64
        %v5487 = vpop.permute.xlu0 %5486
        %5488 = vrot.lane.b32.xlu0 %v1255, 64
        %v5489 = vpop.permute.xlu0 %5488
        %5490 = vrot.lane.b32.xlu0 %v1256, 64
        %v5491 = vpop.permute.xlu0 %5490
        %5492 = vrot.lane.b32.xlu0 %v1257, 64
        %v5493 = vpop.permute.xlu0 %5492
        %5494 = vrot.lane.b32.xlu0 %v1258, 64
        %v5495 = vpop.permute.xlu0 %5494
        %5496 = vrot.lane.b32.xlu0 %v1259, 64
        %v5497 = vpop.permute.xlu0 %5496
        %5498 = vrot.lane.b32.xlu0 %v1260, 64
        %v5499 = vpop.permute.xlu0 %5498
        %5500 = vrot.lane.b32.xlu0 %v1261, 64
        %v5501 = vpop.permute.xlu0 %5500
        %5502 = vrot.lane.b32.xlu0 %v1262, 64
        %v5503 = vpop.permute.xlu0 %5502
        %5504 = vrot.lane.b32.xlu0 %v1263, 64
        %v5505 = vpop.permute.xlu0 %5504
        %5506 = vrot.lane.b32.xlu0 %v1264, 64
        %v5507 = vpop.permute.xlu0 %5506
        %5508 = vrot.lane.b32.xlu0 %v1265, 64
        %v5509 = vpop.permute.xlu0 %5508
        %5510 = vrot.lane.b32.xlu0 %v1266, 64
        %v5511 = vpop.permute.xlu0 %5510
        %5512 = vrot.lane.b32.xlu0 %v1267, 64
        %v5513 = vpop.permute.xlu0 %5512
        %5514 = vrot.lane.b32.xlu0 %v1268, 64
        %v5515 = vpop.permute.xlu0 %5514
        %5532 = vmatprep.subr.bf16.mxu0 0
        %5533 = vmatpush1.bf16.msra.mxu0 %v5485
        %5534 = vmatprep.subr.bf16.mxu0 0
        %5535 = vmatpush1.bf16.msra.mxu0 %v5487
        %5536 = vmatprep.subr.bf16.mxu0 0
        %5537 = vmatpush1.bf16.msra.mxu0 %v5489
        %5538 = vmatprep.subr.bf16.mxu0 0
        %5539 = vmatpush1.bf16.msra.mxu0 %v5491
        %5540 = vmatprep.subr.bf16.mxu0 0
        %5541 = vmatpush1.bf16.msra.mxu0 %v5493
        %5542 = vmatprep.subr.bf16.mxu0 0
        %5543 = vmatpush1.bf16.msra.mxu0 %v5495
        %5544 = vmatprep.subr.bf16.mxu0 0
        %5545 = vmatpush1.bf16.msra.mxu0 %v5497
        %5546 = vmatprep.subr.bf16.mxu0 0
        %5547 = vmatpush1.bf16.msra.mxu0 %v5499
        %5548 = vmatprep.subr.bf16.mxu0 0
        %5549 = vmatpush1.bf16.msra.mxu0 %v5501
        %5550 = vmatprep.subr.bf16.mxu0 0
        %5551 = vmatpush1.bf16.msra.mxu0 %v5503
        %5552 = vmatprep.subr.bf16.mxu0 0
        %5553 = vmatpush1.bf16.msra.mxu0 %v5505
        %5554 = vmatprep.subr.bf16.mxu0 0
        %5555 = vmatpush1.bf16.msra.mxu0 %v5507
        %5556 = vmatprep.subr.bf16.mxu0 0
        %5557 = vmatpush1.bf16.msra.mxu0 %v5509
        %5558 = vmatprep.subr.bf16.mxu0 0
        %5559 = vmatpush1.bf16.msra.mxu0 %v5511
        %5560 = vmatprep.subr.bf16.mxu0 0
        %5561 = vmatpush1.bf16.msra.mxu0 %v5513
        %5562 = vmatprep.subr.bf16.mxu0 0
        %5563 = vmatpush1.bf16.msra.mxu0 %v5515
        %5564 = vmatprep.mubr.bf16.mxu0 %v5469
        %5565 = vmatmul.mubr.bf16.gmra.mrb[0].mxu0 %v5468
        %v5566 = vpop.f32.mrb[0].mxu0
        %v5567 = vadd.f32 0.0, %v5566
        %v5568 = vpop.f32.mrb[0].mxu0
        %v5569 = vpop.f32.mrb[0].mxu0
        %v5570 = vadd.f32 0.0, %v5569
        %v5571 = vpop.f32.mrb[0].mxu0
        %5572 = vmatprep.mubr.bf16.mxu0 %v5471
        %5573 = vmatmul.mubr.bf16.gmra.mrb[0].mxu0 %v5470
        %v5574 = vpop.f32.mrb[0].mxu0
        %v5575 = vadd.f32 0.0, %v5574
        %v5576 = vpop.f32.mrb[0].mxu0
        %v5577 = vpop.f32.mrb[0].mxu0
        %v5578 = vadd.f32 0.0, %v5577
        %v5579 = vpop.f32.mrb[0].mxu0
        %5580 = vmatprep.mubr.bf16.mxu0 %v5473
        %5581 = vmatmul.mubr.bf16.gmra.mrb[0].mxu0 %v5472
        %v5582 = vpop.f32.mrb[0].mxu0
        %v5583 = vadd.f32 0.0, %v5582
        %v5584 = vpop.f32.mrb[0].mxu0
        %v5585 = vpop.f32.mrb[0].mxu0
        %v5586 = vadd.f32 0.0, %v5585
        %v5587 = vpop.f32.mrb[0].mxu0
        %5588 = vmatprep.mubr.bf16.mxu0 %v5475
        %5589 = vmatmul.mubr.bf16.gmra.mrb[0].mxu0 %v5474
        %v5590 = vpop.f32.mrb[0].mxu0
        %v5591 = vadd.f32 0.0, %v5590
        %v5592 = vpop.f32.mrb[0].mxu0
        %v5593 = vpop.f32.mrb[0].mxu0
        %v5594 = vadd.f32 0.0, %v5593
        %v5595 = vpop.f32.mrb[0].mxu0
        %5596 = vmatprep.mubr.bf16.mxu0 %v5477
        %5597 = vmatmul.mubr.bf16.gmra.mrb[0].mxu0 %v5476
        %v5598 = vpop.f32.mrb[0].mxu0
        %v5599 = vadd.f32 0.0, %v5598
        %v5600 = vpop.f32.mrb[0].mxu0
        %v5601 = vpop.f32.mrb[0].mxu0
        %v5602 = vadd.f32 0.0, %v5601
        %v5603 = vpop.f32.mrb[0].mxu0
        %5604 = vmatprep.mubr.bf16.mxu0 %v5479
        %5605 = vmatmul.mubr.bf16.gmra.mrb[0].mxu0 %v5478
        %v5606 = vpop.f32.mrb[0].mxu0
        %v5607 = vadd.f32 0.0, %v5606
        %v5608 = vpop.f32.mrb[0].mxu0
        %v5609 = vpop.f32.mrb[0].mxu0
        %v5610 = vadd.f32 0.0, %v5609
        %v5611 = vpop.f32.mrb[0].mxu0
        %5612 = vmatprep.mubr.bf16.mxu0 %v5481
        %5613 = vmatmul.mubr.bf16.gmra.mrb[0].mxu0 %v5480
        %v5614 = vpop.f32.mrb[0].mxu0
        %v5615 = vadd.f32 0.0, %v5614
        %v5616 = vpop.f32.mrb[0].mxu0
        %v5617 = vpop.f32.mrb[0].mxu0
        %v5618 = vadd.f32 0.0, %v5617
        %v5619 = vpop.f32.mrb[0].mxu0
        %5620 = vmatprep.mubr.bf16.mxu0 %v5483
        %5621 = vmatmul.mubr.bf16.gmra.mrb[0].mxu0 %v5482
        %v5622 = vpop.f32.mrb[0].mxu0
        %v5623 = vadd.f32 0.0, %v5622
        %v5624 = vpop.f32.mrb[0].mxu0
        %v5625 = vpop.f32.mrb[0].mxu0
        %v5626 = vadd.f32 0.0, %v5625
        %v5627 = vpop.f32.mrb[0].mxu0
        %5628 = vdwg.mxu0
        %5645 = vrot.lane.b32.xlu0 %v5567, 64
        %v5646 = vpop.permute.xlu0 %5645
        %5647 = vrot.lane.b32.xlu0 %v5570, 64
        %v5648 = vpop.permute.xlu0 %5647
        %5649 = vrot.lane.b32.xlu0 %v5575, 64
        %v5650 = vpop.permute.xlu0 %5649
        %5651 = vrot.lane.b32.xlu0 %v5578, 64
        %v5652 = vpop.permute.xlu0 %5651
        %5653 = vrot.lane.b32.xlu0 %v5583, 64
        %v5654 = vpop.permute.xlu0 %5653
        %5655 = vrot.lane.b32.xlu0 %v5586, 64
        %v5656 = vpop.permute.xlu0 %5655
        %5657 = vrot.lane.b32.xlu0 %v5591, 64
        %v5658 = vpop.permute.xlu0 %5657
        %5659 = vrot.lane.b32.xlu0 %v5594, 64
        %v5660 = vpop.permute.xlu0 %5659
        %5661 = vrot.lane.b32.xlu0 %v5599, 64
        %v5662 = vpop.permute.xlu0 %5661
        %5663 = vrot.lane.b32.xlu0 %v5602, 64
        %v5664 = vpop.permute.xlu0 %5663
        %5665 = vrot.lane.b32.xlu0 %v5607, 64
        %v5666 = vpop.permute.xlu0 %5665
        %5667 = vrot.lane.b32.xlu0 %v5610, 64
        %v5668 = vpop.permute.xlu0 %5667
        %5669 = vrot.lane.b32.xlu0 %v5615, 64
        %v5670 = vpop.permute.xlu0 %5669
        %5671 = vrot.lane.b32.xlu0 %v5618, 64
        %v5672 = vpop.permute.xlu0 %5671
        %5673 = vrot.lane.b32.xlu0 %v5623, 64
        %v5674 = vpop.permute.xlu0 %5673
        %5675 = vrot.lane.b32.xlu0 %v5626, 64
        %v5676 = vpop.permute.xlu0 %5675
        %vm5693 = vcmask 654848
        %5694 = vst.msk [vmem:[#allocation2] sm:$0xff] %vm5693, %v5646
        %5695 = vst.msk [vmem:[#allocation2 + $0x8] sm:$0xff] %vm5693, %v5648
        %5696 = vst.msk [vmem:[#allocation2 + $0x10] sm:$0xff] %vm5693, %v5650
        %5697 = vst.msk [vmem:[#allocation2 + $0x18] sm:$0xff] %vm5693, %v5652
        %5698 = vst.msk [vmem:[#allocation2 + $0x20] sm:$0xff] %vm5693, %v5654
        %5699 = vst.msk [vmem:[#allocation2 + $0x28] sm:$0xff] %vm5693, %v5656
        %5700 = vst.msk [vmem:[#allocation2 + $0x30] sm:$0xff] %vm5693, %v5658
        %5701 = vst.msk [vmem:[#allocation2 + $0x38] sm:$0xff] %vm5693, %v5660
        %5702 = vst.msk [vmem:[#allocation2 + $0x40] sm:$0xff] %vm5693, %v5662
        %5703 = vst.msk [vmem:[#allocation2 + $0x48] sm:$0xff] %vm5693, %v5664
        %5704 = vst.msk [vmem:[#allocation2 + $0x50] sm:$0xff] %vm5693, %v5666
        %5705 = vst.msk [vmem:[#allocation2 + $0x58] sm:$0xff] %vm5693, %v5668
        %5706 = vst.msk [vmem:[#allocation2 + $0x60] sm:$0xff] %vm5693, %v5670
        %5707 = vst.msk [vmem:[#allocation2 + $0x68] sm:$0xff] %vm5693, %v5672
        %5708 = vst.msk [vmem:[#allocation2 + $0x70] sm:$0xff] %vm5693, %v5674
        %5709 = vst.msk [vmem:[#allocation2 + $0x78] sm:$0xff] %vm5693, %v5676
        %5710 = vrot.lane.b32.xlu0 %v765, 48
        %v5711 = vpop.permute.xlu0 %5710
        %5712 = vrot.lane.b32.xlu0 %v766, 48
        %v5713 = vpop.permute.xlu0 %5712
        %5714 = vrot.lane.b32.xlu0 %v767, 48
        %v5715 = vpop.permute.xlu0 %5714
        %5716 = vrot.lane.b32.xlu0 %v768, 48
        %v5717 = vpop.permute.xlu0 %5716
        %5718 = vrot.lane.b32.xlu0 %v769, 48
        %v5719 = vpop.permute.xlu0 %5718
        %5720 = vrot.lane.b32.xlu0 %v770, 48
        %v5721 = vpop.permute.xlu0 %5720
        %5722 = vrot.lane.b32.xlu0 %v771, 48
        %v5723 = vpop.permute.xlu0 %5722
        %5724 = vrot.lane.b32.xlu0 %v772, 48
        %v5725 = vpop.permute.xlu0 %5724
        %5726 = vrot.lane.b32.xlu0 %v1005, 48
        %v5727 = vpop.permute.xlu0 %5726
        %5728 = vrot.lane.b32.xlu0 %v1006, 48
        %v5729 = vpop.permute.xlu0 %5728
        %5730 = vrot.lane.b32.xlu0 %v1007, 48
        %v5731 = vpop.permute.xlu0 %5730
        %5732 = vrot.lane.b32.xlu0 %v1008, 48
        %v5733 = vpop.permute.xlu0 %5732
        %5734 = vrot.lane.b32.xlu0 %v1009, 48
        %v5735 = vpop.permute.xlu0 %5734
        %5736 = vrot.lane.b32.xlu0 %v1010, 48
        %v5737 = vpop.permute.xlu0 %5736
        %5738 = vrot.lane.b32.xlu0 %v1011, 48
        %v5739 = vpop.permute.xlu0 %5738
        %5740 = vrot.lane.b32.xlu0 %v1012, 48
        %v5741 = vpop.permute.xlu0 %5740
        %5742 = vrot.lane.b32.xlu0 %v1013, 48
        %v5743 = vpop.permute.xlu0 %5742
        %5744 = vrot.lane.b32.xlu0 %v1014, 48
        %v5745 = vpop.permute.xlu0 %5744
        %5746 = vrot.lane.b32.xlu0 %v1015, 48
        %v5747 = vpop.permute.xlu0 %5746
        %5748 = vrot.lane.b32.xlu0 %v1016, 48
        %v5749 = vpop.permute.xlu0 %5748
        %5750 = vrot.lane.b32.xlu0 %v1017, 48
        %v5751 = vpop.permute.xlu0 %5750
        %5752 = vrot.lane.b32.xlu0 %v1018, 48
        %v5753 = vpop.permute.xlu0 %5752
        %5754 = vrot.lane.b32.xlu0 %v1019, 48
        %v5755 = vpop.permute.xlu0 %5754
        %5756 = vrot.lane.b32.xlu0 %v1020, 48
        %v5757 = vpop.permute.xlu0 %5756
        %v5759 = vsel %vm1435, %v5711, 0
        %v5762 = vsel %vm1435, %v5713, 0
        %v5765 = vsel %vm1435, %v5715, 0
        %v5768 = vsel %vm1435, %v5717, 0
        %v5771 = vsel %vm1435, %v5719, 0
        %v5774 = vsel %vm1435, %v5721, 0
        %v5777 = vsel %vm1435, %v5723, 0
        %v5780 = vsel %vm1435, %v5725, 0
        %v5783 = vsel %vm1435, %v5727, 0
        %v5786 = vsel %vm1435, %v5729, 0
        %v5789 = vsel %vm1435, %v5731, 0
        %v5792 = vsel %vm1435, %v5733, 0
        %v5795 = vsel %vm1435, %v5735, 0
        %v5798 = vsel %vm1435, %v5737, 0
        %v5801 = vsel %vm1435, %v5739, 0
        %v5804 = vsel %vm1435, %v5741, 0
        %v5807 = vsel %vm1435, %v5743, 0
        %v5810 = vsel %vm1435, %v5745, 0
        %v5813 = vsel %vm1435, %v5747, 0
        %v5816 = vsel %vm1435, %v5749, 0
        %v5819 = vsel %vm1435, %v5751, 0
        %v5822 = vsel %vm1435, %v5753, 0
        %v5825 = vsel %vm1435, %v5755, 0
        %v5828 = vsel %vm1435, %v5757, 0
        %5830 = vmatprep.subr.bf16.mxu0 0
        %5831 = vmatpush1.bf16.xpose.msra.mxu0 %v5783
        %5832 = vmatprep.subr.bf16.mxu0 0
        %5833 = vmatpush1.bf16.xpose.msra.mxu0 %v5786
        %5834 = vmatprep.subr.bf16.mxu0 0
        %5835 = vmatpush1.bf16.xpose.msra.mxu0 %v5789
        %5836 = vmatprep.subr.bf16.mxu0 0
        %5837 = vmatpush1.bf16.xpose.msra.mxu0 %v5792
        %5838 = vmatprep.subr.bf16.mxu0 0
        %5839 = vmatpush1.bf16.xpose.msra.mxu0 %v5795
        %5840 = vmatprep.subr.bf16.mxu0 0
        %5841 = vmatpush1.bf16.xpose.msra.mxu0 %v5798
        %5842 = vmatprep.subr.bf16.mxu0 0
        %5843 = vmatpush1.bf16.xpose.msra.mxu0 %v5801
        %5844 = vmatprep.subr.bf16.mxu0 0
        %5845 = vmatpush1.bf16.xpose.msra.mxu0 %v5804
        %5846 = vmatprep.subr.bf16.mxu0 0
        %5847 = vmatpush1.bf16.xpose.msra.mxu0 %v5807
        %5848 = vmatprep.subr.bf16.mxu0 0
        %5849 = vmatpush1.bf16.xpose.msra.mxu0 %v5810
        %5850 = vmatprep.subr.bf16.mxu0 0
        %5851 = vmatpush1.bf16.xpose.msra.mxu0 %v5813
        %5852 = vmatprep.subr.bf16.mxu0 0
        %5853 = vmatpush1.bf16.xpose.msra.mxu0 %v5816
        %5854 = vmatprep.subr.bf16.mxu0 0
        %5855 = vmatpush1.bf16.xpose.msra.mxu0 %v5819
        %5856 = vmatprep.subr.bf16.mxu0 0
        %5857 = vmatpush1.bf16.xpose.msra.mxu0 %v5822
        %5858 = vmatprep.subr.bf16.mxu0 0
        %5859 = vmatpush1.bf16.xpose.msra.mxu0 %v5825
        %5860 = vmatprep.subr.bf16.mxu0 0
        %5861 = vmatpush1.bf16.xpose.msra.mxu0 %v5828
        %5862 = vmatprep.mubr.bf16.mxu0 0
        %5863 = vmatmul.mubr.bf16.gmra.mrb[0].mxu0 %v5759
        %v5864 = vpop.f32.mrb[0].mxu0
        %v5865 = vadd.f32 0.0, %v5864
        %v5866 = vpop.f32.mrb[0].mxu0
        %v5867 = vadd.f32 0.0, %v5866
        %v5868 = vpop.f32.mrb[0].mxu0
        %v5869 = vadd.f32 0.0, %v5868
        %v5870 = vpop.f32.mrb[0].mxu0
        %v5871 = vadd.f32 0.0, %v5870
        %5872 = vmatprep.mubr.bf16.mxu0 0
        %5873 = vmatmul.mubr.bf16.gmra.mrb[0].mxu0 %v5762
        %v5874 = vpop.f32.mrb[0].mxu0
        %v5875 = vadd.f32 0.0, %v5874
        %v5876 = vpop.f32.mrb[0].mxu0
        %v5877 = vadd.f32 0.0, %v5876
        %v5878 = vpop.f32.mrb[0].mxu0
        %v5879 = vadd.f32 0.0, %v5878
        %v5880 = vpop.f32.mrb[0].mxu0
        %v5881 = vadd.f32 0.0, %v5880
        %5882 = vmatprep.mubr.bf16.mxu0 0
        %5883 = vmatmul.mubr.bf16.gmra.mrb[0].mxu0 %v5765
        %v5884 = vpop.f32.mrb[0].mxu0
        %v5885 = vadd.f32 0.0, %v5884
        %v5886 = vpop.f32.mrb[0].mxu0
        %v5887 = vadd.f32 0.0, %v5886
        %v5888 = vpop.f32.mrb[0].mxu0
        %v5889 = vadd.f32 0.0, %v5888
        %v5890 = vpop.f32.mrb[0].mxu0
        %v5891 = vadd.f32 0.0, %v5890
        %5892 = vmatprep.mubr.bf16.mxu0 0
        %5893 = vmatmul.mubr.bf16.gmra.mrb[0].mxu0 %v5768
        %v5894 = vpop.f32.mrb[0].mxu0
        %v5895 = vadd.f32 0.0, %v5894
        %v5896 = vpop.f32.mrb[0].mxu0
        %v5897 = vadd.f32 0.0, %v5896
        %v5898 = vpop.f32.mrb[0].mxu0
        %v5899 = vadd.f32 0.0, %v5898
        %v5900 = vpop.f32.mrb[0].mxu0
        %v5901 = vadd.f32 0.0, %v5900
        %5902 = vmatprep.mubr.bf16.mxu0 0
        %5903 = vmatmul.mubr.bf16.gmra.mrb[0].mxu0 %v5771
        %v5904 = vpop.f32.mrb[0].mxu0
        %v5905 = vadd.f32 0.0, %v5904
        %v5906 = vpop.f32.mrb[0].mxu0
        %v5907 = vadd.f32 0.0, %v5906
        %v5908 = vpop.f32.mrb[0].mxu0
        %v5909 = vadd.f32 0.0, %v5908
        %v5910 = vpop.f32.mrb[0].mxu0
        %v5911 = vadd.f32 0.0, %v5910
        %5912 = vmatprep.mubr.bf16.mxu0 0
        %5913 = vmatmul.mubr.bf16.gmra.mrb[0].mxu0 %v5774
        %v5914 = vpop.f32.mrb[0].mxu0
        %v5915 = vadd.f32 0.0, %v5914
        %v5916 = vpop.f32.mrb[0].mxu0
        %v5917 = vadd.f32 0.0, %v5916
        %v5918 = vpop.f32.mrb[0].mxu0
        %v5919 = vadd.f32 0.0, %v5918
        %v5920 = vpop.f32.mrb[0].mxu0
        %v5921 = vadd.f32 0.0, %v5920
        %5922 = vmatprep.mubr.bf16.mxu0 0
        %5923 = vmatmul.mubr.bf16.gmra.mrb[0].mxu0 %v5777
        %v5924 = vpop.f32.mrb[0].mxu0
        %v5925 = vadd.f32 0.0, %v5924
        %v5926 = vpop.f32.mrb[0].mxu0
        %v5927 = vadd.f32 0.0, %v5926
        %v5928 = vpop.f32.mrb[0].mxu0
        %v5929 = vadd.f32 0.0, %v5928
        %v5930 = vpop.f32.mrb[0].mxu0
        %v5931 = vadd.f32 0.0, %v5930
        %5932 = vmatprep.mubr.bf16.mxu0 0
        %5933 = vmatmul.mubr.bf16.gmra.mrb[0].mxu0 %v5780
        %v5934 = vpop.f32.mrb[0].mxu0
        %v5935 = vadd.f32 0.0, %v5934
        %v5936 = vpop.f32.mrb[0].mxu0
        %v5937 = vadd.f32 0.0, %v5936
        %v5938 = vpop.f32.mrb[0].mxu0
        %v5939 = vadd.f32 0.0, %v5938
        %v5940 = vpop.f32.mrb[0].mxu0
        %v5941 = vadd.f32 0.0, %v5940
        %5942 = vdwg.mxu0
        %v5943 = vrot.slane %v1434, 5
        %s5944 = vtos %v5943
        %v5945 = vstv %s5944
        %v5947 = vmul.f32 %v1402, %v5945
        %v5948 = vmul.f32 %v1403, %v5945
        %v5949 = vmul.f32 %v1404, %v5945
        %v5950 = vmul.f32 %v1405, %v5945
        %v5951 = vmul.f32 %v1406, %v5945
        %v5952 = vmul.f32 %v1407, %v5945
        %v5953 = vmul.f32 %v1408, %v5945
        %v5954 = vmul.f32 %v1409, %v5945
        %v5955 = vmul.f32 %v1410, %v5945
        %v5956 = vmul.f32 %v1411, %v5945
        %v5957 = vmul.f32 %v1412, %v5945
        %v5958 = vmul.f32 %v1413, %v5945
        %v5959 = vmul.f32 %v1414, %v5945
        %v5960 = vmul.f32 %v1415, %v5945
        %v5961 = vmul.f32 %v1416, %v5945
        %v5962 = vmul.f32 %v1417, %v5945
        %v5963 = vmul.f32 %v1418, %v5945
        %v5964 = vmul.f32 %v1419, %v5945
        %v5965 = vmul.f32 %v1420, %v5945
        %v5966 = vmul.f32 %v1421, %v5945
        %v5967 = vmul.f32 %v1422, %v5945
        %v5968 = vmul.f32 %v1423, %v5945
        %v5969 = vmul.f32 %v1424, %v5945
        %v5970 = vmul.f32 %v1425, %v5945
        %v5971 = vmul.f32 %v1426, %v5945
        %v5972 = vmul.f32 %v1427, %v5945
        %v5973 = vmul.f32 %v1428, %v5945
        %v5974 = vmul.f32 %v1429, %v5945
        %v5975 = vmul.f32 %v1430, %v5945
        %v5976 = vmul.f32 %v1431, %v5945
        %v5977 = vmul.f32 %v1432, %v5945
        %v5978 = vmul.f32 %v1433, %v5945
        %v5979 = vmul.f32 %v5947, 1.442695
        %v5980 = vpow.pop %v5979
        %v5981 = vmul.f32 %v5948, 1.442695
        %v5982 = vpow.pop %v5981
        %v5983 = vmul.f32 %v5949, 1.442695
        %v5984 = vpow.pop %v5983
        %v5985 = vmul.f32 %v5950, 1.442695
        %v5986 = vpow.pop %v5985
        %v5987 = vmul.f32 %v5951, 1.442695
        %v5988 = vpow.pop %v5987
        %v5989 = vmul.f32 %v5952, 1.442695
        %v5990 = vpow.pop %v5989
        %v5991 = vmul.f32 %v5953, 1.442695
        %v5992 = vpow.pop %v5991
        %v5993 = vmul.f32 %v5954, 1.442695
        %v5994 = vpow.pop %v5993
        %v5995 = vmul.f32 %v5955, 1.442695
        %v5996 = vpow.pop %v5995
        %v5997 = vmul.f32 %v5956, 1.442695
        %v5998 = vpow.pop %v5997
        %v5999 = vmul.f32 %v5957, 1.442695
        %v6000 = vpow.pop %v5999
        %v6001 = vmul.f32 %v5958, 1.442695
        %v6002 = vpow.pop %v6001
        %v6003 = vmul.f32 %v5959, 1.442695
        %v6004 = vpow.pop %v6003
        %v6005 = vmul.f32 %v5960, 1.442695
        %v6006 = vpow.pop %v6005
        %v6007 = vmul.f32 %v5961, 1.442695
        %v6008 = vpow.pop %v6007
        %v6009 = vmul.f32 %v5962, 1.442695
        %v6010 = vpow.pop %v6009
        %v6011 = vmul.f32 %v5963, 1.442695
        %v6012 = vpow.pop %v6011
        %v6013 = vmul.f32 %v5964, 1.442695
        %v6014 = vpow.pop %v6013
        %v6015 = vmul.f32 %v5965, 1.442695
        %v6016 = vpow.pop %v6015
        %v6017 = vmul.f32 %v5966, 1.442695
        %v6018 = vpow.pop %v6017
        %v6019 = vmul.f32 %v5967, 1.442695
        %v6020 = vpow.pop %v6019
        %v6021 = vmul.f32 %v5968, 1.442695
        %v6022 = vpow.pop %v6021
        %v6023 = vmul.f32 %v5969, 1.442695
        %v6024 = vpow.pop %v6023
        %v6025 = vmul.f32 %v5970, 1.442695
        %v6026 = vpow.pop %v6025
        %v6027 = vmul.f32 %v5971, 1.442695
        %v6028 = vpow.pop %v6027
        %v6029 = vmul.f32 %v5972, 1.442695
        %v6030 = vpow.pop %v6029
        %v6031 = vmul.f32 %v5973, 1.442695
        %v6032 = vpow.pop %v6031
        %v6033 = vmul.f32 %v5974, 1.442695
        %v6034 = vpow.pop %v6033
        %v6035 = vmul.f32 %v5975, 1.442695
        %v6036 = vpow.pop %v6035
        %v6037 = vmul.f32 %v5976, 1.442695
        %v6038 = vpow.pop %v6037
        %v6039 = vmul.f32 %v5977, 1.442695
        %v6040 = vpow.pop %v6039
        %v6041 = vmul.f32 %v5978, 1.442695
        %v6042 = vpow.pop %v6041
        %v6043 = vsel %vm1338, %v5980, 0.0
        %v6044 = vsel %vm1339, %v5982, 0.0
        %v6045 = vsel %vm1340, %v5984, 0.0
        %v6046 = vsel %vm1341, %v5986, 0.0
        %v6047 = vsel %vm1342, %v5988, 0.0
        %v6048 = vsel %vm1343, %v5990, 0.0
        %v6049 = vsel %vm1344, %v5992, 0.0
        %v6050 = vsel %vm1345, %v5994, 0.0
        %v6051 = vsel %vm1346, %v5996, 0.0
        %v6052 = vsel %vm1347, %v5998, 0.0
        %v6053 = vsel %vm1348, %v6000, 0.0
        %v6054 = vsel %vm1349, %v6002, 0.0
        %v6055 = vsel %vm1350, %v6004, 0.0
        %v6056 = vsel %vm1351, %v6006, 0.0
        %v6057 = vsel %vm1352, %v6008, 0.0
        %v6058 = vsel %vm1353, %v6010, 0.0
        %v6059 = vsel %vm1354, %v6012, 0.0
        %v6060 = vsel %vm1355, %v6014, 0.0
        %v6061 = vsel %vm1356, %v6016, 0.0
        %v6062 = vsel %vm1357, %v6018, 0.0
        %v6063 = vsel %vm1358, %v6020, 0.0
        %v6064 = vsel %vm1359, %v6022, 0.0
        %v6065 = vsel %vm1360, %v6024, 0.0
        %v6066 = vsel %vm1361, %v6026, 0.0
        %v6067 = vsel %vm1362, %v6028, 0.0
        %v6068 = vsel %vm1363, %v6030, 0.0
        %v6069 = vsel %vm1364, %v6032, 0.0
        %v6070 = vsel %vm1365, %v6034, 0.0
        %v6071 = vsel %vm1366, %v6036, 0.0
        %v6072 = vsel %vm1367, %v6038, 0.0
        %v6073 = vsel %vm1368, %v6040, 0.0
        %v6074 = vsel %vm1369, %v6042, 0.0
        %v6075 = vmul.f32 %v5865, %v6043
        %v6076 = vmul.f32 %v5867, %v6044
        %v6077 = vmul.f32 %v5869, %v6045
        %v6078 = vmul.f32 %v5871, %v6046
        %v6079 = vmul.f32 %v5875, %v6047
        %v6080 = vmul.f32 %v5877, %v6048
        %v6081 = vmul.f32 %v5879, %v6049
        %v6082 = vmul.f32 %v5881, %v6050
        %v6083 = vmul.f32 %v5885, %v6051
        %v6084 = vmul.f32 %v5887, %v6052
        %v6085 = vmul.f32 %v5889, %v6053
        %v6086 = vmul.f32 %v5891, %v6054
        %v6087 = vmul.f32 %v5895, %v6055
        %v6088 = vmul.f32 %v5897, %v6056
        %v6089 = vmul.f32 %v5899, %v6057
        %v6090 = vmul.f32 %v5901, %v6058
        %v6091 = vmul.f32 %v5905, %v6059
        %v6092 = vmul.f32 %v5907, %v6060
        %v6093 = vmul.f32 %v5909, %v6061
        %v6094 = vmul.f32 %v5911, %v6062
        %v6095 = vmul.f32 %v5915, %v6063
        %v6096 = vmul.f32 %v5917, %v6064
        %v6097 = vmul.f32 %v5919, %v6065
        %v6098 = vmul.f32 %v5921, %v6066
        %v6099 = vmul.f32 %v5925, %v6067
        %v6100 = vmul.f32 %v5927, %v6068
        %v6101 = vmul.f32 %v5929, %v6069
        %v6102 = vmul.f32 %v5931, %v6070
        %v6103 = vmul.f32 %v5935, %v6071
        %v6104 = vmul.f32 %v5937, %v6072
        %v6105 = vmul.f32 %v5939, %v6073
        %v6106 = vmul.f32 %v5941, %v6074
        %v6107 = vmax.f32 %v6075, %v6076
        %6108 = vmax.xlane.f32.xlu0 %v6107
        %v6109 = vpop.xlane.xlu0 %6108
        %v6110 = vmax.f32 %v6077, %v6078
        %6111 = vmax.xlane.f32.xlu0 %v6110
        %v6112 = vpop.xlane.xlu0 %6111
        %v6113 = vmax.f32 %v6079, %v6080
        %6114 = vmax.xlane.f32.xlu0 %v6113
        %v6115 = vpop.xlane.xlu0 %6114
        %v6116 = vmax.f32 %v6081, %v6082
        %6117 = vmax.xlane.f32.xlu0 %v6116
        %v6118 = vpop.xlane.xlu0 %6117
        %v6119 = vmax.f32 %v6083, %v6084
        %6120 = vmax.xlane.f32.xlu0 %v6119
        %v6121 = vpop.xlane.xlu0 %6120
        %v6122 = vmax.f32 %v6085, %v6086
        %6123 = vmax.xlane.f32.xlu0 %v6122
        %v6124 = vpop.xlane.xlu0 %6123
        %v6125 = vmax.f32 %v6087, %v6088
        %6126 = vmax.xlane.f32.xlu0 %v6125
        %v6127 = vpop.xlane.xlu0 %6126
        %v6128 = vmax.f32 %v6089, %v6090
        %6129 = vmax.xlane.f32.xlu0 %v6128
        %v6130 = vpop.xlane.xlu0 %6129
        %v6131 = vmax.f32 %v6091, %v6092
        %6132 = vmax.xlane.f32.xlu0 %v6131
        %v6133 = vpop.xlane.xlu0 %6132
        %v6134 = vmax.f32 %v6093, %v6094
        %6135 = vmax.xlane.f32.xlu0 %v6134
        %v6136 = vpop.xlane.xlu0 %6135
        %v6137 = vmax.f32 %v6095, %v6096
        %6138 = vmax.xlane.f32.xlu0 %v6137
        %v6139 = vpop.xlane.xlu0 %6138
        %v6140 = vmax.f32 %v6097, %v6098
        %6141 = vmax.xlane.f32.xlu0 %v6140
        %v6142 = vpop.xlane.xlu0 %6141
        %v6143 = vmax.f32 %v6099, %v6100
        %6144 = vmax.xlane.f32.xlu0 %v6143
        %v6145 = vpop.xlane.xlu0 %6144
        %v6146 = vmax.f32 %v6101, %v6102
        %6147 = vmax.xlane.f32.xlu0 %v6146
        %v6148 = vpop.xlane.xlu0 %6147
        %v6149 = vmax.f32 %v6103, %v6104
        %6150 = vmax.xlane.f32.xlu0 %v6149
        %v6151 = vpop.xlane.xlu0 %6150
        %v6152 = vmax.f32 %v6105, %v6106
        %6153 = vmax.xlane.f32.xlu0 %v6152
        %v6154 = vpop.xlane.xlu0 %6153
        %v6155 = vsub.f32 %v6075, %v6109
        %v6156 = vsub.f32 %v6076, %v6109
        %v6157 = vsub.f32 %v6077, %v6112
        %v6158 = vsub.f32 %v6078, %v6112
        %v6159 = vsub.f32 %v6079, %v6115
        %v6160 = vsub.f32 %v6080, %v6115
        %v6161 = vsub.f32 %v6081, %v6118
        %v6162 = vsub.f32 %v6082, %v6118
        %v6163 = vsub.f32 %v6083, %v6121
        %v6164 = vsub.f32 %v6084, %v6121
        %v6165 = vsub.f32 %v6085, %v6124
        %v6166 = vsub.f32 %v6086, %v6124
        %v6167 = vsub.f32 %v6087, %v6127
        %v6168 = vsub.f32 %v6088, %v6127
        %v6169 = vsub.f32 %v6089, %v6130
        %v6170 = vsub.f32 %v6090, %v6130
        %v6171 = vsub.f32 %v6091, %v6133
        %v6172 = vsub.f32 %v6092, %v6133
        %v6173 = vsub.f32 %v6093, %v6136
        %v6174 = vsub.f32 %v6094, %v6136
        %v6175 = vsub.f32 %v6095, %v6139
        %v6176 = vsub.f32 %v6096, %v6139
        %v6177 = vsub.f32 %v6097, %v6142
        %v6178 = vsub.f32 %v6098, %v6142
        %v6179 = vsub.f32 %v6099, %v6145
        %v6180 = vsub.f32 %v6100, %v6145
        %v6181 = vsub.f32 %v6101, %v6148
        %v6182 = vsub.f32 %v6102, %v6148
        %v6183 = vsub.f32 %v6103, %v6151
        %v6184 = vsub.f32 %v6104, %v6151
        %v6185 = vsub.f32 %v6105, %v6154
        %v6186 = vsub.f32 %v6106, %v6154
        %v6187 = vmul.f32 %v6155, 1.442695
        %v6188 = vpow.pop %v6187
        %v6189 = vmul.f32 %v6156, 1.442695
        %v6190 = vpow.pop %v6189
        %v6191 = vmul.f32 %v6157, 1.442695
        %v6192 = vpow.pop %v6191
        %v6193 = vmul.f32 %v6158, 1.442695
        %v6194 = vpow.pop %v6193
        %v6195 = vmul.f32 %v6159, 1.442695
        %v6196 = vpow.pop %v6195
        %v6197 = vmul.f32 %v6160, 1.442695
        %v6198 = vpow.pop %v6197
        %v6199 = vmul.f32 %v6161, 1.442695
        %v6200 = vpow.pop %v6199
        %v6201 = vmul.f32 %v6162, 1.442695
        %v6202 = vpow.pop %v6201
        %v6203 = vmul.f32 %v6163, 1.442695
        %v6204 = vpow.pop %v6203
        %v6205 = vmul.f32 %v6164, 1.442695
        %v6206 = vpow.pop %v6205
        %v6207 = vmul.f32 %v6165, 1.442695
        %v6208 = vpow.pop %v6207
        %v6209 = vmul.f32 %v6166, 1.442695
        %v6210 = vpow.pop %v6209
        %v6211 = vmul.f32 %v6167, 1.442695
        %v6212 = vpow.pop %v6211
        %v6213 = vmul.f32 %v6168, 1.442695
        %v6214 = vpow.pop %v6213
        %v6215 = vmul.f32 %v6169, 1.442695
        %v6216 = vpow.pop %v6215
        %v6217 = vmul.f32 %v6170, 1.442695
        %v6218 = vpow.pop %v6217
        %v6219 = vmul.f32 %v6171, 1.442695
        %v6220 = vpow.pop %v6219
        %v6221 = vmul.f32 %v6172, 1.442695
        %v6222 = vpow.pop %v6221
        %v6223 = vmul.f32 %v6173, 1.442695
        %v6224 = vpow.pop %v6223
        %v6225 = vmul.f32 %v6174, 1.442695
        %v6226 = vpow.pop %v6225
        %v6227 = vmul.f32 %v6175, 1.442695
        %v6228 = vpow.pop %v6227
        %v6229 = vmul.f32 %v6176, 1.442695
        %v6230 = vpow.pop %v6229
        %v6231 = vmul.f32 %v6177, 1.442695
        %v6232 = vpow.pop %v6231
        %v6233 = vmul.f32 %v6178, 1.442695
        %v6234 = vpow.pop %v6233
        %v6235 = vmul.f32 %v6179, 1.442695
        %v6236 = vpow.pop %v6235
        %v6237 = vmul.f32 %v6180, 1.442695
        %v6238 = vpow.pop %v6237
        %v6239 = vmul.f32 %v6181, 1.442695
        %v6240 = vpow.pop %v6239
        %v6241 = vmul.f32 %v6182, 1.442695
        %v6242 = vpow.pop %v6241
        %v6243 = vmul.f32 %v6183, 1.442695
        %v6244 = vpow.pop %v6243
        %v6245 = vmul.f32 %v6184, 1.442695
        %v6246 = vpow.pop %v6245
        %v6247 = vmul.f32 %v6185, 1.442695
        %v6248 = vpow.pop %v6247
        %v6249 = vmul.f32 %v6186, 1.442695
        %v6250 = vpow.pop %v6249
        %v6251 = vadd.f32 %v6188, %v6190
        %6252 = vadd.xlane.f32.xlu0 %v6251
        %v6253 = vpop.xlane.xlu0 %6252
        %v6254 = vadd.f32 %v6192, %v6194
        %6255 = vadd.xlane.f32.xlu0 %v6254
        %v6256 = vpop.xlane.xlu0 %6255
        %v6257 = vadd.f32 %v6196, %v6198
        %6258 = vadd.xlane.f32.xlu0 %v6257
        %v6259 = vpop.xlane.xlu0 %6258
        %v6260 = vadd.f32 %v6200, %v6202
        %6261 = vadd.xlane.f32.xlu0 %v6260
        %v6262 = vpop.xlane.xlu0 %6261
        %v6263 = vadd.f32 %v6204, %v6206
        %6264 = vadd.xlane.f32.xlu0 %v6263
        %v6265 = vpop.xlane.xlu0 %6264
        %v6266 = vadd.f32 %v6208, %v6210
        %6267 = vadd.xlane.f32.xlu0 %v6266
        %v6268 = vpop.xlane.xlu0 %6267
        %v6269 = vadd.f32 %v6212, %v6214
        %6270 = vadd.xlane.f32.xlu0 %v6269
        %v6271 = vpop.xlane.xlu0 %6270
        %v6272 = vadd.f32 %v6216, %v6218
        %6273 = vadd.xlane.f32.xlu0 %v6272
        %v6274 = vpop.xlane.xlu0 %6273
        %v6275 = vadd.f32 %v6220, %v6222
        %6276 = vadd.xlane.f32.xlu0 %v6275
        %v6277 = vpop.xlane.xlu0 %6276
        %v6278 = vadd.f32 %v6224, %v6226
        %6279 = vadd.xlane.f32.xlu0 %v6278
        %v6280 = vpop.xlane.xlu0 %6279
        %v6281 = vadd.f32 %v6228, %v6230
        %6282 = vadd.xlane.f32.xlu0 %v6281
        %v6283 = vpop.xlane.xlu0 %6282
        %v6284 = vadd.f32 %v6232, %v6234
        %6285 = vadd.xlane.f32.xlu0 %v6284
        %v6286 = vpop.xlane.xlu0 %6285
        %v6287 = vadd.f32 %v6236, %v6238
        %6288 = vadd.xlane.f32.xlu0 %v6287
        %v6289 = vpop.xlane.xlu0 %6288
        %v6290 = vadd.f32 %v6240, %v6242
        %6291 = vadd.xlane.f32.xlu0 %v6290
        %v6292 = vpop.xlane.xlu0 %6291
        %v6293 = vadd.f32 %v6244, %v6246
        %6294 = vadd.xlane.f32.xlu0 %v6293
        %v6295 = vpop.xlane.xlu0 %6294
        %v6296 = vadd.f32 %v6248, %v6250
        %6297 = vadd.xlane.f32.xlu0 %v6296
        %v6298 = vpop.xlane.xlu0 %6297
        %v6299 = vrcp.pop %v6253
        %v6300 = vrcp.pop %v6256
        %v6301 = vrcp.pop %v6259
        %v6302 = vrcp.pop %v6262
        %v6303 = vrcp.pop %v6265
        %v6304 = vrcp.pop %v6268
        %v6305 = vrcp.pop %v6271
        %v6306 = vrcp.pop %v6274
        %v6307 = vrcp.pop %v6277
        %v6308 = vrcp.pop %v6280
        %v6309 = vrcp.pop %v6283
        %v6310 = vrcp.pop %v6286
        %v6311 = vrcp.pop %v6289
        %v6312 = vrcp.pop %v6292
        %v6313 = vrcp.pop %v6295
        %v6314 = vrcp.pop %v6298
        %v6315 = vmul.f32 %v6188, %v6299
        %v6316 = vmul.f32 %v6190, %v6299
        %v6317 = vmul.f32 %v6192, %v6300
        %v6318 = vmul.f32 %v6194, %v6300
        %v6319 = vmul.f32 %v6196, %v6301
        %v6320 = vmul.f32 %v6198, %v6301
        %v6321 = vmul.f32 %v6200, %v6302
        %v6322 = vmul.f32 %v6202, %v6302
        %v6323 = vmul.f32 %v6204, %v6303
        %v6324 = vmul.f32 %v6206, %v6303
        %v6325 = vmul.f32 %v6208, %v6304
        %v6326 = vmul.f32 %v6210, %v6304
        %v6327 = vmul.f32 %v6212, %v6305
        %v6328 = vmul.f32 %v6214, %v6305
        %v6329 = vmul.f32 %v6216, %v6306
        %v6330 = vmul.f32 %v6218, %v6306
        %v6331 = vmul.f32 %v6220, %v6307
        %v6332 = vmul.f32 %v6222, %v6307
        %v6333 = vmul.f32 %v6224, %v6308
        %v6334 = vmul.f32 %v6226, %v6308
        %v6335 = vmul.f32 %v6228, %v6309
        %v6336 = vmul.f32 %v6230, %v6309
        %v6337 = vmul.f32 %v6232, %v6310
        %v6338 = vmul.f32 %v6234, %v6310
        %v6339 = vmul.f32 %v6236, %v6311
        %v6340 = vmul.f32 %v6238, %v6311
        %v6341 = vmul.f32 %v6240, %v6312
        %v6342 = vmul.f32 %v6242, %v6312
        %v6343 = vmul.f32 %v6244, %v6313
        %v6344 = vmul.f32 %v6246, %v6313
        %v6345 = vmul.f32 %v6248, %v6314
        %v6346 = vmul.f32 %v6250, %v6314
        %v6347 = vpack.c.bf16 %v6317, %v6315
        %v6348 = vpack.c.bf16 %v6318, %v6316
        %v6349 = vpack.c.bf16 %v6321, %v6319
        %v6350 = vpack.c.bf16 %v6322, %v6320
        %v6351 = vpack.c.bf16 %v6325, %v6323
        %v6352 = vpack.c.bf16 %v6326, %v6324
        %v6353 = vpack.c.bf16 %v6329, %v6327
        %v6354 = vpack.c.bf16 %v6330, %v6328
        %v6355 = vpack.c.bf16 %v6333, %v6331
        %v6356 = vpack.c.bf16 %v6334, %v6332
        %v6357 = vpack.c.bf16 %v6337, %v6335
        %v6358 = vpack.c.bf16 %v6338, %v6336
        %v6359 = vpack.c.bf16 %v6341, %v6339
        %v6360 = vpack.c.bf16 %v6342, %v6340
        %v6361 = vpack.c.bf16 %v6345, %v6343
        %v6362 = vpack.c.bf16 %v6346, %v6344
        %6363 = vrot.lane.b32.xlu0 %v1253, 48
        %v6364 = vpop.permute.xlu0 %6363
        %6365 = vrot.lane.b32.xlu0 %v1254, 48
        %v6366 = vpop.permute.xlu0 %6365
        %6367 = vrot.lane.b32.xlu0 %v1255, 48
        %v6368 = vpop.permute.xlu0 %6367
        %6369 = vrot.lane.b32.xlu0 %v1256, 48
        %v6370 = vpop.permute.xlu0 %6369
        %6371 = vrot.lane.b32.xlu0 %v1257, 48
        %v6372 = vpop.permute.xlu0 %6371
        %6373 = vrot.lane.b32.xlu0 %v1258, 48
        %v6374 = vpop.permute.xlu0 %6373
        %6375 = vrot.lane.b32.xlu0 %v1259, 48
        %v6376 = vpop.permute.xlu0 %6375
        %6377 = vrot.lane.b32.xlu0 %v1260, 48
        %v6378 = vpop.permute.xlu0 %6377
        %6379 = vrot.lane.b32.xlu0 %v1261, 48
        %v6380 = vpop.permute.xlu0 %6379
        %6381 = vrot.lane.b32.xlu0 %v1262, 48
        %v6382 = vpop.permute.xlu0 %6381
        %6383 = vrot.lane.b32.xlu0 %v1263, 48
        %v6384 = vpop.permute.xlu0 %6383
        %6385 = vrot.lane.b32.xlu0 %v1264, 48
        %v6386 = vpop.permute.xlu0 %6385
        %6387 = vrot.lane.b32.xlu0 %v1265, 48
        %v6388 = vpop.permute.xlu0 %6387
        %6389 = vrot.lane.b32.xlu0 %v1266, 48
        %v6390 = vpop.permute.xlu0 %6389
        %6391 = vrot.lane.b32.xlu0 %v1267, 48
        %v6392 = vpop.permute.xlu0 %6391
        %6393 = vrot.lane.b32.xlu0 %v1268, 48
        %v6394 = vpop.permute.xlu0 %6393
        %6411 = vmatprep.subr.bf16.mxu0 0
        %6412 = vmatpush1.bf16.msra.mxu0 %v6364
        %6413 = vmatprep.subr.bf16.mxu0 0
        %6414 = vmatpush1.bf16.msra.mxu0 %v6366
        %6415 = vmatprep.subr.bf16.mxu0 0
        %6416 = vmatpush1.bf16.msra.mxu0 %v6368
        %6417 = vmatprep.subr.bf16.mxu0 0
        %6418 = vmatpush1.bf16.msra.mxu0 %v6370
        %6419 = vmatprep.subr.bf16.mxu0 0
        %6420 = vmatpush1.bf16.msra.mxu0 %v6372
        %6421 = vmatprep.subr.bf16.mxu0 0
        %6422 = vmatpush1.bf16.msra.mxu0 %v6374
        %6423 = vmatprep.subr.bf16.mxu0 0
        %6424 = vmatpush1.bf16.msra.mxu0 %v6376
        %6425 = vmatprep.subr.bf16.mxu0 0
        %6426 = vmatpush1.bf16.msra.mxu0 %v6378
        %6427 = vmatprep.subr.bf16.mxu0 0
        %6428 = vmatpush1.bf16.msra.mxu0 %v6380
        %6429 = vmatprep.subr.bf16.mxu0 0
        %6430 = vmatpush1.bf16.msra.mxu0 %v6382
        %6431 = vmatprep.subr.bf16.mxu0 0
        %6432 = vmatpush1.bf16.msra.mxu0 %v6384
        %6433 = vmatprep.subr.bf16.mxu0 0
        %6434 = vmatpush1.bf16.msra.mxu0 %v6386
        %6435 = vmatprep.subr.bf16.mxu0 0
        %6436 = vmatpush1.bf16.msra.mxu0 %v6388
        %6437 = vmatprep.subr.bf16.mxu0 0
        %6438 = vmatpush1.bf16.msra.mxu0 %v6390
        %6439 = vmatprep.subr.bf16.mxu0 0
        %6440 = vmatpush1.bf16.msra.mxu0 %v6392
        %6441 = vmatprep.subr.bf16.mxu0 0
        %6442 = vmatpush1.bf16.msra.mxu0 %v6394
        %6443 = vmatprep.mubr.bf16.mxu0 %v6348
        %6444 = vmatmul.mubr.bf16.gmra.mrb[0].mxu0 %v6347
        %v6445 = vpop.f32.mrb[0].mxu0
        %v6446 = vadd.f32 0.0, %v6445
        %v6447 = vpop.f32.mrb[0].mxu0
        %v6448 = vpop.f32.mrb[0].mxu0
        %v6449 = vadd.f32 0.0, %v6448
        %v6450 = vpop.f32.mrb[0].mxu0
        %6451 = vmatprep.mubr.bf16.mxu0 %v6350
        %6452 = vmatmul.mubr.bf16.gmra.mrb[0].mxu0 %v6349
        %v6453 = vpop.f32.mrb[0].mxu0
        %v6454 = vadd.f32 0.0, %v6453
        %v6455 = vpop.f32.mrb[0].mxu0
        %v6456 = vpop.f32.mrb[0].mxu0
        %v6457 = vadd.f32 0.0, %v6456
        %v6458 = vpop.f32.mrb[0].mxu0
        %6459 = vmatprep.mubr.bf16.mxu0 %v6352
        %6460 = vmatmul.mubr.bf16.gmra.mrb[0].mxu0 %v6351
        %v6461 = vpop.f32.mrb[0].mxu0
        %v6462 = vadd.f32 0.0, %v6461
        %v6463 = vpop.f32.mrb[0].mxu0
        %v6464 = vpop.f32.mrb[0].mxu0
        %v6465 = vadd.f32 0.0, %v6464
        %v6466 = vpop.f32.mrb[0].mxu0
        %6467 = vmatprep.mubr.bf16.mxu0 %v6354
        %6468 = vmatmul.mubr.bf16.gmra.mrb[0].mxu0 %v6353
        %v6469 = vpop.f32.mrb[0].mxu0
        %v6470 = vadd.f32 0.0, %v6469
        %v6471 = vpop.f32.mrb[0].mxu0
        %v6472 = vpop.f32.mrb[0].mxu0
        %v6473 = vadd.f32 0.0, %v6472
        %v6474 = vpop.f32.mrb[0].mxu0
        %6475 = vmatprep.mubr.bf16.mxu0 %v6356
        %6476 = vmatmul.mubr.bf16.gmra.mrb[0].mxu0 %v6355
        %v6477 = vpop.f32.mrb[0].mxu0
        %v6478 = vadd.f32 0.0, %v6477
        %v6479 = vpop.f32.mrb[0].mxu0
        %v6480 = vpop.f32.mrb[0].mxu0
        %v6481 = vadd.f32 0.0, %v6480
        %v6482 = vpop.f32.mrb[0].mxu0
        %6483 = vmatprep.mubr.bf16.mxu0 %v6358
        %6484 = vmatmul.mubr.bf16.gmra.mrb[0].mxu0 %v6357
        %v6485 = vpop.f32.mrb[0].mxu0
        %v6486 = vadd.f32 0.0, %v6485
        %v6487 = vpop.f32.mrb[0].mxu0
        %v6488 = vpop.f32.mrb[0].mxu0
        %v6489 = vadd.f32 0.0, %v6488
        %v6490 = vpop.f32.mrb[0].mxu0
        %6491 = vmatprep.mubr.bf16.mxu0 %v6360
        %6492 = vmatmul.mubr.bf16.gmra.mrb[0].mxu0 %v6359
        %v6493 = vpop.f32.mrb[0].mxu0
        %v6494 = vadd.f32 0.0, %v6493
        %v6495 = vpop.f32.mrb[0].mxu0
        %v6496 = vpop.f32.mrb[0].mxu0
        %v6497 = vadd.f32 0.0, %v6496
        %v6498 = vpop.f32.mrb[0].mxu0
        %6499 = vmatprep.mubr.bf16.mxu0 %v6362
        %6500 = vmatmul.mubr.bf16.gmra.mrb[0].mxu0 %v6361
        %v6501 = vpop.f32.mrb[0].mxu0
        %v6502 = vadd.f32 0.0, %v6501
        %v6503 = vpop.f32.mrb[0].mxu0
        %v6504 = vpop.f32.mrb[0].mxu0
        %v6505 = vadd.f32 0.0, %v6504
        %v6506 = vpop.f32.mrb[0].mxu0
        %6507 = vdwg.mxu0
        %6524 = vrot.lane.b32.xlu0 %v6446, 80
        %v6525 = vpop.permute.xlu0 %6524
        %6526 = vrot.lane.b32.xlu0 %v6449, 80
        %v6527 = vpop.permute.xlu0 %6526
        %6528 = vrot.lane.b32.xlu0 %v6454, 80
        %v6529 = vpop.permute.xlu0 %6528
        %6530 = vrot.lane.b32.xlu0 %v6457, 80
        %v6531 = vpop.permute.xlu0 %6530
        %6532 = vrot.lane.b32.xlu0 %v6462, 80
        %v6533 = vpop.permute.xlu0 %6532
        %6534 = vrot.lane.b32.xlu0 %v6465, 80
        %v6535 = vpop.permute.xlu0 %6534
        %6536 = vrot.lane.b32.xlu0 %v6470, 80
        %v6537 = vpop.permute.xlu0 %6536
        %6538 = vrot.lane.b32.xlu0 %v6473, 80
        %v6539 = vpop.permute.xlu0 %6538
        %6540 = vrot.lane.b32.xlu0 %v6478, 80
        %v6541 = vpop.permute.xlu0 %6540
        %6542 = vrot.lane.b32.xlu0 %v6481, 80
        %v6543 = vpop.permute.xlu0 %6542
        %6544 = vrot.lane.b32.xlu0 %v6486, 80
        %v6545 = vpop.permute.xlu0 %6544
        %6546 = vrot.lane.b32.xlu0 %v6489, 80
        %v6547 = vpop.permute.xlu0 %6546
        %6548 = vrot.lane.b32.xlu0 %v6494, 80
        %v6549 = vpop.permute.xlu0 %6548
        %6550 = vrot.lane.b32.xlu0 %v6497, 80
        %v6551 = vpop.permute.xlu0 %6550
        %6552 = vrot.lane.b32.xlu0 %v6502, 80
        %v6553 = vpop.permute.xlu0 %6552
        %6554 = vrot.lane.b32.xlu0 %v6505, 80
        %v6555 = vpop.permute.xlu0 %6554
        %vm6572 = vcmask 786048
        %6573 = vst.msk [vmem:[#allocation2] sm:$0xff] %vm6572, %v6525
        %6574 = vst.msk [vmem:[#allocation2 + $0x8] sm:$0xff] %vm6572, %v6527
        %6575 = vst.msk [vmem:[#allocation2 + $0x10] sm:$0xff] %vm6572, %v6529
        %6576 = vst.msk [vmem:[#allocation2 + $0x18] sm:$0xff] %vm6572, %v6531
        %6577 = vst.msk [vmem:[#allocation2 + $0x20] sm:$0xff] %vm6572, %v6533
        %6578 = vst.msk [vmem:[#allocation2 + $0x28] sm:$0xff] %vm6572, %v6535
        %6579 = vst.msk [vmem:[#allocation2 + $0x30] sm:$0xff] %vm6572, %v6537
        %6580 = vst.msk [vmem:[#allocation2 + $0x38] sm:$0xff] %vm6572, %v6539
        %6581 = vst.msk [vmem:[#allocation2 + $0x40] sm:$0xff] %vm6572, %v6541
        %6582 = vst.msk [vmem:[#allocation2 + $0x48] sm:$0xff] %vm6572, %v6543
        %6583 = vst.msk [vmem:[#allocation2 + $0x50] sm:$0xff] %vm6572, %v6545
        %6584 = vst.msk [vmem:[#allocation2 + $0x58] sm:$0xff] %vm6572, %v6547
        %6585 = vst.msk [vmem:[#allocation2 + $0x60] sm:$0xff] %vm6572, %v6549
        %6586 = vst.msk [vmem:[#allocation2 + $0x68] sm:$0xff] %vm6572, %v6551
        %6587 = vst.msk [vmem:[#allocation2 + $0x70] sm:$0xff] %vm6572, %v6553
        %6588 = vst.msk [vmem:[#allocation2 + $0x78] sm:$0xff] %vm6572, %v6555
        %6589 = vrot.lane.b32.xlu0 %v765, 32
        %v6590 = vpop.permute.xlu0 %6589
        %6591 = vrot.lane.b32.xlu0 %v766, 32
        %v6592 = vpop.permute.xlu0 %6591
        %6593 = vrot.lane.b32.xlu0 %v767, 32
        %v6594 = vpop.permute.xlu0 %6593
        %6595 = vrot.lane.b32.xlu0 %v768, 32
        %v6596 = vpop.permute.xlu0 %6595
        %6597 = vrot.lane.b32.xlu0 %v769, 32
        %v6598 = vpop.permute.xlu0 %6597
        %6599 = vrot.lane.b32.xlu0 %v770, 32
        %v6600 = vpop.permute.xlu0 %6599
        %6601 = vrot.lane.b32.xlu0 %v771, 32
        %v6602 = vpop.permute.xlu0 %6601
        %6603 = vrot.lane.b32.xlu0 %v772, 32
        %v6604 = vpop.permute.xlu0 %6603
        %6605 = vrot.lane.b32.xlu0 %v1005, 32
        %v6606 = vpop.permute.xlu0 %6605
        %6607 = vrot.lane.b32.xlu0 %v1006, 32
        %v6608 = vpop.permute.xlu0 %6607
        %6609 = vrot.lane.b32.xlu0 %v1007, 32
        %v6610 = vpop.permute.xlu0 %6609
        %6611 = vrot.lane.b32.xlu0 %v1008, 32
        %v6612 = vpop.permute.xlu0 %6611
        %6613 = vrot.lane.b32.xlu0 %v1009, 32
        %v6614 = vpop.permute.xlu0 %6613
        %6615 = vrot.lane.b32.xlu0 %v1010, 32
        %v6616 = vpop.permute.xlu0 %6615
        %6617 = vrot.lane.b32.xlu0 %v1011, 32
        %v6618 = vpop.permute.xlu0 %6617
        %6619 = vrot.lane.b32.xlu0 %v1012, 32
        %v6620 = vpop.permute.xlu0 %6619
        %6621 = vrot.lane.b32.xlu0 %v1013, 32
        %v6622 = vpop.permute.xlu0 %6621
        %6623 = vrot.lane.b32.xlu0 %v1014, 32
        %v6624 = vpop.permute.xlu0 %6623
        %6625 = vrot.lane.b32.xlu0 %v1015, 32
        %v6626 = vpop.permute.xlu0 %6625
        %6627 = vrot.lane.b32.xlu0 %v1016, 32
        %v6628 = vpop.permute.xlu0 %6627
        %6629 = vrot.lane.b32.xlu0 %v1017, 32
        %v6630 = vpop.permute.xlu0 %6629
        %6631 = vrot.lane.b32.xlu0 %v1018, 32
        %v6632 = vpop.permute.xlu0 %6631
        %6633 = vrot.lane.b32.xlu0 %v1019, 32
        %v6634 = vpop.permute.xlu0 %6633
        %6635 = vrot.lane.b32.xlu0 %v1020, 32
        %v6636 = vpop.permute.xlu0 %6635
        %v6638 = vsel %vm1435, %v6590, 0
        %v6641 = vsel %vm1435, %v6592, 0
        %v6644 = vsel %vm1435, %v6594, 0
        %v6647 = vsel %vm1435, %v6596, 0
        %v6650 = vsel %vm1435, %v6598, 0
        %v6653 = vsel %vm1435, %v6600, 0
        %v6656 = vsel %vm1435, %v6602, 0
        %v6659 = vsel %vm1435, %v6604, 0
        %v6662 = vsel %vm1435, %v6606, 0
        %v6665 = vsel %vm1435, %v6608, 0
        %v6668 = vsel %vm1435, %v6610, 0
        %v6671 = vsel %vm1435, %v6612, 0
        %v6674 = vsel %vm1435, %v6614, 0
        %v6677 = vsel %vm1435, %v6616, 0
        %v6680 = vsel %vm1435, %v6618, 0
        %v6683 = vsel %vm1435, %v6620, 0
        %v6686 = vsel %vm1435, %v6622, 0
        %v6689 = vsel %vm1435, %v6624, 0
        %v6692 = vsel %vm1435, %v6626, 0
        %v6695 = vsel %vm1435, %v6628, 0
        %v6698 = vsel %vm1435, %v6630, 0
        %v6701 = vsel %vm1435, %v6632, 0
        %v6704 = vsel %vm1435, %v6634, 0
        %v6707 = vsel %vm1435, %v6636, 0
        %6709 = vmatprep.subr.bf16.mxu0 0
        %6710 = vmatpush1.bf16.xpose.msra.mxu0 %v6662
        %6711 = vmatprep.subr.bf16.mxu0 0
        %6712 = vmatpush1.bf16.xpose.msra.mxu0 %v6665
        %6713 = vmatprep.subr.bf16.mxu0 0
        %6714 = vmatpush1.bf16.xpose.msra.mxu0 %v6668
        %6715 = vmatprep.subr.bf16.mxu0 0
        %6716 = vmatpush1.bf16.xpose.msra.mxu0 %v6671
        %6717 = vmatprep.subr.bf16.mxu0 0
        %6718 = vmatpush1.bf16.xpose.msra.mxu0 %v6674
        %6719 = vmatprep.subr.bf16.mxu0 0
        %6720 = vmatpush1.bf16.xpose.msra.mxu0 %v6677
        %6721 = vmatprep.subr.bf16.mxu0 0
        %6722 = vmatpush1.bf16.xpose.msra.mxu0 %v6680
        %6723 = vmatprep.subr.bf16.mxu0 0
        %6724 = vmatpush1.bf16.xpose.msra.mxu0 %v6683
        %6725 = vmatprep.subr.bf16.mxu0 0
        %6726 = vmatpush1.bf16.xpose.msra.mxu0 %v6686
        %6727 = vmatprep.subr.bf16.mxu0 0
        %6728 = vmatpush1.bf16.xpose.msra.mxu0 %v6689
        %6729 = vmatprep.subr.bf16.mxu0 0
        %6730 = vmatpush1.bf16.xpose.msra.mxu0 %v6692
        %6731 = vmatprep.subr.bf16.mxu0 0
        %6732 = vmatpush1.bf16.xpose.msra.mxu0 %v6695
        %6733 = vmatprep.subr.bf16.mxu0 0
        %6734 = vmatpush1.bf16.xpose.msra.mxu0 %v6698
        %6735 = vmatprep.subr.bf16.mxu0 0
        %6736 = vmatpush1.bf16.xpose.msra.mxu0 %v6701
        %6737 = vmatprep.subr.bf16.mxu0 0
        %6738 = vmatpush1.bf16.xpose.msra.mxu0 %v6704
        %6739 = vmatprep.subr.bf16.mxu0 0
        %6740 = vmatpush1.bf16.xpose.msra.mxu0 %v6707
        %6741 = vmatprep.mubr.bf16.mxu0 0
        %6742 = vmatmul.mubr.bf16.gmra.mrb[0].mxu0 %v6638
        %v6743 = vpop.f32.mrb[0].mxu0
        %v6744 = vadd.f32 0.0, %v6743
        %v6745 = vpop.f32.mrb[0].mxu0
        %v6746 = vadd.f32 0.0, %v6745
        %v6747 = vpop.f32.mrb[0].mxu0
        %v6748 = vadd.f32 0.0, %v6747
        %v6749 = vpop.f32.mrb[0].mxu0
        %v6750 = vadd.f32 0.0, %v6749
        %6751 = vmatprep.mubr.bf16.mxu0 0
        %6752 = vmatmul.mubr.bf16.gmra.mrb[0].mxu0 %v6641
        %v6753 = vpop.f32.mrb[0].mxu0
        %v6754 = vadd.f32 0.0, %v6753
        %v6755 = vpop.f32.mrb[0].mxu0
        %v6756 = vadd.f32 0.0, %v6755
        %v6757 = vpop.f32.mrb[0].mxu0
        %v6758 = vadd.f32 0.0, %v6757
        %v6759 = vpop.f32.mrb[0].mxu0
        %v6760 = vadd.f32 0.0, %v6759
        %6761 = vmatprep.mubr.bf16.mxu0 0
        %6762 = vmatmul.mubr.bf16.gmra.mrb[0].mxu0 %v6644
        %v6763 = vpop.f32.mrb[0].mxu0
        %v6764 = vadd.f32 0.0, %v6763
        %v6765 = vpop.f32.mrb[0].mxu0
        %v6766 = vadd.f32 0.0, %v6765
        %v6767 = vpop.f32.mrb[0].mxu0
        %v6768 = vadd.f32 0.0, %v6767
        %v6769 = vpop.f32.mrb[0].mxu0
        %v6770 = vadd.f32 0.0, %v6769
        %6771 = vmatprep.mubr.bf16.mxu0 0
        %6772 = vmatmul.mubr.bf16.gmra.mrb[0].mxu0 %v6647
        %v6773 = vpop.f32.mrb[0].mxu0
        %v6774 = vadd.f32 0.0, %v6773
        %v6775 = vpop.f32.mrb[0].mxu0
        %v6776 = vadd.f32 0.0, %v6775
        %v6777 = vpop.f32.mrb[0].mxu0
        %v6778 = vadd.f32 0.0, %v6777
        %v6779 = vpop.f32.mrb[0].mxu0
        %v6780 = vadd.f32 0.0, %v6779
        %6781 = vmatprep.mubr.bf16.mxu0 0
        %6782 = vmatmul.mubr.bf16.gmra.mrb[0].mxu0 %v6650
        %v6783 = vpop.f32.mrb[0].mxu0
        %v6784 = vadd.f32 0.0, %v6783
        %v6785 = vpop.f32.mrb[0].mxu0
        %v6786 = vadd.f32 0.0, %v6785
        %v6787 = vpop.f32.mrb[0].mxu0
        %v6788 = vadd.f32 0.0, %v6787
        %v6789 = vpop.f32.mrb[0].mxu0
        %v6790 = vadd.f32 0.0, %v6789
        %6791 = vmatprep.mubr.bf16.mxu0 0
        %6792 = vmatmul.mubr.bf16.gmra.mrb[0].mxu0 %v6653
        %v6793 = vpop.f32.mrb[0].mxu0
        %v6794 = vadd.f32 0.0, %v6793
        %v6795 = vpop.f32.mrb[0].mxu0
        %v6796 = vadd.f32 0.0, %v6795
        %v6797 = vpop.f32.mrb[0].mxu0
        %v6798 = vadd.f32 0.0, %v6797
        %v6799 = vpop.f32.mrb[0].mxu0
        %v6800 = vadd.f32 0.0, %v6799
        %6801 = vmatprep.mubr.bf16.mxu0 0
        %6802 = vmatmul.mubr.bf16.gmra.mrb[0].mxu0 %v6656
        %v6803 = vpop.f32.mrb[0].mxu0
        %v6804 = vadd.f32 0.0, %v6803
        %v6805 = vpop.f32.mrb[0].mxu0
        %v6806 = vadd.f32 0.0, %v6805
        %v6807 = vpop.f32.mrb[0].mxu0
        %v6808 = vadd.f32 0.0, %v6807
        %v6809 = vpop.f32.mrb[0].mxu0
        %v6810 = vadd.f32 0.0, %v6809
        %6811 = vmatprep.mubr.bf16.mxu0 0
        %6812 = vmatmul.mubr.bf16.gmra.mrb[0].mxu0 %v6659
        %v6813 = vpop.f32.mrb[0].mxu0
        %v6814 = vadd.f32 0.0, %v6813
        %v6815 = vpop.f32.mrb[0].mxu0
        %v6816 = vadd.f32 0.0, %v6815
        %v6817 = vpop.f32.mrb[0].mxu0
        %v6818 = vadd.f32 0.0, %v6817
        %v6819 = vpop.f32.mrb[0].mxu0
        %v6820 = vadd.f32 0.0, %v6819
        %6821 = vdwg.mxu0
        %v6822 = vrot.slane %v1434, 6
        %s6823 = vtos %v6822
        %v6824 = vstv %s6823
        %v6826 = vmul.f32 %v1402, %v6824
        %v6827 = vmul.f32 %v1403, %v6824
        %v6828 = vmul.f32 %v1404, %v6824
        %v6829 = vmul.f32 %v1405, %v6824
        %v6830 = vmul.f32 %v1406, %v6824
        %v6831 = vmul.f32 %v1407, %v6824
        %v6832 = vmul.f32 %v1408, %v6824
        %v6833 = vmul.f32 %v1409, %v6824
        %v6834 = vmul.f32 %v1410, %v6824
        %v6835 = vmul.f32 %v1411, %v6824
        %v6836 = vmul.f32 %v1412, %v6824
        %v6837 = vmul.f32 %v1413, %v6824
        %v6838 = vmul.f32 %v1414, %v6824
        %v6839 = vmul.f32 %v1415, %v6824
        %v6840 = vmul.f32 %v1416, %v6824
        %v6841 = vmul.f32 %v1417, %v6824
        %v6842 = vmul.f32 %v1418, %v6824
        %v6843 = vmul.f32 %v1419, %v6824
        %v6844 = vmul.f32 %v1420, %v6824
        %v6845 = vmul.f32 %v1421, %v6824
        %v6846 = vmul.f32 %v1422, %v6824
        %v6847 = vmul.f32 %v1423, %v6824
        %v6848 = vmul.f32 %v1424, %v6824
        %v6849 = vmul.f32 %v1425, %v6824
        %v6850 = vmul.f32 %v1426, %v6824
        %v6851 = vmul.f32 %v1427, %v6824
        %v6852 = vmul.f32 %v1428, %v6824
        %v6853 = vmul.f32 %v1429, %v6824
        %v6854 = vmul.f32 %v1430, %v6824
        %v6855 = vmul.f32 %v1431, %v6824
        %v6856 = vmul.f32 %v1432, %v6824
        %v6857 = vmul.f32 %v1433, %v6824
        %v6858 = vmul.f32 %v6826, 1.442695
        %v6859 = vpow.pop %v6858
        %v6860 = vmul.f32 %v6827, 1.442695
        %v6861 = vpow.pop %v6860
        %v6862 = vmul.f32 %v6828, 1.442695
        %v6863 = vpow.pop %v6862
        %v6864 = vmul.f32 %v6829, 1.442695
        %v6865 = vpow.pop %v6864
        %v6866 = vmul.f32 %v6830, 1.442695
        %v6867 = vpow.pop %v6866
        %v6868 = vmul.f32 %v6831, 1.442695
        %v6869 = vpow.pop %v6868
        %v6870 = vmul.f32 %v6832, 1.442695
        %v6871 = vpow.pop %v6870
        %v6872 = vmul.f32 %v6833, 1.442695
        %v6873 = vpow.pop %v6872
        %v6874 = vmul.f32 %v6834, 1.442695
        %v6875 = vpow.pop %v6874
        %v6876 = vmul.f32 %v6835, 1.442695
        %v6877 = vpow.pop %v6876
        %v6878 = vmul.f32 %v6836, 1.442695
        %v6879 = vpow.pop %v6878
        %v6880 = vmul.f32 %v6837, 1.442695
        %v6881 = vpow.pop %v6880
        %v6882 = vmul.f32 %v6838, 1.442695
        %v6883 = vpow.pop %v6882
        %v6884 = vmul.f32 %v6839, 1.442695
        %v6885 = vpow.pop %v6884
        %v6886 = vmul.f32 %v6840, 1.442695
        %v6887 = vpow.pop %v6886
        %v6888 = vmul.f32 %v6841, 1.442695
        %v6889 = vpow.pop %v6888
        %v6890 = vmul.f32 %v6842, 1.442695
        %v6891 = vpow.pop %v6890
        %v6892 = vmul.f32 %v6843, 1.442695
        %v6893 = vpow.pop %v6892
        %v6894 = vmul.f32 %v6844, 1.442695
        %v6895 = vpow.pop %v6894
        %v6896 = vmul.f32 %v6845, 1.442695
        %v6897 = vpow.pop %v6896
        %v6898 = vmul.f32 %v6846, 1.442695
        %v6899 = vpow.pop %v6898
        %v6900 = vmul.f32 %v6847, 1.442695
        %v6901 = vpow.pop %v6900
        %v6902 = vmul.f32 %v6848, 1.442695
        %v6903 = vpow.pop %v6902
        %v6904 = vmul.f32 %v6849, 1.442695
        %v6905 = vpow.pop %v6904
        %v6906 = vmul.f32 %v6850, 1.442695
        %v6907 = vpow.pop %v6906
        %v6908 = vmul.f32 %v6851, 1.442695
        %v6909 = vpow.pop %v6908
        %v6910 = vmul.f32 %v6852, 1.442695
        %v6911 = vpow.pop %v6910
        %v6912 = vmul.f32 %v6853, 1.442695
        %v6913 = vpow.pop %v6912
        %v6914 = vmul.f32 %v6854, 1.442695
        %v6915 = vpow.pop %v6914
        %v6916 = vmul.f32 %v6855, 1.442695
        %v6917 = vpow.pop %v6916
        %v6918 = vmul.f32 %v6856, 1.442695
        %v6919 = vpow.pop %v6918
        %v6920 = vmul.f32 %v6857, 1.442695
        %v6921 = vpow.pop %v6920
        %v6922 = vsel %vm1338, %v6859, 0.0
        %v6923 = vsel %vm1339, %v6861, 0.0
        %v6924 = vsel %vm1340, %v6863, 0.0
        %v6925 = vsel %vm1341, %v6865, 0.0
        %v6926 = vsel %vm1342, %v6867, 0.0
        %v6927 = vsel %vm1343, %v6869, 0.0
        %v6928 = vsel %vm1344, %v6871, 0.0
        %v6929 = vsel %vm1345, %v6873, 0.0
        %v6930 = vsel %vm1346, %v6875, 0.0
        %v6931 = vsel %vm1347, %v6877, 0.0
        %v6932 = vsel %vm1348, %v6879, 0.0
        %v6933 = vsel %vm1349, %v6881, 0.0
        %v6934 = vsel %vm1350, %v6883, 0.0
        %v6935 = vsel %vm1351, %v6885, 0.0
        %v6936 = vsel %vm1352, %v6887, 0.0
        %v6937 = vsel %vm1353, %v6889, 0.0
        %v6938 = vsel %vm1354, %v6891, 0.0
        %v6939 = vsel %vm1355, %v6893, 0.0
        %v6940 = vsel %vm1356, %v6895, 0.0
        %v6941 = vsel %vm1357, %v6897, 0.0
        %v6942 = vsel %vm1358, %v6899, 0.0
        %v6943 = vsel %vm1359, %v6901, 0.0
        %v6944 = vsel %vm1360, %v6903, 0.0
        %v6945 = vsel %vm1361, %v6905, 0.0
        %v6946 = vsel %vm1362, %v6907, 0.0
        %v6947 = vsel %vm1363, %v6909, 0.0
        %v6948 = vsel %vm1364, %v6911, 0.0
        %v6949 = vsel %vm1365, %v6913, 0.0
        %v6950 = vsel %vm1366, %v6915, 0.0
        %v6951 = vsel %vm1367, %v6917, 0.0
        %v6952 = vsel %vm1368, %v6919, 0.0
        %v6953 = vsel %vm1369, %v6921, 0.0
        %v6954 = vmul.f32 %v6744, %v6922
        %v6955 = vmul.f32 %v6746, %v6923
        %v6956 = vmul.f32 %v6748, %v6924
        %v6957 = vmul.f32 %v6750, %v6925
        %v6958 = vmul.f32 %v6754, %v6926
        %v6959 = vmul.f32 %v6756, %v6927
        %v6960 = vmul.f32 %v6758, %v6928
        %v6961 = vmul.f32 %v6760, %v6929
        %v6962 = vmul.f32 %v6764, %v6930
        %v6963 = vmul.f32 %v6766, %v6931
        %v6964 = vmul.f32 %v6768, %v6932
        %v6965 = vmul.f32 %v6770, %v6933
        %v6966 = vmul.f32 %v6774, %v6934
        %v6967 = vmul.f32 %v6776, %v6935
        %v6968 = vmul.f32 %v6778, %v6936
        %v6969 = vmul.f32 %v6780, %v6937
        %v6970 = vmul.f32 %v6784, %v6938
        %v6971 = vmul.f32 %v6786, %v6939
        %v6972 = vmul.f32 %v6788, %v6940
        %v6973 = vmul.f32 %v6790, %v6941
        %v6974 = vmul.f32 %v6794, %v6942
        %v6975 = vmul.f32 %v6796, %v6943
        %v6976 = vmul.f32 %v6798, %v6944
        %v6977 = vmul.f32 %v6800, %v6945
        %v6978 = vmul.f32 %v6804, %v6946
        %v6979 = vmul.f32 %v6806, %v6947
        %v6980 = vmul.f32 %v6808, %v6948
        %v6981 = vmul.f32 %v6810, %v6949
        %v6982 = vmul.f32 %v6814, %v6950
        %v6983 = vmul.f32 %v6816, %v6951
        %v6984 = vmul.f32 %v6818, %v6952
        %v6985 = vmul.f32 %v6820, %v6953
        %v6986 = vmax.f32 %v6954, %v6955
        %6987 = vmax.xlane.f32.xlu0 %v6986
        %v6988 = vpop.xlane.xlu0 %6987
        %v6989 = vmax.f32 %v6956, %v6957
        %6990 = vmax.xlane.f32.xlu0 %v6989
        %v6991 = vpop.xlane.xlu0 %6990
        %v6992 = vmax.f32 %v6958, %v6959
        %6993 = vmax.xlane.f32.xlu0 %v6992
        %v6994 = vpop.xlane.xlu0 %6993
        %v6995 = vmax.f32 %v6960, %v6961
        %6996 = vmax.xlane.f32.xlu0 %v6995
        %v6997 = vpop.xlane.xlu0 %6996
        %v6998 = vmax.f32 %v6962, %v6963
        %6999 = vmax.xlane.f32.xlu0 %v6998
        %v7000 = vpop.xlane.xlu0 %6999
        %v7001 = vmax.f32 %v6964, %v6965
        %7002 = vmax.xlane.f32.xlu0 %v7001
        %v7003 = vpop.xlane.xlu0 %7002
        %v7004 = vmax.f32 %v6966, %v6967
        %7005 = vmax.xlane.f32.xlu0 %v7004
        %v7006 = vpop.xlane.xlu0 %7005
        %v7007 = vmax.f32 %v6968, %v6969
        %7008 = vmax.xlane.f32.xlu0 %v7007
        %v7009 = vpop.xlane.xlu0 %7008
        %v7010 = vmax.f32 %v6970, %v6971
        %7011 = vmax.xlane.f32.xlu0 %v7010
        %v7012 = vpop.xlane.xlu0 %7011
        %v7013 = vmax.f32 %v6972, %v6973
        %7014 = vmax.xlane.f32.xlu0 %v7013
        %v7015 = vpop.xlane.xlu0 %7014
        %v7016 = vmax.f32 %v6974, %v6975
        %7017 = vmax.xlane.f32.xlu0 %v7016
        %v7018 = vpop.xlane.xlu0 %7017
        %v7019 = vmax.f32 %v6976, %v6977
        %7020 = vmax.xlane.f32.xlu0 %v7019
        %v7021 = vpop.xlane.xlu0 %7020
        %v7022 = vmax.f32 %v6978, %v6979
        %7023 = vmax.xlane.f32.xlu0 %v7022
        %v7024 = vpop.xlane.xlu0 %7023
        %v7025 = vmax.f32 %v6980, %v6981
        %7026 = vmax.xlane.f32.xlu0 %v7025
        %v7027 = vpop.xlane.xlu0 %7026
        %v7028 = vmax.f32 %v6982, %v6983
        %7029 = vmax.xlane.f32.xlu0 %v7028
        %v7030 = vpop.xlane.xlu0 %7029
        %v7031 = vmax.f32 %v6984, %v6985
        %7032 = vmax.xlane.f32.xlu0 %v7031
        %v7033 = vpop.xlane.xlu0 %7032
        %v7034 = vsub.f32 %v6954, %v6988
        %v7035 = vsub.f32 %v6955, %v6988
        %v7036 = vsub.f32 %v6956, %v6991
        %v7037 = vsub.f32 %v6957, %v6991
        %v7038 = vsub.f32 %v6958, %v6994
        %v7039 = vsub.f32 %v6959, %v6994
        %v7040 = vsub.f32 %v6960, %v6997
        %v7041 = vsub.f32 %v6961, %v6997
        %v7042 = vsub.f32 %v6962, %v7000
        %v7043 = vsub.f32 %v6963, %v7000
        %v7044 = vsub.f32 %v6964, %v7003
        %v7045 = vsub.f32 %v6965, %v7003
        %v7046 = vsub.f32 %v6966, %v7006
        %v7047 = vsub.f32 %v6967, %v7006
        %v7048 = vsub.f32 %v6968, %v7009
        %v7049 = vsub.f32 %v6969, %v7009
        %v7050 = vsub.f32 %v6970, %v7012
        %v7051 = vsub.f32 %v6971, %v7012
        %v7052 = vsub.f32 %v6972, %v7015
        %v7053 = vsub.f32 %v6973, %v7015
        %v7054 = vsub.f32 %v6974, %v7018
        %v7055 = vsub.f32 %v6975, %v7018
        %v7056 = vsub.f32 %v6976, %v7021
        %v7057 = vsub.f32 %v6977, %v7021
        %v7058 = vsub.f32 %v6978, %v7024
        %v7059 = vsub.f32 %v6979, %v7024
        %v7060 = vsub.f32 %v6980, %v7027
        %v7061 = vsub.f32 %v6981, %v7027
        %v7062 = vsub.f32 %v6982, %v7030
        %v7063 = vsub.f32 %v6983, %v7030
        %v7064 = vsub.f32 %v6984, %v7033
        %v7065 = vsub.f32 %v6985, %v7033
        %v7066 = vmul.f32 %v7034, 1.442695
        %v7067 = vpow.pop %v7066
        %v7068 = vmul.f32 %v7035, 1.442695
        %v7069 = vpow.pop %v7068
        %v7070 = vmul.f32 %v7036, 1.442695
        %v7071 = vpow.pop %v7070
        %v7072 = vmul.f32 %v7037, 1.442695
        %v7073 = vpow.pop %v7072
        %v7074 = vmul.f32 %v7038, 1.442695
        %v7075 = vpow.pop %v7074
        %v7076 = vmul.f32 %v7039, 1.442695
        %v7077 = vpow.pop %v7076
        %v7078 = vmul.f32 %v7040, 1.442695
        %v7079 = vpow.pop %v7078
        %v7080 = vmul.f32 %v7041, 1.442695
        %v7081 = vpow.pop %v7080
        %v7082 = vmul.f32 %v7042, 1.442695
        %v7083 = vpow.pop %v7082
        %v7084 = vmul.f32 %v7043, 1.442695
        %v7085 = vpow.pop %v7084
        %v7086 = vmul.f32 %v7044, 1.442695
        %v7087 = vpow.pop %v7086
        %v7088 = vmul.f32 %v7045, 1.442695
        %v7089 = vpow.pop %v7088
        %v7090 = vmul.f32 %v7046, 1.442695
        %v7091 = vpow.pop %v7090
        %v7092 = vmul.f32 %v7047, 1.442695
        %v7093 = vpow.pop %v7092
        %v7094 = vmul.f32 %v7048, 1.442695
        %v7095 = vpow.pop %v7094
        %v7096 = vmul.f32 %v7049, 1.442695
        %v7097 = vpow.pop %v7096
        %v7098 = vmul.f32 %v7050, 1.442695
        %v7099 = vpow.pop %v7098
        %v7100 = vmul.f32 %v7051, 1.442695
        %v7101 = vpow.pop %v7100
        %v7102 = vmul.f32 %v7052, 1.442695
        %v7103 = vpow.pop %v7102
        %v7104 = vmul.f32 %v7053, 1.442695
        %v7105 = vpow.pop %v7104
        %v7106 = vmul.f32 %v7054, 1.442695
        %v7107 = vpow.pop %v7106
        %v7108 = vmul.f32 %v7055, 1.442695
        %v7109 = vpow.pop %v7108
        %v7110 = vmul.f32 %v7056, 1.442695
        %v7111 = vpow.pop %v7110
        %v7112 = vmul.f32 %v7057, 1.442695
        %v7113 = vpow.pop %v7112
        %v7114 = vmul.f32 %v7058, 1.442695
        %v7115 = vpow.pop %v7114
        %v7116 = vmul.f32 %v7059, 1.442695
        %v7117 = vpow.pop %v7116
        %v7118 = vmul.f32 %v7060, 1.442695
        %v7119 = vpow.pop %v7118
        %v7120 = vmul.f32 %v7061, 1.442695
        %v7121 = vpow.pop %v7120
        %v7122 = vmul.f32 %v7062, 1.442695
        %v7123 = vpow.pop %v7122
        %v7124 = vmul.f32 %v7063, 1.442695
        %v7125 = vpow.pop %v7124
        %v7126 = vmul.f32 %v7064, 1.442695
        %v7127 = vpow.pop %v7126
        %v7128 = vmul.f32 %v7065, 1.442695
        %v7129 = vpow.pop %v7128
        %v7130 = vadd.f32 %v7067, %v7069
        %7131 = vadd.xlane.f32.xlu0 %v7130
        %v7132 = vpop.xlane.xlu0 %7131
        %v7133 = vadd.f32 %v7071, %v7073
        %7134 = vadd.xlane.f32.xlu0 %v7133
        %v7135 = vpop.xlane.xlu0 %7134
        %v7136 = vadd.f32 %v7075, %v7077
        %7137 = vadd.xlane.f32.xlu0 %v7136
        %v7138 = vpop.xlane.xlu0 %7137
        %v7139 = vadd.f32 %v7079, %v7081
        %7140 = vadd.xlane.f32.xlu0 %v7139
        %v7141 = vpop.xlane.xlu0 %7140
        %v7142 = vadd.f32 %v7083, %v7085
        %7143 = vadd.xlane.f32.xlu0 %v7142
        %v7144 = vpop.xlane.xlu0 %7143
        %v7145 = vadd.f32 %v7087, %v7089
        %7146 = vadd.xlane.f32.xlu0 %v7145
        %v7147 = vpop.xlane.xlu0 %7146
        %v7148 = vadd.f32 %v7091, %v7093
        %7149 = vadd.xlane.f32.xlu0 %v7148
        %v7150 = vpop.xlane.xlu0 %7149
        %v7151 = vadd.f32 %v7095, %v7097
        %7152 = vadd.xlane.f32.xlu0 %v7151
        %v7153 = vpop.xlane.xlu0 %7152
        %v7154 = vadd.f32 %v7099, %v7101
        %7155 = vadd.xlane.f32.xlu0 %v7154
        %v7156 = vpop.xlane.xlu0 %7155
        %v7157 = vadd.f32 %v7103, %v7105
        %7158 = vadd.xlane.f32.xlu0 %v7157
        %v7159 = vpop.xlane.xlu0 %7158
        %v7160 = vadd.f32 %v7107, %v7109
        %7161 = vadd.xlane.f32.xlu0 %v7160
        %v7162 = vpop.xlane.xlu0 %7161
        %v7163 = vadd.f32 %v7111, %v7113
        %7164 = vadd.xlane.f32.xlu0 %v7163
        %v7165 = vpop.xlane.xlu0 %7164
        %v7166 = vadd.f32 %v7115, %v7117
        %7167 = vadd.xlane.f32.xlu0 %v7166
        %v7168 = vpop.xlane.xlu0 %7167
        %v7169 = vadd.f32 %v7119, %v7121
        %7170 = vadd.xlane.f32.xlu0 %v7169
        %v7171 = vpop.xlane.xlu0 %7170
        %v7172 = vadd.f32 %v7123, %v7125
        %7173 = vadd.xlane.f32.xlu0 %v7172
        %v7174 = vpop.xlane.xlu0 %7173
        %v7175 = vadd.f32 %v7127, %v7129
        %7176 = vadd.xlane.f32.xlu0 %v7175
        %v7177 = vpop.xlane.xlu0 %7176
        %v7178 = vrcp.pop %v7132
        %v7179 = vrcp.pop %v7135
        %v7180 = vrcp.pop %v7138
        %v7181 = vrcp.pop %v7141
        %v7182 = vrcp.pop %v7144
        %v7183 = vrcp.pop %v7147
        %v7184 = vrcp.pop %v7150
        %v7185 = vrcp.pop %v7153
        %v7186 = vrcp.pop %v7156
        %v7187 = vrcp.pop %v7159
        %v7188 = vrcp.pop %v7162
        %v7189 = vrcp.pop %v7165
        %v7190 = vrcp.pop %v7168
        %v7191 = vrcp.pop %v7171
        %v7192 = vrcp.pop %v7174
        %v7193 = vrcp.pop %v7177
        %v7194 = vmul.f32 %v7067, %v7178
        %v7195 = vmul.f32 %v7069, %v7178
        %v7196 = vmul.f32 %v7071, %v7179
        %v7197 = vmul.f32 %v7073, %v7179
        %v7198 = vmul.f32 %v7075, %v7180
        %v7199 = vmul.f32 %v7077, %v7180
        %v7200 = vmul.f32 %v7079, %v7181
        %v7201 = vmul.f32 %v7081, %v7181
        %v7202 = vmul.f32 %v7083, %v7182
        %v7203 = vmul.f32 %v7085, %v7182
        %v7204 = vmul.f32 %v7087, %v7183
        %v7205 = vmul.f32 %v7089, %v7183
        %v7206 = vmul.f32 %v7091, %v7184
        %v7207 = vmul.f32 %v7093, %v7184
        %v7208 = vmul.f32 %v7095, %v7185
        %v7209 = vmul.f32 %v7097, %v7185
        %v7210 = vmul.f32 %v7099, %v7186
        %v7211 = vmul.f32 %v7101, %v7186
        %v7212 = vmul.f32 %v7103, %v7187
        %v7213 = vmul.f32 %v7105, %v7187
        %v7214 = vmul.f32 %v7107, %v7188
        %v7215 = vmul.f32 %v7109, %v7188
        %v7216 = vmul.f32 %v7111, %v7189
        %v7217 = vmul.f32 %v7113, %v7189
        %v7218 = vmul.f32 %v7115, %v7190
        %v7219 = vmul.f32 %v7117, %v7190
        %v7220 = vmul.f32 %v7119, %v7191
        %v7221 = vmul.f32 %v7121, %v7191
        %v7222 = vmul.f32 %v7123, %v7192
        %v7223 = vmul.f32 %v7125, %v7192
        %v7224 = vmul.f32 %v7127, %v7193
        %v7225 = vmul.f32 %v7129, %v7193
        %v7226 = vpack.c.bf16 %v7196, %v7194
        %v7227 = vpack.c.bf16 %v7197, %v7195
        %v7228 = vpack.c.bf16 %v7200, %v7198
        %v7229 = vpack.c.bf16 %v7201, %v7199
        %v7230 = vpack.c.bf16 %v7204, %v7202
        %v7231 = vpack.c.bf16 %v7205, %v7203
        %v7232 = vpack.c.bf16 %v7208, %v7206
        %v7233 = vpack.c.bf16 %v7209, %v7207
        %v7234 = vpack.c.bf16 %v7212, %v7210
        %v7235 = vpack.c.bf16 %v7213, %v7211
        %v7236 = vpack.c.bf16 %v7216, %v7214
        %v7237 = vpack.c.bf16 %v7217, %v7215
        %v7238 = vpack.c.bf16 %v7220, %v7218
        %v7239 = vpack.c.bf16 %v7221, %v7219
        %v7240 = vpack.c.bf16 %v7224, %v7222
        %v7241 = vpack.c.bf16 %v7225, %v7223
        %7242 = vrot.lane.b32.xlu0 %v1253, 32
        %v7243 = vpop.permute.xlu0 %7242
        %7244 = vrot.lane.b32.xlu0 %v1254, 32
        %v7245 = vpop.permute.xlu0 %7244
        %7246 = vrot.lane.b32.xlu0 %v1255, 32
        %v7247 = vpop.permute.xlu0 %7246
        %7248 = vrot.lane.b32.xlu0 %v1256, 32
        %v7249 = vpop.permute.xlu0 %7248
        %7250 = vrot.lane.b32.xlu0 %v1257, 32
        %v7251 = vpop.permute.xlu0 %7250
        %7252 = vrot.lane.b32.xlu0 %v1258, 32
        %v7253 = vpop.permute.xlu0 %7252
        %7254 = vrot.lane.b32.xlu0 %v1259, 32
        %v7255 = vpop.permute.xlu0 %7254
        %7256 = vrot.lane.b32.xlu0 %v1260, 32
        %v7257 = vpop.permute.xlu0 %7256
        %7258 = vrot.lane.b32.xlu0 %v1261, 32
        %v7259 = vpop.permute.xlu0 %7258
        %7260 = vrot.lane.b32.xlu0 %v1262, 32
        %v7261 = vpop.permute.xlu0 %7260
        %7262 = vrot.lane.b32.xlu0 %v1263, 32
        %v7263 = vpop.permute.xlu0 %7262
        %7264 = vrot.lane.b32.xlu0 %v1264, 32
        %v7265 = vpop.permute.xlu0 %7264
        %7266 = vrot.lane.b32.xlu0 %v1265, 32
        %v7267 = vpop.permute.xlu0 %7266
        %7268 = vrot.lane.b32.xlu0 %v1266, 32
        %v7269 = vpop.permute.xlu0 %7268
        %7270 = vrot.lane.b32.xlu0 %v1267, 32
        %v7271 = vpop.permute.xlu0 %7270
        %7272 = vrot.lane.b32.xlu0 %v1268, 32
        %v7273 = vpop.permute.xlu0 %7272
        %7290 = vmatprep.subr.bf16.mxu0 0
        %7291 = vmatpush1.bf16.msra.mxu0 %v7243
        %7292 = vmatprep.subr.bf16.mxu0 0
        %7293 = vmatpush1.bf16.msra.mxu0 %v7245
        %7294 = vmatprep.subr.bf16.mxu0 0
        %7295 = vmatpush1.bf16.msra.mxu0 %v7247
        %7296 = vmatprep.subr.bf16.mxu0 0
        %7297 = vmatpush1.bf16.msra.mxu0 %v7249
        %7298 = vmatprep.subr.bf16.mxu0 0
        %7299 = vmatpush1.bf16.msra.mxu0 %v7251
        %7300 = vmatprep.subr.bf16.mxu0 0
        %7301 = vmatpush1.bf16.msra.mxu0 %v7253
        %7302 = vmatprep.subr.bf16.mxu0 0
        %7303 = vmatpush1.bf16.msra.mxu0 %v7255
        %7304 = vmatprep.subr.bf16.mxu0 0
        %7305 = vmatpush1.bf16.msra.mxu0 %v7257
        %7306 = vmatprep.subr.bf16.mxu0 0
        %7307 = vmatpush1.bf16.msra.mxu0 %v7259
        %7308 = vmatprep.subr.bf16.mxu0 0
        %7309 = vmatpush1.bf16.msra.mxu0 %v7261
        %7310 = vmatprep.subr.bf16.mxu0 0
        %7311 = vmatpush1.bf16.msra.mxu0 %v7263
        %7312 = vmatprep.subr.bf16.mxu0 0
        %7313 = vmatpush1.bf16.msra.mxu0 %v7265
        %7314 = vmatprep.subr.bf16.mxu0 0
        %7315 = vmatpush1.bf16.msra.mxu0 %v7267
        %7316 = vmatprep.subr.bf16.mxu0 0
        %7317 = vmatpush1.bf16.msra.mxu0 %v7269
        %7318 = vmatprep.subr.bf16.mxu0 0
        %7319 = vmatpush1.bf16.msra.mxu0 %v7271
        %7320 = vmatprep.subr.bf16.mxu0 0
        %7321 = vmatpush1.bf16.msra.mxu0 %v7273
        %7322 = vmatprep.mubr.bf16.mxu0 %v7227
        %7323 = vmatmul.mubr.bf16.gmra.mrb[0].mxu0 %v7226
        %v7324 = vpop.f32.mrb[0].mxu0
        %v7325 = vadd.f32 0.0, %v7324
        %v7326 = vpop.f32.mrb[0].mxu0
        %v7327 = vpop.f32.mrb[0].mxu0
        %v7328 = vadd.f32 0.0, %v7327
        %v7329 = vpop.f32.mrb[0].mxu0
        %7330 = vmatprep.mubr.bf16.mxu0 %v7229
        %7331 = vmatmul.mubr.bf16.gmra.mrb[0].mxu0 %v7228
        %v7332 = vpop.f32.mrb[0].mxu0
        %v7333 = vadd.f32 0.0, %v7332
        %v7334 = vpop.f32.mrb[0].mxu0
        %v7335 = vpop.f32.mrb[0].mxu0
        %v7336 = vadd.f32 0.0, %v7335
        %v7337 = vpop.f32.mrb[0].mxu0
        %7338 = vmatprep.mubr.bf16.mxu0 %v7231
        %7339 = vmatmul.mubr.bf16.gmra.mrb[0].mxu0 %v7230
        %v7340 = vpop.f32.mrb[0].mxu0
        %v7341 = vadd.f32 0.0, %v7340
        %v7342 = vpop.f32.mrb[0].mxu0
        %v7343 = vpop.f32.mrb[0].mxu0
        %v7344 = vadd.f32 0.0, %v7343
        %v7345 = vpop.f32.mrb[0].mxu0
        %7346 = vmatprep.mubr.bf16.mxu0 %v7233
        %7347 = vmatmul.mubr.bf16.gmra.mrb[0].mxu0 %v7232
        %v7348 = vpop.f32.mrb[0].mxu0
        %v7349 = vadd.f32 0.0, %v7348
        %v7350 = vpop.f32.mrb[0].mxu0
        %v7351 = vpop.f32.mrb[0].mxu0
        %v7352 = vadd.f32 0.0, %v7351
        %v7353 = vpop.f32.mrb[0].mxu0
        %7354 = vmatprep.mubr.bf16.mxu0 %v7235
        %7355 = vmatmul.mubr.bf16.gmra.mrb[0].mxu0 %v7234
        %v7356 = vpop.f32.mrb[0].mxu0
        %v7357 = vadd.f32 0.0, %v7356
        %v7358 = vpop.f32.mrb[0].mxu0
        %v7359 = vpop.f32.mrb[0].mxu0
        %v7360 = vadd.f32 0.0, %v7359
        %v7361 = vpop.f32.mrb[0].mxu0
        %7362 = vmatprep.mubr.bf16.mxu0 %v7237
        %7363 = vmatmul.mubr.bf16.gmra.mrb[0].mxu0 %v7236
        %v7364 = vpop.f32.mrb[0].mxu0
        %v7365 = vadd.f32 0.0, %v7364
        %v7366 = vpop.f32.mrb[0].mxu0
        %v7367 = vpop.f32.mrb[0].mxu0
        %v7368 = vadd.f32 0.0, %v7367
        %v7369 = vpop.f32.mrb[0].mxu0
        %7370 = vmatprep.mubr.bf16.mxu0 %v7239
        %7371 = vmatmul.mubr.bf16.gmra.mrb[0].mxu0 %v7238
        %v7372 = vpop.f32.mrb[0].mxu0
        %v7373 = vadd.f32 0.0, %v7372
        %v7374 = vpop.f32.mrb[0].mxu0
        %v7375 = vpop.f32.mrb[0].mxu0
        %v7376 = vadd.f32 0.0, %v7375
        %v7377 = vpop.f32.mrb[0].mxu0
        %7378 = vmatprep.mubr.bf16.mxu0 %v7241
        %7379 = vmatmul.mubr.bf16.gmra.mrb[0].mxu0 %v7240
        %v7380 = vpop.f32.mrb[0].mxu0
        %v7381 = vadd.f32 0.0, %v7380
        %v7382 = vpop.f32.mrb[0].mxu0
        %v7383 = vpop.f32.mrb[0].mxu0
        %v7384 = vadd.f32 0.0, %v7383
        %v7385 = vpop.f32.mrb[0].mxu0
        %7386 = vdwg.mxu0
        %7403 = vrot.lane.b32.xlu0 %v7325, 96
        %v7404 = vpop.permute.xlu0 %7403
        %7405 = vrot.lane.b32.xlu0 %v7328, 96
        %v7406 = vpop.permute.xlu0 %7405
        %7407 = vrot.lane.b32.xlu0 %v7333, 96
        %v7408 = vpop.permute.xlu0 %7407
        %7409 = vrot.lane.b32.xlu0 %v7336, 96
        %v7410 = vpop.permute.xlu0 %7409
        %7411 = vrot.lane.b32.xlu0 %v7341, 96
        %v7412 = vpop.permute.xlu0 %7411
        %7413 = vrot.lane.b32.xlu0 %v7344, 96
        %v7414 = vpop.permute.xlu0 %7413
        %7415 = vrot.lane.b32.xlu0 %v7349, 96
        %v7416 = vpop.permute.xlu0 %7415
        %7417 = vrot.lane.b32.xlu0 %v7352, 96
        %v7418 = vpop.permute.xlu0 %7417
        %7419 = vrot.lane.b32.xlu0 %v7357, 96
        %v7420 = vpop.permute.xlu0 %7419
        %7421 = vrot.lane.b32.xlu0 %v7360, 96
        %v7422 = vpop.permute.xlu0 %7421
        %7423 = vrot.lane.b32.xlu0 %v7365, 96
        %v7424 = vpop.permute.xlu0 %7423
        %7425 = vrot.lane.b32.xlu0 %v7368, 96
        %v7426 = vpop.permute.xlu0 %7425
        %7427 = vrot.lane.b32.xlu0 %v7373, 96
        %v7428 = vpop.permute.xlu0 %7427
        %7429 = vrot.lane.b32.xlu0 %v7376, 96
        %v7430 = vpop.permute.xlu0 %7429
        %7431 = vrot.lane.b32.xlu0 %v7381, 96
        %v7432 = vpop.permute.xlu0 %7431
        %7433 = vrot.lane.b32.xlu0 %v7384, 96
        %v7434 = vpop.permute.xlu0 %7433
        %vm7451 = vcmask 917248
        %7452 = vst.msk [vmem:[#allocation2] sm:$0xff] %vm7451, %v7404
        %7453 = vst.msk [vmem:[#allocation2 + $0x8] sm:$0xff] %vm7451, %v7406
        %7454 = vst.msk [vmem:[#allocation2 + $0x10] sm:$0xff] %vm7451, %v7408
        %7455 = vst.msk [vmem:[#allocation2 + $0x18] sm:$0xff] %vm7451, %v7410
        %7456 = vst.msk [vmem:[#allocation2 + $0x20] sm:$0xff] %vm7451, %v7412
        %7457 = vst.msk [vmem:[#allocation2 + $0x28] sm:$0xff] %vm7451, %v7414
        %7458 = vst.msk [vmem:[#allocation2 + $0x30] sm:$0xff] %vm7451, %v7416
        %7459 = vst.msk [vmem:[#allocation2 + $0x38] sm:$0xff] %vm7451, %v7418
        %7460 = vst.msk [vmem:[#allocation2 + $0x40] sm:$0xff] %vm7451, %v7420
        %7461 = vst.msk [vmem:[#allocation2 + $0x48] sm:$0xff] %vm7451, %v7422
        %7462 = vst.msk [vmem:[#allocation2 + $0x50] sm:$0xff] %vm7451, %v7424
        %7463 = vst.msk [vmem:[#allocation2 + $0x58] sm:$0xff] %vm7451, %v7426
        %7464 = vst.msk [vmem:[#allocation2 + $0x60] sm:$0xff] %vm7451, %v7428
        %7465 = vst.msk [vmem:[#allocation2 + $0x68] sm:$0xff] %vm7451, %v7430
        %7466 = vst.msk [vmem:[#allocation2 + $0x70] sm:$0xff] %vm7451, %v7432
        %7467 = vst.msk [vmem:[#allocation2 + $0x78] sm:$0xff] %vm7451, %v7434
        %7468 = vrot.lane.b32.xlu0 %v765, 16
        %v7469 = vpop.permute.xlu0 %7468
        %7470 = vrot.lane.b32.xlu0 %v766, 16
        %v7471 = vpop.permute.xlu0 %7470
        %7472 = vrot.lane.b32.xlu0 %v767, 16
        %v7473 = vpop.permute.xlu0 %7472
        %7474 = vrot.lane.b32.xlu0 %v768, 16
        %v7475 = vpop.permute.xlu0 %7474
        %7476 = vrot.lane.b32.xlu0 %v769, 16
        %v7477 = vpop.permute.xlu0 %7476
        %7478 = vrot.lane.b32.xlu0 %v770, 16
        %v7479 = vpop.permute.xlu0 %7478
        %7480 = vrot.lane.b32.xlu0 %v771, 16
        %v7481 = vpop.permute.xlu0 %7480
        %7482 = vrot.lane.b32.xlu0 %v772, 16
        %v7483 = vpop.permute.xlu0 %7482
        %7484 = vrot.lane.b32.xlu0 %v1005, 16
        %v7485 = vpop.permute.xlu0 %7484
        %7486 = vrot.lane.b32.xlu0 %v1006, 16
        %v7487 = vpop.permute.xlu0 %7486
        %7488 = vrot.lane.b32.xlu0 %v1007, 16
        %v7489 = vpop.permute.xlu0 %7488
        %7490 = vrot.lane.b32.xlu0 %v1008, 16
        %v7491 = vpop.permute.xlu0 %7490
        %7492 = vrot.lane.b32.xlu0 %v1009, 16
        %v7493 = vpop.permute.xlu0 %7492
        %7494 = vrot.lane.b32.xlu0 %v1010, 16
        %v7495 = vpop.permute.xlu0 %7494
        %7496 = vrot.lane.b32.xlu0 %v1011, 16
        %v7497 = vpop.permute.xlu0 %7496
        %7498 = vrot.lane.b32.xlu0 %v1012, 16
        %v7499 = vpop.permute.xlu0 %7498
        %7500 = vrot.lane.b32.xlu0 %v1013, 16
        %v7501 = vpop.permute.xlu0 %7500
        %7502 = vrot.lane.b32.xlu0 %v1014, 16
        %v7503 = vpop.permute.xlu0 %7502
        %7504 = vrot.lane.b32.xlu0 %v1015, 16
        %v7505 = vpop.permute.xlu0 %7504
        %7506 = vrot.lane.b32.xlu0 %v1016, 16
        %v7507 = vpop.permute.xlu0 %7506
        %7508 = vrot.lane.b32.xlu0 %v1017, 16
        %v7509 = vpop.permute.xlu0 %7508
        %7510 = vrot.lane.b32.xlu0 %v1018, 16
        %v7511 = vpop.permute.xlu0 %7510
        %7512 = vrot.lane.b32.xlu0 %v1019, 16
        %v7513 = vpop.permute.xlu0 %7512
        %7514 = vrot.lane.b32.xlu0 %v1020, 16
        %v7515 = vpop.permute.xlu0 %7514
        %v7517 = vsel %vm1435, %v7469, 0
        %v7520 = vsel %vm1435, %v7471, 0
        %v7523 = vsel %vm1435, %v7473, 0
        %v7526 = vsel %vm1435, %v7475, 0
        %v7529 = vsel %vm1435, %v7477, 0
        %v7532 = vsel %vm1435, %v7479, 0
        %v7535 = vsel %vm1435, %v7481, 0
        %v7538 = vsel %vm1435, %v7483, 0
        %v7541 = vsel %vm1435, %v7485, 0
        %v7544 = vsel %vm1435, %v7487, 0
        %v7547 = vsel %vm1435, %v7489, 0
        %v7550 = vsel %vm1435, %v7491, 0
        %v7553 = vsel %vm1435, %v7493, 0
        %v7556 = vsel %vm1435, %v7495, 0
        %v7559 = vsel %vm1435, %v7497, 0
        %v7562 = vsel %vm1435, %v7499, 0
        %v7565 = vsel %vm1435, %v7501, 0
        %v7568 = vsel %vm1435, %v7503, 0
        %v7571 = vsel %vm1435, %v7505, 0
        %v7574 = vsel %vm1435, %v7507, 0
        %v7577 = vsel %vm1435, %v7509, 0
        %v7580 = vsel %vm1435, %v7511, 0
        %v7583 = vsel %vm1435, %v7513, 0
        %v7586 = vsel %vm1435, %v7515, 0
        %7588 = vmatprep.subr.bf16.mxu0 0
        %7589 = vmatpush1.bf16.xpose.msra.mxu0 %v7541
        %7590 = vmatprep.subr.bf16.mxu0 0
        %7591 = vmatpush1.bf16.xpose.msra.mxu0 %v7544
        %7592 = vmatprep.subr.bf16.mxu0 0
        %7593 = vmatpush1.bf16.xpose.msra.mxu0 %v7547
        %7594 = vmatprep.subr.bf16.mxu0 0
        %7595 = vmatpush1.bf16.xpose.msra.mxu0 %v7550
        %7596 = vmatprep.subr.bf16.mxu0 0
        %7597 = vmatpush1.bf16.xpose.msra.mxu0 %v7553
        %7598 = vmatprep.subr.bf16.mxu0 0
        %7599 = vmatpush1.bf16.xpose.msra.mxu0 %v7556
        %7600 = vmatprep.subr.bf16.mxu0 0
        %7601 = vmatpush1.bf16.xpose.msra.mxu0 %v7559
        %7602 = vmatprep.subr.bf16.mxu0 0
        %7603 = vmatpush1.bf16.xpose.msra.mxu0 %v7562
        %7604 = vmatprep.subr.bf16.mxu0 0
        %7605 = vmatpush1.bf16.xpose.msra.mxu0 %v7565
        %7606 = vmatprep.subr.bf16.mxu0 0
        %7607 = vmatpush1.bf16.xpose.msra.mxu0 %v7568
        %7608 = vmatprep.subr.bf16.mxu0 0
        %7609 = vmatpush1.bf16.xpose.msra.mxu0 %v7571
        %7610 = vmatprep.subr.bf16.mxu0 0
        %7611 = vmatpush1.bf16.xpose.msra.mxu0 %v7574
        %7612 = vmatprep.subr.bf16.mxu0 0
        %7613 = vmatpush1.bf16.xpose.msra.mxu0 %v7577
        %7614 = vmatprep.subr.bf16.mxu0 0
        %7615 = vmatpush1.bf16.xpose.msra.mxu0 %v7580
        %7616 = vmatprep.subr.bf16.mxu0 0
        %7617 = vmatpush1.bf16.xpose.msra.mxu0 %v7583
        %7618 = vmatprep.subr.bf16.mxu0 0
        %7619 = vmatpush1.bf16.xpose.msra.mxu0 %v7586
        %7620 = vmatprep.mubr.bf16.mxu0 0
        %7621 = vmatmul.mubr.bf16.gmra.mrb[0].mxu0 %v7517
        %v7622 = vpop.f32.mrb[0].mxu0
        %v7623 = vadd.f32 0.0, %v7622
        %v7624 = vpop.f32.mrb[0].mxu0
        %v7625 = vadd.f32 0.0, %v7624
        %v7626 = vpop.f32.mrb[0].mxu0
        %v7627 = vadd.f32 0.0, %v7626
        %v7628 = vpop.f32.mrb[0].mxu0
        %v7629 = vadd.f32 0.0, %v7628
        %7630 = vmatprep.mubr.bf16.mxu0 0
        %7631 = vmatmul.mubr.bf16.gmra.mrb[0].mxu0 %v7520
        %v7632 = vpop.f32.mrb[0].mxu0
        %v7633 = vadd.f32 0.0, %v7632
        %v7634 = vpop.f32.mrb[0].mxu0
        %v7635 = vadd.f32 0.0, %v7634
        %v7636 = vpop.f32.mrb[0].mxu0
        %v7637 = vadd.f32 0.0, %v7636
        %v7638 = vpop.f32.mrb[0].mxu0
        %v7639 = vadd.f32 0.0, %v7638
        %7640 = vmatprep.mubr.bf16.mxu0 0
        %7641 = vmatmul.mubr.bf16.gmra.mrb[0].mxu0 %v7523
        %v7642 = vpop.f32.mrb[0].mxu0
        %v7643 = vadd.f32 0.0, %v7642
        %v7644 = vpop.f32.mrb[0].mxu0
        %v7645 = vadd.f32 0.0, %v7644
        %v7646 = vpop.f32.mrb[0].mxu0
        %v7647 = vadd.f32 0.0, %v7646
        %v7648 = vpop.f32.mrb[0].mxu0
        %v7649 = vadd.f32 0.0, %v7648
        %7650 = vmatprep.mubr.bf16.mxu0 0
        %7651 = vmatmul.mubr.bf16.gmra.mrb[0].mxu0 %v7526
        %v7652 = vpop.f32.mrb[0].mxu0
        %v7653 = vadd.f32 0.0, %v7652
        %v7654 = vpop.f32.mrb[0].mxu0
        %v7655 = vadd.f32 0.0, %v7654
        %v7656 = vpop.f32.mrb[0].mxu0
        %v7657 = vadd.f32 0.0, %v7656
        %v7658 = vpop.f32.mrb[0].mxu0
        %v7659 = vadd.f32 0.0, %v7658
        %7660 = vmatprep.mubr.bf16.mxu0 0
        %7661 = vmatmul.mubr.bf16.gmra.mrb[0].mxu0 %v7529
        %v7662 = vpop.f32.mrb[0].mxu0
        %v7663 = vadd.f32 0.0, %v7662
        %v7664 = vpop.f32.mrb[0].mxu0
        %v7665 = vadd.f32 0.0, %v7664
        %v7666 = vpop.f32.mrb[0].mxu0
        %v7667 = vadd.f32 0.0, %v7666
        %v7668 = vpop.f32.mrb[0].mxu0
        %v7669 = vadd.f32 0.0, %v7668
        %7670 = vmatprep.mubr.bf16.mxu0 0
        %7671 = vmatmul.mubr.bf16.gmra.mrb[0].mxu0 %v7532
        %v7672 = vpop.f32.mrb[0].mxu0
        %v7673 = vadd.f32 0.0, %v7672
        %v7674 = vpop.f32.mrb[0].mxu0
        %v7675 = vadd.f32 0.0, %v7674
        %v7676 = vpop.f32.mrb[0].mxu0
        %v7677 = vadd.f32 0.0, %v7676
        %v7678 = vpop.f32.mrb[0].mxu0
        %v7679 = vadd.f32 0.0, %v7678
        %7680 = vmatprep.mubr.bf16.mxu0 0
        %7681 = vmatmul.mubr.bf16.gmra.mrb[0].mxu0 %v7535
        %v7682 = vpop.f32.mrb[0].mxu0
        %v7683 = vadd.f32 0.0, %v7682
        %v7684 = vpop.f32.mrb[0].mxu0
        %v7685 = vadd.f32 0.0, %v7684
        %v7686 = vpop.f32.mrb[0].mxu0
        %v7687 = vadd.f32 0.0, %v7686
        %v7688 = vpop.f32.mrb[0].mxu0
        %v7689 = vadd.f32 0.0, %v7688
        %7690 = vmatprep.mubr.bf16.mxu0 0
        %7691 = vmatmul.mubr.bf16.gmra.mrb[0].mxu0 %v7538
        %v7692 = vpop.f32.mrb[0].mxu0
        %v7693 = vadd.f32 0.0, %v7692
        %v7694 = vpop.f32.mrb[0].mxu0
        %v7695 = vadd.f32 0.0, %v7694
        %v7696 = vpop.f32.mrb[0].mxu0
        %v7697 = vadd.f32 0.0, %v7696
        %v7698 = vpop.f32.mrb[0].mxu0
        %v7699 = vadd.f32 0.0, %v7698
        %7700 = vdwg.mxu0
        %v7701 = vrot.slane %v1434, 7
        %s7702 = vtos %v7701
        %v7703 = vstv %s7702
        %v7705 = vmul.f32 %v1402, %v7703
        %v7706 = vmul.f32 %v1403, %v7703
        %v7707 = vmul.f32 %v1404, %v7703
        %v7708 = vmul.f32 %v1405, %v7703
        %v7709 = vmul.f32 %v1406, %v7703
        %v7710 = vmul.f32 %v1407, %v7703
        %v7711 = vmul.f32 %v1408, %v7703
        %v7712 = vmul.f32 %v1409, %v7703
        %v7713 = vmul.f32 %v1410, %v7703
        %v7714 = vmul.f32 %v1411, %v7703
        %v7715 = vmul.f32 %v1412, %v7703
        %v7716 = vmul.f32 %v1413, %v7703
        %v7717 = vmul.f32 %v1414, %v7703
        %v7718 = vmul.f32 %v1415, %v7703
        %v7719 = vmul.f32 %v1416, %v7703
        %v7720 = vmul.f32 %v1417, %v7703
        %v7721 = vmul.f32 %v1418, %v7703
        %v7722 = vmul.f32 %v1419, %v7703
        %v7723 = vmul.f32 %v1420, %v7703
        %v7724 = vmul.f32 %v1421, %v7703
        %v7725 = vmul.f32 %v1422, %v7703
        %v7726 = vmul.f32 %v1423, %v7703
        %v7727 = vmul.f32 %v1424, %v7703
        %v7728 = vmul.f32 %v1425, %v7703
        %v7729 = vmul.f32 %v1426, %v7703
        %v7730 = vmul.f32 %v1427, %v7703
        %v7731 = vmul.f32 %v1428, %v7703
        %v7732 = vmul.f32 %v1429, %v7703
        %v7733 = vmul.f32 %v1430, %v7703
        %v7734 = vmul.f32 %v1431, %v7703
        %v7735 = vmul.f32 %v1432, %v7703
        %v7736 = vmul.f32 %v1433, %v7703
        %v7737 = vmul.f32 %v7705, 1.442695
        %v7738 = vpow.pop %v7737
        %v7739 = vmul.f32 %v7706, 1.442695
        %v7740 = vpow.pop %v7739
        %v7741 = vmul.f32 %v7707, 1.442695
        %v7742 = vpow.pop %v7741
        %v7743 = vmul.f32 %v7708, 1.442695
        %v7744 = vpow.pop %v7743
        %v7745 = vmul.f32 %v7709, 1.442695
        %v7746 = vpow.pop %v7745
        %v7747 = vmul.f32 %v7710, 1.442695
        %v7748 = vpow.pop %v7747
        %v7749 = vmul.f32 %v7711, 1.442695
        %v7750 = vpow.pop %v7749
        %v7751 = vmul.f32 %v7712, 1.442695
        %v7752 = vpow.pop %v7751
        %v7753 = vmul.f32 %v7713, 1.442695
        %v7754 = vpow.pop %v7753
        %v7755 = vmul.f32 %v7714, 1.442695
        %v7756 = vpow.pop %v7755
        %v7757 = vmul.f32 %v7715, 1.442695
        %v7758 = vpow.pop %v7757
        %v7759 = vmul.f32 %v7716, 1.442695
        %v7760 = vpow.pop %v7759
        %v7761 = vmul.f32 %v7717, 1.442695
        %v7762 = vpow.pop %v7761
        %v7763 = vmul.f32 %v7718, 1.442695
        %v7764 = vpow.pop %v7763
        %v7765 = vmul.f32 %v7719, 1.442695
        %v7766 = vpow.pop %v7765
        %v7767 = vmul.f32 %v7720, 1.442695
        %v7768 = vpow.pop %v7767
        %v7769 = vmul.f32 %v7721, 1.442695
        %v7770 = vpow.pop %v7769
        %v7771 = vmul.f32 %v7722, 1.442695
        %v7772 = vpow.pop %v7771
        %v7773 = vmul.f32 %v7723, 1.442695
        %v7774 = vpow.pop %v7773
        %v7775 = vmul.f32 %v7724, 1.442695
        %v7776 = vpow.pop %v7775
        %v7777 = vmul.f32 %v7725, 1.442695
        %v7778 = vpow.pop %v7777
        %v7779 = vmul.f32 %v7726, 1.442695
        %v7780 = vpow.pop %v7779
        %v7781 = vmul.f32 %v7727, 1.442695
        %v7782 = vpow.pop %v7781
        %v7783 = vmul.f32 %v7728, 1.442695
        %v7784 = vpow.pop %v7783
        %v7785 = vmul.f32 %v7729, 1.442695
        %v7786 = vpow.pop %v7785
        %v7787 = vmul.f32 %v7730, 1.442695
        %v7788 = vpow.pop %v7787
        %v7789 = vmul.f32 %v7731, 1.442695
        %v7790 = vpow.pop %v7789
        %v7791 = vmul.f32 %v7732, 1.442695
        %v7792 = vpow.pop %v7791
        %v7793 = vmul.f32 %v7733, 1.442695
        %v7794 = vpow.pop %v7793
        %v7795 = vmul.f32 %v7734, 1.442695
        %v7796 = vpow.pop %v7795
        %v7797 = vmul.f32 %v7735, 1.442695
        %v7798 = vpow.pop %v7797
        %v7799 = vmul.f32 %v7736, 1.442695
        %v7800 = vpow.pop %v7799
        %v7801 = vsel %vm1338, %v7738, 0.0
        %v7802 = vsel %vm1339, %v7740, 0.0
        %v7803 = vsel %vm1340, %v7742, 0.0
        %v7804 = vsel %vm1341, %v7744, 0.0
        %v7805 = vsel %vm1342, %v7746, 0.0
        %v7806 = vsel %vm1343, %v7748, 0.0
        %v7807 = vsel %vm1344, %v7750, 0.0
        %v7808 = vsel %vm1345, %v7752, 0.0
        %v7809 = vsel %vm1346, %v7754, 0.0
        %v7810 = vsel %vm1347, %v7756, 0.0
        %v7811 = vsel %vm1348, %v7758, 0.0
        %v7812 = vsel %vm1349, %v7760, 0.0
        %v7813 = vsel %vm1350, %v7762, 0.0
        %v7814 = vsel %vm1351, %v7764, 0.0
        %v7815 = vsel %vm1352, %v7766, 0.0
        %v7816 = vsel %vm1353, %v7768, 0.0
        %v7817 = vsel %vm1354, %v7770, 0.0
        %v7818 = vsel %vm1355, %v7772, 0.0
        %v7819 = vsel %vm1356, %v7774, 0.0
        %v7820 = vsel %vm1357, %v7776, 0.0
        %v7821 = vsel %vm1358, %v7778, 0.0
        %v7822 = vsel %vm1359, %v7780, 0.0
        %v7823 = vsel %vm1360, %v7782, 0.0
        %v7824 = vsel %vm1361, %v7784, 0.0
        %v7825 = vsel %vm1362, %v7786, 0.0
        %v7826 = vsel %vm1363, %v7788, 0.0
        %v7827 = vsel %vm1364, %v7790, 0.0
        %v7828 = vsel %vm1365, %v7792, 0.0
        %v7829 = vsel %vm1366, %v7794, 0.0
        %v7830 = vsel %vm1367, %v7796, 0.0
        %v7831 = vsel %vm1368, %v7798, 0.0
        %v7832 = vsel %vm1369, %v7800, 0.0
        %v7833 = vmul.f32 %v7623, %v7801
        %v7834 = vmul.f32 %v7625, %v7802
        %v7835 = vmul.f32 %v7627, %v7803
        %v7836 = vmul.f32 %v7629, %v7804
        %v7837 = vmul.f32 %v7633, %v7805
        %v7838 = vmul.f32 %v7635, %v7806
        %v7839 = vmul.f32 %v7637, %v7807
        %v7840 = vmul.f32 %v7639, %v7808
        %v7841 = vmul.f32 %v7643, %v7809
        %v7842 = vmul.f32 %v7645, %v7810
        %v7843 = vmul.f32 %v7647, %v7811
        %v7844 = vmul.f32 %v7649, %v7812
        %v7845 = vmul.f32 %v7653, %v7813
        %v7846 = vmul.f32 %v7655, %v7814
        %v7847 = vmul.f32 %v7657, %v7815
        %v7848 = vmul.f32 %v7659, %v7816
        %v7849 = vmul.f32 %v7663, %v7817
        %v7850 = vmul.f32 %v7665, %v7818
        %v7851 = vmul.f32 %v7667, %v7819
        %v7852 = vmul.f32 %v7669, %v7820
        %v7853 = vmul.f32 %v7673, %v7821
        %v7854 = vmul.f32 %v7675, %v7822
        %v7855 = vmul.f32 %v7677, %v7823
        %v7856 = vmul.f32 %v7679, %v7824
        %v7857 = vmul.f32 %v7683, %v7825
        %v7858 = vmul.f32 %v7685, %v7826
        %v7859 = vmul.f32 %v7687, %v7827
        %v7860 = vmul.f32 %v7689, %v7828
        %v7861 = vmul.f32 %v7693, %v7829
        %v7862 = vmul.f32 %v7695, %v7830
        %v7863 = vmul.f32 %v7697, %v7831
        %v7864 = vmul.f32 %v7699, %v7832
        %v7865 = vmax.f32 %v7833, %v7834
        %7866 = vmax.xlane.f32.xlu0 %v7865
        %v7867 = vpop.xlane.xlu0 %7866
        %v7868 = vmax.f32 %v7835, %v7836
        %7869 = vmax.xlane.f32.xlu0 %v7868
        %v7870 = vpop.xlane.xlu0 %7869
        %v7871 = vmax.f32 %v7837, %v7838
        %7872 = vmax.xlane.f32.xlu0 %v7871
        %v7873 = vpop.xlane.xlu0 %7872
        %v7874 = vmax.f32 %v7839, %v7840
        %7875 = vmax.xlane.f32.xlu0 %v7874
        %v7876 = vpop.xlane.xlu0 %7875
        %v7877 = vmax.f32 %v7841, %v7842
        %7878 = vmax.xlane.f32.xlu0 %v7877
        %v7879 = vpop.xlane.xlu0 %7878
        %v7880 = vmax.f32 %v7843, %v7844
        %7881 = vmax.xlane.f32.xlu0 %v7880
        %v7882 = vpop.xlane.xlu0 %7881
        %v7883 = vmax.f32 %v7845, %v7846
        %7884 = vmax.xlane.f32.xlu0 %v7883
        %v7885 = vpop.xlane.xlu0 %7884
        %v7886 = vmax.f32 %v7847, %v7848
        %7887 = vmax.xlane.f32.xlu0 %v7886
        %v7888 = vpop.xlane.xlu0 %7887
        %v7889 = vmax.f32 %v7849, %v7850
        %7890 = vmax.xlane.f32.xlu0 %v7889
        %v7891 = vpop.xlane.xlu0 %7890
        %v7892 = vmax.f32 %v7851, %v7852
        %7893 = vmax.xlane.f32.xlu0 %v7892
        %v7894 = vpop.xlane.xlu0 %7893
        %v7895 = vmax.f32 %v7853, %v7854
        %7896 = vmax.xlane.f32.xlu0 %v7895
        %v7897 = vpop.xlane.xlu0 %7896
        %v7898 = vmax.f32 %v7855, %v7856
        %7899 = vmax.xlane.f32.xlu0 %v7898
        %v7900 = vpop.xlane.xlu0 %7899
        %v7901 = vmax.f32 %v7857, %v7858
        %7902 = vmax.xlane.f32.xlu0 %v7901
        %v7903 = vpop.xlane.xlu0 %7902
        %v7904 = vmax.f32 %v7859, %v7860
        %7905 = vmax.xlane.f32.xlu0 %v7904
        %v7906 = vpop.xlane.xlu0 %7905
        %v7907 = vmax.f32 %v7861, %v7862
        %7908 = vmax.xlane.f32.xlu0 %v7907
        %v7909 = vpop.xlane.xlu0 %7908
        %v7910 = vmax.f32 %v7863, %v7864
        %7911 = vmax.xlane.f32.xlu0 %v7910
        %v7912 = vpop.xlane.xlu0 %7911
        %v7913 = vsub.f32 %v7833, %v7867
        %v7914 = vsub.f32 %v7834, %v7867
        %v7915 = vsub.f32 %v7835, %v7870
        %v7916 = vsub.f32 %v7836, %v7870
        %v7917 = vsub.f32 %v7837, %v7873
        %v7918 = vsub.f32 %v7838, %v7873
        %v7919 = vsub.f32 %v7839, %v7876
        %v7920 = vsub.f32 %v7840, %v7876
        %v7921 = vsub.f32 %v7841, %v7879
        %v7922 = vsub.f32 %v7842, %v7879
        %v7923 = vsub.f32 %v7843, %v7882
        %v7924 = vsub.f32 %v7844, %v7882
        %v7925 = vsub.f32 %v7845, %v7885
        %v7926 = vsub.f32 %v7846, %v7885
        %v7927 = vsub.f32 %v7847, %v7888
        %v7928 = vsub.f32 %v7848, %v7888
        %v7929 = vsub.f32 %v7849, %v7891
        %v7930 = vsub.f32 %v7850, %v7891
        %v7931 = vsub.f32 %v7851, %v7894
        %v7932 = vsub.f32 %v7852, %v7894
        %v7933 = vsub.f32 %v7853, %v7897
        %v7934 = vsub.f32 %v7854, %v7897
        %v7935 = vsub.f32 %v7855, %v7900
        %v7936 = vsub.f32 %v7856, %v7900
        %v7937 = vsub.f32 %v7857, %v7903
        %v7938 = vsub.f32 %v7858, %v7903
        %v7939 = vsub.f32 %v7859, %v7906
        %v7940 = vsub.f32 %v7860, %v7906
        %v7941 = vsub.f32 %v7861, %v7909
        %v7942 = vsub.f32 %v7862, %v7909
        %v7943 = vsub.f32 %v7863, %v7912
        %v7944 = vsub.f32 %v7864, %v7912
        %v7945 = vmul.f32 %v7913, 1.442695
        %v7946 = vpow.pop %v7945
        %v7947 = vmul.f32 %v7914, 1.442695
        %v7948 = vpow.pop %v7947
        %v7949 = vmul.f32 %v7915, 1.442695
        %v7950 = vpow.pop %v7949
        %v7951 = vmul.f32 %v7916, 1.442695
        %v7952 = vpow.pop %v7951
        %v7953 = vmul.f32 %v7917, 1.442695
        %v7954 = vpow.pop %v7953
        %v7955 = vmul.f32 %v7918, 1.442695
        %v7956 = vpow.pop %v7955
        %v7957 = vmul.f32 %v7919, 1.442695
        %v7958 = vpow.pop %v7957
        %v7959 = vmul.f32 %v7920, 1.442695
        %v7960 = vpow.pop %v7959
        %v7961 = vmul.f32 %v7921, 1.442695
        %v7962 = vpow.pop %v7961
        %v7963 = vmul.f32 %v7922, 1.442695
        %v7964 = vpow.pop %v7963
        %v7965 = vmul.f32 %v7923, 1.442695
        %v7966 = vpow.pop %v7965
        %v7967 = vmul.f32 %v7924, 1.442695
        %v7968 = vpow.pop %v7967
        %v7969 = vmul.f32 %v7925, 1.442695
        %v7970 = vpow.pop %v7969
        %v7971 = vmul.f32 %v7926, 1.442695
        %v7972 = vpow.pop %v7971
        %v7973 = vmul.f32 %v7927, 1.442695
        %v7974 = vpow.pop %v7973
        %v7975 = vmul.f32 %v7928, 1.442695
        %v7976 = vpow.pop %v7975
        %v7977 = vmul.f32 %v7929, 1.442695
        %v7978 = vpow.pop %v7977
        %v7979 = vmul.f32 %v7930, 1.442695
        %v7980 = vpow.pop %v7979
        %v7981 = vmul.f32 %v7931, 1.442695
        %v7982 = vpow.pop %v7981
        %v7983 = vmul.f32 %v7932, 1.442695
        %v7984 = vpow.pop %v7983
        %v7985 = vmul.f32 %v7933, 1.442695
        %v7986 = vpow.pop %v7985
        %v7987 = vmul.f32 %v7934, 1.442695
        %v7988 = vpow.pop %v7987
        %v7989 = vmul.f32 %v7935, 1.442695
        %v7990 = vpow.pop %v7989
        %v7991 = vmul.f32 %v7936, 1.442695
        %v7992 = vpow.pop %v7991
        %v7993 = vmul.f32 %v7937, 1.442695
        %v7994 = vpow.pop %v7993
        %v7995 = vmul.f32 %v7938, 1.442695
        %v7996 = vpow.pop %v7995
        %v7997 = vmul.f32 %v7939, 1.442695
        %v7998 = vpow.pop %v7997
        %v7999 = vmul.f32 %v7940, 1.442695
        %v8000 = vpow.pop %v7999
        %v8001 = vmul.f32 %v7941, 1.442695
        %v8002 = vpow.pop %v8001
        %v8003 = vmul.f32 %v7942, 1.442695
        %v8004 = vpow.pop %v8003
        %v8005 = vmul.f32 %v7943, 1.442695
        %v8006 = vpow.pop %v8005
        %v8007 = vmul.f32 %v7944, 1.442695
        %v8008 = vpow.pop %v8007
        %v8009 = vadd.f32 %v7946, %v7948
        %8010 = vadd.xlane.f32.xlu0 %v8009
        %v8011 = vpop.xlane.xlu0 %8010
        %v8012 = vadd.f32 %v7950, %v7952
        %8013 = vadd.xlane.f32.xlu0 %v8012
        %v8014 = vpop.xlane.xlu0 %8013
        %v8015 = vadd.f32 %v7954, %v7956
        %8016 = vadd.xlane.f32.xlu0 %v8015
        %v8017 = vpop.xlane.xlu0 %8016
        %v8018 = vadd.f32 %v7958, %v7960
        %8019 = vadd.xlane.f32.xlu0 %v8018
        %v8020 = vpop.xlane.xlu0 %8019
        %v8021 = vadd.f32 %v7962, %v7964
        %8022 = vadd.xlane.f32.xlu0 %v8021
        %v8023 = vpop.xlane.xlu0 %8022
        %v8024 = vadd.f32 %v7966, %v7968
        %8025 = vadd.xlane.f32.xlu0 %v8024
        %v8026 = vpop.xlane.xlu0 %8025
        %v8027 = vadd.f32 %v7970, %v7972
        %8028 = vadd.xlane.f32.xlu0 %v8027
        %v8029 = vpop.xlane.xlu0 %8028
        %v8030 = vadd.f32 %v7974, %v7976
        %8031 = vadd.xlane.f32.xlu0 %v8030
        %v8032 = vpop.xlane.xlu0 %8031
        %v8033 = vadd.f32 %v7978, %v7980
        %8034 = vadd.xlane.f32.xlu0 %v8033
        %v8035 = vpop.xlane.xlu0 %8034
        %v8036 = vadd.f32 %v7982, %v7984
        %8037 = vadd.xlane.f32.xlu0 %v8036
        %v8038 = vpop.xlane.xlu0 %8037
        %v8039 = vadd.f32 %v7986, %v7988
        %8040 = vadd.xlane.f32.xlu0 %v8039
        %v8041 = vpop.xlane.xlu0 %8040
        %v8042 = vadd.f32 %v7990, %v7992
        %8043 = vadd.xlane.f32.xlu0 %v8042
        %v8044 = vpop.xlane.xlu0 %8043
        %v8045 = vadd.f32 %v7994, %v7996
        %8046 = vadd.xlane.f32.xlu0 %v8045
        %v8047 = vpop.xlane.xlu0 %8046
        %v8048 = vadd.f32 %v7998, %v8000
        %8049 = vadd.xlane.f32.xlu0 %v8048
        %v8050 = vpop.xlane.xlu0 %8049
        %v8051 = vadd.f32 %v8002, %v8004
        %8052 = vadd.xlane.f32.xlu0 %v8051
        %v8053 = vpop.xlane.xlu0 %8052
        %v8054 = vadd.f32 %v8006, %v8008
        %8055 = vadd.xlane.f32.xlu0 %v8054
        %v8056 = vpop.xlane.xlu0 %8055
        %v8057 = vrcp.pop %v8011
        %v8058 = vrcp.pop %v8014
        %v8059 = vrcp.pop %v8017
        %v8060 = vrcp.pop %v8020
        %v8061 = vrcp.pop %v8023
        %v8062 = vrcp.pop %v8026
        %v8063 = vrcp.pop %v8029
        %v8064 = vrcp.pop %v8032
        %v8065 = vrcp.pop %v8035
        %v8066 = vrcp.pop %v8038
        %v8067 = vrcp.pop %v8041
        %v8068 = vrcp.pop %v8044
        %v8069 = vrcp.pop %v8047
        %v8070 = vrcp.pop %v8050
        %v8071 = vrcp.pop %v8053
        %v8072 = vrcp.pop %v8056
        %v8073 = vmul.f32 %v7946, %v8057
        %v8074 = vmul.f32 %v7948, %v8057
        %v8075 = vmul.f32 %v7950, %v8058
        %v8076 = vmul.f32 %v7952, %v8058
        %v8077 = vmul.f32 %v7954, %v8059
        %v8078 = vmul.f32 %v7956, %v8059
        %v8079 = vmul.f32 %v7958, %v8060
        %v8080 = vmul.f32 %v7960, %v8060
        %v8081 = vmul.f32 %v7962, %v8061
        %v8082 = vmul.f32 %v7964, %v8061
        %v8083 = vmul.f32 %v7966, %v8062
        %v8084 = vmul.f32 %v7968, %v8062
        %v8085 = vmul.f32 %v7970, %v8063
        %v8086 = vmul.f32 %v7972, %v8063
        %v8087 = vmul.f32 %v7974, %v8064
        %v8088 = vmul.f32 %v7976, %v8064
        %v8089 = vmul.f32 %v7978, %v8065
        %v8090 = vmul.f32 %v7980, %v8065
        %v8091 = vmul.f32 %v7982, %v8066
        %v8092 = vmul.f32 %v7984, %v8066
        %v8093 = vmul.f32 %v7986, %v8067
        %v8094 = vmul.f32 %v7988, %v8067
        %v8095 = vmul.f32 %v7990, %v8068
        %v8096 = vmul.f32 %v7992, %v8068
        %v8097 = vmul.f32 %v7994, %v8069
        %v8098 = vmul.f32 %v7996, %v8069
        %v8099 = vmul.f32 %v7998, %v8070
        %v8100 = vmul.f32 %v8000, %v8070
        %v8101 = vmul.f32 %v8002, %v8071
        %v8102 = vmul.f32 %v8004, %v8071
        %v8103 = vmul.f32 %v8006, %v8072
        %v8104 = vmul.f32 %v8008, %v8072
        %v8105 = vpack.c.bf16 %v8075, %v8073
        %v8106 = vpack.c.bf16 %v8076, %v8074
        %v8107 = vpack.c.bf16 %v8079, %v8077
        %v8108 = vpack.c.bf16 %v8080, %v8078
        %v8109 = vpack.c.bf16 %v8083, %v8081
        %v8110 = vpack.c.bf16 %v8084, %v8082
        %v8111 = vpack.c.bf16 %v8087, %v8085
        %v8112 = vpack.c.bf16 %v8088, %v8086
        %v8113 = vpack.c.bf16 %v8091, %v8089
        %v8114 = vpack.c.bf16 %v8092, %v8090
        %v8115 = vpack.c.bf16 %v8095, %v8093
        %v8116 = vpack.c.bf16 %v8096, %v8094
        %v8117 = vpack.c.bf16 %v8099, %v8097
        %v8118 = vpack.c.bf16 %v8100, %v8098
        %v8119 = vpack.c.bf16 %v8103, %v8101
        %v8120 = vpack.c.bf16 %v8104, %v8102
        %8121 = vrot.lane.b32.xlu0 %v1253, 16
        %v8122 = vpop.permute.xlu0 %8121
        %8123 = vrot.lane.b32.xlu0 %v1254, 16
        %v8124 = vpop.permute.xlu0 %8123
        %8125 = vrot.lane.b32.xlu0 %v1255, 16
        %v8126 = vpop.permute.xlu0 %8125
        %8127 = vrot.lane.b32.xlu0 %v1256, 16
        %v8128 = vpop.permute.xlu0 %8127
        %8129 = vrot.lane.b32.xlu0 %v1257, 16
        %v8130 = vpop.permute.xlu0 %8129
        %8131 = vrot.lane.b32.xlu0 %v1258, 16
        %v8132 = vpop.permute.xlu0 %8131
        %8133 = vrot.lane.b32.xlu0 %v1259, 16
        %v8134 = vpop.permute.xlu0 %8133
        %8135 = vrot.lane.b32.xlu0 %v1260, 16
        %v8136 = vpop.permute.xlu0 %8135
        %8137 = vrot.lane.b32.xlu0 %v1261, 16
        %v8138 = vpop.permute.xlu0 %8137
        %8139 = vrot.lane.b32.xlu0 %v1262, 16
        %v8140 = vpop.permute.xlu0 %8139
        %8141 = vrot.lane.b32.xlu0 %v1263, 16
        %v8142 = vpop.permute.xlu0 %8141
        %8143 = vrot.lane.b32.xlu0 %v1264, 16
        %v8144 = vpop.permute.xlu0 %8143
        %8145 = vrot.lane.b32.xlu0 %v1265, 16
        %v8146 = vpop.permute.xlu0 %8145
        %8147 = vrot.lane.b32.xlu0 %v1266, 16
        %v8148 = vpop.permute.xlu0 %8147
        %8149 = vrot.lane.b32.xlu0 %v1267, 16
        %v8150 = vpop.permute.xlu0 %8149
        %8151 = vrot.lane.b32.xlu0 %v1268, 16
        %v8152 = vpop.permute.xlu0 %8151
        %8169 = vmatprep.subr.bf16.mxu0 0
        %8170 = vmatpush1.bf16.msra.mxu0 %v8122
        %8171 = vmatprep.subr.bf16.mxu0 0
        %8172 = vmatpush1.bf16.msra.mxu0 %v8124
        %8173 = vmatprep.subr.bf16.mxu0 0
        %8174 = vmatpush1.bf16.msra.mxu0 %v8126
        %8175 = vmatprep.subr.bf16.mxu0 0
        %8176 = vmatpush1.bf16.msra.mxu0 %v8128
        %8177 = vmatprep.subr.bf16.mxu0 0
        %8178 = vmatpush1.bf16.msra.mxu0 %v8130
        %8179 = vmatprep.subr.bf16.mxu0 0
        %8180 = vmatpush1.bf16.msra.mxu0 %v8132
        %8181 = vmatprep.subr.bf16.mxu0 0
        %8182 = vmatpush1.bf16.msra.mxu0 %v8134
        %8183 = vmatprep.subr.bf16.mxu0 0
        %8184 = vmatpush1.bf16.msra.mxu0 %v8136
        %8185 = vmatprep.subr.bf16.mxu0 0
        %8186 = vmatpush1.bf16.msra.mxu0 %v8138
        %8187 = vmatprep.subr.bf16.mxu0 0
        %8188 = vmatpush1.bf16.msra.mxu0 %v8140
        %8189 = vmatprep.subr.bf16.mxu0 0
        %8190 = vmatpush1.bf16.msra.mxu0 %v8142
        %8191 = vmatprep.subr.bf16.mxu0 0
        %8192 = vmatpush1.bf16.msra.mxu0 %v8144
        %8193 = vmatprep.subr.bf16.mxu0 0
        %8194 = vmatpush1.bf16.msra.mxu0 %v8146
        %8195 = vmatprep.subr.bf16.mxu0 0
        %8196 = vmatpush1.bf16.msra.mxu0 %v8148
        %8197 = vmatprep.subr.bf16.mxu0 0
        %8198 = vmatpush1.bf16.msra.mxu0 %v8150
        %8199 = vmatprep.subr.bf16.mxu0 0
        %8200 = vmatpush1.bf16.msra.mxu0 %v8152
        %8201 = vmatprep.mubr.bf16.mxu0 %v8106
        %8202 = vmatmul.mubr.bf16.gmra.mrb[0].mxu0 %v8105
        %v8203 = vpop.f32.mrb[0].mxu0
        %v8204 = vadd.f32 0.0, %v8203
        %v8205 = vpop.f32.mrb[0].mxu0
        %v8206 = vpop.f32.mrb[0].mxu0
        %v8207 = vadd.f32 0.0, %v8206
        %v8208 = vpop.f32.mrb[0].mxu0
        %8209 = vmatprep.mubr.bf16.mxu0 %v8108
        %8210 = vmatmul.mubr.bf16.gmra.mrb[0].mxu0 %v8107
        %v8211 = vpop.f32.mrb[0].mxu0
        %v8212 = vadd.f32 0.0, %v8211
        %v8213 = vpop.f32.mrb[0].mxu0
        %v8214 = vpop.f32.mrb[0].mxu0
        %v8215 = vadd.f32 0.0, %v8214
        %v8216 = vpop.f32.mrb[0].mxu0
        %8217 = vmatprep.mubr.bf16.mxu0 %v8110
        %8218 = vmatmul.mubr.bf16.gmra.mrb[0].mxu0 %v8109
        %v8219 = vpop.f32.mrb[0].mxu0
        %v8220 = vadd.f32 0.0, %v8219
        %v8221 = vpop.f32.mrb[0].mxu0
        %v8222 = vpop.f32.mrb[0].mxu0
        %v8223 = vadd.f32 0.0, %v8222
        %v8224 = vpop.f32.mrb[0].mxu0
        %8225 = vmatprep.mubr.bf16.mxu0 %v8112
        %8226 = vmatmul.mubr.bf16.gmra.mrb[0].mxu0 %v8111
        %v8227 = vpop.f32.mrb[0].mxu0
        %v8228 = vadd.f32 0.0, %v8227
        %v8229 = vpop.f32.mrb[0].mxu0
        %v8230 = vpop.f32.mrb[0].mxu0
        %v8231 = vadd.f32 0.0, %v8230
        %v8232 = vpop.f32.mrb[0].mxu0
        %8233 = vmatprep.mubr.bf16.mxu0 %v8114
        %8234 = vmatmul.mubr.bf16.gmra.mrb[0].mxu0 %v8113
        %v8235 = vpop.f32.mrb[0].mxu0
        %v8236 = vadd.f32 0.0, %v8235
        %v8237 = vpop.f32.mrb[0].mxu0
        %v8238 = vpop.f32.mrb[0].mxu0
        %v8239 = vadd.f32 0.0, %v8238
        %v8240 = vpop.f32.mrb[0].mxu0
        %8241 = vmatprep.mubr.bf16.mxu0 %v8116
        %8242 = vmatmul.mubr.bf16.gmra.mrb[0].mxu0 %v8115
        %v8243 = vpop.f32.mrb[0].mxu0
        %v8244 = vadd.f32 0.0, %v8243
        %v8245 = vpop.f32.mrb[0].mxu0
        %v8246 = vpop.f32.mrb[0].mxu0
        %v8247 = vadd.f32 0.0, %v8246
        %v8248 = vpop.f32.mrb[0].mxu0
        %8249 = vmatprep.mubr.bf16.mxu0 %v8118
        %8250 = vmatmul.mubr.bf16.gmra.mrb[0].mxu0 %v8117
        %v8251 = vpop.f32.mrb[0].mxu0
        %v8252 = vadd.f32 0.0, %v8251
        %v8253 = vpop.f32.mrb[0].mxu0
        %v8254 = vpop.f32.mrb[0].mxu0
        %v8255 = vadd.f32 0.0, %v8254
        %v8256 = vpop.f32.mrb[0].mxu0
        %8257 = vmatprep.mubr.bf16.mxu0 %v8120
        %8258 = vmatmul.mubr.bf16.gmra.mrb[0].mxu0 %v8119
        %v8259 = vpop.f32.mrb[0].mxu0
        %v8260 = vadd.f32 0.0, %v8259
        %v8261 = vpop.f32.mrb[0].mxu0
        %v8262 = vpop.f32.mrb[0].mxu0
        %v8263 = vadd.f32 0.0, %v8262
        %v8264 = vpop.f32.mrb[0].mxu0
        %8265 = vdwg.mxu0
        %8282 = vrot.lane.b32.xlu0 %v8204, 112
        %v8283 = vpop.permute.xlu0 %8282
        %8284 = vrot.lane.b32.xlu0 %v8207, 112
        %v8285 = vpop.permute.xlu0 %8284
        %8286 = vrot.lane.b32.xlu0 %v8212, 112
        %v8287 = vpop.permute.xlu0 %8286
        %8288 = vrot.lane.b32.xlu0 %v8215, 112
        %v8289 = vpop.permute.xlu0 %8288
        %8290 = vrot.lane.b32.xlu0 %v8220, 112
        %v8291 = vpop.permute.xlu0 %8290
        %8292 = vrot.lane.b32.xlu0 %v8223, 112
        %v8293 = vpop.permute.xlu0 %8292
        %8294 = vrot.lane.b32.xlu0 %v8228, 112
        %v8295 = vpop.permute.xlu0 %8294
        %8296 = vrot.lane.b32.xlu0 %v8231, 112
        %v8297 = vpop.permute.xlu0 %8296
        %8298 = vrot.lane.b32.xlu0 %v8236, 112
        %v8299 = vpop.permute.xlu0 %8298
        %8300 = vrot.lane.b32.xlu0 %v8239, 112
        %v8301 = vpop.permute.xlu0 %8300
        %8302 = vrot.lane.b32.xlu0 %v8244, 112
        %v8303 = vpop.permute.xlu0 %8302
        %8304 = vrot.lane.b32.xlu0 %v8247, 112
        %v8305 = vpop.permute.xlu0 %8304
        %8306 = vrot.lane.b32.xlu0 %v8252, 112
        %v8307 = vpop.permute.xlu0 %8306
        %8308 = vrot.lane.b32.xlu0 %v8255, 112
        %v8309 = vpop.permute.xlu0 %8308
        %8310 = vrot.lane.b32.xlu0 %v8260, 112
        %v8311 = vpop.permute.xlu0 %8310
        %8312 = vrot.lane.b32.xlu0 %v8263, 112
        %v8313 = vpop.permute.xlu0 %8312
        %vm8330 = vcmask 1048448
        %8331 = vst.msk [vmem:[#allocation2] sm:$0xff] %vm8330, %v8283
        %8332 = vst.msk [vmem:[#allocation2 + $0x8] sm:$0xff] %vm8330, %v8285
        %8333 = vst.msk [vmem:[#allocation2 + $0x10] sm:$0xff] %vm8330, %v8287
        %8334 = vst.msk [vmem:[#allocation2 + $0x18] sm:$0xff] %vm8330, %v8289
        %8335 = vst.msk [vmem:[#allocation2 + $0x20] sm:$0xff] %vm8330, %v8291
        %8336 = vst.msk [vmem:[#allocation2 + $0x28] sm:$0xff] %vm8330, %v8293
        %8337 = vst.msk [vmem:[#allocation2 + $0x30] sm:$0xff] %vm8330, %v8295
        %8338 = vst.msk [vmem:[#allocation2 + $0x38] sm:$0xff] %vm8330, %v8297
        %8339 = vst.msk [vmem:[#allocation2 + $0x40] sm:$0xff] %vm8330, %v8299
        %8340 = vst.msk [vmem:[#allocation2 + $0x48] sm:$0xff] %vm8330, %v8301
        %8341 = vst.msk [vmem:[#allocation2 + $0x50] sm:$0xff] %vm8330, %v8303
        %8342 = vst.msk [vmem:[#allocation2 + $0x58] sm:$0xff] %vm8330, %v8305
        %8343 = vst.msk [vmem:[#allocation2 + $0x60] sm:$0xff] %vm8330, %v8307
        %8344 = vst.msk [vmem:[#allocation2 + $0x68] sm:$0xff] %vm8330, %v8309
        %8345 = vst.msk [vmem:[#allocation2 + $0x70] sm:$0xff] %vm8330, %v8311
        %8346 = vst.msk [vmem:[#allocation2 + $0x78] sm:$0xff] %vm8330, %v8313
        %v8347 = vld [vmem:[#allocation2] sm:$0xff]
        %v8348 = vld [vmem:[#allocation2 + $0x8] sm:$0xff]
        %v8349 = vld [vmem:[#allocation2 + $0x10] sm:$0xff]
        %v8350 = vld [vmem:[#allocation2 + $0x18] sm:$0xff]
        %v8351 = vld [vmem:[#allocation2 + $0x20] sm:$0xff]
        %v8352 = vld [vmem:[#allocation2 + $0x28] sm:$0xff]
        %v8353 = vld [vmem:[#allocation2 + $0x30] sm:$0xff]
        %v8354 = vld [vmem:[#allocation2 + $0x38] sm:$0xff]
        %v8355 = vld [vmem:[#allocation2 + $0x40] sm:$0xff]
        %v8356 = vld [vmem:[#allocation2 + $0x48] sm:$0xff]
        %v8357 = vld [vmem:[#allocation2 + $0x50] sm:$0xff]
        %v8358 = vld [vmem:[#allocation2 + $0x58] sm:$0xff]
        %v8359 = vld [vmem:[#allocation2 + $0x60] sm:$0xff]
        %v8360 = vld [vmem:[#allocation2 + $0x68] sm:$0xff]
        %v8361 = vld [vmem:[#allocation2 + $0x70] sm:$0xff]
        %v8362 = vld [vmem:[#allocation2 + $0x78] sm:$0xff]
        %v8363 = vpack.c.bf16 %v8348, %v8347
        %v8364 = vpack.c.bf16 %v8350, %v8349
        %v8365 = vpack.c.bf16 %v8352, %v8351
        %v8366 = vpack.c.bf16 %v8354, %v8353
        %v8367 = vpack.c.bf16 %v8356, %v8355
        %v8368 = vpack.c.bf16 %v8358, %v8357
        %v8369 = vpack.c.bf16 %v8360, %v8359
        %v8370 = vpack.c.bf16 %v8362, %v8361
        %v8371 = vld [vmem:[#allocation12] sm:$0xf]
        %v8372 = vld [vmem:[#allocation12 + $0x4] sm:$0xf]
        %v8373 = vld [vmem:[#allocation12 + $0x8] sm:$0xf]
        %v8374 = vld [vmem:[#allocation12 + $0xc] sm:$0xf]
        %v8375 = vld [vmem:[#allocation12 + $0x10] sm:$0xf]
        %v8376 = vld [vmem:[#allocation12 + $0x14] sm:$0xf]
        %v8377 = vld [vmem:[#allocation12 + $0x18] sm:$0xf]
        %v8378 = vld [vmem:[#allocation12 + $0x1c] sm:$0xf]
        %v8379 = vld [vmem:[#allocation12 + $0x20] sm:$0xf]
        %v8380 = vld [vmem:[#allocation12 + $0x24] sm:$0xf]
        %v8381 = vld [vmem:[#allocation12 + $0x28] sm:$0xf]
        %v8382 = vld [vmem:[#allocation12 + $0x2c] sm:$0xf]
        %v8383 = vld [vmem:[#allocation12 + $0x30] sm:$0xf]
        %v8384 = vld [vmem:[#allocation12 + $0x34] sm:$0xf]
        %v8385 = vld [vmem:[#allocation12 + $0x38] sm:$0xf]
        %v8386 = vld [vmem:[#allocation12 + $0x3c] sm:$0xf]
        %v8387 = vld [vmem:[%s9] sm:$0x1]
        %v8389 = vlaneseq
        %v8390 = vshrl.u32 %v8389, 7
        %v8391 = vsub.s32 0, %v8390
        %v8392 = vrot.slane %v8387, %v8391
        %v8410 = vunpack.c.l.b16 %v8371
        %v8411 = vunpack.c.l.b16 %v8372
        %v8412 = vunpack.c.l.b16 %v8373
        %v8413 = vunpack.c.l.b16 %v8374
        %v8414 = vunpack.c.l.b16 %v8375
        %v8415 = vunpack.c.l.b16 %v8376
        %v8416 = vunpack.c.l.b16 %v8377
        %v8417 = vunpack.c.l.b16 %v8378
        %v8418 = vunpack.c.l.b16 %v8379
        %v8419 = vunpack.c.l.b16 %v8380
        %v8420 = vunpack.c.l.b16 %v8381
        %v8421 = vunpack.c.l.b16 %v8382
        %v8422 = vunpack.c.l.b16 %v8383
        %v8423 = vunpack.c.l.b16 %v8384
        %v8424 = vunpack.c.l.b16 %v8385
        %v8425 = vunpack.c.l.b16 %v8386
        %v8426 = vpack.c.b16 %v8411, %v8410
        %v8427 = vpack.c.b16 %v8413, %v8412
        %v8428 = vpack.c.b16 %v8415, %v8414
        %v8429 = vpack.c.b16 %v8417, %v8416
        %v8430 = vpack.c.b16 %v8419, %v8418
        %v8431 = vpack.c.b16 %v8421, %v8420
        %v8432 = vpack.c.b16 %v8423, %v8422
        %v8433 = vpack.c.b16 %v8425, %v8424
        %8442 = vmatprep.subr.bf16.mxu0 0
        %8443 = vmatpush1.bf16.msra.mxu0 %v8426
        %8444 = vmatprep.subr.bf16.mxu0 0
        %8445 = vmatpush1.bf16.msra.mxu0 %v8427
        %8446 = vmatprep.subr.bf16.mxu0 0
        %8447 = vmatpush1.bf16.msra.mxu0 %v8428
        %8448 = vmatprep.subr.bf16.mxu0 0
        %8449 = vmatpush1.bf16.msra.mxu0 %v8429
        %8450 = vmatprep.subr.bf16.mxu0 0
        %8451 = vmatpush1.bf16.msra.mxu0 %v8430
        %8452 = vmatprep.subr.bf16.mxu0 0
        %8453 = vmatpush1.bf16.msra.mxu0 %v8431
        %8454 = vmatprep.subr.bf16.mxu0 0
        %8455 = vmatpush1.bf16.msra.mxu0 %v8432
        %8456 = vmatprep.subr.bf16.mxu0 0
        %8457 = vmatpush1.bf16.msra.mxu0 %v8433
        %8458 = vmatprep.subr.bf16.mxu0 0
        %8459 = vmatpush1.bf16.msra.mxu0 0
        %8460 = vmatprep.subr.bf16.mxu0 0
        %8461 = vmatpush1.bf16.msra.mxu0 0
        %8462 = vmatprep.subr.bf16.mxu0 0
        %8463 = vmatpush1.bf16.msra.mxu0 0
        %8464 = vmatprep.subr.bf16.mxu0 0
        %8465 = vmatpush1.bf16.msra.mxu0 0
        %8466 = vmatprep.subr.bf16.mxu0 0
        %8467 = vmatpush1.bf16.msra.mxu0 0
        %8468 = vmatprep.subr.bf16.mxu0 0
        %8469 = vmatpush1.bf16.msra.mxu0 0
        %8470 = vmatprep.subr.bf16.mxu0 0
        %8471 = vmatpush1.bf16.msra.mxu0 0
        %8472 = vmatprep.subr.bf16.mxu0 0
        %8473 = vmatpush1.bf16.msra.mxu0 0
        %8474 = vmatprep.mubr.bf16.mxu0 0
        %8475 = vmatmul.mubr.bf16.gmra.mrb[0].mxu0 %v8363
        %v8476 = vpop.f32.mrb[0].mxu0
        %v8477 = vadd.f32 %v8392, %v8476
        %v8478 = vpop.f32.mrb[0].mxu0
        %v8479 = vpop.f32.mrb[0].mxu0
        %v8480 = vadd.f32 %v8392, %v8479
        %v8481 = vpop.f32.mrb[0].mxu0
        %8482 = vmatprep.mubr.bf16.mxu0 0
        %8483 = vmatmul.mubr.bf16.gmra.mrb[0].mxu0 %v8364
        %v8484 = vpop.f32.mrb[0].mxu0
        %v8485 = vadd.f32 %v8392, %v8484
        %v8486 = vpop.f32.mrb[0].mxu0
        %v8487 = vpop.f32.mrb[0].mxu0
        %v8488 = vadd.f32 %v8392, %v8487
        %v8489 = vpop.f32.mrb[0].mxu0
        %8490 = vmatprep.mubr.bf16.mxu0 0
        %8491 = vmatmul.mubr.bf16.gmra.mrb[0].mxu0 %v8365
        %v8492 = vpop.f32.mrb[0].mxu0
        %v8493 = vadd.f32 %v8392, %v8492
        %v8494 = vpop.f32.mrb[0].mxu0
        %v8495 = vpop.f32.mrb[0].mxu0
        %v8496 = vadd.f32 %v8392, %v8495
        %v8497 = vpop.f32.mrb[0].mxu0
        %8498 = vmatprep.mubr.bf16.mxu0 0
        %8499 = vmatmul.mubr.bf16.gmra.mrb[0].mxu0 %v8366
        %v8500 = vpop.f32.mrb[0].mxu0
        %v8501 = vadd.f32 %v8392, %v8500
        %v8502 = vpop.f32.mrb[0].mxu0
        %v8503 = vpop.f32.mrb[0].mxu0
        %v8504 = vadd.f32 %v8392, %v8503
        %v8505 = vpop.f32.mrb[0].mxu0
        %8506 = vmatprep.mubr.bf16.mxu0 0
        %8507 = vmatmul.mubr.bf16.gmra.mrb[0].mxu0 %v8367
        %v8508 = vpop.f32.mrb[0].mxu0
        %v8509 = vadd.f32 %v8392, %v8508
        %v8510 = vpop.f32.mrb[0].mxu0
        %v8511 = vpop.f32.mrb[0].mxu0
        %v8512 = vadd.f32 %v8392, %v8511
        %v8513 = vpop.f32.mrb[0].mxu0
        %8514 = vmatprep.mubr.bf16.mxu0 0
        %8515 = vmatmul.mubr.bf16.gmra.mrb[0].mxu0 %v8368
        %v8516 = vpop.f32.mrb[0].mxu0
        %v8517 = vadd.f32 %v8392, %v8516
        %v8518 = vpop.f32.mrb[0].mxu0
        %v8519 = vpop.f32.mrb[0].mxu0
        %v8520 = vadd.f32 %v8392, %v8519
        %v8521 = vpop.f32.mrb[0].mxu0
        %8522 = vmatprep.mubr.bf16.mxu0 0
        %8523 = vmatmul.mubr.bf16.gmra.mrb[0].mxu0 %v8369
        %v8524 = vpop.f32.mrb[0].mxu0
        %v8525 = vadd.f32 %v8392, %v8524
        %v8526 = vpop.f32.mrb[0].mxu0
        %v8527 = vpop.f32.mrb[0].mxu0
        %v8528 = vadd.f32 %v8392, %v8527
        %v8529 = vpop.f32.mrb[0].mxu0
        %8530 = vmatprep.mubr.bf16.mxu0 0
        %8531 = vmatmul.mubr.bf16.gmra.mrb[0].mxu0 %v8370
        %v8532 = vpop.f32.mrb[0].mxu0
        %v8533 = vadd.f32 %v8392, %v8532
        %v8534 = vpop.f32.mrb[0].mxu0
        %v8535 = vpop.f32.mrb[0].mxu0
        %v8536 = vadd.f32 %v8392, %v8535
        %v8537 = vpop.f32.mrb[0].mxu0
        %8538 = vdwg.mxu0
        %8539 = vst [vmem:[%s520] sm:$0xff] %v8477
        %8540 = vst [vmem:[%s520 + $0x8] sm:$0xff] %v8480
        %8541 = vst [vmem:[%s520 + $0x10] sm:$0xff] %v8485
        %8542 = vst [vmem:[%s520 + $0x18] sm:$0xff] %v8488
        %8543 = vst [vmem:[%s520 + $0x20] sm:$0xff] %v8493
        %8544 = vst [vmem:[%s520 + $0x28] sm:$0xff] %v8496
        %8545 = vst [vmem:[%s520 + $0x30] sm:$0xff] %v8501
        %8546 = vst [vmem:[%s520 + $0x38] sm:$0xff] %v8504
        %8547 = vst [vmem:[%s520 + $0x40] sm:$0xff] %v8509
        %8548 = vst [vmem:[%s520 + $0x48] sm:$0xff] %v8512
        %8549 = vst [vmem:[%s520 + $0x50] sm:$0xff] %v8517
        %8550 = vst [vmem:[%s520 + $0x58] sm:$0xff] %v8520
        %8551 = vst [vmem:[%s520 + $0x60] sm:$0xff] %v8525
        %8552 = vst [vmem:[%s520 + $0x68] sm:$0xff] %v8528
        %8553 = vst [vmem:[%s520 + $0x70] sm:$0xff] %v8533
        %8554 = vst [vmem:[%s520 + $0x78] sm:$0xff] %v8536
        %s8555 = sand.u32 %s298, 1
        %s8556 = scalar_lea.sflag [#allocation5], %s8555
        %s8557 = sand.u32 %s298, 1
        %s8558 = smul.addr %s8557, 128
        %s8559 = scalar_lea.vmem [#allocation14], %s8558
        // Predicated region
        $region89: #{tpu_custom_call.1} parent=63 // pred_check
          %p8560 = pneg %p308
        $region90: #{tpu_custom_call.1} parent=63 // pred_check_branch
          %8562 = sbr.rel (%p8560) target = $region92
        $region91: #{tpu_custom_call.1} parent=63 // pred_region
          %s8563 = smul.u32 16, %s38
          %s8565 = ssub.s32 2048, 2048
          %8566 = vsyncadd %s8556, %s8565
          %s8567 = smul.addr %s37, 32
          %s8568 = sadd.s32 %s8563, %s8567
          %s8569 = smul.addr %s8568, 128
          %s8570 = scalar_lea.hbm %s11, %s8569
          %s8571 = sshll.u32 %s8559, 4
          %s8572 = int_to_ptr.vmem [resolvable:$true] %s8571
          %8577 = dma.vmem_to_hbm [thread:$0]  %s8572, 2048, %s8570, %s8556, 128, 128, 8
        $region92: #{tpu_custom_call.1} parent=63 // pred_fallthru
          _
      $region64: #{tpu_custom_call.1} parent=5 // pred_fallthru
        _
      %p8578 = scmp.le.s32.totalorder 2, %s28
      // Predicated region
      $region93: #{tpu_custom_call.1} parent=5 // pred_check
        %p8579 = pneg %p8578
      $region94: #{tpu_custom_call.1} parent=5 // pred_check_branch
        %8581 = sbr.rel (%p8579) target = $region96
      $region95: #{tpu_custom_call.1} parent=5 // pred_region
        %s8582 = ssub.s32 %s28, 2
        // Predicated region
        $region97: #{tpu_custom_call.1} parent=95 // pred_check
          %p8583 = pneg %p314
        $region98: #{tpu_custom_call.1} parent=95 // pred_check_branch
          %8585 = sbr.rel (%p8583) target = $region100
        $region99: #{tpu_custom_call.1} parent=95 // pred_region
          %s8586 = sand.u32 %s299, 1
          %s8587 = scalar_lea.sflag [#allocation5], %s8586
          %s8588 = sand.u32 %s299, 1
          %s8589 = smul.addr %s8588, 128
          %s8590 = scalar_lea.vmem [#allocation14], %s8589
          %8591 = dma.done %s8587, 2048
        $region100: #{tpu_custom_call.1} parent=95 // pred_fallthru
          _
      $region96: #{tpu_custom_call.1} parent=5 // pred_fallthru
        _
    $region6: #{tpu_custom_call.1} parent=1 // loop_footer
      %s32 = sadd.s32 1, %s28
    $region7: #{tpu_custom_call.1} parent=1 // loop_footer_branch
      %27 = sbr.rel target = $region3
    $region8: #{tpu_custom_call.1} parent=1 // loop_exit
      _
    %8592 = vsyncpa [#allocation4], 1
    %s8593 = scalar_lea.sflag [#allocation4], 1
    %8594 = vsyncpa %s8593, 1
    %8595 = vsyncpa [#allocation7], 1
    %s8596 = scalar_lea.sflag [#allocation7], 1
    %8597 = vsyncpa %s8596, 1
    %8598 = vsyncpa [#allocation10], 1
    %8599 = vsyncpa [#allocation13], 1
    %8600 = vsyncpa [#allocation5], 1
    %s8601 = scalar_lea.sflag [#allocation5], 1
    %8602 = vsyncpa %s8601, 1

</llo_original>
